<compile_context>
chip_gen: v7x
topology: tpu7x:2x2x1
jax: 0.10.0
libtpu: 0.0.40
codegen_flags: <defaults>
</compile_context>

<pallas_src>
import functools

import jax
import jax.numpy as jnp
from jax.experimental import pallas as pl
from jax.experimental.pallas import tpu as pltpu

EPS = 1e-5
LANE = 128

_PAR1 = pltpu.CompilerParams(dimension_semantics=("parallel",))
_ARB1 = pltpu.CompilerParams(dimension_semantics=("arbitrary",))


def _round_up(x, m):
    return ((x + m - 1) // m) * m


# ----------------------------- Pallas kernels -----------------------------

def _conv3x3_body(x, w_ref, b_ref, out_ref, xp_ref, pat_ref):
    # x: (H, W, Cin) f32   w_ref: (9*Cin, Cout) bf16   b_ref: (1, Cout) f32
    # xp_ref: (H+2, W+2, Cin) f32 scratch   pat_ref: (H*W, 9*Cin) bf16 scratch
    H, W, Cin = x.shape
    Cout = out_ref.shape[3]
    # spatial zero-pad in VMEM (no external jnp.pad round trip)
    xp_ref[...] = jnp.zeros(xp_ref.shape, xp_ref.dtype)
    xp_ref[1:H + 1, 1:W + 1, :] = x
    # im2col: one wide-K patch matrix, then a single MXU matmul
    for ky in range(3):
        for kx in range(3):
            t = ky * 3 + kx
            patch = xp_ref[ky:ky + H, kx:kx + W, :].reshape(H * W, Cin)
            pat_ref[:, t * Cin:(t + 1) * Cin] = patch.astype(pat_ref.dtype)
    y = jnp.dot(pat_ref[...], w_ref[...],
                preferred_element_type=jnp.float32) + b_ref[...]
    out_ref[0] = y.reshape(H, W, Cout)


def conv3x3_kernel(x_ref, w_ref, b_ref, out_ref, xp_ref, pat_ref):
    _conv3x3_body(x_ref[0], w_ref, b_ref, out_ref, xp_ref, pat_ref)


def conv3x3_bn_kernel(x_ref, s_ref, t_ref, w_ref, b_ref, out_ref, xp_ref, pat_ref):
    # fused BN affine + ReLU of the *previous* conv's raw output, then conv3x3
    x = jnp.maximum(x_ref[0] * s_ref[0] + t_ref[0], 0.0)   # (H,W,C) * (1,1,C)
    _conv3x3_body(x, w_ref, b_ref, out_ref, xp_ref, pat_ref)


def bn_stats_kernel(x_ref, sum_ref, sumsq_ref):
    # gridded reduction over the batch axis: per-channel sum / sum of squares
    @pl.when(pl.program_id(0) == 0)
    def _():
        sum_ref[...] = jnp.zeros_like(sum_ref)
        sumsq_ref[...] = jnp.zeros_like(sumsq_ref)

    _, H, W, C = x_ref.shape
    x = x_ref[0].reshape(H * W, C)
    sum_ref[...] += jnp.sum(x, axis=0, keepdims=True)
    sumsq_ref[...] += jnp.sum(x * x, axis=0, keepdims=True)


def tail_scse_kernel(*refs, has_proj):
    # Fused: bn3 affine + (optional) 1x1 projection + residual add + ReLU
    #        + cSE (global avg-pool -> fc -> relu -> fc -> sigmoid)
    #        + sSE (1x1 conv -> sigmoid) + SCSE apply.  Writes `conv` directly.
    if has_proj:
        (y3_ref, s_ref, t_ref, x_ref, wp_ref, bp_ref,
         w1_ref, b1_ref, w2_ref, b2_ref, ws_ref, bs_ref, conv_ref) = refs
    else:
        (y3_ref, s_ref, t_ref, x_ref,
         w1_ref, b1_ref, w2_ref, b2_ref, ws_ref, bs_ref, conv_ref) = refs

    _, H, W, C = y3_ref.shape
    h = y3_ref[0] * s_ref[0] + t_ref[0]                         # bn3 affine (no relu)

    if has_proj:
        Cin = x_ref.shape[3]
        res = jnp.dot(x_ref[0].reshape(H * W, Cin).astype(jnp.bfloat16), wp_ref[...],
                      preferred_element_type=jnp.float32) + bp_ref[...]
        res = res.reshape(H, W, C)
    else:
        res = x_ref[0]

    r = jnp.maximum(h + res, 0.0)                               # ResBlock output
    r2d = r.reshape(H * W, C)

    # cSE: global average pool + 2-layer FC + sigmoid (per-batch, all in VMEM)
    pooled = jnp.mean(r2d, axis=0, keepdims=True)               # (1, C) f32
    hfc = jnp.dot(pooled.astype(jnp.bfloat16), w1_ref[...],
                  preferred_element_type=jnp.float32) + b1_ref[...]
    hfc = jnp.maximum(hfc, 0.0)
    cse = jax.nn.sigmoid(jnp.dot(hfc.astype(jnp.bfloat16), w2_ref[...],
                                 preferred_element_type=jnp.float32) + b2_ref[...])

    # sSE: 1x1 conv to a single map + sigmoid (never materialized in HBM)
    sse = jax.nn.sigmoid(jnp.dot(r2d.astype(jnp.bfloat16), ws_ref[...],
                                 preferred_element_type=jnp.float32) + bs_ref[...])

    conv = r2d * cse + r2d * sse                                # SCSE = cSE + sSE
    conv_ref[0] = conv.reshape(H, W, C)


def maxpool_kernel(x_ref, out_ref):
    # x_ref: (1, Ho, 2, Wo, 2, C) -> (1, Ho, Wo, C)
    v = x_ref[...]
    v = jnp.max(v, axis=4)
    v = jnp.max(v, axis=2)
    out_ref[...] = v


# ----------------------------- pallas_call wrappers -----------------------------

def _conv3x3(x, w, b, scale=None, shift=None):
    N, H, W, Cin = x.shape
    Cout = w.shape[1]
    scratch = [pltpu.VMEM((H + 2, W + 2, Cin), jnp.float32),
               pltpu.VMEM((H * W, 9 * Cin), jnp.bfloat16)]
    if scale is None:
        kern = conv3x3_kernel
        in_specs = [pl.BlockSpec((1, H, W, Cin), lambda n: (n, 0, 0, 0))]
        args = [x]
    else:
        kern = conv3x3_bn_kernel
        in_specs = [pl.BlockSpec((1, H, W, Cin), lambda n: (n, 0, 0, 0)),
                    pl.BlockSpec((1, 1, 1, Cin), lambda n: (0, 0, 0, 0)),
                    pl.BlockSpec((1, 1, 1, Cin), lambda n: (0, 0, 0, 0))]
        args = [x, scale, shift]
    in_specs += [pl.BlockSpec((9 * Cin, Cout), lambda n: (0, 0)),
                 pl.BlockSpec((1, Cout), lambda n: (0, 0))]
    args += [w, b]
    return pl.pallas_call(
        kern,
        out_shape=jax.ShapeDtypeStruct((N, H, W, Cout), jnp.float32),
        grid=(N,),
        in_specs=in_specs,
        out_specs=pl.BlockSpec((1, H, W, Cout), lambda n: (n, 0, 0, 0)),
        scratch_shapes=scratch,
        compiler_params=_PAR1,
    )(*args)


def _bn_scale_shift(y, gamma, beta):
    # training-mode BatchNorm: batch mean / biased variance over N,H,W (f32)
    N, H, W, C = y.shape
    s, ss = pl.pallas_call(
        bn_stats_kernel,
        out_shape=(jax.ShapeDtypeStruct((1, C), jnp.float32),
                   jax.ShapeDtypeStruct((1, C), jnp.float32)),
        grid=(N,),
        in_specs=[pl.BlockSpec((1, H, W, C), lambda n: (n, 0, 0, 0))],
        out_specs=(pl.BlockSpec((1, C), lambda n: (0, 0)),
                   pl.BlockSpec((1, C), lambda n: (0, 0))),
        compiler_params=_ARB1,
    )(y)
    cnt = float(N * H * W)
    mean = s / cnt
    var = jnp.maximum(ss / cnt - mean * mean, 0.0)
    scale = gamma / jnp.sqrt(var + EPS)
    shift = beta - mean * scale
    return scale.reshape(1, 1, 1, C), shift.reshape(1, 1, 1, C)


def _tail_scse(y3, scale3, shift3, xres, p, has_proj):
    N, H, W, C = y3.shape
    Cin = xres.shape[3]
    Hidp = p["fc1_w"].shape[1]
    kern = functools.partial(tail_scse_kernel, has_proj=has_proj)
    in_specs = [
        pl.BlockSpec((1, H, W, C), lambda n: (n, 0, 0, 0)),        # y3 (raw conv3)
        pl.BlockSpec((1, 1, 1, C), lambda n: (0, 0, 0, 0)),        # bn3 scale
        pl.BlockSpec((1, 1, 1, C), lambda n: (0, 0, 0, 0)),        # bn3 shift
        pl.BlockSpec((1, H, W, Cin), lambda n: (n, 0, 0, 0)),      # residual input
    ]
    args = [y3, scale3, shift3, xres]
    if has_proj:
        in_specs += [pl.BlockSpec((Cin, C), lambda n: (0, 0)),
                     pl.BlockSpec((1, C), lambda n: (0, 0))]
        args += [p["proj_w"], p["proj_b"]]
    in_specs += [
        pl.BlockSpec((C, Hidp), lambda n: (0, 0)),                 # fc1 w
        pl.BlockSpec((1, Hidp), lambda n: (0, 0)),                 # fc1 b
        pl.BlockSpec((Hidp, C), lambda n: (0, 0)),                 # fc2 w
        pl.BlockSpec((1, C), lambda n: (0, 0)),                    # fc2 b
        pl.BlockSpec((C, 1), lambda n: (0, 0)),                    # sSE w
        pl.BlockSpec((1, 1), lambda n: (0, 0)),                    # sSE b
    ]
    args += [p["fc1_w"], p["fc1_b"], p["fc2_w"], p["fc2_b"], p["sse_w"], p["sse_b"]]
    return pl.pallas_call(
        kern,
        out_shape=jax.ShapeDtypeStruct((N, H, W, C), jnp.float32),
        grid=(N,),
        in_specs=in_specs,
        out_specs=pl.BlockSpec((1, H, W, C), lambda n: (n, 0, 0, 0)),
        compiler_params=_PAR1,
    )(*args)


def _maxpool2x2(x):
    N, H, W, C = x.shape
    Ho, Wo = H // 2, W // 2
    xr = x.reshape(N, Ho, 2, Wo, 2, C)
    return pl.pallas_call(
        maxpool_kernel,
        out_shape=jax.ShapeDtypeStruct((N, Ho, Wo, C), jnp.float32),
        grid=(N,),
        in_specs=[pl.BlockSpec((1, Ho, 2, Wo, 2, C),
                               lambda n: (n, 0, 0, 0, 0, 0))],
        out_specs=pl.BlockSpec((1, Ho, Wo, C), lambda n: (n, 0, 0, 0)),
        compiler_params=_PAR1,
    )(xr)


# ----------------------------- forward -----------------------------

@functools.partial(jax.jit, static_argnums=(2, 3))
def downsample_forward(x_nchw, p, in_ch, out_ch):
    """DownSample.forward: returns (down, conv), both NCHW like the PyTorch module."""
    N, _, H, W = x_nchw.shape
    assert H % 2 == 0 and W % 2 == 0  # MaxPool2d(2) with even spatial dims
    Cinp = _round_up(in_ch, LANE)

    x = jnp.transpose(x_nchw, (0, 2, 3, 1)).astype(jnp.float32)          # NHWC
    x = jnp.pad(x, ((0, 0), (0, 0), (0, 0), (0, Cinp - in_ch)))          # lane pad

    # ------------- ResBlock trunk (BN affine fused into consumers) -------------
    y1 = _conv3x3(x, p["conv1_w"], p["conv1_b"])
    s1, t1 = _bn_scale_shift(y1, p["bn1_g"], p["bn1_b"])
    y2 = _conv3x3(y1, p["conv2_w"], p["conv2_b"], s1, t1)                # bn1+relu fused in
    s2, t2 = _bn_scale_shift(y2, p["bn2_g"], p["bn2_b"])
    y3 = _conv3x3(y2, p["conv3_w"], p["conv3_b"], s2, t2)                # bn2+relu fused in
    s3, t3 = _bn_scale_shift(y3, p["bn3_g"], p["bn3_b"])

    # ------------- bn3 + projection + add + ReLU + SCSE (one fused kernel) -------------
    has_proj = p["proj_w"] is not None
    conv_p = _tail_scse(y3, s3, t3, x, p, has_proj)
    down_p = _maxpool2x2(conv_p)

    conv_out = jnp.transpose(conv_p[..., :out_ch], (0, 3, 1, 2))
    down_out = jnp.transpose(down_p[..., :out_ch], (0, 3, 1, 2))
    return down_out, conv_out


# ----------------------------- parameter setup -----------------------------

def _pad_row(v, cp):
    # (C,) -> (1, Cp) f32, zero padded
    v = jnp.asarray(v, jnp.float32)
    return jnp.pad(v, (0, cp - v.shape[0])).reshape(1, cp)


def _pad_mat_bf16(m, rp, cp):
    m = jnp.asarray(m, jnp.float32)
    return jnp.pad(m, ((0, rp - m.shape[0]), (0, cp - m.shape[1]))).astype(jnp.bfloat16)


def _conv_taps(w, cinp, coutp):
    # torch conv weight (Cout, Cin, 3, 3) -> merged-tap layout (9*Cinp, Coutp), bf16
    cout, cin = w.shape[0], w.shape[1]
    w = jnp.transpose(w, (2, 3, 1, 0))                         # (3,3,Cin,Cout)
    w = jnp.pad(w, ((0, 0), (0, 0), (0, cinp - cin), (0, coutp - cout)))
    return w.reshape(9 * cinp, coutp).astype(jnp.bfloat16)


def _expand_grouped(w, groups):
    # (Cout, Cin//g, kh, kw) -> (Cout, Cin, kh, kw) block-diagonal (exact semantics)
    cout, cpg, kh, kw = w.shape
    opg = cout // groups
    full = jnp.zeros((cout, cpg * groups, kh, kw), w.dtype)
    for g in range(groups):
        full = full.at[g * opg:(g + 1) * opg, g * cpg:(g + 1) * cpg].set(
            w[g * opg:(g + 1) * opg])
    return full


def init_params(key, in_ch, out_ch):
    ks = jax.random.split(key, 24)
    nrm = lambda k, s, sc=0.1: (sc * jax.random.normal(k, s)).astype(jnp.float32)
    hid = int(out_ch * (2.0 / 3.0))                   # SCSE default r = 2/3
    cinp = _round_up(in_ch, LANE)
    coutp = _round_up(out_ch, LANE)
    hidp = _round_up(hid, LANE)

    w1_t = nrm(ks[0], (out_ch, in_ch, 3, 3))
    w2_t = nrm(ks[1], (out_ch, out_ch // 2, 3, 3))    # groups = 2
    w3_t = nrm(ks[2], (out_ch, out_ch, 3, 3))
    wp_t = nrm(ks[3], (out_ch, in_ch, 1, 1))
    ws_t = nrm(ks[4], (1, out_ch, 1, 1))
    fc1_t = nrm(ks[5], (hid, out_ch))                 # torch Linear: (out, in)
    fc2_t = nrm(ks[6], (out_ch, hid))

    p = {
        "conv1_w": _conv_taps(w1_t, cinp, coutp),
        "conv1_b": _pad_row(nrm(ks[7], (out_ch,)), coutp),
        # grouped conv expanded block-diagonally (see TODO in header): exact semantics;
        # with 128-lane channel padding the MXU tile is the same size either way.
        "conv2_w": _conv_taps(_expand_grouped(w2_t, 2), coutp, coutp),
        "conv2_b": _pad_row(nrm(ks[8], (out_ch,)), coutp),
        "conv3_w": _conv_taps(w3_t, coutp, coutp),
        "conv3_b": _pad_row(nrm(ks[9], (out_ch,)), coutp),
        "bn1_g": _pad_row(1.0 + nrm(ks[10], (out_ch,)), coutp),
        "bn1_b": _pad_row(nrm(ks[11], (out_ch,)), coutp),
        "bn2_g": _pad_row(1.0 + nrm(ks[12], (out_ch,)), coutp),
        "bn2_b": _pad_row(nrm(ks[13], (out_ch,)), coutp),
        "bn3_g": _pad_row(1.0 + nrm(ks[14], (out_ch,)), coutp),
        "bn3_b": _pad_row(nrm(ks[15], (out_ch,)), coutp),
        "fc1_w": _pad_mat_bf16(fc1_t.T, coutp, hidp),
        "fc1_b": _pad_row(nrm(ks[16], (hid,)), hidp),
        "fc2_w": _pad_mat_bf16(fc2_t.T, hidp, coutp),
        "fc2_b": _pad_row(nrm(ks[17], (out_ch,)), coutp),
        "sse_w": _pad_mat_bf16(ws_t[:, :, 0, 0].T, coutp, 1),
        "sse_b": nrm(ks[18], (1, 1)),
    }
    if in_ch != out_ch:
        p["proj_w"] = _pad_mat_bf16(wp_t[:, :, 0, 0].T, cinp, coutp)
        p["proj_b"] = _pad_row(nrm(ks[19], (out_ch,)), coutp)
    else:
        p["proj_w"] = None
        p["proj_b"] = None
    return p


if __name__ == "__main__":
    key = jax.random.PRNGKey(0)
    k_x, k_p = jax.random.split(key)

    N, IN_CH, OUT_CH, H, W = 2, 4, 8, 16, 16
    x = jax.random.normal(k_x, (N, IN_CH, H, W), dtype=jnp.float32)   # NCHW like PyTorch
    params = init_params(k_p, IN_CH, OUT_CH)

    down, conv = downsample_forward(x, params, IN_CH, OUT_CH)
    down = jax.block_until_ready(down)
    conv = jax.block_until_ready(conv)

    assert down.shape == (N, OUT_CH, H // 2, W // 2), down.shape
    assert conv.shape == (N, OUT_CH, H, W), conv.shape
    assert jnp.all(jnp.isfinite(down)) and jnp.all(jnp.isfinite(conv))
    print("KERNEL_OK")
</pallas_src>

<mosaic_0001>
module attributes {stable_mosaic.version = 11 : i64} {
  func.func @conv3x3_kernel(%arg0: i32, %arg1: memref<1x16x16x128xf32, #tpu.memory_space<vmem>>, %arg2: memref<1152x128xbf16, #tpu.memory_space<vmem>>, %arg3: memref<1x128xf32, #tpu.memory_space<vmem>>, %arg4: memref<1x16x16x128xf32, #tpu.memory_space<vmem>>, %arg5: memref<18x18x128xf32, #tpu.memory_space<vmem>>, %arg6: memref<256x1152xbf16, #tpu.memory_space<vmem>>) attributes {dimension_semantics = [#tpu.dimension_semantics<parallel>], iteration_bounds = array<i64: 2>, scalar_prefetch = 0 : i64, scratch_operands = 2 : i64, tpu.core_type = #tpu.core_type<tc>, window_params = [{transform_indices = @transform_0, window_bounds = array<i64: 1, 16, 16, 128>}, {pipeline_mode = #tpu.pipeline_mode<synchronous>, transform_indices = @transform_1, window_bounds = array<i64: 1152, 128>}, {pipeline_mode = #tpu.pipeline_mode<synchronous>, transform_indices = @transform_2, window_bounds = array<i64: 1, 128>}, {transform_indices = @transform_3, window_bounds = array<i64: 1, 16, 16, 128>}]} {
    %c0 = arith.constant 0 : index
    %c0_0 = arith.constant 0 : index
    %c0_1 = arith.constant 0 : index
    %c0_2 = arith.constant 0 : index
    %0 = vector.load %arg1[%c0, %c0_0, %c0_1, %c0_2] : memref<1x16x16x128xf32, #tpu.memory_space<vmem>>, vector<1x16x16x128xf32>
    %1 = vector.shape_cast %0 : vector<1x16x16x128xf32> to vector<16x16x128xf32>
    %cst = arith.constant 0.000000e+00 : f32
    %2 = vector.broadcast %cst : f32 to vector<18x18x128xf32>
    %c0_3 = arith.constant 0 : index
    %c0_4 = arith.constant 0 : index
    %c0_5 = arith.constant 0 : index
    %3 = vector.load %arg5[%c0_3, %c0_4, %c0_5] : memref<18x18x128xf32, #tpu.memory_space<vmem>>, vector<18x18x128xf32>
    tpu.vector_store %arg5[%c0_3, %c0_4, %c0_5], %2 {strides = array<i32>} : memref<18x18x128xf32, #tpu.memory_space<vmem>>, vector<18x18x128xf32>,
    %c1 = arith.constant 1 : index
    %c1_6 = arith.constant 1 : index
    %c0_7 = arith.constant 0 : index
    %4 = vector.load %arg5[%c1, %c1_6, %c0_7] : memref<18x18x128xf32, #tpu.memory_space<vmem>>, vector<16x16x128xf32>
    tpu.vector_store %arg5[%c1, %c1_6, %c0_7], %1 {strides = array<i32>} : memref<18x18x128xf32, #tpu.memory_space<vmem>>, vector<16x16x128xf32>,
    %c0_8 = arith.constant 0 : index
    %c0_9 = arith.constant 0 : index
    %c0_10 = arith.constant 0 : index
    %5 = vector.load %arg5[%c0_8, %c0_9, %c0_10] : memref<18x18x128xf32, #tpu.memory_space<vmem>>, vector<16x16x128xf32>
    %6 = vector.shape_cast %5 : vector<16x16x128xf32> to vector<256x128xf32>
    %7 = arith.truncf %6 : vector<256x128xf32> to vector<256x128xbf16>
    %c0_11 = arith.constant 0 : index
    %c0_12 = arith.constant 0 : index
    %8 = vector.load %arg6[%c0_11, %c0_12] : memref<256x1152xbf16, #tpu.memory_space<vmem>>, vector<256x128xbf16>
    tpu.vector_store %arg6[%c0_11, %c0_12], %7 {strides = array<i32>} : memref<256x1152xbf16, #tpu.memory_space<vmem>>, vector<256x128xbf16>,
    %c0_13 = arith.constant 0 : index
    %c1_14 = arith.constant 1 : index
    %c0_15 = arith.constant 0 : index
    %9 = vector.load %arg5[%c0_13, %c1_14, %c0_15] : memref<18x18x128xf32, #tpu.memory_space<vmem>>, vector<16x16x128xf32>
    %10 = vector.shape_cast %9 : vector<16x16x128xf32> to vector<256x128xf32>
    %11 = arith.truncf %10 : vector<256x128xf32> to vector<256x128xbf16>
    %c0_16 = arith.constant 0 : index
    %c128 = arith.constant 128 : index
    %12 = vector.load %arg6[%c0_16, %c128] : memref<256x1152xbf16, #tpu.memory_space<vmem>>, vector<256x128xbf16>
    tpu.vector_store %arg6[%c0_16, %c128], %11 {strides = array<i32>} : memref<256x1152xbf16, #tpu.memory_space<vmem>>, vector<256x128xbf16>,
    %c0_17 = arith.constant 0 : index
    %c2 = arith.constant 2 : index
    %c0_18 = arith.constant 0 : index
    %13 = vector.load %arg5[%c0_17, %c2, %c0_18] : memref<18x18x128xf32, #tpu.memory_space<vmem>>, vector<16x16x128xf32>
    %14 = vector.shape_cast %13 : vector<16x16x128xf32> to vector<256x128xf32>
    %15 = arith.truncf %14 : vector<256x128xf32> to vector<256x128xbf16>
    %c0_19 = arith.constant 0 : index
    %c256 = arith.constant 256 : index
    %16 = vector.load %arg6[%c0_19, %c256] : memref<256x1152xbf16, #tpu.memory_space<vmem>>, vector<256x128xbf16>
    tpu.vector_store %arg6[%c0_19, %c256], %15 {strides = array<i32>} : memref<256x1152xbf16, #tpu.memory_space<vmem>>, vector<256x128xbf16>,
    %c1_20 = arith.constant 1 : index
    %c0_21 = arith.constant 0 : index
    %c0_22 = arith.constant 0 : index
    %17 = vector.load %arg5[%c1_20, %c0_21, %c0_22] : memref<18x18x128xf32, #tpu.memory_space<vmem>>, vector<16x16x128xf32>
    %18 = vector.shape_cast %17 : vector<16x16x128xf32> to vector<256x128xf32>
    %19 = arith.truncf %18 : vector<256x128xf32> to vector<256x128xbf16>
    %c0_23 = arith.constant 0 : index
    %c384 = arith.constant 384 : index
    %20 = vector.load %arg6[%c0_23, %c384] : memref<256x1152xbf16, #tpu.memory_space<vmem>>, vector<256x128xbf16>
    tpu.vector_store %arg6[%c0_23, %c384], %19 {strides = array<i32>} : memref<256x1152xbf16, #tpu.memory_space<vmem>>, vector<256x128xbf16>,
    %c1_24 = arith.constant 1 : index
    %c1_25 = arith.constant 1 : index
    %c0_26 = arith.constant 0 : index
    %21 = vector.load %arg5[%c1_24, %c1_25, %c0_26] : memref<18x18x128xf32, #tpu.memory_space<vmem>>, vector<16x16x128xf32>
    %22 = vector.shape_cast %21 : vector<16x16x128xf32> to vector<256x128xf32>
    %23 = arith.truncf %22 : vector<256x128xf32> to vector<256x128xbf16>
    %c0_27 = arith.constant 0 : index
    %c512 = arith.constant 512 : index
    %24 = vector.load %arg6[%c0_27, %c512] : memref<256x1152xbf16, #tpu.memory_space<vmem>>, vector<256x128xbf16>
    tpu.vector_store %arg6[%c0_27, %c512], %23 {strides = array<i32>} : memref<256x1152xbf16, #tpu.memory_space<vmem>>, vector<256x128xbf16>,
    %c1_28 = arith.constant 1 : index
    %c2_29 = arith.constant 2 : index
    %c0_30 = arith.constant 0 : index
    %25 = vector.load %arg5[%c1_28, %c2_29, %c0_30] : memref<18x18x128xf32, #tpu.memory_space<vmem>>, vector<16x16x128xf32>
    %26 = vector.shape_cast %25 : vector<16x16x128xf32> to vector<256x128xf32>
    %27 = arith.truncf %26 : vector<256x128xf32> to vector<256x128xbf16>
    %c0_31 = arith.constant 0 : index
    %c640 = arith.constant 640 : index
    %28 = vector.load %arg6[%c0_31, %c640] : memref<256x1152xbf16, #tpu.memory_space<vmem>>, vector<256x128xbf16>
    tpu.vector_store %arg6[%c0_31, %c640], %27 {strides = array<i32>} : memref<256x1152xbf16, #tpu.memory_space<vmem>>, vector<256x128xbf16>,
    %c2_32 = arith.constant 2 : index
    %c0_33 = arith.constant 0 : index
    %c0_34 = arith.constant 0 : index
    %29 = vector.load %arg5[%c2_32, %c0_33, %c0_34] : memref<18x18x128xf32, #tpu.memory_space<vmem>>, vector<16x16x128xf32>
    %30 = vector.shape_cast %29 : vector<16x16x128xf32> to vector<256x128xf32>
    %31 = arith.truncf %30 : vector<256x128xf32> to vector<256x128xbf16>
    %c0_35 = arith.constant 0 : index
    %c768 = arith.constant 768 : index
    %32 = vector.load %arg6[%c0_35, %c768] : memref<256x1152xbf16, #tpu.memory_space<vmem>>, vector<256x128xbf16>
    tpu.vector_store %arg6[%c0_35, %c768], %31 {strides = array<i32>} : memref<256x1152xbf16, #tpu.memory_space<vmem>>, vector<256x128xbf16>,
    %c2_36 = arith.constant 2 : index
    %c1_37 = arith.constant 1 : index
    %c0_38 = arith.constant 0 : index
    %33 = vector.load %arg5[%c2_36, %c1_37, %c0_38] : memref<18x18x128xf32, #tpu.memory_space<vmem>>, vector<16x16x128xf32>
    %34 = vector.shape_cast %33 : vector<16x16x128xf32> to vector<256x128xf32>
    %35 = arith.truncf %34 : vector<256x128xf32> to vector<256x128xbf16>
    %c0_39 = arith.constant 0 : index
    %c896 = arith.constant 896 : index
    %36 = vector.load %arg6[%c0_39, %c896] : memref<256x1152xbf16, #tpu.memory_space<vmem>>, vector<256x128xbf16>
    tpu.vector_store %arg6[%c0_39, %c896], %35 {strides = array<i32>} : memref<256x1152xbf16, #tpu.memory_space<vmem>>, vector<256x128xbf16>,
    %c2_40 = arith.constant 2 : index
    %c2_41 = arith.constant 2 : index
    %c0_42 = arith.constant 0 : index
    %37 = vector.load %arg5[%c2_40, %c2_41, %c0_42] : memref<18x18x128xf32, #tpu.memory_space<vmem>>, vector<16x16x128xf32>
    %38 = vector.shape_cast %37 : vector<16x16x128xf32> to vector<256x128xf32>
    %39 = arith.truncf %38 : vector<256x128xf32> to vector<256x128xbf16>
    %c0_43 = arith.constant 0 : index
    %c1024 = arith.constant 1024 : index
    %40 = vector.load %arg6[%c0_43, %c1024] : memref<256x1152xbf16, #tpu.memory_space<vmem>>, vector<256x128xbf16>
    tpu.vector_store %arg6[%c0_43, %c1024], %39 {strides = array<i32>} : memref<256x1152xbf16, #tpu.memory_space<vmem>>, vector<256x128xbf16>,
    %c0_44 = arith.constant 0 : index
    %c0_45 = arith.constant 0 : index
    %41 = vector.load %arg6[%c0_44, %c0_45] : memref<256x1152xbf16, #tpu.memory_space<vmem>>, vector<256x1152xbf16>
    %c0_46 = arith.constant 0 : index
    %c0_47 = arith.constant 0 : index
    %42 = vector.load %arg2[%c0_46, %c0_47] : memref<1152x128xbf16, #tpu.memory_space<vmem>>, vector<1152x128xbf16>
    %cst_48 = arith.constant dense<0.000000e+00> : vector<256x128xf32>
    %43 = tpu.matmul %41, %42, %cst_48 {dimension_numbers = #tpu.dot_dimension_numbers<[1], [0], [0], [1], [0, 0, 1, 1], [], []>} : vector<256x1152xbf16>, vector<1152x128xbf16>, vector<256x128xf32> -> vector<256x128xf32>
    %c0_49 = arith.constant 0 : index
    %c0_50 = arith.constant 0 : index
    %44 = vector.load %arg3[%c0_49, %c0_50] : memref<1x128xf32, #tpu.memory_space<vmem>>, vector<1x128xf32>
    %45 = vector.broadcast %44 : vector<1x128xf32> to vector<256x128xf32>
    %46 = arith.addf %43, %45 : vector<256x128xf32>
    %47 = vector.shape_cast %46 : vector<256x128xf32> to vector<16x16x128xf32>
    %c0_51 = arith.constant 0 : index
    %c0_52 = arith.constant 0 : index
    %c0_53 = arith.constant 0 : index
    %c0_54 = arith.constant 0 : index
    %48 = vector.load %arg4[%c0_51, %c0_52, %c0_53, %c0_54] : memref<1x16x16x128xf32, #tpu.memory_space<vmem>>, vector<1x16x16x128xf32>
    %49 = vector.shape_cast %48 : vector<1x16x16x128xf32> to vector<16x16x128xf32>
    %50 = vector.shape_cast %47 : vector<16x16x128xf32> to vector<1x16x16x128xf32>
    tpu.vector_store %arg4[%c0_51, %c0_52, %c0_53, %c0_54], %50 {strides = array<i32>} : memref<1x16x16x128xf32, #tpu.memory_space<vmem>>, vector<1x16x16x128xf32>,
    return
  }
  func.func @transform_0(%arg0: i32) -> (i32, i32, i32, i32) {
    %c0_i32 = arith.constant 0 : i32
    %c0_i32_0 = arith.constant 0 : i32
    %c0_i32_1 = arith.constant 0 : i32
    %c0_i32_2 = arith.constant 0 : i32
    return %arg0, %c0_i32, %c0_i32_0, %c0_i32_1 : i32, i32, i32, i32
  }
  func.func @transform_1(%arg0: i32) -> (i32, i32) {
    %c0_i32 = arith.constant 0 : i32
    %c0_i32_0 = arith.constant 0 : i32
    %c0_i32_1 = arith.constant 0 : i32
    return %c0_i32, %c0_i32_0 : i32, i32
  }
  func.func @transform_2(%arg0: i32) -> (i32, i32) {
    %c0_i32 = arith.constant 0 : i32
    %c0_i32_0 = arith.constant 0 : i32
    %c0_i32_1 = arith.constant 0 : i32
    return %c0_i32, %c0_i32_0 : i32, i32
  }
  func.func @transform_3(%arg0: i32) -> (i32, i32, i32, i32) {
    %c0_i32 = arith.constant 0 : i32
    %c0_i32_0 = arith.constant 0 : i32
    %c0_i32_1 = arith.constant 0 : i32
    %c0_i32_2 = arith.constant 0 : i32
    return %arg0, %c0_i32, %c0_i32_0, %c0_i32_1 : i32, i32, i32, i32
  }
}

module attributes {stable_mosaic.version = 11 : i64} {
  func.func @bn_stats_kernel(%arg0: i32, %arg1: memref<1x16x16x128xf32, #tpu.memory_space<vmem>>, %arg2: memref<1x128xf32, #tpu.memory_space<vmem>>, %arg3: memref<1x128xf32, #tpu.memory_space<vmem>>) attributes {dimension_semantics = [#tpu.dimension_semantics<arbitrary>], iteration_bounds = array<i64: 2>, scalar_prefetch = 0 : i64, scratch_operands = 0 : i64, tpu.core_type = #tpu.core_type<tc>, window_params = [{transform_indices = @transform_0, window_bounds = array<i64: 1, 16, 16, 128>}, {pipeline_mode = #tpu.pipeline_mode<synchronous>, transform_indices = @transform_1, window_bounds = array<i64: 1, 128>}, {pipeline_mode = #tpu.pipeline_mode<synchronous>, transform_indices = @transform_2, window_bounds = array<i64: 1, 128>}]} {
    %c0_i32 = arith.constant 0 : i32
    %0 = arith.cmpi eq, %arg0, %c0_i32 : i32
    %1 = arith.extui %0 : i1 to i32
    %c0_i32_0 = arith.constant 0 : i32
    %2 = arith.cmpi ne, %1, %c0_i32_0 : i32
    scf.if %2 {
      %cst_13 = arith.constant 0.000000e+00 : f32
      %17 = vector.broadcast %cst_13 : f32 to vector<1x128xf32>
      %c0_14 = arith.constant 0 : index
      %c0_15 = arith.constant 0 : index
      %18 = vector.load %arg2[%c0_14, %c0_15] : memref<1x128xf32, #tpu.memory_space<vmem>>, vector<1x128xf32>
      tpu.vector_store %arg2[%c0_14, %c0_15], %17 {strides = array<i32>} : memref<1x128xf32, #tpu.memory_space<vmem>>, vector<1x128xf32>,
      %cst_16 = arith.constant 0.000000e+00 : f32
      %19 = vector.broadcast %cst_16 : f32 to vector<1x128xf32>
      %c0_17 = arith.constant 0 : index
      %c0_18 = arith.constant 0 : index
      %20 = vector.load %arg3[%c0_17, %c0_18] : memref<1x128xf32, #tpu.memory_space<vmem>>, vector<1x128xf32>
      tpu.vector_store %arg3[%c0_17, %c0_18], %19 {strides = array<i32>} : memref<1x128xf32, #tpu.memory_space<vmem>>, vector<1x128xf32>,
    } else {
    }
    %c0 = arith.constant 0 : index
    %c0_1 = arith.constant 0 : index
    %c0_2 = arith.constant 0 : index
    %c0_3 = arith.constant 0 : index
    %3 = vector.load %arg1[%c0, %c0_1, %c0_2, %c0_3] : memref<1x16x16x128xf32, #tpu.memory_space<vmem>>, vector<1x16x16x128xf32>
    %4 = vector.shape_cast %3 : vector<1x16x16x128xf32> to vector<16x16x128xf32>
    %5 = vector.shape_cast %4 : vector<16x16x128xf32> to vector<256x128xf32>
    %c0_4 = arith.constant 0 : index
    %c0_5 = arith.constant 0 : index
    %6 = vector.load %arg2[%c0_4, %c0_5] : memref<1x128xf32, #tpu.memory_space<vmem>>, vector<1x128xf32>
    %cst = arith.constant dense<0.000000e+00> : vector<128xf32>
    %7 = vector.multi_reduction <add>, %5, %cst [0] : vector<256x128xf32> to vector<128xf32>
    %8 = vector.shape_cast %7 : vector<128xf32> to vector<1x128xf32>
    %9 = arith.addf %6, %8 : vector<1x128xf32>
    %c0_6 = arith.constant 0 : index
    %c0_7 = arith.constant 0 : index
    %10 = vector.load %arg2[%c0_6, %c0_7] : memref<1x128xf32, #tpu.memory_space<vmem>>, vector<1x128xf32>
    tpu.vector_store %arg2[%c0_6, %c0_7], %9 {strides = array<i32>} : memref<1x128xf32, #tpu.memory_space<vmem>>, vector<1x128xf32>,
    %c0_8 = arith.constant 0 : index
    %c0_9 = arith.constant 0 : index
    %11 = vector.load %arg3[%c0_8, %c0_9] : memref<1x128xf32, #tpu.memory_space<vmem>>, vector<1x128xf32>
    %12 = arith.mulf %5, %5 : vector<256x128xf32>
    %cst_10 = arith.constant dense<0.000000e+00> : vector<128xf32>
    %13 = vector.multi_reduction <add>, %12, %cst_10 [0] : vector<256x128xf32> to vector<128xf32>
    %14 = vector.shape_cast %13 : vector<128xf32> to vector<1x128xf32>
    %15 = arith.addf %11, %14 : vector<1x128xf32>
    %c0_11 = arith.constant 0 : index
    %c0_12 = arith.constant 0 : index
    %16 = vector.load %arg3[%c0_11, %c0_12] : memref<1x128xf32, #tpu.memory_space<vmem>>, vector<1x128xf32>
    tpu.vector_store %arg3[%c0_11, %c0_12], %15 {strides = array<i32>} : memref<1x128xf32, #tpu.memory_space<vmem>>, vector<1x128xf32>,
    return
  }
  func.func @transform_0(%arg0: i32) -> (i32, i32, i32, i32) {
    %c0_i32 = arith.constant 0 : i32
    %c0_i32_0 = arith.constant 0 : i32
    %c0_i32_1 = arith.constant 0 : i32
    %c0_i32_2 = arith.constant 0 : i32
    return %arg0, %c0_i32, %c0_i32_0, %c0_i32_1 : i32, i32, i32, i32
  }
  func.func @transform_1(%arg0: i32) -> (i32, i32) {
    %c0_i32 = arith.constant 0 : i32
    %c0_i32_0 = arith.constant 0 : i32
    %c0_i32_1 = arith.constant 0 : i32
    return %c0_i32, %c0_i32_0 : i32, i32
  }
  func.func @transform_2(%arg0: i32) -> (i32, i32) {
    %c0_i32 = arith.constant 0 : i32
    %c0_i32_0 = arith.constant 0 : i32
    %c0_i32_1 = arith.constant 0 : i32
    return %c0_i32, %c0_i32_0 : i32, i32
  }
}

module attributes {stable_mosaic.version = 11 : i64} {
  func.func @tail_scse_kernel(%arg0: i32, %arg1: memref<1x16x16x128xf32, #tpu.memory_space<vmem>>, %arg2: memref<1x1x1x128xf32, #tpu.memory_space<vmem>>, %arg3: memref<1x1x1x128xf32, #tpu.memory_space<vmem>>, %arg4: memref<1x16x16x128xf32, #tpu.memory_space<vmem>>, %arg5: memref<128x128xbf16, #tpu.memory_space<vmem>>, %arg6: memref<1x128xf32, #tpu.memory_space<vmem>>, %arg7: memref<128x128xbf16, #tpu.memory_space<vmem>>, %arg8: memref<1x128xf32, #tpu.memory_space<vmem>>, %arg9: memref<128x128xbf16, #tpu.memory_space<vmem>>, %arg10: memref<1x128xf32, #tpu.memory_space<vmem>>, %arg11: memref<128x1xbf16, #tpu.memory_space<vmem>>, %arg12: memref<1x1xf32, #tpu.memory_space<vmem>>, %arg13: memref<1x16x16x128xf32, #tpu.memory_space<vmem>>) attributes {dimension_semantics = [#tpu.dimension_semantics<parallel>], iteration_bounds = array<i64: 2>, scalar_prefetch = 0 : i64, scratch_operands = 0 : i64, tpu.core_type = #tpu.core_type<tc>, window_params = [{transform_indices = @transform_0, window_bounds = array<i64: 1, 16, 16, 128>}, {pipeline_mode = #tpu.pipeline_mode<synchronous>, transform_indices = @transform_1, window_bounds = array<i64: 1, 1, 1, 128>}, {pipeline_mode = #tpu.pipeline_mode<synchronous>, transform_indices = @transform_2, window_bounds = array<i64: 1, 1, 1, 128>}, {transform_indices = @transform_3, window_bounds = array<i64: 1, 16, 16, 128>}, {pipeline_mode = #tpu.pipeline_mode<synchronous>, transform_indices = @transform_4, window_bounds = array<i64: 128, 128>}, {pipeline_mode = #tpu.pipeline_mode<synchronous>, transform_indices = @transform_5, window_bounds = array<i64: 1, 128>}, {pipeline_mode = #tpu.pipeline_mode<synchronous>, transform_indices = @transform_6, window_bounds = array<i64: 128, 128>}, {pipeline_mode = #tpu.pipeline_mode<synchronous>, transform_indices = @transform_7, window_bounds = array<i64: 1, 128>}, {pipeline_mode = #tpu.pipeline_mode<synchronous>, transform_indices = @transform_8, window_bounds = array<i64: 128, 128>}, {pipeline_mode = #tpu.pipeline_mode<synchronous>, transform_indices = @transform_9, window_bounds = array<i64: 1, 128>}, {pipeline_mode = #tpu.pipeline_mode<synchronous>, transform_indices = @transform_10, window_bounds = array<i64: 128, 1>}, {pipeline_mode = #tpu.pipeline_mode<synchronous>, transform_indices = @transform_11, window_bounds = array<i64: 1, 1>}, {transform_indices = @transform_12, window_bounds = array<i64: 1, 16, 16, 128>}]} {
    %c0 = arith.constant 0 : index
    %c0_0 = arith.constant 0 : index
    %c0_1 = arith.constant 0 : index
    %c0_2 = arith.constant 0 : index
    %0 = vector.load %arg1[%c0, %c0_0, %c0_1, %c0_2] : memref<1x16x16x128xf32, #tpu.memory_space<vmem>>, vector<1x16x16x128xf32>
    %1 = vector.shape_cast %0 : vector<1x16x16x128xf32> to vector<16x16x128xf32>
    %c0_3 = arith.constant 0 : index
    %c0_4 = arith.constant 0 : index
    %c0_5 = arith.constant 0 : index
    %c0_6 = arith.constant 0 : index
    %2 = vector.load %arg2[%c0_3, %c0_4, %c0_5, %c0_6] : memref<1x1x1x128xf32, #tpu.memory_space<vmem>>, vector<1x1x1x128xf32>
    %3 = vector.shape_cast %2 : vector<1x1x1x128xf32> to vector<1x1x128xf32>
    %4 = vector.broadcast %3 : vector<1x1x128xf32> to vector<16x16x128xf32>
    %5 = arith.mulf %1, %4 : vector<16x16x128xf32>
    %c0_7 = arith.constant 0 : index
    %c0_8 = arith.constant 0 : index
    %c0_9 = arith.constant 0 : index
    %c0_10 = arith.constant 0 : index
    %6 = vector.load %arg3[%c0_7, %c0_8, %c0_9, %c0_10] : memref<1x1x1x128xf32, #tpu.memory_space<vmem>>, vector<1x1x1x128xf32>
    %7 = vector.shape_cast %6 : vector<1x1x1x128xf32> to vector<1x1x128xf32>
    %8 = vector.broadcast %7 : vector<1x1x128xf32> to vector<16x16x128xf32>
    %9 = arith.addf %5, %8 : vector<16x16x128xf32>
    %c0_11 = arith.constant 0 : index
    %c0_12 = arith.constant 0 : index
    %c0_13 = arith.constant 0 : index
    %c0_14 = arith.constant 0 : index
    %10 = vector.load %arg4[%c0_11, %c0_12, %c0_13, %c0_14] : memref<1x16x16x128xf32, #tpu.memory_space<vmem>>, vector<1x16x16x128xf32>
    %11 = vector.shape_cast %10 : vector<1x16x16x128xf32> to vector<16x16x128xf32>
    %12 = vector.shape_cast %11 : vector<16x16x128xf32> to vector<256x128xf32>
    %13 = arith.truncf %12 : vector<256x128xf32> to vector<256x128xbf16>
    %c0_15 = arith.constant 0 : index
    %c0_16 = arith.constant 0 : index
    %14 = vector.load %arg5[%c0_15, %c0_16] : memref<128x128xbf16, #tpu.memory_space<vmem>>, vector<128x128xbf16>
    %cst = arith.constant dense<0.000000e+00> : vector<256x128xf32>
    %15 = tpu.matmul %13, %14, %cst {dimension_numbers = #tpu.dot_dimension_numbers<[1], [0], [0], [1], [0, 0, 1, 1], [], []>} : vector<256x128xbf16>, vector<128x128xbf16>, vector<256x128xf32> -> vector<256x128xf32>
    %c0_17 = arith.constant 0 : index
    %c0_18 = arith.constant 0 : index
    %16 = vector.load %arg6[%c0_17, %c0_18] : memref<1x128xf32, #tpu.memory_space<vmem>>, vector<1x128xf32>
    %17 = vector.broadcast %16 : vector<1x128xf32> to vector<256x128xf32>
    %18 = arith.addf %15, %17 : vector<256x128xf32>
    %19 = vector.shape_cast %18 : vector<256x128xf32> to vector<16x16x128xf32>
    %20 = arith.addf %9, %19 : vector<16x16x128xf32>
    %cst_19 = arith.constant 0.000000e+00 : f32
    %21 = vector.broadcast %cst_19 : f32 to vector<16x16x128xf32>
    %22 = arith.maximumf %20, %21 : vector<16x16x128xf32>
    %23 = vector.shape_cast %22 : vector<16x16x128xf32> to vector<256x128xf32>
    %cst_20 = arith.constant dense<0.000000e+00> : vector<128xf32>
    %24 = vector.multi_reduction <add>, %23, %cst_20 [0] : vector<256x128xf32> to vector<128xf32>
    %25 = vector.shape_cast %24 : vector<128xf32> to vector<1x128xf32>
    %cst_21 = arith.constant 2.560000e+02 : f32
    %26 = vector.broadcast %cst_21 : f32 to vector<1x128xf32>
    %27 = arith.divf %25, %26 : vector<1x128xf32>
    %28 = arith.truncf %27 : vector<1x128xf32> to vector<1x128xbf16>
    %c0_22 = arith.constant 0 : index
    %c0_23 = arith.constant 0 : index
    %29 = vector.load %arg7[%c0_22, %c0_23] : memref<128x128xbf16, #tpu.memory_space<vmem>>, vector<128x128xbf16>
    %cst_24 = arith.constant dense<0.000000e+00> : vector<1x128xf32>
    %30 = tpu.matmul %28, %29, %cst_24 {dimension_numbers = #tpu.dot_dimension_numbers<[1], [0], [0], [1], [0, 0, 1, 1], [], []>} : vector<1x128xbf16>, vector<128x128xbf16>, vector<1x128xf32> -> vector<1x128xf32>
    %c0_25 = arith.constant 0 : index
    %c0_26 = arith.constant 0 : index
    %31 = vector.load %arg8[%c0_25, %c0_26] : memref<1x128xf32, #tpu.memory_space<vmem>>, vector<1x128xf32>
    %32 = arith.addf %30, %31 : vector<1x128xf32>
    %cst_27 = arith.constant 0.000000e+00 : f32
    %33 = vector.broadcast %cst_27 : f32 to vector<1x128xf32>
    %34 = arith.maximumf %32, %33 : vector<1x128xf32>
    %35 = arith.truncf %34 : vector<1x128xf32> to vector<1x128xbf16>
    %c0_28 = arith.constant 0 : index
    %c0_29 = arith.constant 0 : index
    %36 = vector.load %arg9[%c0_28, %c0_29] : memref<128x128xbf16, #tpu.memory_space<vmem>>, vector<128x128xbf16>
    %cst_30 = arith.constant dense<0.000000e+00> : vector<1x128xf32>
    %37 = tpu.matmul %35, %36, %cst_30 {dimension_numbers = #tpu.dot_dimension_numbers<[1], [0], [0], [1], [0, 0, 1, 1], [], []>} : vector<1x128xbf16>, vector<128x128xbf16>, vector<1x128xf32> -> vector<1x128xf32>
    %c0_31 = arith.constant 0 : index
    %c0_32 = arith.constant 0 : index
    %38 = vector.load %arg10[%c0_31, %c0_32] : memref<1x128xf32, #tpu.memory_space<vmem>>, vector<1x128xf32>
    %39 = arith.addf %37, %38 : vector<1x128xf32>
    %40 = arith.negf %39 : vector<1x128xf32>
    %41 = math.exp %40 : vector<1x128xf32>
    %cst_33 = arith.constant 1.000000e+00 : f32
    %42 = vector.broadcast %cst_33 : f32 to vector<1x128xf32>
    %43 = arith.addf %42, %41 : vector<1x128xf32>
    %44 = arith.divf %42, %43 : vector<1x128xf32>
    %45 = arith.truncf %23 : vector<256x128xf32> to vector<256x128xbf16>
    %c0_34 = arith.constant 0 : index
    %c0_35 = arith.constant 0 : index
    %46 = vector.load %arg11[%c0_34, %c0_35] : memref<128x1xbf16, #tpu.memory_space<vmem>>, vector<128x1xbf16>
    %cst_36 = arith.constant dense<0.000000e+00> : vector<256x1xf32>
    %47 = tpu.matmul %45, %46, %cst_36 {dimension_numbers = #tpu.dot_dimension_numbers<[1], [0], [0], [1], [0, 0, 1, 1], [], []>} : vector<256x128xbf16>, vector<128x1xbf16>, vector<256x1xf32> -> vector<256x1xf32>
    %c0_37 = arith.constant 0 : index
    %c0_38 = arith.constant 0 : index
    %48 = vector.load %arg12[%c0_37, %c0_38] : memref<1x1xf32, #tpu.memory_space<vmem>>, vector<1x1xf32>
    %49 = vector.broadcast %48 : vector<1x1xf32> to vector<256x1xf32>
    %50 = arith.addf %47, %49 : vector<256x1xf32>
    %51 = arith.negf %50 : vector<256x1xf32>
    %52 = math.exp %51 : vector<256x1xf32>
    %cst_39 = arith.constant 1.000000e+00 : f32
    %53 = vector.broadcast %cst_39 : f32 to vector<256x1xf32>
    %54 = arith.addf %53, %52 : vector<256x1xf32>
    %55 = arith.divf %53, %54 : vector<256x1xf32>
    %56 = vector.broadcast %44 : vector<1x128xf32> to vector<256x128xf32>
    %57 = arith.mulf %23, %56 : vector<256x128xf32>
    %58 = vector.broadcast %55 : vector<256x1xf32> to vector<256x128xf32>
    %59 = arith.mulf %23, %58 : vector<256x128xf32>
    %60 = arith.addf %57, %59 : vector<256x128xf32>
    %61 = vector.shape_cast %60 : vector<256x128xf32> to vector<16x16x128xf32>
    %c0_40 = arith.constant 0 : index
    %c0_41 = arith.constant 0 : index
    %c0_42 = arith.constant 0 : index
    %c0_43 = arith.constant 0 : index
    %62 = vector.load %arg13[%c0_40, %c0_41, %c0_42, %c0_43] : memref<1x16x16x128xf32, #tpu.memory_space<vmem>>, vector<1x16x16x128xf32>
    %63 = vector.shape_cast %62 : vector<1x16x16x128xf32> to vector<16x16x128xf32>
    %64 = vector.shape_cast %61 : vector<16x16x128xf32> to vector<1x16x16x128xf32>
    tpu.vector_store %arg13[%c0_40, %c0_41, %c0_42, %c0_43], %64 {strides = array<i32>} : memref<1x16x16x128xf32, #tpu.memory_space<vmem>>, vector<1x16x16x128xf32>,
    return
  }
  func.func @transform_0(%arg0: i32) -> (i32, i32, i32, i32) {
    %c0_i32 = arith.constant 0 : i32
    %c0_i32_0 = arith.constant 0 : i32
    %c0_i32_1 = arith.constant 0 : i32
    %c0_i32_2 = arith.constant 0 : i32
    return %arg0, %c0_i32, %c0_i32_0, %c0_i32_1 : i32, i32, i32, i32
  }
  func.func @transform_1(%arg0: i32) -> (i32, i32, i32, i32) {
    %c0_i32 = arith.constant 0 : i32
    %c0_i32_0 = arith.constant 0 : i32
    %c0_i32_1 = arith.constant 0 : i32
    %c0_i32_2 = arith.constant 0 : i32
    %c0_i32_3 = arith.constant 0 : i32
    return %c0_i32, %c0_i32_0, %c0_i32_1, %c0_i32_2 : i32, i32, i32, i32
  }
  func.func @transform_2(%arg0: i32) -> (i32, i32, i32, i32) {
    %c0_i32 = arith.constant 0 : i32
    %c0_i32_0 = arith.constant 0 : i32
    %c0_i32_1 = arith.constant 0 : i32
    %c0_i32_2 = arith.constant 0 : i32
    %c0_i32_3 = arith.constant 0 : i32
    return %c0_i32, %c0_i32_0, %c0_i32_1, %c0_i32_2 : i32, i32, i32, i32
  }
  func.func @transform_3(%arg0: i32) -> (i32, i32, i32, i32) {
    %c0_i32 = arith.constant 0 : i32
    %c0_i32_0 = arith.constant 0 : i32
    %c0_i32_1 = arith.constant 0 : i32
    %c0_i32_2 = arith.constant 0 : i32
    return %arg0, %c0_i32, %c0_i32_0, %c0_i32_1 : i32, i32, i32, i32
  }
  func.func @transform_4(%arg0: i32) -> (i32, i32) {
    %c0_i32 = arith.constant 0 : i32
    %c0_i32_0 = arith.constant 0 : i32
    %c0_i32_1 = arith.constant 0 : i32
    return %c0_i32, %c0_i32_0 : i32, i32
  }
  func.func @transform_5(%arg0: i32) -> (i32, i32) {
    %c0_i32 = arith.constant 0 : i32
    %c0_i32_0 = arith.constant 0 : i32
    %c0_i32_1 = arith.constant 0 : i32
    return %c0_i32, %c0_i32_0 : i32, i32
  }
  func.func @transform_6(%arg0: i32) -> (i32, i32) {
    %c0_i32 = arith.constant 0 : i32
    %c0_i32_0 = arith.constant 0 : i32
    %c0_i32_1 = arith.constant 0 : i32
    return %c0_i32, %c0_i32_0 : i32, i32
  }
  func.func @transform_7(%arg0: i32) -> (i32, i32) {
    %c0_i32 = arith.constant 0 : i32
    %c0_i32_0 = arith.constant 0 : i32
    %c0_i32_1 = arith.constant 0 : i32
    return %c0_i32, %c0_i32_0 : i32, i32
  }
  func.func @transform_8(%arg0: i32) -> (i32, i32) {
    %c0_i32 = arith.constant 0 : i32
    %c0_i32_0 = arith.constant 0 : i32
    %c0_i32_1 = arith.constant 0 : i32
    return %c0_i32, %c0_i32_0 : i32, i32
  }
  func.func @transform_9(%arg0: i32) -> (i32, i32) {
    %c0_i32 = arith.constant 0 : i32
    %c0_i32_0 = arith.constant 0 : i32
    %c0_i32_1 = arith.constant 0 : i32
    return %c0_i32, %c0_i32_0 : i32, i32
  }
  func.func @transform_10(%arg0: i32) -> (i32, i32) {
    %c0_i32 = arith.constant 0 : i32
    %c0_i32_0 = arith.constant 0 : i32
    %c0_i32_1 = arith.constant 0 : i32
    return %c0_i32, %c0_i32_0 : i32, i32
  }
  func.func @transform_11(%arg0: i32) -> (i32, i32) {
    %c0_i32 = arith.constant 0 : i32
    %c0_i32_0 = arith.constant 0 : i32
    %c0_i32_1 = arith.constant 0 : i32
    return %c0_i32, %c0_i32_0 : i32, i32
  }
  func.func @transform_12(%arg0: i32) -> (i32, i32, i32, i32) {
    %c0_i32 = arith.constant 0 : i32
    %c0_i32_0 = arith.constant 0 : i32
    %c0_i32_1 = arith.constant 0 : i32
    %c0_i32_2 = arith.constant 0 : i32
    return %arg0, %c0_i32, %c0_i32_0, %c0_i32_1 : i32, i32, i32, i32
  }
}

module attributes {stable_mosaic.version = 11 : i64} {
  func.func @conv3x3_bn_kernel(%arg0: i32, %arg1: memref<1x16x16x128xf32, #tpu.memory_space<vmem>>, %arg2: memref<1x1x1x128xf32, #tpu.memory_space<vmem>>, %arg3: memref<1x1x1x128xf32, #tpu.memory_space<vmem>>, %arg4: memref<1152x128xbf16, #tpu.memory_space<vmem>>, %arg5: memref<1x128xf32, #tpu.memory_space<vmem>>, %arg6: memref<1x16x16x128xf32, #tpu.memory_space<vmem>>, %arg7: memref<18x18x128xf32, #tpu.memory_space<vmem>>, %arg8: memref<256x1152xbf16, #tpu.memory_space<vmem>>) attributes {dimension_semantics = [#tpu.dimension_semantics<parallel>], iteration_bounds = array<i64: 2>, scalar_prefetch = 0 : i64, scratch_operands = 2 : i64, tpu.core_type = #tpu.core_type<tc>, window_params = [{transform_indices = @transform_0, window_bounds = array<i64: 1, 16, 16, 128>}, {pipeline_mode = #tpu.pipeline_mode<synchronous>, transform_indices = @transform_1, window_bounds = array<i64: 1, 1, 1, 128>}, {pipeline_mode = #tpu.pipeline_mode<synchronous>, transform_indices = @transform_2, window_bounds = array<i64: 1, 1, 1, 128>}, {pipeline_mode = #tpu.pipeline_mode<synchronous>, transform_indices = @transform_3, window_bounds = array<i64: 1152, 128>}, {pipeline_mode = #tpu.pipeline_mode<synchronous>, transform_indices = @transform_4, window_bounds = array<i64: 1, 128>}, {transform_indices = @transform_5, window_bounds = array<i64: 1, 16, 16, 128>}]} {
    %c0 = arith.constant 0 : index
    %c0_0 = arith.constant 0 : index
    %c0_1 = arith.constant 0 : index
    %c0_2 = arith.constant 0 : index
    %0 = vector.load %arg1[%c0, %c0_0, %c0_1, %c0_2] : memref<1x16x16x128xf32, #tpu.memory_space<vmem>>, vector<1x16x16x128xf32>
    %1 = vector.shape_cast %0 : vector<1x16x16x128xf32> to vector<16x16x128xf32>
    %c0_3 = arith.constant 0 : index
    %c0_4 = arith.constant 0 : index
    %c0_5 = arith.constant 0 : index
    %c0_6 = arith.constant 0 : index
    %2 = vector.load %arg2[%c0_3, %c0_4, %c0_5, %c0_6] : memref<1x1x1x128xf32, #tpu.memory_space<vmem>>, vector<1x1x1x128xf32>
    %3 = vector.shape_cast %2 : vector<1x1x1x128xf32> to vector<1x1x128xf32>
    %4 = vector.broadcast %3 : vector<1x1x128xf32> to vector<16x16x128xf32>
    %5 = arith.mulf %1, %4 : vector<16x16x128xf32>
    %c0_7 = arith.constant 0 : index
    %c0_8 = arith.constant 0 : index
    %c0_9 = arith.constant 0 : index
    %c0_10 = arith.constant 0 : index
    %6 = vector.load %arg3[%c0_7, %c0_8, %c0_9, %c0_10] : memref<1x1x1x128xf32, #tpu.memory_space<vmem>>, vector<1x1x1x128xf32>
    %7 = vector.shape_cast %6 : vector<1x1x1x128xf32> to vector<1x1x128xf32>
    %8 = vector.broadcast %7 : vector<1x1x128xf32> to vector<16x16x128xf32>
    %9 = arith.addf %5, %8 : vector<16x16x128xf32>
    %cst = arith.constant 0.000000e+00 : f32
    %10 = vector.broadcast %cst : f32 to vector<16x16x128xf32>
    %11 = arith.maximumf %9, %10 : vector<16x16x128xf32>
    %cst_11 = arith.constant 0.000000e+00 : f32
    %12 = vector.broadcast %cst_11 : f32 to vector<18x18x128xf32>
    %c0_12 = arith.constant 0 : index
    %c0_13 = arith.constant 0 : index
    %c0_14 = arith.constant 0 : index
    %13 = vector.load %arg7[%c0_12, %c0_13, %c0_14] : memref<18x18x128xf32, #tpu.memory_space<vmem>>, vector<18x18x128xf32>
    tpu.vector_store %arg7[%c0_12, %c0_13, %c0_14], %12 {strides = array<i32>} : memref<18x18x128xf32, #tpu.memory_space<vmem>>, vector<18x18x128xf32>,
    %c1 = arith.constant 1 : index
    %c1_15 = arith.constant 1 : index
    %c0_16 = arith.constant 0 : index
    %14 = vector.load %arg7[%c1, %c1_15, %c0_16] : memref<18x18x128xf32, #tpu.memory_space<vmem>>, vector<16x16x128xf32>
    tpu.vector_store %arg7[%c1, %c1_15, %c0_16], %11 {strides = array<i32>} : memref<18x18x128xf32, #tpu.memory_space<vmem>>, vector<16x16x128xf32>,
    %c0_17 = arith.constant 0 : index
    %c0_18 = arith.constant 0 : index
    %c0_19 = arith.constant 0 : index
    %15 = vector.load %arg7[%c0_17, %c0_18, %c0_19] : memref<18x18x128xf32, #tpu.memory_space<vmem>>, vector<16x16x128xf32>
    %16 = vector.shape_cast %15 : vector<16x16x128xf32> to vector<256x128xf32>
    %17 = arith.truncf %16 : vector<256x128xf32> to vector<256x128xbf16>
    %c0_20 = arith.constant 0 : index
    %c0_21 = arith.constant 0 : index
    %18 = vector.load %arg8[%c0_20, %c0_21] : memref<256x1152xbf16, #tpu.memory_space<vmem>>, vector<256x128xbf16>
    tpu.vector_store %arg8[%c0_20, %c0_21], %17 {strides = array<i32>} : memref<256x1152xbf16, #tpu.memory_space<vmem>>, vector<256x128xbf16>,
    %c0_22 = arith.constant 0 : index
    %c1_23 = arith.constant 1 : index
    %c0_24 = arith.constant 0 : index
    %19 = vector.load %arg7[%c0_22, %c1_23, %c0_24] : memref<18x18x128xf32, #tpu.memory_space<vmem>>, vector<16x16x128xf32>
    %20 = vector.shape_cast %19 : vector<16x16x128xf32> to vector<256x128xf32>
    %21 = arith.truncf %20 : vector<256x128xf32> to vector<256x128xbf16>
    %c0_25 = arith.constant 0 : index
    %c128 = arith.constant 128 : index
    %22 = vector.load %arg8[%c0_25, %c128] : memref<256x1152xbf16, #tpu.memory_space<vmem>>, vector<256x128xbf16>
    tpu.vector_store %arg8[%c0_25, %c128], %21 {strides = array<i32>} : memref<256x1152xbf16, #tpu.memory_space<vmem>>, vector<256x128xbf16>,
    %c0_26 = arith.constant 0 : index
    %c2 = arith.constant 2 : index
    %c0_27 = arith.constant 0 : index
    %23 = vector.load %arg7[%c0_26, %c2, %c0_27] : memref<18x18x128xf32, #tpu.memory_space<vmem>>, vector<16x16x128xf32>
    %24 = vector.shape_cast %23 : vector<16x16x128xf32> to vector<256x128xf32>
    %25 = arith.truncf %24 : vector<256x128xf32> to vector<256x128xbf16>
    %c0_28 = arith.constant 0 : index
    %c256 = arith.constant 256 : index
    %26 = vector.load %arg8[%c0_28, %c256] : memref<256x1152xbf16, #tpu.memory_space<vmem>>, vector<256x128xbf16>
    tpu.vector_store %arg8[%c0_28, %c256], %25 {strides = array<i32>} : memref<256x1152xbf16, #tpu.memory_space<vmem>>, vector<256x128xbf16>,
    %c1_29 = arith.constant 1 : index
    %c0_30 = arith.constant 0 : index
    %c0_31 = arith.constant 0 : index
    %27 = vector.load %arg7[%c1_29, %c0_30, %c0_31] : memref<18x18x128xf32, #tpu.memory_space<vmem>>, vector<16x16x128xf32>
    %28 = vector.shape_cast %27 : vector<16x16x128xf32> to vector<256x128xf32>
    %29 = arith.truncf %28 : vector<256x128xf32> to vector<256x128xbf16>
    %c0_32 = arith.constant 0 : index
    %c384 = arith.constant 384 : index
    %30 = vector.load %arg8[%c0_32, %c384] : memref<256x1152xbf16, #tpu.memory_space<vmem>>, vector<256x128xbf16>
    tpu.vector_store %arg8[%c0_32, %c384], %29 {strides = array<i32>} : memref<256x1152xbf16, #tpu.memory_space<vmem>>, vector<256x128xbf16>,
    %c1_33 = arith.constant 1 : index
    %c1_34 = arith.constant 1 : index
    %c0_35 = arith.constant 0 : index
    %31 = vector.load %arg7[%c1_33, %c1_34, %c0_35] : memref<18x18x128xf32, #tpu.memory_space<vmem>>, vector<16x16x128xf32>
    %32 = vector.shape_cast %31 : vector<16x16x128xf32> to vector<256x128xf32>
    %33 = arith.truncf %32 : vector<256x128xf32> to vector<256x128xbf16>
    %c0_36 = arith.constant 0 : index
    %c512 = arith.constant 512 : index
    %34 = vector.load %arg8[%c0_36, %c512] : memref<256x1152xbf16, #tpu.memory_space<vmem>>, vector<256x128xbf16>
    tpu.vector_store %arg8[%c0_36, %c512], %33 {strides = array<i32>} : memref<256x1152xbf16, #tpu.memory_space<vmem>>, vector<256x128xbf16>,
    %c1_37 = arith.constant 1 : index
    %c2_38 = arith.constant 2 : index
    %c0_39 = arith.constant 0 : index
    %35 = vector.load %arg7[%c1_37, %c2_38, %c0_39] : memref<18x18x128xf32, #tpu.memory_space<vmem>>, vector<16x16x128xf32>
    %36 = vector.shape_cast %35 : vector<16x16x128xf32> to vector<256x128xf32>
    %37 = arith.truncf %36 : vector<256x128xf32> to vector<256x128xbf16>
    %c0_40 = arith.constant 0 : index
    %c640 = arith.constant 640 : index
    %38 = vector.load %arg8[%c0_40, %c640] : memref<256x1152xbf16, #tpu.memory_space<vmem>>, vector<256x128xbf16>
    tpu.vector_store %arg8[%c0_40, %c640], %37 {strides = array<i32>} : memref<256x1152xbf16, #tpu.memory_space<vmem>>, vector<256x128xbf16>,
    %c2_41 = arith.constant 2 : index
    %c0_42 = arith.constant 0 : index
    %c0_43 = arith.constant 0 : index
    %39 = vector.load %arg7[%c2_41, %c0_42, %c0_43] : memref<18x18x128xf32, #tpu.memory_space<vmem>>, vector<16x16x128xf32>
    %40 = vector.shape_cast %39 : vector<16x16x128xf32> to vector<256x128xf32>
    %41 = arith.truncf %40 : vector<256x128xf32> to vector<256x128xbf16>
    %c0_44 = arith.constant 0 : index
    %c768 = arith.constant 768 : index
    %42 = vector.load %arg8[%c0_44, %c768] : memref<256x1152xbf16, #tpu.memory_space<vmem>>, vector<256x128xbf16>
    tpu.vector_store %arg8[%c0_44, %c768], %41 {strides = array<i32>} : memref<256x1152xbf16, #tpu.memory_space<vmem>>, vector<256x128xbf16>,
    %c2_45 = arith.constant 2 : index
    %c1_46 = arith.constant 1 : index
    %c0_47 = arith.constant 0 : index
    %43 = vector.load %arg7[%c2_45, %c1_46, %c0_47] : memref<18x18x128xf32, #tpu.memory_space<vmem>>, vector<16x16x128xf32>
    %44 = vector.shape_cast %43 : vector<16x16x128xf32> to vector<256x128xf32>
    %45 = arith.truncf %44 : vector<256x128xf32> to vector<256x128xbf16>
    %c0_48 = arith.constant 0 : index
    %c896 = arith.constant 896 : index
    %46 = vector.load %arg8[%c0_48, %c896] : memref<256x1152xbf16, #tpu.memory_space<vmem>>, vector<256x128xbf16>
    tpu.vector_store %arg8[%c0_48, %c896], %45 {strides = array<i32>} : memref<256x1152xbf16, #tpu.memory_space<vmem>>, vector<256x128xbf16>,
    %c2_49 = arith.constant 2 : index
    %c2_50 = arith.constant 2 : index
    %c0_51 = arith.constant 0 : index
    %47 = vector.load %arg7[%c2_49, %c2_50, %c0_51] : memref<18x18x128xf32, #tpu.memory_space<vmem>>, vector<16x16x128xf32>
    %48 = vector.shape_cast %47 : vector<16x16x128xf32> to vector<256x128xf32>
    %49 = arith.truncf %48 : vector<256x128xf32> to vector<256x128xbf16>
    %c0_52 = arith.constant 0 : index
    %c1024 = arith.constant 1024 : index
    %50 = vector.load %arg8[%c0_52, %c1024] : memref<256x1152xbf16, #tpu.memory_space<vmem>>, vector<256x128xbf16>
    tpu.vector_store %arg8[%c0_52, %c1024], %49 {strides = array<i32>} : memref<256x1152xbf16, #tpu.memory_space<vmem>>, vector<256x128xbf16>,
    %c0_53 = arith.constant 0 : index
    %c0_54 = arith.constant 0 : index
    %51 = vector.load %arg8[%c0_53, %c0_54] : memref<256x1152xbf16, #tpu.memory_space<vmem>>, vector<256x1152xbf16>
    %c0_55 = arith.constant 0 : index
    %c0_56 = arith.constant 0 : index
    %52 = vector.load %arg4[%c0_55, %c0_56] : memref<1152x128xbf16, #tpu.memory_space<vmem>>, vector<1152x128xbf16>
    %cst_57 = arith.constant dense<0.000000e+00> : vector<256x128xf32>
    %53 = tpu.matmul %51, %52, %cst_57 {dimension_numbers = #tpu.dot_dimension_numbers<[1], [0], [0], [1], [0, 0, 1, 1], [], []>} : vector<256x1152xbf16>, vector<1152x128xbf16>, vector<256x128xf32> -> vector<256x128xf32>
    %c0_58 = arith.constant 0 : index
    %c0_59 = arith.constant 0 : index
    %54 = vector.load %arg5[%c0_58, %c0_59] : memref<1x128xf32, #tpu.memory_space<vmem>>, vector<1x128xf32>
    %55 = vector.broadcast %54 : vector<1x128xf32> to vector<256x128xf32>
    %56 = arith.addf %53, %55 : vector<256x128xf32>
    %57 = vector.shape_cast %56 : vector<256x128xf32> to vector<16x16x128xf32>
    %c0_60 = arith.constant 0 : index
    %c0_61 = arith.constant 0 : index
    %c0_62 = arith.constant 0 : index
    %c0_63 = arith.constant 0 : index
    %58 = vector.load %arg6[%c0_60, %c0_61, %c0_62, %c0_63] : memref<1x16x16x128xf32, #tpu.memory_space<vmem>>, vector<1x16x16x128xf32>
    %59 = vector.shape_cast %58 : vector<1x16x16x128xf32> to vector<16x16x128xf32>
    %60 = vector.shape_cast %57 : vector<16x16x128xf32> to vector<1x16x16x128xf32>
    tpu.vector_store %arg6[%c0_60, %c0_61, %c0_62, %c0_63], %60 {strides = array<i32>} : memref<1x16x16x128xf32, #tpu.memory_space<vmem>>, vector<1x16x16x128xf32>,
    return
  }
  func.func @transform_0(%arg0: i32) -> (i32, i32, i32, i32) {
    %c0_i32 = arith.constant 0 : i32
    %c0_i32_0 = arith.constant 0 : i32
    %c0_i32_1 = arith.constant 0 : i32
    %c0_i32_2 = arith.constant 0 : i32
    return %arg0, %c0_i32, %c0_i32_0, %c0_i32_1 : i32, i32, i32, i32
  }
  func.func @transform_1(%arg0: i32) -> (i32, i32, i32, i32) {
    %c0_i32 = arith.constant 0 : i32
    %c0_i32_0 = arith.constant 0 : i32
    %c0_i32_1 = arith.constant 0 : i32
    %c0_i32_2 = arith.constant 0 : i32
    %c0_i32_3 = arith.constant 0 : i32
    return %c0_i32, %c0_i32_0, %c0_i32_1, %c0_i32_2 : i32, i32, i32, i32
  }
  func.func @transform_2(%arg0: i32) -> (i32, i32, i32, i32) {
    %c0_i32 = arith.constant 0 : i32
    %c0_i32_0 = arith.constant 0 : i32
    %c0_i32_1 = arith.constant 0 : i32
    %c0_i32_2 = arith.constant 0 : i32
    %c0_i32_3 = arith.constant 0 : i32
    return %c0_i32, %c0_i32_0, %c0_i32_1, %c0_i32_2 : i32, i32, i32, i32
  }
  func.func @transform_3(%arg0: i32) -> (i32, i32) {
    %c0_i32 = arith.constant 0 : i32
    %c0_i32_0 = arith.constant 0 : i32
    %c0_i32_1 = arith.constant 0 : i32
    return %c0_i32, %c0_i32_0 : i32, i32
  }
  func.func @transform_4(%arg0: i32) -> (i32, i32) {
    %c0_i32 = arith.constant 0 : i32
    %c0_i32_0 = arith.constant 0 : i32
    %c0_i32_1 = arith.constant 0 : i32
    return %c0_i32, %c0_i32_0 : i32, i32
  }
  func.func @transform_5(%arg0: i32) -> (i32, i32, i32, i32) {
    %c0_i32 = arith.constant 0 : i32
    %c0_i32_0 = arith.constant 0 : i32
    %c0_i32_1 = arith.constant 0 : i32
    %c0_i32_2 = arith.constant 0 : i32
    return %arg0, %c0_i32, %c0_i32_0, %c0_i32_1 : i32, i32, i32, i32
  }
}

module attributes {stable_mosaic.version = 11 : i64} {
  func.func @maxpool_kernel(%arg0: i32, %arg1: memref<1x8x2x8x2x128xf32, #tpu.memory_space<vmem>>, %arg2: memref<1x8x8x128xf32, #tpu.memory_space<vmem>>) attributes {dimension_semantics = [#tpu.dimension_semantics<parallel>], iteration_bounds = array<i64: 2>, scalar_prefetch = 0 : i64, scratch_operands = 0 : i64, tpu.core_type = #tpu.core_type<tc>, window_params = [{transform_indices = @transform_0, window_bounds = array<i64: 1, 8, 2, 8, 2, 128>}, {transform_indices = @transform_1, window_bounds = array<i64: 1, 8, 8, 128>}]} {
    %c0 = arith.constant 0 : index
    %c0_0 = arith.constant 0 : index
    %c0_1 = arith.constant 0 : index
    %c0_2 = arith.constant 0 : index
    %c0_3 = arith.constant 0 : index
    %c0_4 = arith.constant 0 : index
    %0 = vector.load %arg1[%c0, %c0_0, %c0_1, %c0_2, %c0_3, %c0_4] : memref<1x8x2x8x2x128xf32, #tpu.memory_space<vmem>>, vector<1x8x2x8x2x128xf32>
    %cst = arith.constant dense<0xFF800000> : vector<1x8x2x8x128xf32>
    %1 = vector.multi_reduction <maximumf>, %0, %cst [4] : vector<1x8x2x8x2x128xf32> to vector<1x8x2x8x128xf32>
    %cst_5 = arith.constant dense<0xFF800000> : vector<1x8x8x128xf32>
    %2 = vector.multi_reduction <maximumf>, %1, %cst_5 [2] : vector<1x8x2x8x128xf32> to vector<1x8x8x128xf32>
    %c0_6 = arith.constant 0 : index
    %c0_7 = arith.constant 0 : index
    %c0_8 = arith.constant 0 : index
    %c0_9 = arith.constant 0 : index
    %3 = vector.load %arg2[%c0_6, %c0_7, %c0_8, %c0_9] : memref<1x8x8x128xf32, #tpu.memory_space<vmem>>, vector<1x8x8x128xf32>
    tpu.vector_store %arg2[%c0_6, %c0_7, %c0_8, %c0_9], %2 {strides = array<i32>} : memref<1x8x8x128xf32, #tpu.memory_space<vmem>>, vector<1x8x8x128xf32>,
    return
  }
  func.func @transform_0(%arg0: i32) -> (i32, i32, i32, i32, i32, i32) {
    %c0_i32 = arith.constant 0 : i32
    %c0_i32_0 = arith.constant 0 : i32
    %c0_i32_1 = arith.constant 0 : i32
    %c0_i32_2 = arith.constant 0 : i32
    %c0_i32_3 = arith.constant 0 : i32
    %c0_i32_4 = arith.constant 0 : i32
    return %arg0, %c0_i32, %c0_i32_0, %c0_i32_1, %c0_i32_2, %c0_i32_3 : i32, i32, i32, i32, i32, i32
  }
  func.func @transform_1(%arg0: i32) -> (i32, i32, i32, i32) {
    %c0_i32 = arith.constant 0 : i32
    %c0_i32_0 = arith.constant 0 : i32
    %c0_i32_1 = arith.constant 0 : i32
    %c0_i32_2 = arith.constant 0 : i32
    return %arg0, %c0_i32, %c0_i32_0, %c0_i32_1 : i32, i32, i32, i32
  }
}

</mosaic_0001>

<llo_original>
// kernel: downsample_forward.9
$region0: #{downsample_forward.9}
  #allocation0 [shape = 'u32[]', space=smem, size = 0x4, offset = 0x4, fixed_abs, tag = 'smem constant byte address 0x4 - core index']
  #allocation1 [shape = 'u32[144,128]{1,0:T(1,128)}', space=vmem, size = 0x12000, scoped, tag = 'internal scratch']
  %s0 = inlined_call_operand.vmem [shape: f32[2,16,16,128], index: 0, kind: input, shape index: {}]
  %s1 = inlined_call_operand.vmem [shape: f32[1,128], index: 1, kind: output, shape index: {0}]
  %s2 = inlined_call_operand.vmem [shape: f32[1,128], index: 2, kind: output, shape index: {1}]
  %3 = xla_tuple %s1, %s2
  %s4 = sld [smem:[#allocation0]]
  $region49: #{downsample_forward.9} parent=0
    _
  %s6 = ssub.s32 1, %s4
  %s7 = scalar_select 0, %s6, %s4
  loop: start=0, step=1, limit=4
  $region2: #{downsample_forward.9} parent=0 // loop_pre_header
    _
  $region3: #{downsample_forward.9} parent=0 // loop_header
    %s9 = sphi 0, %s13
    %p10 = scmp.ge.s32.totalorder %s9, 4
    %s19 = sphi 0, %s21
    %s22 = sphi 0, %s19
    %s23 = sphi 0, %s22
    %s39 = sphi 0, %s23
    %s43 = sphi 0, %s43
    %s45 = sphi 0, %s43
    %s46 = sphi 0, %s45
    %s60 = sphi 0, %s46
    %s64 = sphi 0, %s64
    %s66 = sphi 0, %s64
    %s67 = sphi 0, %s66
    %s81 = sphi 0, %s67
  $region4: #{downsample_forward.9} parent=0 // loop_header_branch
    %12 = sbr.rel (%p10) target = $region8
  $region5: #{downsample_forward.9} parent=0 // loop_body
    %s14 = ssub.s32 %s9, 1
    %s15 = ssub.s32 %s9, 2
    %s16 = sadd.s32 %s9, 1
    %s17 = ssub.s32 %s9, %s16
    %p18 = scmp.eq.s32.totalorder %s17, 0
    %s20 = sadd.s32 %s19, 1
    %s21 = scalar_select %p18, %s19, %s20
    %p24 = pneg %p18
    %p25 = scmp.eq.s32.totalorder %s9, 1
    %p26 = por %p24, %p25
    %p27 = scmp.ne.s32.totalorder %s19, %s22
    %p28 = scmp.eq.s32.totalorder %s9, 0
    %p29 = por %p27, %p28
    %p30 = scmp.ne.s32.totalorder %s19, %s22
    %p31 = scmp.eq.s32.totalorder %s14, 1
    %p32 = por %p30, %p31
    %p33 = scmp.ne.s32.totalorder %s22, %s23
    %p34 = scmp.eq.s32.totalorder %s14, 0
    %p35 = por %p33, %p34
    %p36 = scmp.ne.s32.totalorder %s22, %s23
    %p37 = scmp.eq.s32.totalorder %s15, 1
    %p38 = por %p36, %p37
    %p40 = scmp.ne.s32.totalorder %s23, %s39
    %p41 = scmp.eq.s32.totalorder %s15, 0
    %p42 = por %p40, %p41
    %s44 = sadd.s32 %s43, 1
    %p47 = scmp.eq.s32.totalorder %s9, 1
    %p48 = scmp.ne.s32.totalorder %s43, %s45
    %p49 = scmp.eq.s32.totalorder %s9, 0
    %p50 = por %p48, %p49
    %p51 = scmp.ne.s32.totalorder %s43, %s45
    %p52 = scmp.eq.s32.totalorder %s14, 1
    %p53 = por %p51, %p52
    %p54 = scmp.ne.s32.totalorder %s45, %s46
    %p55 = scmp.eq.s32.totalorder %s14, 0
    %p56 = por %p54, %p55
    %p57 = scmp.ne.s32.totalorder %s45, %s46
    %p58 = scmp.eq.s32.totalorder %s15, 1
    %p59 = por %p57, %p58
    %p61 = scmp.ne.s32.totalorder %s46, %s60
    %p62 = scmp.eq.s32.totalorder %s15, 0
    %p63 = por %p61, %p62
    %s65 = sadd.s32 %s64, 1
    %p68 = scmp.eq.s32.totalorder %s9, 1
    %p69 = scmp.ne.s32.totalorder %s64, %s66
    %p70 = scmp.eq.s32.totalorder %s9, 0
    %p71 = por %p69, %p70
    %p72 = scmp.ne.s32.totalorder %s64, %s66
    %p73 = scmp.eq.s32.totalorder %s14, 1
    %p74 = por %p72, %p73
    %p75 = scmp.ne.s32.totalorder %s66, %s67
    %p76 = scmp.eq.s32.totalorder %s14, 0
    %p77 = por %p75, %p76
    %p78 = scmp.ne.s32.totalorder %s66, %s67
    %p79 = scmp.eq.s32.totalorder %s15, 1
    %p80 = por %p78, %p79
    %p82 = scmp.ne.s32.totalorder %s67, %s81
    %p83 = scmp.eq.s32.totalorder %s15, 0
    %p84 = por %p82, %p83
    %p85 = scmp.le.s32.totalorder 1, %s9
    %p86 = scmp.lt.s32.totalorder %s9, 3
    %p87 = pnand %p85, %p86
    %p88 = pneg %p87
    // Predicated region
    $region9: #{downsample_forward.9} parent=5 // pred_check
      _
    $region10: #{downsample_forward.9} parent=5 // pred_check_branch
      %90 = sbr.rel (%p87) target = $region12
    $region11: #{downsample_forward.9} parent=5 // pred_region
      %s91 = ssub.s32 %s9, 1
    $region12: #{downsample_forward.9} parent=5 // pred_fallthru
      _
    %p92 = scmp.lt.s32.totalorder %s9, 2
    // Predicated region
    $region13: #{downsample_forward.9} parent=5 // pred_check
      %p93 = pneg %p92
    $region14: #{downsample_forward.9} parent=5 // pred_check_branch
      %95 = sbr.rel (%p93) target = $region16
    $region15: #{downsample_forward.9} parent=5 // pred_region
      // Predicated region
      $region17: #{downsample_forward.9} parent=15 // pred_check
        %p96 = pneg %p29
      $region18: #{downsample_forward.9} parent=15 // pred_check_branch
        %98 = sbr.rel (%p96) target = $region20
      $region19: #{downsample_forward.9} parent=15 // pred_region
        %p99 = scmp.lt.s32.totalorder %s9, 1
        %s100 = scalar_select %p99, %s9, 1
        %s101 = smul.addr %s100, 32
        %s102 = smul.addr %s101, 8
        %s103 = scalar_lea.vmem %s0, %s102
      $region20: #{downsample_forward.9} parent=15 // pred_fallthru
        _
    $region16: #{downsample_forward.9} parent=5 // pred_fallthru
      _
    %p104 = scmp.le.s32.totalorder 1, %s9
    %p105 = scmp.lt.s32.totalorder %s9, 3
    %p106 = pnand %p104, %p105
    %p107 = pneg %p106
    // Predicated region
    $region21: #{downsample_forward.9} parent=5 // pred_check
      _
    $region22: #{downsample_forward.9} parent=5 // pred_check_branch
      %109 = sbr.rel (%p106) target = $region24
    $region23: #{downsample_forward.9} parent=5 // pred_region
      %s110 = ssub.s32 %s9, 1
      %p111 = scmp.lt.s32.totalorder %s14, 1
      %s112 = scalar_select %p111, %s14, 1
      %s113 = smul.addr %s112, 32
      %s114 = smul.addr %s113, 8
      %s115 = scalar_lea.vmem %s0, %s114
      %p116 = pneg %p35
      %p117 = pneg %p32
      %p118 = pneg %p56
      %p119 = pneg %p53
      %p120 = pneg %p77
      %p121 = pneg %p74
      %p122 = scmp.lt.s32.totalorder %s14, 1
      %s123 = scalar_select %p122, %s14, 1
      %s124 = smul.addr %s123, 32
      %s125 = smul.addr %s124, 8
      %s126 = scalar_lea.vmem %s0, %s125
      %p127 = scmp.eq.s32.totalorder %s14, 0
      // Predicated region
      $region25: #{downsample_forward.9} parent=23 // pred_check
        %p128 = pneg %p127
      $region26: #{downsample_forward.9} parent=23 // pred_check_branch
        %130 = sbr.rel (%p128) target = $region28
      $region27: #{downsample_forward.9} parent=23 // pred_region
        %131 = vst [vmem:[%s1] sm:$0x1] 0.0
        %132 = vst [vmem:[%s2] sm:$0x1] 0.0
      $region28: #{downsample_forward.9} parent=23 // pred_fallthru
        _
      %v133 = vld [vmem:[%s126] sm:$0xff]
      %v134 = vld [vmem:[%s126 + $0x8] sm:$0xff]
      %v135 = vld [vmem:[%s126 + $0x10] sm:$0xff]
      %v136 = vld [vmem:[%s126 + $0x18] sm:$0xff]
      %v137 = vld [vmem:[%s126 + $0x20] sm:$0xff]
      %v138 = vld [vmem:[%s126 + $0x28] sm:$0xff]
      %v139 = vld [vmem:[%s126 + $0x30] sm:$0xff]
      %v140 = vld [vmem:[%s126 + $0x38] sm:$0xff]
      %v141 = vld [vmem:[%s126 + $0x40] sm:$0xff]
      %v142 = vld [vmem:[%s126 + $0x48] sm:$0xff]
      %v143 = vld [vmem:[%s126 + $0x50] sm:$0xff]
      %v144 = vld [vmem:[%s126 + $0x58] sm:$0xff]
      %v145 = vld [vmem:[%s126 + $0x60] sm:$0xff]
      %v146 = vld [vmem:[%s126 + $0x68] sm:$0xff]
      %v147 = vld [vmem:[%s126 + $0x70] sm:$0xff]
      %v148 = vld [vmem:[%s126 + $0x78] sm:$0xff]
      %v149 = vld [vmem:[%s126 + $0x80] sm:$0xff]
      %v150 = vld [vmem:[%s126 + $0x88] sm:$0xff]
      %v151 = vld [vmem:[%s126 + $0x90] sm:$0xff]
      %v152 = vld [vmem:[%s126 + $0x98] sm:$0xff]
      %v153 = vld [vmem:[%s126 + $0xa0] sm:$0xff]
      %v154 = vld [vmem:[%s126 + $0xa8] sm:$0xff]
      %v155 = vld [vmem:[%s126 + $0xb0] sm:$0xff]
      %v156 = vld [vmem:[%s126 + $0xb8] sm:$0xff]
      %v157 = vld [vmem:[%s126 + $0xc0] sm:$0xff]
      %v158 = vld [vmem:[%s126 + $0xc8] sm:$0xff]
      %v159 = vld [vmem:[%s126 + $0xd0] sm:$0xff]
      %v160 = vld [vmem:[%s126 + $0xd8] sm:$0xff]
      %v161 = vld [vmem:[%s126 + $0xe0] sm:$0xff]
      %v162 = vld [vmem:[%s126 + $0xe8] sm:$0xff]
      %v163 = vld [vmem:[%s126 + $0xf0] sm:$0xff]
      %v164 = vld [vmem:[%s126 + $0xf8] sm:$0xff]
      %v165 = vld [vmem:[%s1] sm:$0x1]
      %v166 = vadd.f32 %v133, %v134
      %v167 = vadd.f32 %v166, %v135
      %v168 = vadd.f32 %v167, %v136
      %v169 = vadd.f32 %v168, %v137
      %v170 = vadd.f32 %v169, %v138
      %v171 = vadd.f32 %v170, %v139
      %v172 = vadd.f32 %v171, %v140
      %v173 = vadd.f32 %v172, %v141
      %v174 = vadd.f32 %v173, %v142
      %v175 = vadd.f32 %v174, %v143
      %v176 = vadd.f32 %v175, %v144
      %v177 = vadd.f32 %v176, %v145
      %v178 = vadd.f32 %v177, %v146
      %v179 = vadd.f32 %v178, %v147
      %v180 = vadd.f32 %v179, %v148
      %v181 = vadd.f32 %v180, %v149
      %v182 = vadd.f32 %v181, %v150
      %v183 = vadd.f32 %v182, %v151
      %v184 = vadd.f32 %v183, %v152
      %v185 = vadd.f32 %v184, %v153
      %v186 = vadd.f32 %v185, %v154
      %v187 = vadd.f32 %v186, %v155
      %v188 = vadd.f32 %v187, %v156
      %v189 = vadd.f32 %v188, %v157
      %v190 = vadd.f32 %v189, %v158
      %v191 = vadd.f32 %v190, %v159
      %v192 = vadd.f32 %v191, %v160
      %v193 = vadd.f32 %v192, %v161
      %v194 = vadd.f32 %v193, %v162
      %v195 = vadd.f32 %v194, %v163
      %v196 = vadd.f32 %v195, %v164
      %v197 = vrot.slane %v196, 4
      %v198 = vadd.f32 %v196, %v197
      %v199 = vrot.slane %v198, 2
      %v200 = vadd.f32 %v198, %v199
      %v201 = vrot.slane %v200, 1
      %v202 = vadd.f32 %v200, %v201
      %v203 = vadd.f32 %v165, %v202
      %204 = vst [vmem:[%s1] sm:$0x1] %v203
      %v205 = vld [vmem:[%s2] sm:$0x1]
      %v206 = vmul.f32 %v133, %v133
      %v207 = vmul.f32 %v134, %v134
      %v208 = vmul.f32 %v135, %v135
      %v209 = vmul.f32 %v136, %v136
      %v210 = vmul.f32 %v137, %v137
      %v211 = vmul.f32 %v138, %v138
      %v212 = vmul.f32 %v139, %v139
      %v213 = vmul.f32 %v140, %v140
      %v214 = vmul.f32 %v141, %v141
      %v215 = vmul.f32 %v142, %v142
      %v216 = vmul.f32 %v143, %v143
      %v217 = vmul.f32 %v144, %v144
      %v218 = vmul.f32 %v145, %v145
      %v219 = vmul.f32 %v146, %v146
      %v220 = vmul.f32 %v147, %v147
      %v221 = vmul.f32 %v148, %v148
      %v222 = vmul.f32 %v149, %v149
      %v223 = vmul.f32 %v150, %v150
      %v224 = vmul.f32 %v151, %v151
      %v225 = vmul.f32 %v152, %v152
      %v226 = vmul.f32 %v153, %v153
      %v227 = vmul.f32 %v154, %v154
      %v228 = vmul.f32 %v155, %v155
      %v229 = vmul.f32 %v156, %v156
      %v230 = vmul.f32 %v157, %v157
      %v231 = vmul.f32 %v158, %v158
      %v232 = vmul.f32 %v159, %v159
      %v233 = vmul.f32 %v160, %v160
      %v234 = vmul.f32 %v161, %v161
      %v235 = vmul.f32 %v162, %v162
      %v236 = vmul.f32 %v163, %v163
      %v237 = vmul.f32 %v164, %v164
      %v238 = vadd.f32 %v206, %v207
      %v239 = vadd.f32 %v238, %v208
      %v240 = vadd.f32 %v239, %v209
      %v241 = vadd.f32 %v240, %v210
      %v242 = vadd.f32 %v241, %v211
      %v243 = vadd.f32 %v242, %v212
      %v244 = vadd.f32 %v243, %v213
      %v245 = vadd.f32 %v244, %v214
      %v246 = vadd.f32 %v245, %v215
      %v247 = vadd.f32 %v246, %v216
      %v248 = vadd.f32 %v247, %v217
      %v249 = vadd.f32 %v248, %v218
      %v250 = vadd.f32 %v249, %v219
      %v251 = vadd.f32 %v250, %v220
      %v252 = vadd.f32 %v251, %v221
      %v253 = vadd.f32 %v252, %v222
      %v254 = vadd.f32 %v253, %v223
      %v255 = vadd.f32 %v254, %v224
      %v256 = vadd.f32 %v255, %v225
      %v257 = vadd.f32 %v256, %v226
      %v258 = vadd.f32 %v257, %v227
      %v259 = vadd.f32 %v258, %v228
      %v260 = vadd.f32 %v259, %v229
      %v261 = vadd.f32 %v260, %v230
      %v262 = vadd.f32 %v261, %v231
      %v263 = vadd.f32 %v262, %v232
      %v264 = vadd.f32 %v263, %v233
      %v265 = vadd.f32 %v264, %v234
      %v266 = vadd.f32 %v265, %v235
      %v267 = vadd.f32 %v266, %v236
      %v268 = vadd.f32 %v267, %v237
      %v269 = vrot.slane %v268, 4
      %v270 = vadd.f32 %v268, %v269
      %v271 = vrot.slane %v270, 2
      %v272 = vadd.f32 %v270, %v271
      %v273 = vrot.slane %v272, 1
      %v274 = vadd.f32 %v272, %v273
      %v275 = vadd.f32 %v205, %v274
      %276 = vst [vmem:[%s2] sm:$0x1] %v275
      // Predicated region
      $region29: #{downsample_forward.9} parent=23 // pred_check
        %p277 = pneg %p53
      $region30: #{downsample_forward.9} parent=23 // pred_check_branch
        %279 = sbr.rel (%p277) target = $region32
      $region31: #{downsample_forward.9} parent=23 // pred_region
        _
      $region32: #{downsample_forward.9} parent=23 // pred_fallthru
        _
      // Predicated region
      $region33: #{downsample_forward.9} parent=23 // pred_check
        %p280 = pneg %p74
      $region34: #{downsample_forward.9} parent=23 // pred_check_branch
        %282 = sbr.rel (%p280) target = $region36
      $region35: #{downsample_forward.9} parent=23 // pred_region
        _
      $region36: #{downsample_forward.9} parent=23 // pred_fallthru
        _
      // Predicated region
      $region37: #{downsample_forward.9} parent=23 // pred_check
        %p283 = pneg %p53
      $region38: #{downsample_forward.9} parent=23 // pred_check_branch
        %285 = sbr.rel (%p283) target = $region40
      $region39: #{downsample_forward.9} parent=23 // pred_region
        _
      $region40: #{downsample_forward.9} parent=23 // pred_fallthru
        _
      // Predicated region
      $region41: #{downsample_forward.9} parent=23 // pred_check
        %p286 = pneg %p74
      $region42: #{downsample_forward.9} parent=23 // pred_check_branch
        %288 = sbr.rel (%p286) target = $region44
      $region43: #{downsample_forward.9} parent=23 // pred_region
        _
      $region44: #{downsample_forward.9} parent=23 // pred_fallthru
        _
    $region24: #{downsample_forward.9} parent=5 // pred_fallthru
      _
    %p289 = scmp.le.s32.totalorder 2, %s9
    // Predicated region
    $region45: #{downsample_forward.9} parent=5 // pred_check
      %p290 = pneg %p289
    $region46: #{downsample_forward.9} parent=5 // pred_check_branch
      %292 = sbr.rel (%p290) target = $region48
    $region47: #{downsample_forward.9} parent=5 // pred_region
      %s293 = ssub.s32 %s9, 2
    $region48: #{downsample_forward.9} parent=5 // pred_fallthru
      _
  $region6: #{downsample_forward.9} parent=0 // loop_footer
    %s13 = sadd.s32 1, %s9
  $region7: #{downsample_forward.9} parent=0 // loop_footer_branch
    %8 = sbr.rel target = $region3
  $region8: #{downsample_forward.9} parent=0 // loop_exit
    _

// kernel: downsample_forward.14
$region0: #{downsample_forward.14}
  #allocation0 [shape = 'u32[]', space=smem, size = 0x4, offset = 0x4, fixed_abs, tag = 'smem constant byte address 0x4 - core index']
  #allocation1 [shape = 'u32[144,128]{1,0:T(1,128)}', space=vmem, size = 0x12000, scoped, tag = 'internal scratch']
  #allocation2 [shape = 'f32[1,1]{1,0:T(1,128)S(1)}', space=vmem, size = 0x200, scoped, tag = 'scoped memory for downsample_forward.14']
  %s0 = inlined_call_operand.vmem [shape: f32[2,16,16,128], index: 0, kind: input, shape index: {}]
  %s1 = inlined_call_operand.vmem [shape: f32[1,1,1,128], index: 1, kind: input, shape index: {}]
  %s2 = inlined_call_operand.vmem [shape: f32[1,1,1,128], index: 2, kind: input, shape index: {}]
  %s3 = inlined_call_operand.vmem [shape: f32[2,16,16,128], index: 3, kind: input, shape index: {}]
  %s4 = inlined_call_operand.vmem [shape: bf16[128,128], index: 4, kind: input, shape index: {}]
  %s5 = inlined_call_operand.vmem [shape: f32[1,128], index: 5, kind: input, shape index: {}]
  %s6 = inlined_call_operand.vmem [shape: bf16[128,128], index: 6, kind: input, shape index: {}]
  %s7 = inlined_call_operand.vmem [shape: f32[1,128], index: 7, kind: input, shape index: {}]
  %s8 = inlined_call_operand.vmem [shape: bf16[128,128], index: 8, kind: input, shape index: {}]
  %s9 = inlined_call_operand.vmem [shape: f32[1,128], index: 9, kind: input, shape index: {}]
  %s10 = inlined_call_operand.vmem [shape: bf16[128,1], index: 10, kind: input, shape index: {}]
  %s11 = inlined_call_operand.<no memory space> [shape: f32[1,1], index: 11, kind: input, shape index: {}]
  %s12 = inlined_call_operand.vmem [shape: f32[2,16,16,128], index: 12, kind: output, shape index: {}]
  %s13 = sld [smem:[#allocation0]]
  $region81: #{downsample_forward.14} parent=0
    _
  %s15 = ssub.s32 1, %s13
  %s16 = scalar_select 0, %s15, %s13
  %v17 = vstv %s11
  %18 = vst [vmem:[#allocation2] sm:$0x1] %v17
  loop: start=0, step=1, limit=4
  $region2: #{downsample_forward.14} parent=0 // loop_pre_header
    _
  $region3: #{downsample_forward.14} parent=0 // loop_header
    %s20 = sphi 0, %s24
    %p21 = scmp.ge.s32.totalorder %s20, 4
    %s30 = sphi 0, %s32
    %s33 = sphi 0, %s30
    %s34 = sphi 0, %s33
    %s50 = sphi 0, %s34
    %s54 = sphi 0, %s54
    %s56 = sphi 0, %s54
    %s57 = sphi 0, %s56
    %s71 = sphi 0, %s57
    %s75 = sphi 0, %s75
    %s77 = sphi 0, %s75
    %s78 = sphi 0, %s77
    %s92 = sphi 0, %s78
    %s98 = sphi 0, %s100
    %s101 = sphi 0, %s98
    %s102 = sphi 0, %s101
    %s118 = sphi 0, %s102
    %s122 = sphi 0, %s122
    %s124 = sphi 0, %s122
    %s125 = sphi 0, %s124
    %s139 = sphi 0, %s125
    %s143 = sphi 0, %s143
    %s145 = sphi 0, %s143
    %s146 = sphi 0, %s145
    %s160 = sphi 0, %s146
    %s164 = sphi 0, %s164
    %s166 = sphi 0, %s164
    %s167 = sphi 0, %s166
    %s181 = sphi 0, %s167
    %s185 = sphi 0, %s185
    %s187 = sphi 0, %s185
    %s188 = sphi 0, %s187
    %s202 = sphi 0, %s188
    %s206 = sphi 0, %s206
    %s208 = sphi 0, %s206
    %s209 = sphi 0, %s208
    %s223 = sphi 0, %s209
    %s227 = sphi 0, %s227
    %s229 = sphi 0, %s227
    %s230 = sphi 0, %s229
    %s244 = sphi 0, %s230
    %s248 = sphi 0, %s248
    %s250 = sphi 0, %s248
    %s251 = sphi 0, %s250
    %s265 = sphi 0, %s251
    %s269 = sphi 0, %s269
    %s271 = sphi 0, %s269
    %s272 = sphi 0, %s271
    %s286 = sphi 0, %s272
    %s292 = sphi 0, %s294
    %s295 = sphi 0, %s292
    %s296 = sphi 0, %s295
    %s312 = sphi 0, %s296
  $region4: #{downsample_forward.14} parent=0 // loop_header_branch
    %23 = sbr.rel (%p21) target = $region8
  $region5: #{downsample_forward.14} parent=0 // loop_body
    %s25 = ssub.s32 %s20, 1
    %s26 = ssub.s32 %s20, 2
    %s27 = sadd.s32 %s20, 1
    %s28 = ssub.s32 %s20, %s27
    %p29 = scmp.eq.s32.totalorder %s28, 0
    %s31 = sadd.s32 %s30, 1
    %s32 = scalar_select %p29, %s30, %s31
    %p35 = pneg %p29
    %p36 = scmp.eq.s32.totalorder %s20, 1
    %p37 = por %p35, %p36
    %p38 = scmp.ne.s32.totalorder %s30, %s33
    %p39 = scmp.eq.s32.totalorder %s20, 0
    %p40 = por %p38, %p39
    %p41 = scmp.ne.s32.totalorder %s30, %s33
    %p42 = scmp.eq.s32.totalorder %s25, 1
    %p43 = por %p41, %p42
    %p44 = scmp.ne.s32.totalorder %s33, %s34
    %p45 = scmp.eq.s32.totalorder %s25, 0
    %p46 = por %p44, %p45
    %p47 = scmp.ne.s32.totalorder %s33, %s34
    %p48 = scmp.eq.s32.totalorder %s26, 1
    %p49 = por %p47, %p48
    %p51 = scmp.ne.s32.totalorder %s34, %s50
    %p52 = scmp.eq.s32.totalorder %s26, 0
    %p53 = por %p51, %p52
    %s55 = sadd.s32 %s54, 1
    %p58 = scmp.eq.s32.totalorder %s20, 1
    %p59 = scmp.ne.s32.totalorder %s54, %s56
    %p60 = scmp.eq.s32.totalorder %s20, 0
    %p61 = por %p59, %p60
    %p62 = scmp.ne.s32.totalorder %s54, %s56
    %p63 = scmp.eq.s32.totalorder %s25, 1
    %p64 = por %p62, %p63
    %p65 = scmp.ne.s32.totalorder %s56, %s57
    %p66 = scmp.eq.s32.totalorder %s25, 0
    %p67 = por %p65, %p66
    %p68 = scmp.ne.s32.totalorder %s56, %s57
    %p69 = scmp.eq.s32.totalorder %s26, 1
    %p70 = por %p68, %p69
    %p72 = scmp.ne.s32.totalorder %s57, %s71
    %p73 = scmp.eq.s32.totalorder %s26, 0
    %p74 = por %p72, %p73
    %s76 = sadd.s32 %s75, 1
    %p79 = scmp.eq.s32.totalorder %s20, 1
    %p80 = scmp.ne.s32.totalorder %s75, %s77
    %p81 = scmp.eq.s32.totalorder %s20, 0
    %p82 = por %p80, %p81
    %p83 = scmp.ne.s32.totalorder %s75, %s77
    %p84 = scmp.eq.s32.totalorder %s25, 1
    %p85 = por %p83, %p84
    %p86 = scmp.ne.s32.totalorder %s77, %s78
    %p87 = scmp.eq.s32.totalorder %s25, 0
    %p88 = por %p86, %p87
    %p89 = scmp.ne.s32.totalorder %s77, %s78
    %p90 = scmp.eq.s32.totalorder %s26, 1
    %p91 = por %p89, %p90
    %p93 = scmp.ne.s32.totalorder %s78, %s92
    %p94 = scmp.eq.s32.totalorder %s26, 0
    %p95 = por %p93, %p94
    %s96 = ssub.s32 %s20, %s27
    %p97 = scmp.eq.s32.totalorder %s96, 0
    %s99 = sadd.s32 %s98, 1
    %s100 = scalar_select %p97, %s98, %s99
    %p103 = pneg %p97
    %p104 = scmp.eq.s32.totalorder %s20, 1
    %p105 = por %p103, %p104
    %p106 = scmp.ne.s32.totalorder %s98, %s101
    %p107 = scmp.eq.s32.totalorder %s20, 0
    %p108 = por %p106, %p107
    %p109 = scmp.ne.s32.totalorder %s98, %s101
    %p110 = scmp.eq.s32.totalorder %s25, 1
    %p111 = por %p109, %p110
    %p112 = scmp.ne.s32.totalorder %s101, %s102
    %p113 = scmp.eq.s32.totalorder %s25, 0
    %p114 = por %p112, %p113
    %p115 = scmp.ne.s32.totalorder %s101, %s102
    %p116 = scmp.eq.s32.totalorder %s26, 1
    %p117 = por %p115, %p116
    %p119 = scmp.ne.s32.totalorder %s102, %s118
    %p120 = scmp.eq.s32.totalorder %s26, 0
    %p121 = por %p119, %p120
    %s123 = sadd.s32 %s122, 1
    %p126 = scmp.eq.s32.totalorder %s20, 1
    %p127 = scmp.ne.s32.totalorder %s122, %s124
    %p128 = scmp.eq.s32.totalorder %s20, 0
    %p129 = por %p127, %p128
    %p130 = scmp.ne.s32.totalorder %s122, %s124
    %p131 = scmp.eq.s32.totalorder %s25, 1
    %p132 = por %p130, %p131
    %p133 = scmp.ne.s32.totalorder %s124, %s125
    %p134 = scmp.eq.s32.totalorder %s25, 0
    %p135 = por %p133, %p134
    %p136 = scmp.ne.s32.totalorder %s124, %s125
    %p137 = scmp.eq.s32.totalorder %s26, 1
    %p138 = por %p136, %p137
    %p140 = scmp.ne.s32.totalorder %s125, %s139
    %p141 = scmp.eq.s32.totalorder %s26, 0
    %p142 = por %p140, %p141
    %s144 = sadd.s32 %s143, 1
    %p147 = scmp.eq.s32.totalorder %s20, 1
    %p148 = scmp.ne.s32.totalorder %s143, %s145
    %p149 = scmp.eq.s32.totalorder %s20, 0
    %p150 = por %p148, %p149
    %p151 = scmp.ne.s32.totalorder %s143, %s145
    %p152 = scmp.eq.s32.totalorder %s25, 1
    %p153 = por %p151, %p152
    %p154 = scmp.ne.s32.totalorder %s145, %s146
    %p155 = scmp.eq.s32.totalorder %s25, 0
    %p156 = por %p154, %p155
    %p157 = scmp.ne.s32.totalorder %s145, %s146
    %p158 = scmp.eq.s32.totalorder %s26, 1
    %p159 = por %p157, %p158
    %p161 = scmp.ne.s32.totalorder %s146, %s160
    %p162 = scmp.eq.s32.totalorder %s26, 0
    %p163 = por %p161, %p162
    %s165 = sadd.s32 %s164, 1
    %p168 = scmp.eq.s32.totalorder %s20, 1
    %p169 = scmp.ne.s32.totalorder %s164, %s166
    %p170 = scmp.eq.s32.totalorder %s20, 0
    %p171 = por %p169, %p170
    %p172 = scmp.ne.s32.totalorder %s164, %s166
    %p173 = scmp.eq.s32.totalorder %s25, 1
    %p174 = por %p172, %p173
    %p175 = scmp.ne.s32.totalorder %s166, %s167
    %p176 = scmp.eq.s32.totalorder %s25, 0
    %p177 = por %p175, %p176
    %p178 = scmp.ne.s32.totalorder %s166, %s167
    %p179 = scmp.eq.s32.totalorder %s26, 1
    %p180 = por %p178, %p179
    %p182 = scmp.ne.s32.totalorder %s167, %s181
    %p183 = scmp.eq.s32.totalorder %s26, 0
    %p184 = por %p182, %p183
    %s186 = sadd.s32 %s185, 1
    %p189 = scmp.eq.s32.totalorder %s20, 1
    %p190 = scmp.ne.s32.totalorder %s185, %s187
    %p191 = scmp.eq.s32.totalorder %s20, 0
    %p192 = por %p190, %p191
    %p193 = scmp.ne.s32.totalorder %s185, %s187
    %p194 = scmp.eq.s32.totalorder %s25, 1
    %p195 = por %p193, %p194
    %p196 = scmp.ne.s32.totalorder %s187, %s188
    %p197 = scmp.eq.s32.totalorder %s25, 0
    %p198 = por %p196, %p197
    %p199 = scmp.ne.s32.totalorder %s187, %s188
    %p200 = scmp.eq.s32.totalorder %s26, 1
    %p201 = por %p199, %p200
    %p203 = scmp.ne.s32.totalorder %s188, %s202
    %p204 = scmp.eq.s32.totalorder %s26, 0
    %p205 = por %p203, %p204
    %s207 = sadd.s32 %s206, 1
    %p210 = scmp.eq.s32.totalorder %s20, 1
    %p211 = scmp.ne.s32.totalorder %s206, %s208
    %p212 = scmp.eq.s32.totalorder %s20, 0
    %p213 = por %p211, %p212
    %p214 = scmp.ne.s32.totalorder %s206, %s208
    %p215 = scmp.eq.s32.totalorder %s25, 1
    %p216 = por %p214, %p215
    %p217 = scmp.ne.s32.totalorder %s208, %s209
    %p218 = scmp.eq.s32.totalorder %s25, 0
    %p219 = por %p217, %p218
    %p220 = scmp.ne.s32.totalorder %s208, %s209
    %p221 = scmp.eq.s32.totalorder %s26, 1
    %p222 = por %p220, %p221
    %p224 = scmp.ne.s32.totalorder %s209, %s223
    %p225 = scmp.eq.s32.totalorder %s26, 0
    %p226 = por %p224, %p225
    %s228 = sadd.s32 %s227, 1
    %p231 = scmp.eq.s32.totalorder %s20, 1
    %p232 = scmp.ne.s32.totalorder %s227, %s229
    %p233 = scmp.eq.s32.totalorder %s20, 0
    %p234 = por %p232, %p233
    %p235 = scmp.ne.s32.totalorder %s227, %s229
    %p236 = scmp.eq.s32.totalorder %s25, 1
    %p237 = por %p235, %p236
    %p238 = scmp.ne.s32.totalorder %s229, %s230
    %p239 = scmp.eq.s32.totalorder %s25, 0
    %p240 = por %p238, %p239
    %p241 = scmp.ne.s32.totalorder %s229, %s230
    %p242 = scmp.eq.s32.totalorder %s26, 1
    %p243 = por %p241, %p242
    %p245 = scmp.ne.s32.totalorder %s230, %s244
    %p246 = scmp.eq.s32.totalorder %s26, 0
    %p247 = por %p245, %p246
    %s249 = sadd.s32 %s248, 1
    %p252 = scmp.eq.s32.totalorder %s20, 1
    %p253 = scmp.ne.s32.totalorder %s248, %s250
    %p254 = scmp.eq.s32.totalorder %s20, 0
    %p255 = por %p253, %p254
    %p256 = scmp.ne.s32.totalorder %s248, %s250
    %p257 = scmp.eq.s32.totalorder %s25, 1
    %p258 = por %p256, %p257
    %p259 = scmp.ne.s32.totalorder %s250, %s251
    %p260 = scmp.eq.s32.totalorder %s25, 0
    %p261 = por %p259, %p260
    %p262 = scmp.ne.s32.totalorder %s250, %s251
    %p263 = scmp.eq.s32.totalorder %s26, 1
    %p264 = por %p262, %p263
    %p266 = scmp.ne.s32.totalorder %s251, %s265
    %p267 = scmp.eq.s32.totalorder %s26, 0
    %p268 = por %p266, %p267
    %s270 = sadd.s32 %s269, 1
    %p273 = scmp.eq.s32.totalorder %s20, 1
    %p274 = scmp.ne.s32.totalorder %s269, %s271
    %p275 = scmp.eq.s32.totalorder %s20, 0
    %p276 = por %p274, %p275
    %p277 = scmp.ne.s32.totalorder %s269, %s271
    %p278 = scmp.eq.s32.totalorder %s25, 1
    %p279 = por %p277, %p278
    %p280 = scmp.ne.s32.totalorder %s271, %s272
    %p281 = scmp.eq.s32.totalorder %s25, 0
    %p282 = por %p280, %p281
    %p283 = scmp.ne.s32.totalorder %s271, %s272
    %p284 = scmp.eq.s32.totalorder %s26, 1
    %p285 = por %p283, %p284
    %p287 = scmp.ne.s32.totalorder %s272, %s286
    %p288 = scmp.eq.s32.totalorder %s26, 0
    %p289 = por %p287, %p288
    %s290 = ssub.s32 %s20, %s27
    %p291 = scmp.eq.s32.totalorder %s290, 0
    %s293 = sadd.s32 %s292, 1
    %s294 = scalar_select %p291, %s292, %s293
    %p297 = pneg %p291
    %p298 = scmp.eq.s32.totalorder %s20, 1
    %p299 = por %p297, %p298
    %p300 = scmp.ne.s32.totalorder %s292, %s295
    %p301 = scmp.eq.s32.totalorder %s20, 0
    %p302 = por %p300, %p301
    %p303 = scmp.ne.s32.totalorder %s292, %s295
    %p304 = scmp.eq.s32.totalorder %s25, 1
    %p305 = por %p303, %p304
    %p306 = scmp.ne.s32.totalorder %s295, %s296
    %p307 = scmp.eq.s32.totalorder %s25, 0
    %p308 = por %p306, %p307
    %p309 = scmp.ne.s32.totalorder %s295, %s296
    %p310 = scmp.eq.s32.totalorder %s26, 1
    %p311 = por %p309, %p310
    %p313 = scmp.ne.s32.totalorder %s296, %s312
    %p314 = scmp.eq.s32.totalorder %s26, 0
    %p315 = por %p313, %p314
    %p316 = scmp.le.s32.totalorder 1, %s20
    %p317 = scmp.lt.s32.totalorder %s20, 3
    %p318 = pnand %p316, %p317
    %p319 = pneg %p318
    // Predicated region
    $region9: #{downsample_forward.14} parent=5 // pred_check
      _
    $region10: #{downsample_forward.14} parent=5 // pred_check_branch
      %321 = sbr.rel (%p318) target = $region12
    $region11: #{downsample_forward.14} parent=5 // pred_region
      %s322 = ssub.s32 %s20, 1
      // Predicated region
      $region13: #{downsample_forward.14} parent=11 // pred_check
        %p323 = pneg %p67
      $region14: #{downsample_forward.14} parent=11 // pred_check_branch
        %325 = sbr.rel (%p323) target = $region16
      $region15: #{downsample_forward.14} parent=11 // pred_region
        _
      $region16: #{downsample_forward.14} parent=11 // pred_fallthru
        _
      // Predicated region
      $region17: #{downsample_forward.14} parent=11 // pred_check
        %p326 = pneg %p88
      $region18: #{downsample_forward.14} parent=11 // pred_check_branch
        %328 = sbr.rel (%p326) target = $region20
      $region19: #{downsample_forward.14} parent=11 // pred_region
        _
      $region20: #{downsample_forward.14} parent=11 // pred_fallthru
        _
      // Predicated region
      $region21: #{downsample_forward.14} parent=11 // pred_check
        %p329 = pneg %p135
      $region22: #{downsample_forward.14} parent=11 // pred_check_branch
        %331 = sbr.rel (%p329) target = $region24
      $region23: #{downsample_forward.14} parent=11 // pred_region
        _
      $region24: #{downsample_forward.14} parent=11 // pred_fallthru
        _
      // Predicated region
      $region25: #{downsample_forward.14} parent=11 // pred_check
        %p332 = pneg %p156
      $region26: #{downsample_forward.14} parent=11 // pred_check_branch
        %334 = sbr.rel (%p332) target = $region28
      $region27: #{downsample_forward.14} parent=11 // pred_region
        _
      $region28: #{downsample_forward.14} parent=11 // pred_fallthru
        _
      // Predicated region
      $region29: #{downsample_forward.14} parent=11 // pred_check
        %p335 = pneg %p177
      $region30: #{downsample_forward.14} parent=11 // pred_check_branch
        %337 = sbr.rel (%p335) target = $region32
      $region31: #{downsample_forward.14} parent=11 // pred_region
        _
      $region32: #{downsample_forward.14} parent=11 // pred_fallthru
        _
      // Predicated region
      $region33: #{downsample_forward.14} parent=11 // pred_check
        %p338 = pneg %p198
      $region34: #{downsample_forward.14} parent=11 // pred_check_branch
        %340 = sbr.rel (%p338) target = $region36
      $region35: #{downsample_forward.14} parent=11 // pred_region
        _
      $region36: #{downsample_forward.14} parent=11 // pred_fallthru
        _
      // Predicated region
      $region37: #{downsample_forward.14} parent=11 // pred_check
        %p341 = pneg %p219
      $region38: #{downsample_forward.14} parent=11 // pred_check_branch
        %343 = sbr.rel (%p341) target = $region40
      $region39: #{downsample_forward.14} parent=11 // pred_region
        _
      $region40: #{downsample_forward.14} parent=11 // pred_fallthru
        _
      // Predicated region
      $region41: #{downsample_forward.14} parent=11 // pred_check
        %p344 = pneg %p240
      $region42: #{downsample_forward.14} parent=11 // pred_check_branch
        %346 = sbr.rel (%p344) target = $region44
      $region43: #{downsample_forward.14} parent=11 // pred_region
        _
      $region44: #{downsample_forward.14} parent=11 // pred_fallthru
        _
      // Predicated region
      $region45: #{downsample_forward.14} parent=11 // pred_check
        %p347 = pneg %p261
      $region46: #{downsample_forward.14} parent=11 // pred_check_branch
        %349 = sbr.rel (%p347) target = $region48
      $region47: #{downsample_forward.14} parent=11 // pred_region
        _
      $region48: #{downsample_forward.14} parent=11 // pred_fallthru
        _
      // Predicated region
      $region49: #{downsample_forward.14} parent=11 // pred_check
        %p350 = pneg %p282
      $region50: #{downsample_forward.14} parent=11 // pred_check_branch
        %352 = sbr.rel (%p350) target = $region52
      $region51: #{downsample_forward.14} parent=11 // pred_region
        _
      $region52: #{downsample_forward.14} parent=11 // pred_fallthru
        _
    $region12: #{downsample_forward.14} parent=5 // pred_fallthru
      _
    %p353 = scmp.lt.s32.totalorder %s20, 2
    // Predicated region
    $region53: #{downsample_forward.14} parent=5 // pred_check
      %p354 = pneg %p353
    $region54: #{downsample_forward.14} parent=5 // pred_check_branch
      %356 = sbr.rel (%p354) target = $region56
    $region55: #{downsample_forward.14} parent=5 // pred_region
      // Predicated region
      $region57: #{downsample_forward.14} parent=55 // pred_check
        %p357 = pneg %p40
      $region58: #{downsample_forward.14} parent=55 // pred_check_branch
        %359 = sbr.rel (%p357) target = $region60
      $region59: #{downsample_forward.14} parent=55 // pred_region
        %p360 = scmp.lt.s32.totalorder %s20, 1
        %s361 = scalar_select %p360, %s20, 1
        %s362 = smul.addr %s361, 32
        %s363 = smul.addr %s362, 8
        %s364 = scalar_lea.vmem %s0, %s363
      $region60: #{downsample_forward.14} parent=55 // pred_fallthru
        _
      // Predicated region
      $region61: #{downsample_forward.14} parent=55 // pred_check
        %p365 = pneg %p108
      $region62: #{downsample_forward.14} parent=55 // pred_check_branch
        %367 = sbr.rel (%p365) target = $region64
      $region63: #{downsample_forward.14} parent=55 // pred_region
        %p368 = scmp.lt.s32.totalorder %s20, 1
        %s369 = scalar_select %p368, %s20, 1
        %s370 = smul.addr %s369, 32
        %s371 = smul.addr %s370, 8
        %s372 = scalar_lea.vmem %s3, %s371
      $region64: #{downsample_forward.14} parent=55 // pred_fallthru
        _
    $region56: #{downsample_forward.14} parent=5 // pred_fallthru
      _
    %p373 = scmp.le.s32.totalorder 1, %s20
    %p374 = scmp.lt.s32.totalorder %s20, 3
    %p375 = pnand %p373, %p374
    %p376 = pneg %p375
    // Predicated region
    $region65: #{downsample_forward.14} parent=5 // pred_check
      _
    $region66: #{downsample_forward.14} parent=5 // pred_check_branch
      %378 = sbr.rel (%p375) target = $region68
    $region67: #{downsample_forward.14} parent=5 // pred_region
      %s379 = ssub.s32 %s20, 1
      %p380 = scmp.lt.s32.totalorder %s25, 1
      %s381 = scalar_select %p380, %s25, 1
      %s382 = smul.addr %s381, 32
      %s383 = smul.addr %s382, 8
      %s384 = scalar_lea.vmem %s0, %s383
      %p385 = pneg %p46
      %p386 = pneg %p43
      %p387 = pneg %p67
      %p388 = pneg %p64
      %p389 = pneg %p88
      %p390 = pneg %p85
      %p391 = scmp.lt.s32.totalorder %s25, 1
      %s392 = scalar_select %p391, %s25, 1
      %s393 = smul.addr %s392, 32
      %s394 = smul.addr %s393, 8
      %s395 = scalar_lea.vmem %s3, %s394
      %p396 = pneg %p114
      %p397 = pneg %p111
      %p398 = pneg %p135
      %p399 = pneg %p132
      %p400 = pneg %p156
      %p401 = pneg %p153
      %p402 = pneg %p177
      %p403 = pneg %p174
      %p404 = pneg %p198
      %p405 = pneg %p195
      %p406 = pneg %p219
      %p407 = pneg %p216
      %p408 = pneg %p240
      %p409 = pneg %p237
      %p410 = pneg %p261
      %p411 = pneg %p258
      %p412 = pneg %p282
      %p413 = pneg %p279
      %p414 = pneg %p308
      %p415 = pneg %p305
      %p416 = scmp.lt.s32.totalorder %s25, 1
      %s417 = scalar_select %p416, %s25, 1
      %s418 = smul.addr %s417, 32
      %s419 = smul.addr %s418, 8
      %s420 = scalar_lea.vmem %s12, %s419
      %p421 = scmp.lt.s32.totalorder %s25, 1
      %s422 = scalar_select %p421, %s25, 1
      %s423 = smul.addr %s422, 32
      %s424 = smul.addr %s423, 8
      %s425 = scalar_lea.vmem %s0, %s424
      %p426 = scmp.lt.s32.totalorder %s25, 1
      %s427 = scalar_select %p426, %s25, 1
      %s428 = smul.addr %s427, 32
      %s429 = smul.addr %s428, 8
      %s430 = scalar_lea.vmem %s3, %s429
      %p431 = scmp.lt.s32.totalorder %s25, 1
      %s432 = scalar_select %p431, %s25, 1
      %s433 = smul.addr %s432, 32
      %s434 = smul.addr %s433, 8
      %s435 = scalar_lea.vmem %s12, %s434
      %v437 = vld [vmem:[%s425] sm:$0xff]
      %v438 = vld [vmem:[%s425 + $0x8] sm:$0xff]
      %v439 = vld [vmem:[%s425 + $0x10] sm:$0xff]
      %v440 = vld [vmem:[%s425 + $0x18] sm:$0xff]
      %v441 = vld [vmem:[%s425 + $0x20] sm:$0xff]
      %v442 = vld [vmem:[%s425 + $0x28] sm:$0xff]
      %v443 = vld [vmem:[%s425 + $0x30] sm:$0xff]
      %v444 = vld [vmem:[%s425 + $0x38] sm:$0xff]
      %v445 = vld [vmem:[%s425 + $0x40] sm:$0xff]
      %v446 = vld [vmem:[%s425 + $0x48] sm:$0xff]
      %v447 = vld [vmem:[%s425 + $0x50] sm:$0xff]
      %v448 = vld [vmem:[%s425 + $0x58] sm:$0xff]
      %v449 = vld [vmem:[%s425 + $0x60] sm:$0xff]
      %v450 = vld [vmem:[%s425 + $0x68] sm:$0xff]
      %v451 = vld [vmem:[%s425 + $0x70] sm:$0xff]
      %v452 = vld [vmem:[%s425 + $0x78] sm:$0xff]
      %v453 = vld [vmem:[%s425 + $0x80] sm:$0xff]
      %v454 = vld [vmem:[%s425 + $0x88] sm:$0xff]
      %v455 = vld [vmem:[%s425 + $0x90] sm:$0xff]
      %v456 = vld [vmem:[%s425 + $0x98] sm:$0xff]
      %v457 = vld [vmem:[%s425 + $0xa0] sm:$0xff]
      %v458 = vld [vmem:[%s425 + $0xa8] sm:$0xff]
      %v459 = vld [vmem:[%s425 + $0xb0] sm:$0xff]
      %v460 = vld [vmem:[%s425 + $0xb8] sm:$0xff]
      %v461 = vld [vmem:[%s425 + $0xc0] sm:$0xff]
      %v462 = vld [vmem:[%s425 + $0xc8] sm:$0xff]
      %v463 = vld [vmem:[%s425 + $0xd0] sm:$0xff]
      %v464 = vld [vmem:[%s425 + $0xd8] sm:$0xff]
      %v465 = vld [vmem:[%s425 + $0xe0] sm:$0xff]
      %v466 = vld [vmem:[%s425 + $0xe8] sm:$0xff]
      %v467 = vld [vmem:[%s425 + $0xf0] sm:$0xff]
      %v468 = vld [vmem:[%s425 + $0xf8] sm:$0xff]
      %v469 = vld [vmem:[%s1] sm:$0x1]
      %v471 = vlaneseq
      %v472 = vshrl.u32 %v471, 7
      %v473 = vsub.s32 0, %v472
      %v474 = vrot.slane %v469, %v473
      %v476 = vmul.f32 %v437, %v474
      %v477 = vmul.f32 %v438, %v474
      %v478 = vmul.f32 %v439, %v474
      %v479 = vmul.f32 %v440, %v474
      %v480 = vmul.f32 %v441, %v474
      %v481 = vmul.f32 %v442, %v474
      %v482 = vmul.f32 %v443, %v474
      %v483 = vmul.f32 %v444, %v474
      %v484 = vmul.f32 %v445, %v474
      %v485 = vmul.f32 %v446, %v474
      %v486 = vmul.f32 %v447, %v474
      %v487 = vmul.f32 %v448, %v474
      %v488 = vmul.f32 %v449, %v474
      %v489 = vmul.f32 %v450, %v474
      %v490 = vmul.f32 %v451, %v474
      %v491 = vmul.f32 %v452, %v474
      %v492 = vmul.f32 %v453, %v474
      %v493 = vmul.f32 %v454, %v474
      %v494 = vmul.f32 %v455, %v474
      %v495 = vmul.f32 %v456, %v474
      %v496 = vmul.f32 %v457, %v474
      %v497 = vmul.f32 %v458, %v474
      %v498 = vmul.f32 %v459, %v474
      %v499 = vmul.f32 %v460, %v474
      %v500 = vmul.f32 %v461, %v474
      %v501 = vmul.f32 %v462, %v474
      %v502 = vmul.f32 %v463, %v474
      %v503 = vmul.f32 %v464, %v474
      %v504 = vmul.f32 %v465, %v474
      %v505 = vmul.f32 %v466, %v474
      %v506 = vmul.f32 %v467, %v474
      %v507 = vmul.f32 %v468, %v474
      %v508 = vld [vmem:[%s2] sm:$0x1]
      %v510 = vlaneseq
      %v511 = vshrl.u32 %v510, 7
      %v512 = vsub.s32 0, %v511
      %v513 = vrot.slane %v508, %v512
      %v515 = vadd.f32 %v476, %v513
      %v516 = vadd.f32 %v477, %v513
      %v517 = vadd.f32 %v478, %v513
      %v518 = vadd.f32 %v479, %v513
      %v519 = vadd.f32 %v480, %v513
      %v520 = vadd.f32 %v481, %v513
      %v521 = vadd.f32 %v482, %v513
      %v522 = vadd.f32 %v483, %v513
      %v523 = vadd.f32 %v484, %v513
      %v524 = vadd.f32 %v485, %v513
      %v525 = vadd.f32 %v486, %v513
      %v526 = vadd.f32 %v487, %v513
      %v527 = vadd.f32 %v488, %v513
      %v528 = vadd.f32 %v489, %v513
      %v529 = vadd.f32 %v490, %v513
      %v530 = vadd.f32 %v491, %v513
      %v531 = vadd.f32 %v492, %v513
      %v532 = vadd.f32 %v493, %v513
      %v533 = vadd.f32 %v494, %v513
      %v534 = vadd.f32 %v495, %v513
      %v535 = vadd.f32 %v496, %v513
      %v536 = vadd.f32 %v497, %v513
      %v537 = vadd.f32 %v498, %v513
      %v538 = vadd.f32 %v499, %v513
      %v539 = vadd.f32 %v500, %v513
      %v540 = vadd.f32 %v501, %v513
      %v541 = vadd.f32 %v502, %v513
      %v542 = vadd.f32 %v503, %v513
      %v543 = vadd.f32 %v504, %v513
      %v544 = vadd.f32 %v505, %v513
      %v545 = vadd.f32 %v506, %v513
      %v546 = vadd.f32 %v507, %v513
      %v547 = vld [vmem:[%s430] sm:$0xff]
      %v548 = vld [vmem:[%s430 + $0x8] sm:$0xff]
      %v549 = vld [vmem:[%s430 + $0x10] sm:$0xff]
      %v550 = vld [vmem:[%s430 + $0x18] sm:$0xff]
      %v551 = vld [vmem:[%s430 + $0x20] sm:$0xff]
      %v552 = vld [vmem:[%s430 + $0x28] sm:$0xff]
      %v553 = vld [vmem:[%s430 + $0x30] sm:$0xff]
      %v554 = vld [vmem:[%s430 + $0x38] sm:$0xff]
      %v555 = vld [vmem:[%s430 + $0x40] sm:$0xff]
      %v556 = vld [vmem:[%s430 + $0x48] sm:$0xff]
      %v557 = vld [vmem:[%s430 + $0x50] sm:$0xff]
      %v558 = vld [vmem:[%s430 + $0x58] sm:$0xff]
      %v559 = vld [vmem:[%s430 + $0x60] sm:$0xff]
      %v560 = vld [vmem:[%s430 + $0x68] sm:$0xff]
      %v561 = vld [vmem:[%s430 + $0x70] sm:$0xff]
      %v562 = vld [vmem:[%s430 + $0x78] sm:$0xff]
      %v563 = vld [vmem:[%s430 + $0x80] sm:$0xff]
      %v564 = vld [vmem:[%s430 + $0x88] sm:$0xff]
      %v565 = vld [vmem:[%s430 + $0x90] sm:$0xff]
      %v566 = vld [vmem:[%s430 + $0x98] sm:$0xff]
      %v567 = vld [vmem:[%s430 + $0xa0] sm:$0xff]
      %v568 = vld [vmem:[%s430 + $0xa8] sm:$0xff]
      %v569 = vld [vmem:[%s430 + $0xb0] sm:$0xff]
      %v570 = vld [vmem:[%s430 + $0xb8] sm:$0xff]
      %v571 = vld [vmem:[%s430 + $0xc0] sm:$0xff]
      %v572 = vld [vmem:[%s430 + $0xc8] sm:$0xff]
      %v573 = vld [vmem:[%s430 + $0xd0] sm:$0xff]
      %v574 = vld [vmem:[%s430 + $0xd8] sm:$0xff]
      %v575 = vld [vmem:[%s430 + $0xe0] sm:$0xff]
      %v576 = vld [vmem:[%s430 + $0xe8] sm:$0xff]
      %v577 = vld [vmem:[%s430 + $0xf0] sm:$0xff]
      %v578 = vld [vmem:[%s430 + $0xf8] sm:$0xff]
      %v579 = vpack.c.bf16 %v548, %v547
      %v580 = vpack.c.bf16 %v550, %v549
      %v581 = vpack.c.bf16 %v552, %v551
      %v582 = vpack.c.bf16 %v554, %v553
      %v583 = vpack.c.bf16 %v556, %v555
      %v584 = vpack.c.bf16 %v558, %v557
      %v585 = vpack.c.bf16 %v560, %v559
      %v586 = vpack.c.bf16 %v562, %v561
      %v587 = vpack.c.bf16 %v564, %v563
      %v588 = vpack.c.bf16 %v566, %v565
      %v589 = vpack.c.bf16 %v568, %v567
      %v590 = vpack.c.bf16 %v570, %v569
      %v591 = vpack.c.bf16 %v572, %v571
      %v592 = vpack.c.bf16 %v574, %v573
      %v593 = vpack.c.bf16 %v576, %v575
      %v594 = vpack.c.bf16 %v578, %v577
      %v595 = vld [vmem:[%s4] sm:$0xf]
      %v596 = vld [vmem:[%s4 + $0x4] sm:$0xf]
      %v597 = vld [vmem:[%s4 + $0x8] sm:$0xf]
      %v598 = vld [vmem:[%s4 + $0xc] sm:$0xf]
      %v599 = vld [vmem:[%s4 + $0x10] sm:$0xf]
      %v600 = vld [vmem:[%s4 + $0x14] sm:$0xf]
      %v601 = vld [vmem:[%s4 + $0x18] sm:$0xf]
      %v602 = vld [vmem:[%s4 + $0x1c] sm:$0xf]
      %v603 = vld [vmem:[%s4 + $0x20] sm:$0xf]
      %v604 = vld [vmem:[%s4 + $0x24] sm:$0xf]
      %v605 = vld [vmem:[%s4 + $0x28] sm:$0xf]
      %v606 = vld [vmem:[%s4 + $0x2c] sm:$0xf]
      %v607 = vld [vmem:[%s4 + $0x30] sm:$0xf]
      %v608 = vld [vmem:[%s4 + $0x34] sm:$0xf]
      %v609 = vld [vmem:[%s4 + $0x38] sm:$0xf]
      %v610 = vld [vmem:[%s4 + $0x3c] sm:$0xf]
      %v611 = vld [vmem:[%s5] sm:$0x1]
      %v613 = vlaneseq
      %v614 = vshrl.u32 %v613, 7
      %v615 = vsub.s32 0, %v614
      %v616 = vrot.slane %v611, %v615
      %v634 = vunpack.c.l.b16 %v595
      %v635 = vunpack.c.l.b16 %v596
      %v636 = vunpack.c.l.b16 %v597
      %v637 = vunpack.c.l.b16 %v598
      %v638 = vunpack.c.l.b16 %v599
      %v639 = vunpack.c.l.b16 %v600
      %v640 = vunpack.c.l.b16 %v601
      %v641 = vunpack.c.l.b16 %v602
      %v642 = vunpack.c.l.b16 %v603
      %v643 = vunpack.c.l.b16 %v604
      %v644 = vunpack.c.l.b16 %v605
      %v645 = vunpack.c.l.b16 %v606
      %v646 = vunpack.c.l.b16 %v607
      %v647 = vunpack.c.l.b16 %v608
      %v648 = vunpack.c.l.b16 %v609
      %v649 = vunpack.c.l.b16 %v610
      %v650 = vpack.c.b16 %v635, %v634
      %v651 = vpack.c.b16 %v637, %v636
      %v652 = vpack.c.b16 %v639, %v638
      %v653 = vpack.c.b16 %v641, %v640
      %v654 = vpack.c.b16 %v643, %v642
      %v655 = vpack.c.b16 %v645, %v644
      %v656 = vpack.c.b16 %v647, %v646
      %v657 = vpack.c.b16 %v649, %v648
      %666 = vmatprep.subr.bf16.mxu0 0
      %667 = vmatpush1.bf16.msra.mxu0 %v650
      %668 = vmatprep.subr.bf16.mxu0 0
      %669 = vmatpush1.bf16.msra.mxu0 %v651
      %670 = vmatprep.subr.bf16.mxu0 0
      %671 = vmatpush1.bf16.msra.mxu0 %v652
      %672 = vmatprep.subr.bf16.mxu0 0
      %673 = vmatpush1.bf16.msra.mxu0 %v653
      %674 = vmatprep.subr.bf16.mxu0 0
      %675 = vmatpush1.bf16.msra.mxu0 %v654
      %676 = vmatprep.subr.bf16.mxu0 0
      %677 = vmatpush1.bf16.msra.mxu0 %v655
      %678 = vmatprep.subr.bf16.mxu0 0
      %679 = vmatpush1.bf16.msra.mxu0 %v656
      %680 = vmatprep.subr.bf16.mxu0 0
      %681 = vmatpush1.bf16.msra.mxu0 %v657
      %682 = vmatprep.subr.bf16.mxu0 0
      %683 = vmatpush1.bf16.msra.mxu0 0
      %684 = vmatprep.subr.bf16.mxu0 0
      %685 = vmatpush1.bf16.msra.mxu0 0
      %686 = vmatprep.subr.bf16.mxu0 0
      %687 = vmatpush1.bf16.msra.mxu0 0
      %688 = vmatprep.subr.bf16.mxu0 0
      %689 = vmatpush1.bf16.msra.mxu0 0
      %690 = vmatprep.subr.bf16.mxu0 0
      %691 = vmatpush1.bf16.msra.mxu0 0
      %692 = vmatprep.subr.bf16.mxu0 0
      %693 = vmatpush1.bf16.msra.mxu0 0
      %694 = vmatprep.subr.bf16.mxu0 0
      %695 = vmatpush1.bf16.msra.mxu0 0
      %696 = vmatprep.subr.bf16.mxu0 0
      %697 = vmatpush1.bf16.msra.mxu0 0
      %698 = vmatprep.mubr.bf16.mxu0 0
      %699 = vmatmul.mubr.bf16.gmra.mrb[0].mxu0 %v579
      %v700 = vpop.f32.mrb[0].mxu0
      %v701 = vadd.f32 %v616, %v700
      %v702 = vpop.f32.mrb[0].mxu0
      %v703 = vpop.f32.mrb[0].mxu0
      %v704 = vadd.f32 %v616, %v703
      %v705 = vpop.f32.mrb[0].mxu0
      %706 = vmatprep.mubr.bf16.mxu0 0
      %707 = vmatmul.mubr.bf16.gmra.mrb[0].mxu0 %v580
      %v708 = vpop.f32.mrb[0].mxu0
      %v709 = vadd.f32 %v616, %v708
      %v710 = vpop.f32.mrb[0].mxu0
      %v711 = vpop.f32.mrb[0].mxu0
      %v712 = vadd.f32 %v616, %v711
      %v713 = vpop.f32.mrb[0].mxu0
      %714 = vmatprep.mubr.bf16.mxu0 0
      %715 = vmatmul.mubr.bf16.gmra.mrb[0].mxu0 %v581
      %v716 = vpop.f32.mrb[0].mxu0
      %v717 = vadd.f32 %v616, %v716
      %v718 = vpop.f32.mrb[0].mxu0
      %v719 = vpop.f32.mrb[0].mxu0
      %v720 = vadd.f32 %v616, %v719
      %v721 = vpop.f32.mrb[0].mxu0
      %722 = vmatprep.mubr.bf16.mxu0 0
      %723 = vmatmul.mubr.bf16.gmra.mrb[0].mxu0 %v582
      %v724 = vpop.f32.mrb[0].mxu0
      %v725 = vadd.f32 %v616, %v724
      %v726 = vpop.f32.mrb[0].mxu0
      %v727 = vpop.f32.mrb[0].mxu0
      %v728 = vadd.f32 %v616, %v727
      %v729 = vpop.f32.mrb[0].mxu0
      %730 = vmatprep.mubr.bf16.mxu0 0
      %731 = vmatmul.mubr.bf16.gmra.mrb[0].mxu0 %v583
      %v732 = vpop.f32.mrb[0].mxu0
      %v733 = vadd.f32 %v616, %v732
      %v734 = vpop.f32.mrb[0].mxu0
      %v735 = vpop.f32.mrb[0].mxu0
      %v736 = vadd.f32 %v616, %v735
      %v737 = vpop.f32.mrb[0].mxu0
      %738 = vmatprep.mubr.bf16.mxu0 0
      %739 = vmatmul.mubr.bf16.gmra.mrb[0].mxu0 %v584
      %v740 = vpop.f32.mrb[0].mxu0
      %v741 = vadd.f32 %v616, %v740
      %v742 = vpop.f32.mrb[0].mxu0
      %v743 = vpop.f32.mrb[0].mxu0
      %v744 = vadd.f32 %v616, %v743
      %v745 = vpop.f32.mrb[0].mxu0
      %746 = vmatprep.mubr.bf16.mxu0 0
      %747 = vmatmul.mubr.bf16.gmra.mrb[0].mxu0 %v585
      %v748 = vpop.f32.mrb[0].mxu0
      %v749 = vadd.f32 %v616, %v748
      %v750 = vpop.f32.mrb[0].mxu0
      %v751 = vpop.f32.mrb[0].mxu0
      %v752 = vadd.f32 %v616, %v751
      %v753 = vpop.f32.mrb[0].mxu0
      %754 = vmatprep.mubr.bf16.mxu0 0
      %755 = vmatmul.mubr.bf16.gmra.mrb[0].mxu0 %v586
      %v756 = vpop.f32.mrb[0].mxu0
      %v757 = vadd.f32 %v616, %v756
      %v758 = vpop.f32.mrb[0].mxu0
      %v759 = vpop.f32.mrb[0].mxu0
      %v760 = vadd.f32 %v616, %v759
      %v761 = vpop.f32.mrb[0].mxu0
      %762 = vmatprep.mubr.bf16.mxu0 0
      %763 = vmatmul.mubr.bf16.gmra.mrb[0].mxu0 %v587
      %v764 = vpop.f32.mrb[0].mxu0
      %v765 = vadd.f32 %v616, %v764
      %v766 = vpop.f32.mrb[0].mxu0
      %v767 = vpop.f32.mrb[0].mxu0
      %v768 = vadd.f32 %v616, %v767
      %v769 = vpop.f32.mrb[0].mxu0
      %770 = vmatprep.mubr.bf16.mxu0 0
      %771 = vmatmul.mubr.bf16.gmra.mrb[0].mxu0 %v588
      %v772 = vpop.f32.mrb[0].mxu0
      %v773 = vadd.f32 %v616, %v772
      %v774 = vpop.f32.mrb[0].mxu0
      %v775 = vpop.f32.mrb[0].mxu0
      %v776 = vadd.f32 %v616, %v775
      %v777 = vpop.f32.mrb[0].mxu0
      %778 = vmatprep.mubr.bf16.mxu0 0
      %779 = vmatmul.mubr.bf16.gmra.mrb[0].mxu0 %v589
      %v780 = vpop.f32.mrb[0].mxu0
      %v781 = vadd.f32 %v616, %v780
      %v782 = vpop.f32.mrb[0].mxu0
      %v783 = vpop.f32.mrb[0].mxu0
      %v784 = vadd.f32 %v616, %v783
      %v785 = vpop.f32.mrb[0].mxu0
      %786 = vmatprep.mubr.bf16.mxu0 0
      %787 = vmatmul.mubr.bf16.gmra.mrb[0].mxu0 %v590
      %v788 = vpop.f32.mrb[0].mxu0
      %v789 = vadd.f32 %v616, %v788
      %v790 = vpop.f32.mrb[0].mxu0
      %v791 = vpop.f32.mrb[0].mxu0
      %v792 = vadd.f32 %v616, %v791
      %v793 = vpop.f32.mrb[0].mxu0
      %794 = vmatprep.mubr.bf16.mxu0 0
      %795 = vmatmul.mubr.bf16.gmra.mrb[0].mxu0 %v591
      %v796 = vpop.f32.mrb[0].mxu0
      %v797 = vadd.f32 %v616, %v796
      %v798 = vpop.f32.mrb[0].mxu0
      %v799 = vpop.f32.mrb[0].mxu0
      %v800 = vadd.f32 %v616, %v799
      %v801 = vpop.f32.mrb[0].mxu0
      %802 = vmatprep.mubr.bf16.mxu0 0
      %803 = vmatmul.mubr.bf16.gmra.mrb[0].mxu0 %v592
      %v804 = vpop.f32.mrb[0].mxu0
      %v805 = vadd.f32 %v616, %v804
      %v806 = vpop.f32.mrb[0].mxu0
      %v807 = vpop.f32.mrb[0].mxu0
      %v808 = vadd.f32 %v616, %v807
      %v809 = vpop.f32.mrb[0].mxu0
      %810 = vmatprep.mubr.bf16.mxu0 0
      %811 = vmatmul.mubr.bf16.gmra.mrb[0].mxu0 %v593
      %v812 = vpop.f32.mrb[0].mxu0
      %v813 = vadd.f32 %v616, %v812
      %v814 = vpop.f32.mrb[0].mxu0
      %v815 = vpop.f32.mrb[0].mxu0
      %v816 = vadd.f32 %v616, %v815
      %v817 = vpop.f32.mrb[0].mxu0
      %818 = vmatprep.mubr.bf16.mxu0 0
      %819 = vmatmul.mubr.bf16.gmra.mrb[0].mxu0 %v594
      %v820 = vpop.f32.mrb[0].mxu0
      %v821 = vadd.f32 %v616, %v820
      %v822 = vpop.f32.mrb[0].mxu0
      %v823 = vpop.f32.mrb[0].mxu0
      %v824 = vadd.f32 %v616, %v823
      %v825 = vpop.f32.mrb[0].mxu0
      %826 = vdwg.mxu0
      %v827 = vadd.f32 %v515, %v701
      %v828 = vadd.f32 %v516, %v704
      %v829 = vadd.f32 %v517, %v709
      %v830 = vadd.f32 %v518, %v712
      %v831 = vadd.f32 %v519, %v717
      %v832 = vadd.f32 %v520, %v720
      %v833 = vadd.f32 %v521, %v725
      %v834 = vadd.f32 %v522, %v728
      %v835 = vadd.f32 %v523, %v733
      %v836 = vadd.f32 %v524, %v736
      %v837 = vadd.f32 %v525, %v741
      %v838 = vadd.f32 %v526, %v744
      %v839 = vadd.f32 %v527, %v749
      %v840 = vadd.f32 %v528, %v752
      %v841 = vadd.f32 %v529, %v757
      %v842 = vadd.f32 %v530, %v760
      %v843 = vadd.f32 %v531, %v765
      %v844 = vadd.f32 %v532, %v768
      %v845 = vadd.f32 %v533, %v773
      %v846 = vadd.f32 %v534, %v776
      %v847 = vadd.f32 %v535, %v781
      %v848 = vadd.f32 %v536, %v784
      %v849 = vadd.f32 %v537, %v789
      %v850 = vadd.f32 %v538, %v792
      %v851 = vadd.f32 %v539, %v797
      %v852 = vadd.f32 %v540, %v800
      %v853 = vadd.f32 %v541, %v805
      %v854 = vadd.f32 %v542, %v808
      %v855 = vadd.f32 %v543, %v813
      %v856 = vadd.f32 %v544, %v816
      %v857 = vadd.f32 %v545, %v821
      %v858 = vadd.f32 %v546, %v824
      %v859 = vmax.f32 %v827, 0.0
      %v860 = vmax.f32 %v828, 0.0
      %v861 = vmax.f32 %v829, 0.0
      %v862 = vmax.f32 %v830, 0.0
      %v863 = vmax.f32 %v831, 0.0
      %v864 = vmax.f32 %v832, 0.0
      %v865 = vmax.f32 %v833, 0.0
      %v866 = vmax.f32 %v834, 0.0
      %v867 = vmax.f32 %v835, 0.0
      %v868 = vmax.f32 %v836, 0.0
      %v869 = vmax.f32 %v837, 0.0
      %v870 = vmax.f32 %v838, 0.0
      %v871 = vmax.f32 %v839, 0.0
      %v872 = vmax.f32 %v840, 0.0
      %v873 = vmax.f32 %v841, 0.0
      %v874 = vmax.f32 %v842, 0.0
      %v875 = vmax.f32 %v843, 0.0
      %v876 = vmax.f32 %v844, 0.0
      %v877 = vmax.f32 %v845, 0.0
      %v878 = vmax.f32 %v846, 0.0
      %v879 = vmax.f32 %v847, 0.0
      %v880 = vmax.f32 %v848, 0.0
      %v881 = vmax.f32 %v849, 0.0
      %v882 = vmax.f32 %v850, 0.0
      %v883 = vmax.f32 %v851, 0.0
      %v884 = vmax.f32 %v852, 0.0
      %v885 = vmax.f32 %v853, 0.0
      %v886 = vmax.f32 %v854, 0.0
      %v887 = vmax.f32 %v855, 0.0
      %v888 = vmax.f32 %v856, 0.0
      %v889 = vmax.f32 %v857, 0.0
      %v890 = vmax.f32 %v858, 0.0
      %v891 = vadd.f32 %v859, %v860
      %v892 = vadd.f32 %v891, %v861
      %v893 = vadd.f32 %v892, %v862
      %v894 = vadd.f32 %v893, %v863
      %v895 = vadd.f32 %v894, %v864
      %v896 = vadd.f32 %v895, %v865
      %v897 = vadd.f32 %v896, %v866
      %v898 = vadd.f32 %v897, %v867
      %v899 = vadd.f32 %v898, %v868
      %v900 = vadd.f32 %v899, %v869
      %v901 = vadd.f32 %v900, %v870
      %v902 = vadd.f32 %v901, %v871
      %v903 = vadd.f32 %v902, %v872
      %v904 = vadd.f32 %v903, %v873
      %v905 = vadd.f32 %v904, %v874
      %v906 = vadd.f32 %v905, %v875
      %v907 = vadd.f32 %v906, %v876
      %v908 = vadd.f32 %v907, %v877
      %v909 = vadd.f32 %v908, %v878
      %v910 = vadd.f32 %v909, %v879
      %v911 = vadd.f32 %v910, %v880
      %v912 = vadd.f32 %v911, %v881
      %v913 = vadd.f32 %v912, %v882
      %v914 = vadd.f32 %v913, %v883
      %v915 = vadd.f32 %v914, %v884
      %v916 = vadd.f32 %v915, %v885
      %v917 = vadd.f32 %v916, %v886
      %v918 = vadd.f32 %v917, %v887
      %v919 = vadd.f32 %v918, %v888
      %v920 = vadd.f32 %v919, %v889
      %v921 = vadd.f32 %v920, %v890
      %v922 = vrot.slane %v921, 4
      %v923 = vadd.f32 %v921, %v922
      %v924 = vrot.slane %v923, 2
      %v925 = vadd.f32 %v923, %v924
      %v926 = vrot.slane %v925, 1
      %v927 = vadd.f32 %v925, %v926
      %v928 = vrcp.pop 256.0
      %v929 = vmul.f32 %v927, %v928
      %v930 = vpack.c.bf16 %v929, %v929
      %v931 = vld [vmem:[%s6] sm:$0xf]
      %v932 = vld [vmem:[%s6 + $0x4] sm:$0xf]
      %v933 = vld [vmem:[%s6 + $0x8] sm:$0xf]
      %v934 = vld [vmem:[%s6 + $0xc] sm:$0xf]
      %v935 = vld [vmem:[%s6 + $0x10] sm:$0xf]
      %v936 = vld [vmem:[%s6 + $0x14] sm:$0xf]
      %v937 = vld [vmem:[%s6 + $0x18] sm:$0xf]
      %v938 = vld [vmem:[%s6 + $0x1c] sm:$0xf]
      %v939 = vld [vmem:[%s6 + $0x20] sm:$0xf]
      %v940 = vld [vmem:[%s6 + $0x24] sm:$0xf]
      %v941 = vld [vmem:[%s6 + $0x28] sm:$0xf]
      %v942 = vld [vmem:[%s6 + $0x2c] sm:$0xf]
      %v943 = vld [vmem:[%s6 + $0x30] sm:$0xf]
      %v944 = vld [vmem:[%s6 + $0x34] sm:$0xf]
      %v945 = vld [vmem:[%s6 + $0x38] sm:$0xf]
      %v946 = vld [vmem:[%s6 + $0x3c] sm:$0xf]
      %v947 = vld [vmem:[%s7] sm:$0x1]
      %v964 = vunpack.c.l.b16 %v931
      %v965 = vunpack.c.l.b16 %v932
      %v966 = vunpack.c.l.b16 %v933
      %v967 = vunpack.c.l.b16 %v934
      %v968 = vunpack.c.l.b16 %v935
      %v969 = vunpack.c.l.b16 %v936
      %v970 = vunpack.c.l.b16 %v937
      %v971 = vunpack.c.l.b16 %v938
      %v972 = vunpack.c.l.b16 %v939
      %v973 = vunpack.c.l.b16 %v940
      %v974 = vunpack.c.l.b16 %v941
      %v975 = vunpack.c.l.b16 %v942
      %v976 = vunpack.c.l.b16 %v943
      %v977 = vunpack.c.l.b16 %v944
      %v978 = vunpack.c.l.b16 %v945
      %v979 = vunpack.c.l.b16 %v946
      %v980 = vpack.c.b16 %v965, %v964
      %v981 = vpack.c.b16 %v967, %v966
      %v982 = vpack.c.b16 %v969, %v968
      %v983 = vpack.c.b16 %v971, %v970
      %v984 = vpack.c.b16 %v973, %v972
      %v985 = vpack.c.b16 %v975, %v974
      %v986 = vpack.c.b16 %v977, %v976
      %v987 = vpack.c.b16 %v979, %v978
      %996 = vmatprep.subr.bf16.mxu0 0
      %997 = vmatpush1.bf16.msra.mxu0 %v980
      %998 = vmatprep.subr.bf16.mxu0 0
      %999 = vmatpush1.bf16.msra.mxu0 %v981
      %1000 = vmatprep.subr.bf16.mxu0 0
      %1001 = vmatpush1.bf16.msra.mxu0 %v982
      %1002 = vmatprep.subr.bf16.mxu0 0
      %1003 = vmatpush1.bf16.msra.mxu0 %v983
      %1004 = vmatprep.subr.bf16.mxu0 0
      %1005 = vmatpush1.bf16.msra.mxu0 %v984
      %1006 = vmatprep.subr.bf16.mxu0 0
      %1007 = vmatpush1.bf16.msra.mxu0 %v985
      %1008 = vmatprep.subr.bf16.mxu0 0
      %1009 = vmatpush1.bf16.msra.mxu0 %v986
      %1010 = vmatprep.subr.bf16.mxu0 0
      %1011 = vmatpush1.bf16.msra.mxu0 %v987
      %1012 = vmatprep.subr.bf16.mxu0 0
      %1013 = vmatpush1.bf16.msra.mxu0 0
      %1014 = vmatprep.subr.bf16.mxu0 0
      %1015 = vmatpush1.bf16.msra.mxu0 0
      %1016 = vmatprep.subr.bf16.mxu0 0
      %1017 = vmatpush1.bf16.msra.mxu0 0
      %1018 = vmatprep.subr.bf16.mxu0 0
      %1019 = vmatpush1.bf16.msra.mxu0 0
      %1020 = vmatprep.subr.bf16.mxu0 0
      %1021 = vmatpush1.bf16.msra.mxu0 0
      %1022 = vmatprep.subr.bf16.mxu0 0
      %1023 = vmatpush1.bf16.msra.mxu0 0
      %1024 = vmatprep.subr.bf16.mxu0 0
      %1025 = vmatpush1.bf16.msra.mxu0 0
      %1026 = vmatprep.subr.bf16.mxu0 0
      %1027 = vmatpush1.bf16.msra.mxu0 0
      %1028 = vmatprep.mubr.bf16.mxu0 0
      %1029 = vmatmul.mubr.bf16.gmra.mrb[0].mxu0 %v930
      %v1030 = vpop.f32.mrb[0].mxu0
      %v1031 = vadd.f32 %v947, %v1030
      %v1032 = vpop.f32.mrb[0].mxu0
      %v1033 = vpop.f32.mrb[0].mxu0
      %v1034 = vpop.f32.mrb[0].mxu0
      %1035 = vdwg.mxu0
      %v1036 = vmax.f32 %v1031, 0.0
      %v1037 = vpack.c.bf16 %v1036, %v1036
      %v1038 = vld [vmem:[%s8] sm:$0xf]
      %v1039 = vld [vmem:[%s8 + $0x4] sm:$0xf]
      %v1040 = vld [vmem:[%s8 + $0x8] sm:$0xf]
      %v1041 = vld [vmem:[%s8 + $0xc] sm:$0xf]
      %v1042 = vld [vmem:[%s8 + $0x10] sm:$0xf]
      %v1043 = vld [vmem:[%s8 + $0x14] sm:$0xf]
      %v1044 = vld [vmem:[%s8 + $0x18] sm:$0xf]
      %v1045 = vld [vmem:[%s8 + $0x1c] sm:$0xf]
      %v1046 = vld [vmem:[%s8 + $0x20] sm:$0xf]
      %v1047 = vld [vmem:[%s8 + $0x24] sm:$0xf]
      %v1048 = vld [vmem:[%s8 + $0x28] sm:$0xf]
      %v1049 = vld [vmem:[%s8 + $0x2c] sm:$0xf]
      %v1050 = vld [vmem:[%s8 + $0x30] sm:$0xf]
      %v1051 = vld [vmem:[%s8 + $0x34] sm:$0xf]
      %v1052 = vld [vmem:[%s8 + $0x38] sm:$0xf]
      %v1053 = vld [vmem:[%s8 + $0x3c] sm:$0xf]
      %v1054 = vld [vmem:[%s9] sm:$0x1]
      %v1071 = vunpack.c.l.b16 %v1038
      %v1072 = vunpack.c.l.b16 %v1039
      %v1073 = vunpack.c.l.b16 %v1040
      %v1074 = vunpack.c.l.b16 %v1041
      %v1075 = vunpack.c.l.b16 %v1042
      %v1076 = vunpack.c.l.b16 %v1043
      %v1077 = vunpack.c.l.b16 %v1044
      %v1078 = vunpack.c.l.b16 %v1045
      %v1079 = vunpack.c.l.b16 %v1046
      %v1080 = vunpack.c.l.b16 %v1047
      %v1081 = vunpack.c.l.b16 %v1048
      %v1082 = vunpack.c.l.b16 %v1049
      %v1083 = vunpack.c.l.b16 %v1050
      %v1084 = vunpack.c.l.b16 %v1051
      %v1085 = vunpack.c.l.b16 %v1052
      %v1086 = vunpack.c.l.b16 %v1053
      %v1087 = vpack.c.b16 %v1072, %v1071
      %v1088 = vpack.c.b16 %v1074, %v1073
      %v1089 = vpack.c.b16 %v1076, %v1075
      %v1090 = vpack.c.b16 %v1078, %v1077
      %v1091 = vpack.c.b16 %v1080, %v1079
      %v1092 = vpack.c.b16 %v1082, %v1081
      %v1093 = vpack.c.b16 %v1084, %v1083
      %v1094 = vpack.c.b16 %v1086, %v1085
      %1103 = vmatprep.subr.bf16.mxu0 0
      %1104 = vmatpush1.bf16.msra.mxu0 %v1087
      %1105 = vmatprep.subr.bf16.mxu0 0
      %1106 = vmatpush1.bf16.msra.mxu0 %v1088
      %1107 = vmatprep.subr.bf16.mxu0 0
      %1108 = vmatpush1.bf16.msra.mxu0 %v1089
      %1109 = vmatprep.subr.bf16.mxu0 0
      %1110 = vmatpush1.bf16.msra.mxu0 %v1090
      %1111 = vmatprep.subr.bf16.mxu0 0
      %1112 = vmatpush1.bf16.msra.mxu0 %v1091
      %1113 = vmatprep.subr.bf16.mxu0 0
      %1114 = vmatpush1.bf16.msra.mxu0 %v1092
      %1115 = vmatprep.subr.bf16.mxu0 0
      %1116 = vmatpush1.bf16.msra.mxu0 %v1093
      %1117 = vmatprep.subr.bf16.mxu0 0
      %1118 = vmatpush1.bf16.msra.mxu0 %v1094
      %1119 = vmatprep.subr.bf16.mxu0 0
      %1120 = vmatpush1.bf16.msra.mxu0 0
      %1121 = vmatprep.subr.bf16.mxu0 0
      %1122 = vmatpush1.bf16.msra.mxu0 0
      %1123 = vmatprep.subr.bf16.mxu0 0
      %1124 = vmatpush1.bf16.msra.mxu0 0
      %1125 = vmatprep.subr.bf16.mxu0 0
      %1126 = vmatpush1.bf16.msra.mxu0 0
      %1127 = vmatprep.subr.bf16.mxu0 0
      %1128 = vmatpush1.bf16.msra.mxu0 0
      %1129 = vmatprep.subr.bf16.mxu0 0
      %1130 = vmatpush1.bf16.msra.mxu0 0
      %1131 = vmatprep.subr.bf16.mxu0 0
      %1132 = vmatpush1.bf16.msra.mxu0 0
      %1133 = vmatprep.subr.bf16.mxu0 0
      %1134 = vmatpush1.bf16.msra.mxu0 0
      %1135 = vmatprep.mubr.bf16.mxu0 0
      %1136 = vmatmul.mubr.bf16.gmra.mrb[0].mxu0 %v1037
      %v1137 = vpop.f32.mrb[0].mxu0
      %v1138 = vadd.f32 %v1054, %v1137
      %v1139 = vpop.f32.mrb[0].mxu0
      %v1140 = vpop.f32.mrb[0].mxu0
      %v1141 = vpop.f32.mrb[0].mxu0
      %1142 = vdwg.mxu0
      %v1143 = vxor.u32 %v1138, 2147483648
      %v1144 = vmul.f32 %v1143, 1.442695
      %v1145 = vpow.pop %v1144
      %v1146 = vadd.f32 %v1145, 1.0
      %v1147 = vrcp.pop %v1146
      %v1148 = vmul.f32 1.0, %v1147
      %v1149 = vpack.c.bf16 %v860, %v859
      %v1150 = vpack.c.bf16 %v862, %v861
      %v1151 = vpack.c.bf16 %v864, %v863
      %v1152 = vpack.c.bf16 %v866, %v865
      %v1153 = vpack.c.bf16 %v868, %v867
      %v1154 = vpack.c.bf16 %v870, %v869
      %v1155 = vpack.c.bf16 %v872, %v871
      %v1156 = vpack.c.bf16 %v874, %v873
      %v1157 = vpack.c.bf16 %v876, %v875
      %v1158 = vpack.c.bf16 %v878, %v877
      %v1159 = vpack.c.bf16 %v880, %v879
      %v1160 = vpack.c.bf16 %v882, %v881
      %v1161 = vpack.c.bf16 %v884, %v883
      %v1162 = vpack.c.bf16 %v886, %v885
      %v1163 = vpack.c.bf16 %v888, %v887
      %v1164 = vpack.c.bf16 %v890, %v889
      %v1165 = vld [vmem:[%s10] sm:$0xf]
      %v1166 = vld [vmem:[%s10 + $0x4] sm:$0xf]
      %v1167 = vld [vmem:[%s10 + $0x8] sm:$0xf]
      %v1168 = vld [vmem:[%s10 + $0xc] sm:$0xf]
      %v1169 = vld [vmem:[%s10 + $0x10] sm:$0xf]
      %v1170 = vld [vmem:[%s10 + $0x14] sm:$0xf]
      %v1171 = vld [vmem:[%s10 + $0x18] sm:$0xf]
      %v1172 = vld [vmem:[%s10 + $0x1c] sm:$0xf]
      %v1173 = vld [vmem:[%s10 + $0x20] sm:$0xf]
      %v1174 = vld [vmem:[%s10 + $0x24] sm:$0xf]
      %v1175 = vld [vmem:[%s10 + $0x28] sm:$0xf]
      %v1176 = vld [vmem:[%s10 + $0x2c] sm:$0xf]
      %v1177 = vld [vmem:[%s10 + $0x30] sm:$0xf]
      %v1178 = vld [vmem:[%s10 + $0x34] sm:$0xf]
      %v1179 = vld [vmem:[%s10 + $0x38] sm:$0xf]
      %v1180 = vld [vmem:[%s10 + $0x3c] sm:$0xf]
      %v1181 = vld [vmem:[#allocation2] sm:$0x1]
      %v1183 = vlaneseq
      %v1184 = vshrl.u32 %v1183, 7
      %v1185 = vsub.s32 0, %v1184
      %v1186 = vrot.slane %v1181, %v1185
      %v1204 = vunpack.c.l.b16 %v1165
      %v1205 = vunpack.c.l.b16 %v1166
      %v1206 = vunpack.c.l.b16 %v1167
      %v1207 = vunpack.c.l.b16 %v1168
      %v1208 = vunpack.c.l.b16 %v1169
      %v1209 = vunpack.c.l.b16 %v1170
      %v1210 = vunpack.c.l.b16 %v1171
      %v1211 = vunpack.c.l.b16 %v1172
      %v1212 = vunpack.c.l.b16 %v1173
      %v1213 = vunpack.c.l.b16 %v1174
      %v1214 = vunpack.c.l.b16 %v1175
      %v1215 = vunpack.c.l.b16 %v1176
      %v1216 = vunpack.c.l.b16 %v1177
      %v1217 = vunpack.c.l.b16 %v1178
      %v1218 = vunpack.c.l.b16 %v1179
      %v1219 = vunpack.c.l.b16 %v1180
      %v1220 = vpack.c.b16 %v1205, %v1204
      %v1221 = vpack.c.b16 %v1207, %v1206
      %v1222 = vpack.c.b16 %v1209, %v1208
      %v1223 = vpack.c.b16 %v1211, %v1210
      %v1224 = vpack.c.b16 %v1213, %v1212
      %v1225 = vpack.c.b16 %v1215, %v1214
      %v1226 = vpack.c.b16 %v1217, %v1216
      %v1227 = vpack.c.b16 %v1219, %v1218
      %1236 = vmatprep.subr.bf16.mxu0 0
      %1237 = vmatpush1.bf16.msra.mxu0 %v1220
      %1238 = vmatprep.subr.bf16.mxu0 0
      %1239 = vmatpush1.bf16.msra.mxu0 %v1221
      %1240 = vmatprep.subr.bf16.mxu0 0
      %1241 = vmatpush1.bf16.msra.mxu0 %v1222
      %1242 = vmatprep.subr.bf16.mxu0 0
      %1243 = vmatpush1.bf16.msra.mxu0 %v1223
      %1244 = vmatprep.subr.bf16.mxu0 0
      %1245 = vmatpush1.bf16.msra.mxu0 %v1224
      %1246 = vmatprep.subr.bf16.mxu0 0
      %1247 = vmatpush1.bf16.msra.mxu0 %v1225
      %1248 = vmatprep.subr.bf16.mxu0 0
      %1249 = vmatpush1.bf16.msra.mxu0 %v1226
      %1250 = vmatprep.subr.bf16.mxu0 0
      %1251 = vmatpush1.bf16.msra.mxu0 %v1227
      %1252 = vmatprep.subr.bf16.mxu0 0
      %1253 = vmatpush1.bf16.msra.mxu0 0
      %1254 = vmatprep.subr.bf16.mxu0 0
      %1255 = vmatpush1.bf16.msra.mxu0 0
      %1256 = vmatprep.subr.bf16.mxu0 0
      %1257 = vmatpush1.bf16.msra.mxu0 0
      %1258 = vmatprep.subr.bf16.mxu0 0
      %1259 = vmatpush1.bf16.msra.mxu0 0
      %1260 = vmatprep.subr.bf16.mxu0 0
      %1261 = vmatpush1.bf16.msra.mxu0 0
      %1262 = vmatprep.subr.bf16.mxu0 0
      %1263 = vmatpush1.bf16.msra.mxu0 0
      %1264 = vmatprep.subr.bf16.mxu0 0
      %1265 = vmatpush1.bf16.msra.mxu0 0
      %1266 = vmatprep.subr.bf16.mxu0 0
      %1267 = vmatpush1.bf16.msra.mxu0 0
      %1268 = vmatprep.mubr.bf16.mxu0 0
      %1269 = vmatmul.mubr.bf16.gmra.mrb[0].mxu0 %v1149
      %v1270 = vpop.f32.mrb[0].mxu0
      %v1271 = vadd.f32 %v1186, %v1270
      %v1272 = vpop.f32.mrb[0].mxu0
      %v1273 = vpop.f32.mrb[0].mxu0
      %v1274 = vadd.f32 %v1186, %v1273
      %v1275 = vpop.f32.mrb[0].mxu0
      %1276 = vmatprep.mubr.bf16.mxu0 0
      %1277 = vmatmul.mubr.bf16.gmra.mrb[0].mxu0 %v1150
      %v1278 = vpop.f32.mrb[0].mxu0
      %v1279 = vadd.f32 %v1186, %v1278
      %v1280 = vpop.f32.mrb[0].mxu0
      %v1281 = vpop.f32.mrb[0].mxu0
      %v1282 = vadd.f32 %v1186, %v1281
      %v1283 = vpop.f32.mrb[0].mxu0
      %1284 = vmatprep.mubr.bf16.mxu0 0
      %1285 = vmatmul.mubr.bf16.gmra.mrb[0].mxu0 %v1151
      %v1286 = vpop.f32.mrb[0].mxu0
      %v1287 = vadd.f32 %v1186, %v1286
      %v1288 = vpop.f32.mrb[0].mxu0
      %v1289 = vpop.f32.mrb[0].mxu0
      %v1290 = vadd.f32 %v1186, %v1289
      %v1291 = vpop.f32.mrb[0].mxu0
      %1292 = vmatprep.mubr.bf16.mxu0 0
      %1293 = vmatmul.mubr.bf16.gmra.mrb[0].mxu0 %v1152
      %v1294 = vpop.f32.mrb[0].mxu0
      %v1295 = vadd.f32 %v1186, %v1294
      %v1296 = vpop.f32.mrb[0].mxu0
      %v1297 = vpop.f32.mrb[0].mxu0
      %v1298 = vadd.f32 %v1186, %v1297
      %v1299 = vpop.f32.mrb[0].mxu0
      %1300 = vmatprep.mubr.bf16.mxu0 0
      %1301 = vmatmul.mubr.bf16.gmra.mrb[0].mxu0 %v1153
      %v1302 = vpop.f32.mrb[0].mxu0
      %v1303 = vadd.f32 %v1186, %v1302
      %v1304 = vpop.f32.mrb[0].mxu0
      %v1305 = vpop.f32.mrb[0].mxu0
      %v1306 = vadd.f32 %v1186, %v1305
      %v1307 = vpop.f32.mrb[0].mxu0
      %1308 = vmatprep.mubr.bf16.mxu0 0
      %1309 = vmatmul.mubr.bf16.gmra.mrb[0].mxu0 %v1154
      %v1310 = vpop.f32.mrb[0].mxu0
      %v1311 = vadd.f32 %v1186, %v1310
      %v1312 = vpop.f32.mrb[0].mxu0
      %v1313 = vpop.f32.mrb[0].mxu0
      %v1314 = vadd.f32 %v1186, %v1313
      %v1315 = vpop.f32.mrb[0].mxu0
      %1316 = vmatprep.mubr.bf16.mxu0 0
      %1317 = vmatmul.mubr.bf16.gmra.mrb[0].mxu0 %v1155
      %v1318 = vpop.f32.mrb[0].mxu0
      %v1319 = vadd.f32 %v1186, %v1318
      %v1320 = vpop.f32.mrb[0].mxu0
      %v1321 = vpop.f32.mrb[0].mxu0
      %v1322 = vadd.f32 %v1186, %v1321
      %v1323 = vpop.f32.mrb[0].mxu0
      %1324 = vmatprep.mubr.bf16.mxu0 0
      %1325 = vmatmul.mubr.bf16.gmra.mrb[0].mxu0 %v1156
      %v1326 = vpop.f32.mrb[0].mxu0
      %v1327 = vadd.f32 %v1186, %v1326
      %v1328 = vpop.f32.mrb[0].mxu0
      %v1329 = vpop.f32.mrb[0].mxu0
      %v1330 = vadd.f32 %v1186, %v1329
      %v1331 = vpop.f32.mrb[0].mxu0
      %1332 = vmatprep.mubr.bf16.mxu0 0
      %1333 = vmatmul.mubr.bf16.gmra.mrb[0].mxu0 %v1157
      %v1334 = vpop.f32.mrb[0].mxu0
      %v1335 = vadd.f32 %v1186, %v1334
      %v1336 = vpop.f32.mrb[0].mxu0
      %v1337 = vpop.f32.mrb[0].mxu0
      %v1338 = vadd.f32 %v1186, %v1337
      %v1339 = vpop.f32.mrb[0].mxu0
      %1340 = vmatprep.mubr.bf16.mxu0 0
      %1341 = vmatmul.mubr.bf16.gmra.mrb[0].mxu0 %v1158
      %v1342 = vpop.f32.mrb[0].mxu0
      %v1343 = vadd.f32 %v1186, %v1342
      %v1344 = vpop.f32.mrb[0].mxu0
      %v1345 = vpop.f32.mrb[0].mxu0
      %v1346 = vadd.f32 %v1186, %v1345
      %v1347 = vpop.f32.mrb[0].mxu0
      %1348 = vmatprep.mubr.bf16.mxu0 0
      %1349 = vmatmul.mubr.bf16.gmra.mrb[0].mxu0 %v1159
      %v1350 = vpop.f32.mrb[0].mxu0
      %v1351 = vadd.f32 %v1186, %v1350
      %v1352 = vpop.f32.mrb[0].mxu0
      %v1353 = vpop.f32.mrb[0].mxu0
      %v1354 = vadd.f32 %v1186, %v1353
      %v1355 = vpop.f32.mrb[0].mxu0
      %1356 = vmatprep.mubr.bf16.mxu0 0
      %1357 = vmatmul.mubr.bf16.gmra.mrb[0].mxu0 %v1160
      %v1358 = vpop.f32.mrb[0].mxu0
      %v1359 = vadd.f32 %v1186, %v1358
      %v1360 = vpop.f32.mrb[0].mxu0
      %v1361 = vpop.f32.mrb[0].mxu0
      %v1362 = vadd.f32 %v1186, %v1361
      %v1363 = vpop.f32.mrb[0].mxu0
      %1364 = vmatprep.mubr.bf16.mxu0 0
      %1365 = vmatmul.mubr.bf16.gmra.mrb[0].mxu0 %v1161
      %v1366 = vpop.f32.mrb[0].mxu0
      %v1367 = vadd.f32 %v1186, %v1366
      %v1368 = vpop.f32.mrb[0].mxu0
      %v1369 = vpop.f32.mrb[0].mxu0
      %v1370 = vadd.f32 %v1186, %v1369
      %v1371 = vpop.f32.mrb[0].mxu0
      %1372 = vmatprep.mubr.bf16.mxu0 0
      %1373 = vmatmul.mubr.bf16.gmra.mrb[0].mxu0 %v1162
      %v1374 = vpop.f32.mrb[0].mxu0
      %v1375 = vadd.f32 %v1186, %v1374
      %v1376 = vpop.f32.mrb[0].mxu0
      %v1377 = vpop.f32.mrb[0].mxu0
      %v1378 = vadd.f32 %v1186, %v1377
      %v1379 = vpop.f32.mrb[0].mxu0
      %1380 = vmatprep.mubr.bf16.mxu0 0
      %1381 = vmatmul.mubr.bf16.gmra.mrb[0].mxu0 %v1163
      %v1382 = vpop.f32.mrb[0].mxu0
      %v1383 = vadd.f32 %v1186, %v1382
      %v1384 = vpop.f32.mrb[0].mxu0
      %v1385 = vpop.f32.mrb[0].mxu0
      %v1386 = vadd.f32 %v1186, %v1385
      %v1387 = vpop.f32.mrb[0].mxu0
      %1388 = vmatprep.mubr.bf16.mxu0 0
      %1389 = vmatmul.mubr.bf16.gmra.mrb[0].mxu0 %v1164
      %v1390 = vpop.f32.mrb[0].mxu0
      %v1391 = vadd.f32 %v1186, %v1390
      %v1392 = vpop.f32.mrb[0].mxu0
      %v1393 = vpop.f32.mrb[0].mxu0
      %v1394 = vadd.f32 %v1186, %v1393
      %v1395 = vpop.f32.mrb[0].mxu0
      %1396 = vdwg.mxu0
      %v1397 = vxor.u32 %v1271, 2147483648
      %v1398 = vxor.u32 %v1274, 2147483648
      %v1399 = vxor.u32 %v1279, 2147483648
      %v1400 = vxor.u32 %v1282, 2147483648
      %v1401 = vxor.u32 %v1287, 2147483648
      %v1402 = vxor.u32 %v1290, 2147483648
      %v1403 = vxor.u32 %v1295, 2147483648
      %v1404 = vxor.u32 %v1298, 2147483648
      %v1405 = vxor.u32 %v1303, 2147483648
      %v1406 = vxor.u32 %v1306, 2147483648
      %v1407 = vxor.u32 %v1311, 2147483648
      %v1408 = vxor.u32 %v1314, 2147483648
      %v1409 = vxor.u32 %v1319, 2147483648
      %v1410 = vxor.u32 %v1322, 2147483648
      %v1411 = vxor.u32 %v1327, 2147483648
      %v1412 = vxor.u32 %v1330, 2147483648
      %v1413 = vxor.u32 %v1335, 2147483648
      %v1414 = vxor.u32 %v1338, 2147483648
      %v1415 = vxor.u32 %v1343, 2147483648
      %v1416 = vxor.u32 %v1346, 2147483648
      %v1417 = vxor.u32 %v1351, 2147483648
      %v1418 = vxor.u32 %v1354, 2147483648
      %v1419 = vxor.u32 %v1359, 2147483648
      %v1420 = vxor.u32 %v1362, 2147483648
      %v1421 = vxor.u32 %v1367, 2147483648
      %v1422 = vxor.u32 %v1370, 2147483648
      %v1423 = vxor.u32 %v1375, 2147483648
      %v1424 = vxor.u32 %v1378, 2147483648
      %v1425 = vxor.u32 %v1383, 2147483648
      %v1426 = vxor.u32 %v1386, 2147483648
      %v1427 = vxor.u32 %v1391, 2147483648
      %v1428 = vxor.u32 %v1394, 2147483648
      %v1429 = vmul.f32 %v1397, 1.442695
      %v1430 = vpow.pop %v1429
      %v1431 = vmul.f32 %v1398, 1.442695
      %v1432 = vpow.pop %v1431
      %v1433 = vmul.f32 %v1399, 1.442695
      %v1434 = vpow.pop %v1433
      %v1435 = vmul.f32 %v1400, 1.442695
      %v1436 = vpow.pop %v1435
      %v1437 = vmul.f32 %v1401, 1.442695
      %v1438 = vpow.pop %v1437
      %v1439 = vmul.f32 %v1402, 1.442695
      %v1440 = vpow.pop %v1439
      %v1441 = vmul.f32 %v1403, 1.442695
      %v1442 = vpow.pop %v1441
      %v1443 = vmul.f32 %v1404, 1.442695
      %v1444 = vpow.pop %v1443
      %v1445 = vmul.f32 %v1405, 1.442695
      %v1446 = vpow.pop %v1445
      %v1447 = vmul.f32 %v1406, 1.442695
      %v1448 = vpow.pop %v1447
      %v1449 = vmul.f32 %v1407, 1.442695
      %v1450 = vpow.pop %v1449
      %v1451 = vmul.f32 %v1408, 1.442695
      %v1452 = vpow.pop %v1451
      %v1453 = vmul.f32 %v1409, 1.442695
      %v1454 = vpow.pop %v1453
      %v1455 = vmul.f32 %v1410, 1.442695
      %v1456 = vpow.pop %v1455
      %v1457 = vmul.f32 %v1411, 1.442695
      %v1458 = vpow.pop %v1457
      %v1459 = vmul.f32 %v1412, 1.442695
      %v1460 = vpow.pop %v1459
      %v1461 = vmul.f32 %v1413, 1.442695
      %v1462 = vpow.pop %v1461
      %v1463 = vmul.f32 %v1414, 1.442695
      %v1464 = vpow.pop %v1463
      %v1465 = vmul.f32 %v1415, 1.442695
      %v1466 = vpow.pop %v1465
      %v1467 = vmul.f32 %v1416, 1.442695
      %v1468 = vpow.pop %v1467
      %v1469 = vmul.f32 %v1417, 1.442695
      %v1470 = vpow.pop %v1469
      %v1471 = vmul.f32 %v1418, 1.442695
      %v1472 = vpow.pop %v1471
      %v1473 = vmul.f32 %v1419, 1.442695
      %v1474 = vpow.pop %v1473
      %v1475 = vmul.f32 %v1420, 1.442695
      %v1476 = vpow.pop %v1475
      %v1477 = vmul.f32 %v1421, 1.442695
      %v1478 = vpow.pop %v1477
      %v1479 = vmul.f32 %v1422, 1.442695
      %v1480 = vpow.pop %v1479
      %v1481 = vmul.f32 %v1423, 1.442695
      %v1482 = vpow.pop %v1481
      %v1483 = vmul.f32 %v1424, 1.442695
      %v1484 = vpow.pop %v1483
      %v1485 = vmul.f32 %v1425, 1.442695
      %v1486 = vpow.pop %v1485
      %v1487 = vmul.f32 %v1426, 1.442695
      %v1488 = vpow.pop %v1487
      %v1489 = vmul.f32 %v1427, 1.442695
      %v1490 = vpow.pop %v1489
      %v1491 = vmul.f32 %v1428, 1.442695
      %v1492 = vpow.pop %v1491
      %v1493 = vadd.f32 %v1430, 1.0
      %v1494 = vadd.f32 %v1432, 1.0
      %v1495 = vadd.f32 %v1434, 1.0
      %v1496 = vadd.f32 %v1436, 1.0
      %v1497 = vadd.f32 %v1438, 1.0
      %v1498 = vadd.f32 %v1440, 1.0
      %v1499 = vadd.f32 %v1442, 1.0
      %v1500 = vadd.f32 %v1444, 1.0
      %v1501 = vadd.f32 %v1446, 1.0
      %v1502 = vadd.f32 %v1448, 1.0
      %v1503 = vadd.f32 %v1450, 1.0
      %v1504 = vadd.f32 %v1452, 1.0
      %v1505 = vadd.f32 %v1454, 1.0
      %v1506 = vadd.f32 %v1456, 1.0
      %v1507 = vadd.f32 %v1458, 1.0
      %v1508 = vadd.f32 %v1460, 1.0
      %v1509 = vadd.f32 %v1462, 1.0
      %v1510 = vadd.f32 %v1464, 1.0
      %v1511 = vadd.f32 %v1466, 1.0
      %v1512 = vadd.f32 %v1468, 1.0
      %v1513 = vadd.f32 %v1470, 1.0
      %v1514 = vadd.f32 %v1472, 1.0
      %v1515 = vadd.f32 %v1474, 1.0
      %v1516 = vadd.f32 %v1476, 1.0
      %v1517 = vadd.f32 %v1478, 1.0
      %v1518 = vadd.f32 %v1480, 1.0
      %v1519 = vadd.f32 %v1482, 1.0
      %v1520 = vadd.f32 %v1484, 1.0
      %v1521 = vadd.f32 %v1486, 1.0
      %v1522 = vadd.f32 %v1488, 1.0
      %v1523 = vadd.f32 %v1490, 1.0
      %v1524 = vadd.f32 %v1492, 1.0
      %v1525 = vrcp.pop %v1493
      %v1526 = vmul.f32 1.0, %v1525
      %v1527 = vrcp.pop %v1494
      %v1528 = vmul.f32 1.0, %v1527
      %v1529 = vrcp.pop %v1495
      %v1530 = vmul.f32 1.0, %v1529
      %v1531 = vrcp.pop %v1496
      %v1532 = vmul.f32 1.0, %v1531
      %v1533 = vrcp.pop %v1497
      %v1534 = vmul.f32 1.0, %v1533
      %v1535 = vrcp.pop %v1498
      %v1536 = vmul.f32 1.0, %v1535
      %v1537 = vrcp.pop %v1499
      %v1538 = vmul.f32 1.0, %v1537
      %v1539 = vrcp.pop %v1500
      %v1540 = vmul.f32 1.0, %v1539
      %v1541 = vrcp.pop %v1501
      %v1542 = vmul.f32 1.0, %v1541
      %v1543 = vrcp.pop %v1502
      %v1544 = vmul.f32 1.0, %v1543
      %v1545 = vrcp.pop %v1503
      %v1546 = vmul.f32 1.0, %v1545
      %v1547 = vrcp.pop %v1504
      %v1548 = vmul.f32 1.0, %v1547
      %v1549 = vrcp.pop %v1505
      %v1550 = vmul.f32 1.0, %v1549
      %v1551 = vrcp.pop %v1506
      %v1552 = vmul.f32 1.0, %v1551
      %v1553 = vrcp.pop %v1507
      %v1554 = vmul.f32 1.0, %v1553
      %v1555 = vrcp.pop %v1508
      %v1556 = vmul.f32 1.0, %v1555
      %v1557 = vrcp.pop %v1509
      %v1558 = vmul.f32 1.0, %v1557
      %v1559 = vrcp.pop %v1510
      %v1560 = vmul.f32 1.0, %v1559
      %v1561 = vrcp.pop %v1511
      %v1562 = vmul.f32 1.0, %v1561
      %v1563 = vrcp.pop %v1512
      %v1564 = vmul.f32 1.0, %v1563
      %v1565 = vrcp.pop %v1513
      %v1566 = vmul.f32 1.0, %v1565
      %v1567 = vrcp.pop %v1514
      %v1568 = vmul.f32 1.0, %v1567
      %v1569 = vrcp.pop %v1515
      %v1570 = vmul.f32 1.0, %v1569
      %v1571 = vrcp.pop %v1516
      %v1572 = vmul.f32 1.0, %v1571
      %v1573 = vrcp.pop %v1517
      %v1574 = vmul.f32 1.0, %v1573
      %v1575 = vrcp.pop %v1518
      %v1576 = vmul.f32 1.0, %v1575
      %v1577 = vrcp.pop %v1519
      %v1578 = vmul.f32 1.0, %v1577
      %v1579 = vrcp.pop %v1520
      %v1580 = vmul.f32 1.0, %v1579
      %v1581 = vrcp.pop %v1521
      %v1582 = vmul.f32 1.0, %v1581
      %v1583 = vrcp.pop %v1522
      %v1584 = vmul.f32 1.0, %v1583
      %v1585 = vrcp.pop %v1523
      %v1586 = vmul.f32 1.0, %v1585
      %v1587 = vrcp.pop %v1524
      %v1588 = vmul.f32 1.0, %v1587
      %v1589 = vlaneseq
      %v1590 = vshrl.u32 %v1589, 7
      %v1591 = vsub.s32 0, %v1590
      %v1592 = vrot.slane %v1148, %v1591
      %v1593 = vmul.f32 %v859, %v1592
      %v1594 = vmul.f32 %v860, %v1592
      %v1595 = vmul.f32 %v861, %v1592
      %v1596 = vmul.f32 %v862, %v1592
      %v1597 = vmul.f32 %v863, %v1592
      %v1598 = vmul.f32 %v864, %v1592
      %v1599 = vmul.f32 %v865, %v1592
      %v1600 = vmul.f32 %v866, %v1592
      %v1601 = vmul.f32 %v867, %v1592
      %v1602 = vmul.f32 %v868, %v1592
      %v1603 = vmul.f32 %v869, %v1592
      %v1604 = vmul.f32 %v870, %v1592
      %v1605 = vmul.f32 %v871, %v1592
      %v1606 = vmul.f32 %v872, %v1592
      %v1607 = vmul.f32 %v873, %v1592
      %v1608 = vmul.f32 %v874, %v1592
      %v1609 = vmul.f32 %v875, %v1592
      %v1610 = vmul.f32 %v876, %v1592
      %v1611 = vmul.f32 %v877, %v1592
      %v1612 = vmul.f32 %v878, %v1592
      %v1613 = vmul.f32 %v879, %v1592
      %v1614 = vmul.f32 %v880, %v1592
      %v1615 = vmul.f32 %v881, %v1592
      %v1616 = vmul.f32 %v882, %v1592
      %v1617 = vmul.f32 %v883, %v1592
      %v1618 = vmul.f32 %v884, %v1592
      %v1619 = vmul.f32 %v885, %v1592
      %v1620 = vmul.f32 %v886, %v1592
      %v1621 = vmul.f32 %v887, %v1592
      %v1622 = vmul.f32 %v888, %v1592
      %v1623 = vmul.f32 %v889, %v1592
      %v1624 = vmul.f32 %v890, %v1592
      %1626 = vset.pattern.permute.xlu0 0
      %1627 = vperm.xlu0 %1626, %v1526
      %v1628 = vpop.permute.xlu0 %1627
      %1631 = vset.pattern.permute.xlu0 0
      %1632 = vperm.xlu0 %1631, %v1528
      %v1633 = vpop.permute.xlu0 %1632
      %1636 = vset.pattern.permute.xlu0 0
      %1637 = vperm.xlu0 %1636, %v1530
      %v1638 = vpop.permute.xlu0 %1637
      %1641 = vset.pattern.permute.xlu0 0
      %1642 = vperm.xlu0 %1641, %v1532
      %v1643 = vpop.permute.xlu0 %1642
      %1646 = vset.pattern.permute.xlu0 0
      %1647 = vperm.xlu0 %1646, %v1534
      %v1648 = vpop.permute.xlu0 %1647
      %1651 = vset.pattern.permute.xlu0 0
      %1652 = vperm.xlu0 %1651, %v1536
      %v1653 = vpop.permute.xlu0 %1652
      %1656 = vset.pattern.permute.xlu0 0
      %1657 = vperm.xlu0 %1656, %v1538
      %v1658 = vpop.permute.xlu0 %1657
      %1661 = vset.pattern.permute.xlu0 0
      %1662 = vperm.xlu0 %1661, %v1540
      %v1663 = vpop.permute.xlu0 %1662
      %1666 = vset.pattern.permute.xlu0 0
      %1667 = vperm.xlu0 %1666, %v1542
      %v1668 = vpop.permute.xlu0 %1667
      %1671 = vset.pattern.permute.xlu0 0
      %1672 = vperm.xlu0 %1671, %v1544
      %v1673 = vpop.permute.xlu0 %1672
      %1676 = vset.pattern.permute.xlu0 0
      %1677 = vperm.xlu0 %1676, %v1546
      %v1678 = vpop.permute.xlu0 %1677
      %1681 = vset.pattern.permute.xlu0 0
      %1682 = vperm.xlu0 %1681, %v1548
      %v1683 = vpop.permute.xlu0 %1682
      %1686 = vset.pattern.permute.xlu0 0
      %1687 = vperm.xlu0 %1686, %v1550
      %v1688 = vpop.permute.xlu0 %1687
      %1691 = vset.pattern.permute.xlu0 0
      %1692 = vperm.xlu0 %1691, %v1552
      %v1693 = vpop.permute.xlu0 %1692
      %1696 = vset.pattern.permute.xlu0 0
      %1697 = vperm.xlu0 %1696, %v1554
      %v1698 = vpop.permute.xlu0 %1697
      %1701 = vset.pattern.permute.xlu0 0
      %1702 = vperm.xlu0 %1701, %v1556
      %v1703 = vpop.permute.xlu0 %1702
      %1706 = vset.pattern.permute.xlu0 0
      %1707 = vperm.xlu0 %1706, %v1558
      %v1708 = vpop.permute.xlu0 %1707
      %1711 = vset.pattern.permute.xlu0 0
      %1712 = vperm.xlu0 %1711, %v1560
      %v1713 = vpop.permute.xlu0 %1712
      %1716 = vset.pattern.permute.xlu0 0
      %1717 = vperm.xlu0 %1716, %v1562
      %v1718 = vpop.permute.xlu0 %1717
      %1721 = vset.pattern.permute.xlu0 0
      %1722 = vperm.xlu0 %1721, %v1564
      %v1723 = vpop.permute.xlu0 %1722
      %1726 = vset.pattern.permute.xlu0 0
      %1727 = vperm.xlu0 %1726, %v1566
      %v1728 = vpop.permute.xlu0 %1727
      %1731 = vset.pattern.permute.xlu0 0
      %1732 = vperm.xlu0 %1731, %v1568
      %v1733 = vpop.permute.xlu0 %1732
      %1736 = vset.pattern.permute.xlu0 0
      %1737 = vperm.xlu0 %1736, %v1570
      %v1738 = vpop.permute.xlu0 %1737
      %1741 = vset.pattern.permute.xlu0 0
      %1742 = vperm.xlu0 %1741, %v1572
      %v1743 = vpop.permute.xlu0 %1742
      %1746 = vset.pattern.permute.xlu0 0
      %1747 = vperm.xlu0 %1746, %v1574
      %v1748 = vpop.permute.xlu0 %1747
      %1751 = vset.pattern.permute.xlu0 0
      %1752 = vperm.xlu0 %1751, %v1576
      %v1753 = vpop.permute.xlu0 %1752
      %1756 = vset.pattern.permute.xlu0 0
      %1757 = vperm.xlu0 %1756, %v1578
      %v1758 = vpop.permute.xlu0 %1757
      %1761 = vset.pattern.permute.xlu0 0
      %1762 = vperm.xlu0 %1761, %v1580
      %v1763 = vpop.permute.xlu0 %1762
      %1766 = vset.pattern.permute.xlu0 0
      %1767 = vperm.xlu0 %1766, %v1582
      %v1768 = vpop.permute.xlu0 %1767
      %1771 = vset.pattern.permute.xlu0 0
      %1772 = vperm.xlu0 %1771, %v1584
      %v1773 = vpop.permute.xlu0 %1772
      %1776 = vset.pattern.permute.xlu0 0
      %1777 = vperm.xlu0 %1776, %v1586
      %v1778 = vpop.permute.xlu0 %1777
      %1781 = vset.pattern.permute.xlu0 0
      %1782 = vperm.xlu0 %1781, %v1588
      %v1783 = vpop.permute.xlu0 %1782
      %v1785 = vmul.f32 %v859, %v1628
      %v1786 = vmul.f32 %v860, %v1633
      %v1787 = vmul.f32 %v861, %v1638
      %v1788 = vmul.f32 %v862, %v1643
      %v1789 = vmul.f32 %v863, %v1648
      %v1790 = vmul.f32 %v864, %v1653
      %v1791 = vmul.f32 %v865, %v1658
      %v1792 = vmul.f32 %v866, %v1663
      %v1793 = vmul.f32 %v867, %v1668
      %v1794 = vmul.f32 %v868, %v1673
      %v1795 = vmul.f32 %v869, %v1678
      %v1796 = vmul.f32 %v870, %v1683
      %v1797 = vmul.f32 %v871, %v1688
      %v1798 = vmul.f32 %v872, %v1693
      %v1799 = vmul.f32 %v873, %v1698
      %v1800 = vmul.f32 %v874, %v1703
      %v1801 = vmul.f32 %v875, %v1708
      %v1802 = vmul.f32 %v876, %v1713
      %v1803 = vmul.f32 %v877, %v1718
      %v1804 = vmul.f32 %v878, %v1723
      %v1805 = vmul.f32 %v879, %v1728
      %v1806 = vmul.f32 %v880, %v1733
      %v1807 = vmul.f32 %v881, %v1738
      %v1808 = vmul.f32 %v882, %v1743
      %v1809 = vmul.f32 %v883, %v1748
      %v1810 = vmul.f32 %v884, %v1753
      %v1811 = vmul.f32 %v885, %v1758
      %v1812 = vmul.f32 %v886, %v1763
      %v1813 = vmul.f32 %v887, %v1768
      %v1814 = vmul.f32 %v888, %v1773
      %v1815 = vmul.f32 %v889, %v1778
      %v1816 = vmul.f32 %v890, %v1783
      %v1817 = vadd.f32 %v1593, %v1785
      %v1818 = vadd.f32 %v1594, %v1786
      %v1819 = vadd.f32 %v1595, %v1787
      %v1820 = vadd.f32 %v1596, %v1788
      %v1821 = vadd.f32 %v1597, %v1789
      %v1822 = vadd.f32 %v1598, %v1790
      %v1823 = vadd.f32 %v1599, %v1791
      %v1824 = vadd.f32 %v1600, %v1792
      %v1825 = vadd.f32 %v1601, %v1793
      %v1826 = vadd.f32 %v1602, %v1794
      %v1827 = vadd.f32 %v1603, %v1795
      %v1828 = vadd.f32 %v1604, %v1796
      %v1829 = vadd.f32 %v1605, %v1797
      %v1830 = vadd.f32 %v1606, %v1798
      %v1831 = vadd.f32 %v1607, %v1799
      %v1832 = vadd.f32 %v1608, %v1800
      %v1833 = vadd.f32 %v1609, %v1801
      %v1834 = vadd.f32 %v1610, %v1802
      %v1835 = vadd.f32 %v1611, %v1803
      %v1836 = vadd.f32 %v1612, %v1804
      %v1837 = vadd.f32 %v1613, %v1805
      %v1838 = vadd.f32 %v1614, %v1806
      %v1839 = vadd.f32 %v1615, %v1807
      %v1840 = vadd.f32 %v1616, %v1808
      %v1841 = vadd.f32 %v1617, %v1809
      %v1842 = vadd.f32 %v1618, %v1810
      %v1843 = vadd.f32 %v1619, %v1811
      %v1844 = vadd.f32 %v1620, %v1812
      %v1845 = vadd.f32 %v1621, %v1813
      %v1846 = vadd.f32 %v1622, %v1814
      %v1847 = vadd.f32 %v1623, %v1815
      %v1848 = vadd.f32 %v1624, %v1816
      %1849 = vst [vmem:[%s435] sm:$0xff] %v1817
      %1850 = vst [vmem:[%s435 + $0x8] sm:$0xff] %v1818
      %1851 = vst [vmem:[%s435 + $0x10] sm:$0xff] %v1819
      %1852 = vst [vmem:[%s435 + $0x18] sm:$0xff] %v1820
      %1853 = vst [vmem:[%s435 + $0x20] sm:$0xff] %v1821
      %1854 = vst [vmem:[%s435 + $0x28] sm:$0xff] %v1822
      %1855 = vst [vmem:[%s435 + $0x30] sm:$0xff] %v1823
      %1856 = vst [vmem:[%s435 + $0x38] sm:$0xff] %v1824
      %1857 = vst [vmem:[%s435 + $0x40] sm:$0xff] %v1825
      %1858 = vst [vmem:[%s435 + $0x48] sm:$0xff] %v1826
      %1859 = vst [vmem:[%s435 + $0x50] sm:$0xff] %v1827
      %1860 = vst [vmem:[%s435 + $0x58] sm:$0xff] %v1828
      %1861 = vst [vmem:[%s435 + $0x60] sm:$0xff] %v1829
      %1862 = vst [vmem:[%s435 + $0x68] sm:$0xff] %v1830
      %1863 = vst [vmem:[%s435 + $0x70] sm:$0xff] %v1831
      %1864 = vst [vmem:[%s435 + $0x78] sm:$0xff] %v1832
      %1865 = vst [vmem:[%s435 + $0x80] sm:$0xff] %v1833
      %1866 = vst [vmem:[%s435 + $0x88] sm:$0xff] %v1834
      %1867 = vst [vmem:[%s435 + $0x90] sm:$0xff] %v1835
      %1868 = vst [vmem:[%s435 + $0x98] sm:$0xff] %v1836
      %1869 = vst [vmem:[%s435 + $0xa0] sm:$0xff] %v1837
      %1870 = vst [vmem:[%s435 + $0xa8] sm:$0xff] %v1838
      %1871 = vst [vmem:[%s435 + $0xb0] sm:$0xff] %v1839
      %1872 = vst [vmem:[%s435 + $0xb8] sm:$0xff] %v1840
      %1873 = vst [vmem:[%s435 + $0xc0] sm:$0xff] %v1841
      %1874 = vst [vmem:[%s435 + $0xc8] sm:$0xff] %v1842
      %1875 = vst [vmem:[%s435 + $0xd0] sm:$0xff] %v1843
      %1876 = vst [vmem:[%s435 + $0xd8] sm:$0xff] %v1844
      %1877 = vst [vmem:[%s435 + $0xe0] sm:$0xff] %v1845
      %1878 = vst [vmem:[%s435 + $0xe8] sm:$0xff] %v1846
      %1879 = vst [vmem:[%s435 + $0xf0] sm:$0xff] %v1847
      %1880 = vst [vmem:[%s435 + $0xf8] sm:$0xff] %v1848
      %p1881 = scmp.lt.s32.totalorder %s25, 1
      %s1882 = scalar_select %p1881, %s25, 1
      %s1883 = smul.addr %s1882, 32
      %s1884 = smul.addr %s1883, 8
      %s1885 = scalar_lea.vmem %s12, %s1884
      // Predicated region
      $region69: #{downsample_forward.14} parent=67 // pred_check
        %p1886 = pneg %p305
      $region70: #{downsample_forward.14} parent=67 // pred_check_branch
        %1888 = sbr.rel (%p1886) target = $region72
      $region71: #{downsample_forward.14} parent=67 // pred_region
        _
      $region72: #{downsample_forward.14} parent=67 // pred_fallthru
        _
    $region68: #{downsample_forward.14} parent=5 // pred_fallthru
      _
    %p1889 = scmp.le.s32.totalorder 2, %s20
    // Predicated region
    $region73: #{downsample_forward.14} parent=5 // pred_check
      %p1890 = pneg %p1889
    $region74: #{downsample_forward.14} parent=5 // pred_check_branch
      %1892 = sbr.rel (%p1890) target = $region76
    $region75: #{downsample_forward.14} parent=5 // pred_region
      %s1893 = ssub.s32 %s20, 2
      // Predicated region
      $region77: #{downsample_forward.14} parent=75 // pred_check
        %p1894 = pneg %p311
      $region78: #{downsample_forward.14} parent=75 // pred_check_branch
        %1896 = sbr.rel (%p1894) target = $region80
      $region79: #{downsample_forward.14} parent=75 // pred_region
        %p1897 = scmp.lt.s32.totalorder %s26, 1
        %s1898 = scalar_select %p1897, %s26, 1
        %s1899 = smul.addr %s1898, 32
        %s1900 = smul.addr %s1899, 8
        %s1901 = scalar_lea.vmem %s12, %s1900
      $region80: #{downsample_forward.14} parent=75 // pred_fallthru
        _
    $region76: #{downsample_forward.14} parent=5 // pred_fallthru
      _
  $region6: #{downsample_forward.14} parent=0 // loop_footer
    %s24 = sadd.s32 1, %s20
  $region7: #{downsample_forward.14} parent=0 // loop_footer_branch
    %19 = sbr.rel target = $region3
  $region8: #{downsample_forward.14} parent=0 // loop_exit
    _

// kernel: downsample_forward.15
$region0: #{downsample_forward.15}
  #allocation0 [shape = 'u32[]', space=smem, size = 0x4, offset = 0x4, fixed_abs, tag = 'smem constant byte address 0x4 - core index']
  #allocation1 [shape = 'u32[144,128]{1,0:T(1,128)}', space=vmem, size = 0x12000, scoped, tag = 'internal scratch']
  %s0 = inlined_call_operand.vmem [shape: f32[2,8,2,8,2,128], index: 0, kind: input, shape index: {}]
  %s1 = inlined_call_operand.vmem [shape: f32[2,8,8,128], index: 1, kind: output, shape index: {}]
  %s2 = sld [smem:[#allocation0]]
  $region37: #{downsample_forward.15} parent=0
    _
  %s4 = ssub.s32 1, %s2
  %s5 = scalar_select 0, %s4, %s2
  loop: start=0, step=1, limit=4
  $region2: #{downsample_forward.15} parent=0 // loop_pre_header
    _
  $region3: #{downsample_forward.15} parent=0 // loop_header
    %s7 = sphi 0, %s11
    %p8 = scmp.ge.s32.totalorder %s7, 4
    %s17 = sphi 0, %s19
    %s20 = sphi 0, %s17
    %s21 = sphi 0, %s20
    %s37 = sphi 0, %s21
    %s43 = sphi 0, %s45
    %s46 = sphi 0, %s43
    %s47 = sphi 0, %s46
    %s63 = sphi 0, %s47
  $region4: #{downsample_forward.15} parent=0 // loop_header_branch
    %10 = sbr.rel (%p8) target = $region8
  $region5: #{downsample_forward.15} parent=0 // loop_body
    %s12 = ssub.s32 %s7, 1
    %s13 = ssub.s32 %s7, 2
    %s14 = sadd.s32 %s7, 1
    %s15 = ssub.s32 %s7, %s14
    %p16 = scmp.eq.s32.totalorder %s15, 0
    %s18 = sadd.s32 %s17, 1
    %s19 = scalar_select %p16, %s17, %s18
    %p22 = pneg %p16
    %p23 = scmp.eq.s32.totalorder %s7, 1
    %p24 = por %p22, %p23
    %p25 = scmp.ne.s32.totalorder %s17, %s20
    %p26 = scmp.eq.s32.totalorder %s7, 0
    %p27 = por %p25, %p26
    %p28 = scmp.ne.s32.totalorder %s17, %s20
    %p29 = scmp.eq.s32.totalorder %s12, 1
    %p30 = por %p28, %p29
    %p31 = scmp.ne.s32.totalorder %s20, %s21
    %p32 = scmp.eq.s32.totalorder %s12, 0
    %p33 = por %p31, %p32
    %p34 = scmp.ne.s32.totalorder %s20, %s21
    %p35 = scmp.eq.s32.totalorder %s13, 1
    %p36 = por %p34, %p35
    %p38 = scmp.ne.s32.totalorder %s21, %s37
    %p39 = scmp.eq.s32.totalorder %s13, 0
    %p40 = por %p38, %p39
    %s41 = ssub.s32 %s7, %s14
    %p42 = scmp.eq.s32.totalorder %s41, 0
    %s44 = sadd.s32 %s43, 1
    %s45 = scalar_select %p42, %s43, %s44
    %p48 = pneg %p42
    %p49 = scmp.eq.s32.totalorder %s7, 1
    %p50 = por %p48, %p49
    %p51 = scmp.ne.s32.totalorder %s43, %s46
    %p52 = scmp.eq.s32.totalorder %s7, 0
    %p53 = por %p51, %p52
    %p54 = scmp.ne.s32.totalorder %s43, %s46
    %p55 = scmp.eq.s32.totalorder %s12, 1
    %p56 = por %p54, %p55
    %p57 = scmp.ne.s32.totalorder %s46, %s47
    %p58 = scmp.eq.s32.totalorder %s12, 0
    %p59 = por %p57, %p58
    %p60 = scmp.ne.s32.totalorder %s46, %s47
    %p61 = scmp.eq.s32.totalorder %s13, 1
    %p62 = por %p60, %p61
    %p64 = scmp.ne.s32.totalorder %s47, %s63
    %p65 = scmp.eq.s32.totalorder %s13, 0
    %p66 = por %p64, %p65
    %p67 = scmp.le.s32.totalorder 1, %s7
    %p68 = scmp.lt.s32.totalorder %s7, 3
    %p69 = pnand %p67, %p68
    %p70 = pneg %p69
    // Predicated region
    $region9: #{downsample_forward.15} parent=5 // pred_check
      _
    $region10: #{downsample_forward.15} parent=5 // pred_check_branch
      %72 = sbr.rel (%p69) target = $region12
    $region11: #{downsample_forward.15} parent=5 // pred_region
      %s73 = ssub.s32 %s7, 1
    $region12: #{downsample_forward.15} parent=5 // pred_fallthru
      _
    %p74 = scmp.lt.s32.totalorder %s7, 2
    // Predicated region
    $region13: #{downsample_forward.15} parent=5 // pred_check
      %p75 = pneg %p74
    $region14: #{downsample_forward.15} parent=5 // pred_check_branch
      %77 = sbr.rel (%p75) target = $region16
    $region15: #{downsample_forward.15} parent=5 // pred_region
      // Predicated region
      $region17: #{downsample_forward.15} parent=15 // pred_check
        %p78 = pneg %p27
      $region18: #{downsample_forward.15} parent=15 // pred_check_branch
        %80 = sbr.rel (%p78) target = $region20
      $region19: #{downsample_forward.15} parent=15 // pred_region
        %p81 = scmp.lt.s32.totalorder %s7, 1
        %s82 = scalar_select %p81, %s7, 1
        %s83 = smul.addr %s82, 128
        %s84 = smul.addr %s83, 2
        %s85 = scalar_lea.vmem %s0, %s84
      $region20: #{downsample_forward.15} parent=15 // pred_fallthru
        _
    $region16: #{downsample_forward.15} parent=5 // pred_fallthru
      _
    %p86 = scmp.le.s32.totalorder 1, %s7
    %p87 = scmp.lt.s32.totalorder %s7, 3
    %p88 = pnand %p86, %p87
    %p89 = pneg %p88
    // Predicated region
    $region21: #{downsample_forward.15} parent=5 // pred_check
      _
    $region22: #{downsample_forward.15} parent=5 // pred_check_branch
      %91 = sbr.rel (%p88) target = $region24
    $region23: #{downsample_forward.15} parent=5 // pred_region
      %s92 = ssub.s32 %s7, 1
      %p93 = scmp.lt.s32.totalorder %s12, 1
      %s94 = scalar_select %p93, %s12, 1
      %s95 = smul.addr %s94, 128
      %s96 = smul.addr %s95, 2
      %s97 = scalar_lea.vmem %s0, %s96
      %p98 = pneg %p33
      %p99 = pneg %p30
      %p100 = pneg %p59
      %p101 = pneg %p56
      %p102 = scmp.lt.s32.totalorder %s12, 1
      %s103 = scalar_select %p102, %s12, 1
      %s104 = smul.addr %s103, 8
      %s105 = smul.addr %s104, 8
      %s106 = scalar_lea.vmem %s1, %s105
      %p107 = scmp.lt.s32.totalorder %s12, 1
      %s108 = scalar_select %p107, %s12, 1
      %s109 = smul.addr %s108, 128
      %s110 = smul.addr %s109, 2
      %s111 = scalar_lea.vmem %s0, %s110
      %p112 = scmp.lt.s32.totalorder %s12, 1
      %s113 = scalar_select %p112, %s12, 1
      %s114 = smul.addr %s113, 8
      %s115 = smul.addr %s114, 8
      %s116 = scalar_lea.vmem %s1, %s115
      %v117 = vld [vmem:[%s111] sm:$0x3]
      %v118 = vld [vmem:[%s111 + $0x2] sm:$0x3]
      %v119 = vld [vmem:[%s111 + $0x4] sm:$0x3]
      %v120 = vld [vmem:[%s111 + $0x6] sm:$0x3]
      %v121 = vld [vmem:[%s111 + $0x8] sm:$0x3]
      %v122 = vld [vmem:[%s111 + $0xa] sm:$0x3]
      %v123 = vld [vmem:[%s111 + $0xc] sm:$0x3]
      %v124 = vld [vmem:[%s111 + $0xe] sm:$0x3]
      %v125 = vld [vmem:[%s111 + $0x10] sm:$0x3]
      %v126 = vld [vmem:[%s111 + $0x12] sm:$0x3]
      %v127 = vld [vmem:[%s111 + $0x14] sm:$0x3]
      %v128 = vld [vmem:[%s111 + $0x16] sm:$0x3]
      %v129 = vld [vmem:[%s111 + $0x18] sm:$0x3]
      %v130 = vld [vmem:[%s111 + $0x1a] sm:$0x3]
      %v131 = vld [vmem:[%s111 + $0x1c] sm:$0x3]
      %v132 = vld [vmem:[%s111 + $0x1e] sm:$0x3]
      %v133 = vld [vmem:[%s111 + $0x20] sm:$0x3]
      %v134 = vld [vmem:[%s111 + $0x22] sm:$0x3]
      %v135 = vld [vmem:[%s111 + $0x24] sm:$0x3]
      %v136 = vld [vmem:[%s111 + $0x26] sm:$0x3]
      %v137 = vld [vmem:[%s111 + $0x28] sm:$0x3]
      %v138 = vld [vmem:[%s111 + $0x2a] sm:$0x3]
      %v139 = vld [vmem:[%s111 + $0x2c] sm:$0x3]
      %v140 = vld [vmem:[%s111 + $0x2e] sm:$0x3]
      %v141 = vld [vmem:[%s111 + $0x30] sm:$0x3]
      %v142 = vld [vmem:[%s111 + $0x32] sm:$0x3]
      %v143 = vld [vmem:[%s111 + $0x34] sm:$0x3]
      %v144 = vld [vmem:[%s111 + $0x36] sm:$0x3]
      %v145 = vld [vmem:[%s111 + $0x38] sm:$0x3]
      %v146 = vld [vmem:[%s111 + $0x3a] sm:$0x3]
      %v147 = vld [vmem:[%s111 + $0x3c] sm:$0x3]
      %v148 = vld [vmem:[%s111 + $0x3e] sm:$0x3]
      %v149 = vld [vmem:[%s111 + $0x40] sm:$0x3]
      %v150 = vld [vmem:[%s111 + $0x42] sm:$0x3]
      %v151 = vld [vmem:[%s111 + $0x44] sm:$0x3]
      %v152 = vld [vmem:[%s111 + $0x46] sm:$0x3]
      %v153 = vld [vmem:[%s111 + $0x48] sm:$0x3]
      %v154 = vld [vmem:[%s111 + $0x4a] sm:$0x3]
      %v155 = vld [vmem:[%s111 + $0x4c] sm:$0x3]
      %v156 = vld [vmem:[%s111 + $0x4e] sm:$0x3]
      %v157 = vld [vmem:[%s111 + $0x50] sm:$0x3]
      %v158 = vld [vmem:[%s111 + $0x52] sm:$0x3]
      %v159 = vld [vmem:[%s111 + $0x54] sm:$0x3]
      %v160 = vld [vmem:[%s111 + $0x56] sm:$0x3]
      %v161 = vld [vmem:[%s111 + $0x58] sm:$0x3]
      %v162 = vld [vmem:[%s111 + $0x5a] sm:$0x3]
      %v163 = vld [vmem:[%s111 + $0x5c] sm:$0x3]
      %v164 = vld [vmem:[%s111 + $0x5e] sm:$0x3]
      %v165 = vld [vmem:[%s111 + $0x60] sm:$0x3]
      %v166 = vld [vmem:[%s111 + $0x62] sm:$0x3]
      %v167 = vld [vmem:[%s111 + $0x64] sm:$0x3]
      %v168 = vld [vmem:[%s111 + $0x66] sm:$0x3]
      %v169 = vld [vmem:[%s111 + $0x68] sm:$0x3]
      %v170 = vld [vmem:[%s111 + $0x6a] sm:$0x3]
      %v171 = vld [vmem:[%s111 + $0x6c] sm:$0x3]
      %v172 = vld [vmem:[%s111 + $0x6e] sm:$0x3]
      %v173 = vld [vmem:[%s111 + $0x70] sm:$0x3]
      %v174 = vld [vmem:[%s111 + $0x72] sm:$0x3]
      %v175 = vld [vmem:[%s111 + $0x74] sm:$0x3]
      %v176 = vld [vmem:[%s111 + $0x76] sm:$0x3]
      %v177 = vld [vmem:[%s111 + $0x78] sm:$0x3]
      %v178 = vld [vmem:[%s111 + $0x7a] sm:$0x3]
      %v179 = vld [vmem:[%s111 + $0x7c] sm:$0x3]
      %v180 = vld [vmem:[%s111 + $0x7e] sm:$0x3]
      %v181 = vld [vmem:[%s111 + $0x80] sm:$0x3]
      %v182 = vld [vmem:[%s111 + $0x82] sm:$0x3]
      %v183 = vld [vmem:[%s111 + $0x84] sm:$0x3]
      %v184 = vld [vmem:[%s111 + $0x86] sm:$0x3]
      %v185 = vld [vmem:[%s111 + $0x88] sm:$0x3]
      %v186 = vld [vmem:[%s111 + $0x8a] sm:$0x3]
      %v187 = vld [vmem:[%s111 + $0x8c] sm:$0x3]
      %v188 = vld [vmem:[%s111 + $0x8e] sm:$0x3]
      %v189 = vld [vmem:[%s111 + $0x90] sm:$0x3]
      %v190 = vld [vmem:[%s111 + $0x92] sm:$0x3]
      %v191 = vld [vmem:[%s111 + $0x94] sm:$0x3]
      %v192 = vld [vmem:[%s111 + $0x96] sm:$0x3]
      %v193 = vld [vmem:[%s111 + $0x98] sm:$0x3]
      %v194 = vld [vmem:[%s111 + $0x9a] sm:$0x3]
      %v195 = vld [vmem:[%s111 + $0x9c] sm:$0x3]
      %v196 = vld [vmem:[%s111 + $0x9e] sm:$0x3]
      %v197 = vld [vmem:[%s111 + $0xa0] sm:$0x3]
      %v198 = vld [vmem:[%s111 + $0xa2] sm:$0x3]
      %v199 = vld [vmem:[%s111 + $0xa4] sm:$0x3]
      %v200 = vld [vmem:[%s111 + $0xa6] sm:$0x3]
      %v201 = vld [vmem:[%s111 + $0xa8] sm:$0x3]
      %v202 = vld [vmem:[%s111 + $0xaa] sm:$0x3]
      %v203 = vld [vmem:[%s111 + $0xac] sm:$0x3]
      %v204 = vld [vmem:[%s111 + $0xae] sm:$0x3]
      %v205 = vld [vmem:[%s111 + $0xb0] sm:$0x3]
      %v206 = vld [vmem:[%s111 + $0xb2] sm:$0x3]
      %v207 = vld [vmem:[%s111 + $0xb4] sm:$0x3]
      %v208 = vld [vmem:[%s111 + $0xb6] sm:$0x3]
      %v209 = vld [vmem:[%s111 + $0xb8] sm:$0x3]
      %v210 = vld [vmem:[%s111 + $0xba] sm:$0x3]
      %v211 = vld [vmem:[%s111 + $0xbc] sm:$0x3]
      %v212 = vld [vmem:[%s111 + $0xbe] sm:$0x3]
      %v213 = vld [vmem:[%s111 + $0xc0] sm:$0x3]
      %v214 = vld [vmem:[%s111 + $0xc2] sm:$0x3]
      %v215 = vld [vmem:[%s111 + $0xc4] sm:$0x3]
      %v216 = vld [vmem:[%s111 + $0xc6] sm:$0x3]
      %v217 = vld [vmem:[%s111 + $0xc8] sm:$0x3]
      %v218 = vld [vmem:[%s111 + $0xca] sm:$0x3]
      %v219 = vld [vmem:[%s111 + $0xcc] sm:$0x3]
      %v220 = vld [vmem:[%s111 + $0xce] sm:$0x3]
      %v221 = vld [vmem:[%s111 + $0xd0] sm:$0x3]
      %v222 = vld [vmem:[%s111 + $0xd2] sm:$0x3]
      %v223 = vld [vmem:[%s111 + $0xd4] sm:$0x3]
      %v224 = vld [vmem:[%s111 + $0xd6] sm:$0x3]
      %v225 = vld [vmem:[%s111 + $0xd8] sm:$0x3]
      %v226 = vld [vmem:[%s111 + $0xda] sm:$0x3]
      %v227 = vld [vmem:[%s111 + $0xdc] sm:$0x3]
      %v228 = vld [vmem:[%s111 + $0xde] sm:$0x3]
      %v229 = vld [vmem:[%s111 + $0xe0] sm:$0x3]
      %v230 = vld [vmem:[%s111 + $0xe2] sm:$0x3]
      %v231 = vld [vmem:[%s111 + $0xe4] sm:$0x3]
      %v232 = vld [vmem:[%s111 + $0xe6] sm:$0x3]
      %v233 = vld [vmem:[%s111 + $0xe8] sm:$0x3]
      %v234 = vld [vmem:[%s111 + $0xea] sm:$0x3]
      %v235 = vld [vmem:[%s111 + $0xec] sm:$0x3]
      %v236 = vld [vmem:[%s111 + $0xee] sm:$0x3]
      %v237 = vld [vmem:[%s111 + $0xf0] sm:$0x3]
      %v238 = vld [vmem:[%s111 + $0xf2] sm:$0x3]
      %v239 = vld [vmem:[%s111 + $0xf4] sm:$0x3]
      %v240 = vld [vmem:[%s111 + $0xf6] sm:$0x3]
      %v241 = vld [vmem:[%s111 + $0xf8] sm:$0x3]
      %v242 = vld [vmem:[%s111 + $0xfa] sm:$0x3]
      %v243 = vld [vmem:[%s111 + $0xfc] sm:$0x3]
      %v244 = vld [vmem:[%s111 + $0xfe] sm:$0x3]
      %vm245 = vcmask 1041408
      %v246 = vsel %vm245, %v117, -inf
      %v247 = vrot.slane %v246, 4
      %v248 = vmax.f32 %v246, %v247
      %v249 = vrot.slane %v248, 2
      %v250 = vmax.f32 %v248, %v249
      %v251 = vrot.slane %v250, 1
      %v252 = vmax.f32 %v250, %v251
      %v253 = vsel %vm245, %v118, -inf
      %v254 = vrot.slane %v253, 4
      %v255 = vmax.f32 %v253, %v254
      %v256 = vrot.slane %v255, 2
      %v257 = vmax.f32 %v255, %v256
      %v258 = vrot.slane %v257, 1
      %v259 = vmax.f32 %v257, %v258
      %v260 = vsel %vm245, %v119, -inf
      %v261 = vrot.slane %v260, 4
      %v262 = vmax.f32 %v260, %v261
      %v263 = vrot.slane %v262, 2
      %v264 = vmax.f32 %v262, %v263
      %v265 = vrot.slane %v264, 1
      %v266 = vmax.f32 %v264, %v265
      %v267 = vsel %vm245, %v120, -inf
      %v268 = vrot.slane %v267, 4
      %v269 = vmax.f32 %v267, %v268
      %v270 = vrot.slane %v269, 2
      %v271 = vmax.f32 %v269, %v270
      %v272 = vrot.slane %v271, 1
      %v273 = vmax.f32 %v271, %v272
      %v274 = vsel %vm245, %v121, -inf
      %v275 = vrot.slane %v274, 4
      %v276 = vmax.f32 %v274, %v275
      %v277 = vrot.slane %v276, 2
      %v278 = vmax.f32 %v276, %v277
      %v279 = vrot.slane %v278, 1
      %v280 = vmax.f32 %v278, %v279
      %v281 = vsel %vm245, %v122, -inf
      %v282 = vrot.slane %v281, 4
      %v283 = vmax.f32 %v281, %v282
      %v284 = vrot.slane %v283, 2
      %v285 = vmax.f32 %v283, %v284
      %v286 = vrot.slane %v285, 1
      %v287 = vmax.f32 %v285, %v286
      %v288 = vsel %vm245, %v123, -inf
      %v289 = vrot.slane %v288, 4
      %v290 = vmax.f32 %v288, %v289
      %v291 = vrot.slane %v290, 2
      %v292 = vmax.f32 %v290, %v291
      %v293 = vrot.slane %v292, 1
      %v294 = vmax.f32 %v292, %v293
      %v295 = vsel %vm245, %v124, -inf
      %v296 = vrot.slane %v295, 4
      %v297 = vmax.f32 %v295, %v296
      %v298 = vrot.slane %v297, 2
      %v299 = vmax.f32 %v297, %v298
      %v300 = vrot.slane %v299, 1
      %v301 = vmax.f32 %v299, %v300
      %v302 = vsel %vm245, %v125, -inf
      %v303 = vrot.slane %v302, 4
      %v304 = vmax.f32 %v302, %v303
      %v305 = vrot.slane %v304, 2
      %v306 = vmax.f32 %v304, %v305
      %v307 = vrot.slane %v306, 1
      %v308 = vmax.f32 %v306, %v307
      %v309 = vsel %vm245, %v126, -inf
      %v310 = vrot.slane %v309, 4
      %v311 = vmax.f32 %v309, %v310
      %v312 = vrot.slane %v311, 2
      %v313 = vmax.f32 %v311, %v312
      %v314 = vrot.slane %v313, 1
      %v315 = vmax.f32 %v313, %v314
      %v316 = vsel %vm245, %v127, -inf
      %v317 = vrot.slane %v316, 4
      %v318 = vmax.f32 %v316, %v317
      %v319 = vrot.slane %v318, 2
      %v320 = vmax.f32 %v318, %v319
      %v321 = vrot.slane %v320, 1
      %v322 = vmax.f32 %v320, %v321
      %v323 = vsel %vm245, %v128, -inf
      %v324 = vrot.slane %v323, 4
      %v325 = vmax.f32 %v323, %v324
      %v326 = vrot.slane %v325, 2
      %v327 = vmax.f32 %v325, %v326
      %v328 = vrot.slane %v327, 1
      %v329 = vmax.f32 %v327, %v328
      %v330 = vsel %vm245, %v129, -inf
      %v331 = vrot.slane %v330, 4
      %v332 = vmax.f32 %v330, %v331
      %v333 = vrot.slane %v332, 2
      %v334 = vmax.f32 %v332, %v333
      %v335 = vrot.slane %v334, 1
      %v336 = vmax.f32 %v334, %v335
      %v337 = vsel %vm245, %v130, -inf
      %v338 = vrot.slane %v337, 4
      %v339 = vmax.f32 %v337, %v338
      %v340 = vrot.slane %v339, 2
      %v341 = vmax.f32 %v339, %v340
      %v342 = vrot.slane %v341, 1
      %v343 = vmax.f32 %v341, %v342
      %v344 = vsel %vm245, %v131, -inf
      %v345 = vrot.slane %v344, 4
      %v346 = vmax.f32 %v344, %v345
      %v347 = vrot.slane %v346, 2
      %v348 = vmax.f32 %v346, %v347
      %v349 = vrot.slane %v348, 1
      %v350 = vmax.f32 %v348, %v349
      %v351 = vsel %vm245, %v132, -inf
      %v352 = vrot.slane %v351, 4
      %v353 = vmax.f32 %v351, %v352
      %v354 = vrot.slane %v353, 2
      %v355 = vmax.f32 %v353, %v354
      %v356 = vrot.slane %v355, 1
      %v357 = vmax.f32 %v355, %v356
      %v358 = vsel %vm245, %v133, -inf
      %v359 = vrot.slane %v358, 4
      %v360 = vmax.f32 %v358, %v359
      %v361 = vrot.slane %v360, 2
      %v362 = vmax.f32 %v360, %v361
      %v363 = vrot.slane %v362, 1
      %v364 = vmax.f32 %v362, %v363
      %v365 = vsel %vm245, %v134, -inf
      %v366 = vrot.slane %v365, 4
      %v367 = vmax.f32 %v365, %v366
      %v368 = vrot.slane %v367, 2
      %v369 = vmax.f32 %v367, %v368
      %v370 = vrot.slane %v369, 1
      %v371 = vmax.f32 %v369, %v370
      %v372 = vsel %vm245, %v135, -inf
      %v373 = vrot.slane %v372, 4
      %v374 = vmax.f32 %v372, %v373
      %v375 = vrot.slane %v374, 2
      %v376 = vmax.f32 %v374, %v375
      %v377 = vrot.slane %v376, 1
      %v378 = vmax.f32 %v376, %v377
      %v379 = vsel %vm245, %v136, -inf
      %v380 = vrot.slane %v379, 4
      %v381 = vmax.f32 %v379, %v380
      %v382 = vrot.slane %v381, 2
      %v383 = vmax.f32 %v381, %v382
      %v384 = vrot.slane %v383, 1
      %v385 = vmax.f32 %v383, %v384
      %v386 = vsel %vm245, %v137, -inf
      %v387 = vrot.slane %v386, 4
      %v388 = vmax.f32 %v386, %v387
      %v389 = vrot.slane %v388, 2
      %v390 = vmax.f32 %v388, %v389
      %v391 = vrot.slane %v390, 1
      %v392 = vmax.f32 %v390, %v391
      %v393 = vsel %vm245, %v138, -inf
      %v394 = vrot.slane %v393, 4
      %v395 = vmax.f32 %v393, %v394
      %v396 = vrot.slane %v395, 2
      %v397 = vmax.f32 %v395, %v396
      %v398 = vrot.slane %v397, 1
      %v399 = vmax.f32 %v397, %v398
      %v400 = vsel %vm245, %v139, -inf
      %v401 = vrot.slane %v400, 4
      %v402 = vmax.f32 %v400, %v401
      %v403 = vrot.slane %v402, 2
      %v404 = vmax.f32 %v402, %v403
      %v405 = vrot.slane %v404, 1
      %v406 = vmax.f32 %v404, %v405
      %v407 = vsel %vm245, %v140, -inf
      %v408 = vrot.slane %v407, 4
      %v409 = vmax.f32 %v407, %v408
      %v410 = vrot.slane %v409, 2
      %v411 = vmax.f32 %v409, %v410
      %v412 = vrot.slane %v411, 1
      %v413 = vmax.f32 %v411, %v412
      %v414 = vsel %vm245, %v141, -inf
      %v415 = vrot.slane %v414, 4
      %v416 = vmax.f32 %v414, %v415
      %v417 = vrot.slane %v416, 2
      %v418 = vmax.f32 %v416, %v417
      %v419 = vrot.slane %v418, 1
      %v420 = vmax.f32 %v418, %v419
      %v421 = vsel %vm245, %v142, -inf
      %v422 = vrot.slane %v421, 4
      %v423 = vmax.f32 %v421, %v422
      %v424 = vrot.slane %v423, 2
      %v425 = vmax.f32 %v423, %v424
      %v426 = vrot.slane %v425, 1
      %v427 = vmax.f32 %v425, %v426
      %v428 = vsel %vm245, %v143, -inf
      %v429 = vrot.slane %v428, 4
      %v430 = vmax.f32 %v428, %v429
      %v431 = vrot.slane %v430, 2
      %v432 = vmax.f32 %v430, %v431
      %v433 = vrot.slane %v432, 1
      %v434 = vmax.f32 %v432, %v433
      %v435 = vsel %vm245, %v144, -inf
      %v436 = vrot.slane %v435, 4
      %v437 = vmax.f32 %v435, %v436
      %v438 = vrot.slane %v437, 2
      %v439 = vmax.f32 %v437, %v438
      %v440 = vrot.slane %v439, 1
      %v441 = vmax.f32 %v439, %v440
      %v442 = vsel %vm245, %v145, -inf
      %v443 = vrot.slane %v442, 4
      %v444 = vmax.f32 %v442, %v443
      %v445 = vrot.slane %v444, 2
      %v446 = vmax.f32 %v444, %v445
      %v447 = vrot.slane %v446, 1
      %v448 = vmax.f32 %v446, %v447
      %v449 = vsel %vm245, %v146, -inf
      %v450 = vrot.slane %v449, 4
      %v451 = vmax.f32 %v449, %v450
      %v452 = vrot.slane %v451, 2
      %v453 = vmax.f32 %v451, %v452
      %v454 = vrot.slane %v453, 1
      %v455 = vmax.f32 %v453, %v454
      %v456 = vsel %vm245, %v147, -inf
      %v457 = vrot.slane %v456, 4
      %v458 = vmax.f32 %v456, %v457
      %v459 = vrot.slane %v458, 2
      %v460 = vmax.f32 %v458, %v459
      %v461 = vrot.slane %v460, 1
      %v462 = vmax.f32 %v460, %v461
      %v463 = vsel %vm245, %v148, -inf
      %v464 = vrot.slane %v463, 4
      %v465 = vmax.f32 %v463, %v464
      %v466 = vrot.slane %v465, 2
      %v467 = vmax.f32 %v465, %v466
      %v468 = vrot.slane %v467, 1
      %v469 = vmax.f32 %v467, %v468
      %v470 = vsel %vm245, %v149, -inf
      %v471 = vrot.slane %v470, 4
      %v472 = vmax.f32 %v470, %v471
      %v473 = vrot.slane %v472, 2
      %v474 = vmax.f32 %v472, %v473
      %v475 = vrot.slane %v474, 1
      %v476 = vmax.f32 %v474, %v475
      %v477 = vsel %vm245, %v150, -inf
      %v478 = vrot.slane %v477, 4
      %v479 = vmax.f32 %v477, %v478
      %v480 = vrot.slane %v479, 2
      %v481 = vmax.f32 %v479, %v480
      %v482 = vrot.slane %v481, 1
      %v483 = vmax.f32 %v481, %v482
      %v484 = vsel %vm245, %v151, -inf
      %v485 = vrot.slane %v484, 4
      %v486 = vmax.f32 %v484, %v485
      %v487 = vrot.slane %v486, 2
      %v488 = vmax.f32 %v486, %v487
      %v489 = vrot.slane %v488, 1
      %v490 = vmax.f32 %v488, %v489
      %v491 = vsel %vm245, %v152, -inf
      %v492 = vrot.slane %v491, 4
      %v493 = vmax.f32 %v491, %v492
      %v494 = vrot.slane %v493, 2
      %v495 = vmax.f32 %v493, %v494
      %v496 = vrot.slane %v495, 1
      %v497 = vmax.f32 %v495, %v496
      %v498 = vsel %vm245, %v153, -inf
      %v499 = vrot.slane %v498, 4
      %v500 = vmax.f32 %v498, %v499
      %v501 = vrot.slane %v500, 2
      %v502 = vmax.f32 %v500, %v501
      %v503 = vrot.slane %v502, 1
      %v504 = vmax.f32 %v502, %v503
      %v505 = vsel %vm245, %v154, -inf
      %v506 = vrot.slane %v505, 4
      %v507 = vmax.f32 %v505, %v506
      %v508 = vrot.slane %v507, 2
      %v509 = vmax.f32 %v507, %v508
      %v510 = vrot.slane %v509, 1
      %v511 = vmax.f32 %v509, %v510
      %v512 = vsel %vm245, %v155, -inf
      %v513 = vrot.slane %v512, 4
      %v514 = vmax.f32 %v512, %v513
      %v515 = vrot.slane %v514, 2
      %v516 = vmax.f32 %v514, %v515
      %v517 = vrot.slane %v516, 1
      %v518 = vmax.f32 %v516, %v517
      %v519 = vsel %vm245, %v156, -inf
      %v520 = vrot.slane %v519, 4
      %v521 = vmax.f32 %v519, %v520
      %v522 = vrot.slane %v521, 2
      %v523 = vmax.f32 %v521, %v522
      %v524 = vrot.slane %v523, 1
      %v525 = vmax.f32 %v523, %v524
      %v526 = vsel %vm245, %v157, -inf
      %v527 = vrot.slane %v526, 4
      %v528 = vmax.f32 %v526, %v527
      %v529 = vrot.slane %v528, 2
      %v530 = vmax.f32 %v528, %v529
      %v531 = vrot.slane %v530, 1
      %v532 = vmax.f32 %v530, %v531
      %v533 = vsel %vm245, %v158, -inf
      %v534 = vrot.slane %v533, 4
      %v535 = vmax.f32 %v533, %v534
      %v536 = vrot.slane %v535, 2
      %v537 = vmax.f32 %v535, %v536
      %v538 = vrot.slane %v537, 1
      %v539 = vmax.f32 %v537, %v538
      %v540 = vsel %vm245, %v159, -inf
      %v541 = vrot.slane %v540, 4
      %v542 = vmax.f32 %v540, %v541
      %v543 = vrot.slane %v542, 2
      %v544 = vmax.f32 %v542, %v543
      %v545 = vrot.slane %v544, 1
      %v546 = vmax.f32 %v544, %v545
      %v547 = vsel %vm245, %v160, -inf
      %v548 = vrot.slane %v547, 4
      %v549 = vmax.f32 %v547, %v548
      %v550 = vrot.slane %v549, 2
      %v551 = vmax.f32 %v549, %v550
      %v552 = vrot.slane %v551, 1
      %v553 = vmax.f32 %v551, %v552
      %v554 = vsel %vm245, %v161, -inf
      %v555 = vrot.slane %v554, 4
      %v556 = vmax.f32 %v554, %v555
      %v557 = vrot.slane %v556, 2
      %v558 = vmax.f32 %v556, %v557
      %v559 = vrot.slane %v558, 1
      %v560 = vmax.f32 %v558, %v559
      %v561 = vsel %vm245, %v162, -inf
      %v562 = vrot.slane %v561, 4
      %v563 = vmax.f32 %v561, %v562
      %v564 = vrot.slane %v563, 2
      %v565 = vmax.f32 %v563, %v564
      %v566 = vrot.slane %v565, 1
      %v567 = vmax.f32 %v565, %v566
      %v568 = vsel %vm245, %v163, -inf
      %v569 = vrot.slane %v568, 4
      %v570 = vmax.f32 %v568, %v569
      %v571 = vrot.slane %v570, 2
      %v572 = vmax.f32 %v570, %v571
      %v573 = vrot.slane %v572, 1
      %v574 = vmax.f32 %v572, %v573
      %v575 = vsel %vm245, %v164, -inf
      %v576 = vrot.slane %v575, 4
      %v577 = vmax.f32 %v575, %v576
      %v578 = vrot.slane %v577, 2
      %v579 = vmax.f32 %v577, %v578
      %v580 = vrot.slane %v579, 1
      %v581 = vmax.f32 %v579, %v580
      %v582 = vsel %vm245, %v165, -inf
      %v583 = vrot.slane %v582, 4
      %v584 = vmax.f32 %v582, %v583
      %v585 = vrot.slane %v584, 2
      %v586 = vmax.f32 %v584, %v585
      %v587 = vrot.slane %v586, 1
      %v588 = vmax.f32 %v586, %v587
      %v589 = vsel %vm245, %v166, -inf
      %v590 = vrot.slane %v589, 4
      %v591 = vmax.f32 %v589, %v590
      %v592 = vrot.slane %v591, 2
      %v593 = vmax.f32 %v591, %v592
      %v594 = vrot.slane %v593, 1
      %v595 = vmax.f32 %v593, %v594
      %v596 = vsel %vm245, %v167, -inf
      %v597 = vrot.slane %v596, 4
      %v598 = vmax.f32 %v596, %v597
      %v599 = vrot.slane %v598, 2
      %v600 = vmax.f32 %v598, %v599
      %v601 = vrot.slane %v600, 1
      %v602 = vmax.f32 %v600, %v601
      %v603 = vsel %vm245, %v168, -inf
      %v604 = vrot.slane %v603, 4
      %v605 = vmax.f32 %v603, %v604
      %v606 = vrot.slane %v605, 2
      %v607 = vmax.f32 %v605, %v606
      %v608 = vrot.slane %v607, 1
      %v609 = vmax.f32 %v607, %v608
      %v610 = vsel %vm245, %v169, -inf
      %v611 = vrot.slane %v610, 4
      %v612 = vmax.f32 %v610, %v611
      %v613 = vrot.slane %v612, 2
      %v614 = vmax.f32 %v612, %v613
      %v615 = vrot.slane %v614, 1
      %v616 = vmax.f32 %v614, %v615
      %v617 = vsel %vm245, %v170, -inf
      %v618 = vrot.slane %v617, 4
      %v619 = vmax.f32 %v617, %v618
      %v620 = vrot.slane %v619, 2
      %v621 = vmax.f32 %v619, %v620
      %v622 = vrot.slane %v621, 1
      %v623 = vmax.f32 %v621, %v622
      %v624 = vsel %vm245, %v171, -inf
      %v625 = vrot.slane %v624, 4
      %v626 = vmax.f32 %v624, %v625
      %v627 = vrot.slane %v626, 2
      %v628 = vmax.f32 %v626, %v627
      %v629 = vrot.slane %v628, 1
      %v630 = vmax.f32 %v628, %v629
      %v631 = vsel %vm245, %v172, -inf
      %v632 = vrot.slane %v631, 4
      %v633 = vmax.f32 %v631, %v632
      %v634 = vrot.slane %v633, 2
      %v635 = vmax.f32 %v633, %v634
      %v636 = vrot.slane %v635, 1
      %v637 = vmax.f32 %v635, %v636
      %v638 = vsel %vm245, %v173, -inf
      %v639 = vrot.slane %v638, 4
      %v640 = vmax.f32 %v638, %v639
      %v641 = vrot.slane %v640, 2
      %v642 = vmax.f32 %v640, %v641
      %v643 = vrot.slane %v642, 1
      %v644 = vmax.f32 %v642, %v643
      %v645 = vsel %vm245, %v174, -inf
      %v646 = vrot.slane %v645, 4
      %v647 = vmax.f32 %v645, %v646
      %v648 = vrot.slane %v647, 2
      %v649 = vmax.f32 %v647, %v648
      %v650 = vrot.slane %v649, 1
      %v651 = vmax.f32 %v649, %v650
      %v652 = vsel %vm245, %v175, -inf
      %v653 = vrot.slane %v652, 4
      %v654 = vmax.f32 %v652, %v653
      %v655 = vrot.slane %v654, 2
      %v656 = vmax.f32 %v654, %v655
      %v657 = vrot.slane %v656, 1
      %v658 = vmax.f32 %v656, %v657
      %v659 = vsel %vm245, %v176, -inf
      %v660 = vrot.slane %v659, 4
      %v661 = vmax.f32 %v659, %v660
      %v662 = vrot.slane %v661, 2
      %v663 = vmax.f32 %v661, %v662
      %v664 = vrot.slane %v663, 1
      %v665 = vmax.f32 %v663, %v664
      %v666 = vsel %vm245, %v177, -inf
      %v667 = vrot.slane %v666, 4
      %v668 = vmax.f32 %v666, %v667
      %v669 = vrot.slane %v668, 2
      %v670 = vmax.f32 %v668, %v669
      %v671 = vrot.slane %v670, 1
      %v672 = vmax.f32 %v670, %v671
      %v673 = vsel %vm245, %v178, -inf
      %v674 = vrot.slane %v673, 4
      %v675 = vmax.f32 %v673, %v674
      %v676 = vrot.slane %v675, 2
      %v677 = vmax.f32 %v675, %v676
      %v678 = vrot.slane %v677, 1
      %v679 = vmax.f32 %v677, %v678
      %v680 = vsel %vm245, %v179, -inf
      %v681 = vrot.slane %v680, 4
      %v682 = vmax.f32 %v680, %v681
      %v683 = vrot.slane %v682, 2
      %v684 = vmax.f32 %v682, %v683
      %v685 = vrot.slane %v684, 1
      %v686 = vmax.f32 %v684, %v685
      %v687 = vsel %vm245, %v180, -inf
      %v688 = vrot.slane %v687, 4
      %v689 = vmax.f32 %v687, %v688
      %v690 = vrot.slane %v689, 2
      %v691 = vmax.f32 %v689, %v690
      %v692 = vrot.slane %v691, 1
      %v693 = vmax.f32 %v691, %v692
      %v694 = vsel %vm245, %v181, -inf
      %v695 = vrot.slane %v694, 4
      %v696 = vmax.f32 %v694, %v695
      %v697 = vrot.slane %v696, 2
      %v698 = vmax.f32 %v696, %v697
      %v699 = vrot.slane %v698, 1
      %v700 = vmax.f32 %v698, %v699
      %v701 = vsel %vm245, %v182, -inf
      %v702 = vrot.slane %v701, 4
      %v703 = vmax.f32 %v701, %v702
      %v704 = vrot.slane %v703, 2
      %v705 = vmax.f32 %v703, %v704
      %v706 = vrot.slane %v705, 1
      %v707 = vmax.f32 %v705, %v706
      %v708 = vsel %vm245, %v183, -inf
      %v709 = vrot.slane %v708, 4
      %v710 = vmax.f32 %v708, %v709
      %v711 = vrot.slane %v710, 2
      %v712 = vmax.f32 %v710, %v711
      %v713 = vrot.slane %v712, 1
      %v714 = vmax.f32 %v712, %v713
      %v715 = vsel %vm245, %v184, -inf
      %v716 = vrot.slane %v715, 4
      %v717 = vmax.f32 %v715, %v716
      %v718 = vrot.slane %v717, 2
      %v719 = vmax.f32 %v717, %v718
      %v720 = vrot.slane %v719, 1
      %v721 = vmax.f32 %v719, %v720
      %v722 = vsel %vm245, %v185, -inf
      %v723 = vrot.slane %v722, 4
      %v724 = vmax.f32 %v722, %v723
      %v725 = vrot.slane %v724, 2
      %v726 = vmax.f32 %v724, %v725
      %v727 = vrot.slane %v726, 1
      %v728 = vmax.f32 %v726, %v727
      %v729 = vsel %vm245, %v186, -inf
      %v730 = vrot.slane %v729, 4
      %v731 = vmax.f32 %v729, %v730
      %v732 = vrot.slane %v731, 2
      %v733 = vmax.f32 %v731, %v732
      %v734 = vrot.slane %v733, 1
      %v735 = vmax.f32 %v733, %v734
      %v736 = vsel %vm245, %v187, -inf
      %v737 = vrot.slane %v736, 4
      %v738 = vmax.f32 %v736, %v737
      %v739 = vrot.slane %v738, 2
      %v740 = vmax.f32 %v738, %v739
      %v741 = vrot.slane %v740, 1
      %v742 = vmax.f32 %v740, %v741
      %v743 = vsel %vm245, %v188, -inf
      %v744 = vrot.slane %v743, 4
      %v745 = vmax.f32 %v743, %v744
      %v746 = vrot.slane %v745, 2
      %v747 = vmax.f32 %v745, %v746
      %v748 = vrot.slane %v747, 1
      %v749 = vmax.f32 %v747, %v748
      %v750 = vsel %vm245, %v189, -inf
      %v751 = vrot.slane %v750, 4
      %v752 = vmax.f32 %v750, %v751
      %v753 = vrot.slane %v752, 2
      %v754 = vmax.f32 %v752, %v753
      %v755 = vrot.slane %v754, 1
      %v756 = vmax.f32 %v754, %v755
      %v757 = vsel %vm245, %v190, -inf
      %v758 = vrot.slane %v757, 4
      %v759 = vmax.f32 %v757, %v758
      %v760 = vrot.slane %v759, 2
      %v761 = vmax.f32 %v759, %v760
      %v762 = vrot.slane %v761, 1
      %v763 = vmax.f32 %v761, %v762
      %v764 = vsel %vm245, %v191, -inf
      %v765 = vrot.slane %v764, 4
      %v766 = vmax.f32 %v764, %v765
      %v767 = vrot.slane %v766, 2
      %v768 = vmax.f32 %v766, %v767
      %v769 = vrot.slane %v768, 1
      %v770 = vmax.f32 %v768, %v769
      %v771 = vsel %vm245, %v192, -inf
      %v772 = vrot.slane %v771, 4
      %v773 = vmax.f32 %v771, %v772
      %v774 = vrot.slane %v773, 2
      %v775 = vmax.f32 %v773, %v774
      %v776 = vrot.slane %v775, 1
      %v777 = vmax.f32 %v775, %v776
      %v778 = vsel %vm245, %v193, -inf
      %v779 = vrot.slane %v778, 4
      %v780 = vmax.f32 %v778, %v779
      %v781 = vrot.slane %v780, 2
      %v782 = vmax.f32 %v780, %v781
      %v783 = vrot.slane %v782, 1
      %v784 = vmax.f32 %v782, %v783
      %v785 = vsel %vm245, %v194, -inf
      %v786 = vrot.slane %v785, 4
      %v787 = vmax.f32 %v785, %v786
      %v788 = vrot.slane %v787, 2
      %v789 = vmax.f32 %v787, %v788
      %v790 = vrot.slane %v789, 1
      %v791 = vmax.f32 %v789, %v790
      %v792 = vsel %vm245, %v195, -inf
      %v793 = vrot.slane %v792, 4
      %v794 = vmax.f32 %v792, %v793
      %v795 = vrot.slane %v794, 2
      %v796 = vmax.f32 %v794, %v795
      %v797 = vrot.slane %v796, 1
      %v798 = vmax.f32 %v796, %v797
      %v799 = vsel %vm245, %v196, -inf
      %v800 = vrot.slane %v799, 4
      %v801 = vmax.f32 %v799, %v800
      %v802 = vrot.slane %v801, 2
      %v803 = vmax.f32 %v801, %v802
      %v804 = vrot.slane %v803, 1
      %v805 = vmax.f32 %v803, %v804
      %v806 = vsel %vm245, %v197, -inf
      %v807 = vrot.slane %v806, 4
      %v808 = vmax.f32 %v806, %v807
      %v809 = vrot.slane %v808, 2
      %v810 = vmax.f32 %v808, %v809
      %v811 = vrot.slane %v810, 1
      %v812 = vmax.f32 %v810, %v811
      %v813 = vsel %vm245, %v198, -inf
      %v814 = vrot.slane %v813, 4
      %v815 = vmax.f32 %v813, %v814
      %v816 = vrot.slane %v815, 2
      %v817 = vmax.f32 %v815, %v816
      %v818 = vrot.slane %v817, 1
      %v819 = vmax.f32 %v817, %v818
      %v820 = vsel %vm245, %v199, -inf
      %v821 = vrot.slane %v820, 4
      %v822 = vmax.f32 %v820, %v821
      %v823 = vrot.slane %v822, 2
      %v824 = vmax.f32 %v822, %v823
      %v825 = vrot.slane %v824, 1
      %v826 = vmax.f32 %v824, %v825
      %v827 = vsel %vm245, %v200, -inf
      %v828 = vrot.slane %v827, 4
      %v829 = vmax.f32 %v827, %v828
      %v830 = vrot.slane %v829, 2
      %v831 = vmax.f32 %v829, %v830
      %v832 = vrot.slane %v831, 1
      %v833 = vmax.f32 %v831, %v832
      %v834 = vsel %vm245, %v201, -inf
      %v835 = vrot.slane %v834, 4
      %v836 = vmax.f32 %v834, %v835
      %v837 = vrot.slane %v836, 2
      %v838 = vmax.f32 %v836, %v837
      %v839 = vrot.slane %v838, 1
      %v840 = vmax.f32 %v838, %v839
      %v841 = vsel %vm245, %v202, -inf
      %v842 = vrot.slane %v841, 4
      %v843 = vmax.f32 %v841, %v842
      %v844 = vrot.slane %v843, 2
      %v845 = vmax.f32 %v843, %v844
      %v846 = vrot.slane %v845, 1
      %v847 = vmax.f32 %v845, %v846
      %v848 = vsel %vm245, %v203, -inf
      %v849 = vrot.slane %v848, 4
      %v850 = vmax.f32 %v848, %v849
      %v851 = vrot.slane %v850, 2
      %v852 = vmax.f32 %v850, %v851
      %v853 = vrot.slane %v852, 1
      %v854 = vmax.f32 %v852, %v853
      %v855 = vsel %vm245, %v204, -inf
      %v856 = vrot.slane %v855, 4
      %v857 = vmax.f32 %v855, %v856
      %v858 = vrot.slane %v857, 2
      %v859 = vmax.f32 %v857, %v858
      %v860 = vrot.slane %v859, 1
      %v861 = vmax.f32 %v859, %v860
      %v862 = vsel %vm245, %v205, -inf
      %v863 = vrot.slane %v862, 4
      %v864 = vmax.f32 %v862, %v863
      %v865 = vrot.slane %v864, 2
      %v866 = vmax.f32 %v864, %v865
      %v867 = vrot.slane %v866, 1
      %v868 = vmax.f32 %v866, %v867
      %v869 = vsel %vm245, %v206, -inf
      %v870 = vrot.slane %v869, 4
      %v871 = vmax.f32 %v869, %v870
      %v872 = vrot.slane %v871, 2
      %v873 = vmax.f32 %v871, %v872
      %v874 = vrot.slane %v873, 1
      %v875 = vmax.f32 %v873, %v874
      %v876 = vsel %vm245, %v207, -inf
      %v877 = vrot.slane %v876, 4
      %v878 = vmax.f32 %v876, %v877
      %v879 = vrot.slane %v878, 2
      %v880 = vmax.f32 %v878, %v879
      %v881 = vrot.slane %v880, 1
      %v882 = vmax.f32 %v880, %v881
      %v883 = vsel %vm245, %v208, -inf
      %v884 = vrot.slane %v883, 4
      %v885 = vmax.f32 %v883, %v884
      %v886 = vrot.slane %v885, 2
      %v887 = vmax.f32 %v885, %v886
      %v888 = vrot.slane %v887, 1
      %v889 = vmax.f32 %v887, %v888
      %v890 = vsel %vm245, %v209, -inf
      %v891 = vrot.slane %v890, 4
      %v892 = vmax.f32 %v890, %v891
      %v893 = vrot.slane %v892, 2
      %v894 = vmax.f32 %v892, %v893
      %v895 = vrot.slane %v894, 1
      %v896 = vmax.f32 %v894, %v895
      %v897 = vsel %vm245, %v210, -inf
      %v898 = vrot.slane %v897, 4
      %v899 = vmax.f32 %v897, %v898
      %v900 = vrot.slane %v899, 2
      %v901 = vmax.f32 %v899, %v900
      %v902 = vrot.slane %v901, 1
      %v903 = vmax.f32 %v901, %v902
      %v904 = vsel %vm245, %v211, -inf
      %v905 = vrot.slane %v904, 4
      %v906 = vmax.f32 %v904, %v905
      %v907 = vrot.slane %v906, 2
      %v908 = vmax.f32 %v906, %v907
      %v909 = vrot.slane %v908, 1
      %v910 = vmax.f32 %v908, %v909
      %v911 = vsel %vm245, %v212, -inf
      %v912 = vrot.slane %v911, 4
      %v913 = vmax.f32 %v911, %v912
      %v914 = vrot.slane %v913, 2
      %v915 = vmax.f32 %v913, %v914
      %v916 = vrot.slane %v915, 1
      %v917 = vmax.f32 %v915, %v916
      %v918 = vsel %vm245, %v213, -inf
      %v919 = vrot.slane %v918, 4
      %v920 = vmax.f32 %v918, %v919
      %v921 = vrot.slane %v920, 2
      %v922 = vmax.f32 %v920, %v921
      %v923 = vrot.slane %v922, 1
      %v924 = vmax.f32 %v922, %v923
      %v925 = vsel %vm245, %v214, -inf
      %v926 = vrot.slane %v925, 4
      %v927 = vmax.f32 %v925, %v926
      %v928 = vrot.slane %v927, 2
      %v929 = vmax.f32 %v927, %v928
      %v930 = vrot.slane %v929, 1
      %v931 = vmax.f32 %v929, %v930
      %v932 = vsel %vm245, %v215, -inf
      %v933 = vrot.slane %v932, 4
      %v934 = vmax.f32 %v932, %v933
      %v935 = vrot.slane %v934, 2
      %v936 = vmax.f32 %v934, %v935
      %v937 = vrot.slane %v936, 1
      %v938 = vmax.f32 %v936, %v937
      %v939 = vsel %vm245, %v216, -inf
      %v940 = vrot.slane %v939, 4
      %v941 = vmax.f32 %v939, %v940
      %v942 = vrot.slane %v941, 2
      %v943 = vmax.f32 %v941, %v942
      %v944 = vrot.slane %v943, 1
      %v945 = vmax.f32 %v943, %v944
      %v946 = vsel %vm245, %v217, -inf
      %v947 = vrot.slane %v946, 4
      %v948 = vmax.f32 %v946, %v947
      %v949 = vrot.slane %v948, 2
      %v950 = vmax.f32 %v948, %v949
      %v951 = vrot.slane %v950, 1
      %v952 = vmax.f32 %v950, %v951
      %v953 = vsel %vm245, %v218, -inf
      %v954 = vrot.slane %v953, 4
      %v955 = vmax.f32 %v953, %v954
      %v956 = vrot.slane %v955, 2
      %v957 = vmax.f32 %v955, %v956
      %v958 = vrot.slane %v957, 1
      %v959 = vmax.f32 %v957, %v958
      %v960 = vsel %vm245, %v219, -inf
      %v961 = vrot.slane %v960, 4
      %v962 = vmax.f32 %v960, %v961
      %v963 = vrot.slane %v962, 2
      %v964 = vmax.f32 %v962, %v963
      %v965 = vrot.slane %v964, 1
      %v966 = vmax.f32 %v964, %v965
      %v967 = vsel %vm245, %v220, -inf
      %v968 = vrot.slane %v967, 4
      %v969 = vmax.f32 %v967, %v968
      %v970 = vrot.slane %v969, 2
      %v971 = vmax.f32 %v969, %v970
      %v972 = vrot.slane %v971, 1
      %v973 = vmax.f32 %v971, %v972
      %v974 = vsel %vm245, %v221, -inf
      %v975 = vrot.slane %v974, 4
      %v976 = vmax.f32 %v974, %v975
      %v977 = vrot.slane %v976, 2
      %v978 = vmax.f32 %v976, %v977
      %v979 = vrot.slane %v978, 1
      %v980 = vmax.f32 %v978, %v979
      %v981 = vsel %vm245, %v222, -inf
      %v982 = vrot.slane %v981, 4
      %v983 = vmax.f32 %v981, %v982
      %v984 = vrot.slane %v983, 2
      %v985 = vmax.f32 %v983, %v984
      %v986 = vrot.slane %v985, 1
      %v987 = vmax.f32 %v985, %v986
      %v988 = vsel %vm245, %v223, -inf
      %v989 = vrot.slane %v988, 4
      %v990 = vmax.f32 %v988, %v989
      %v991 = vrot.slane %v990, 2
      %v992 = vmax.f32 %v990, %v991
      %v993 = vrot.slane %v992, 1
      %v994 = vmax.f32 %v992, %v993
      %v995 = vsel %vm245, %v224, -inf
      %v996 = vrot.slane %v995, 4
      %v997 = vmax.f32 %v995, %v996
      %v998 = vrot.slane %v997, 2
      %v999 = vmax.f32 %v997, %v998
      %v1000 = vrot.slane %v999, 1
      %v1001 = vmax.f32 %v999, %v1000
      %v1002 = vsel %vm245, %v225, -inf
      %v1003 = vrot.slane %v1002, 4
      %v1004 = vmax.f32 %v1002, %v1003
      %v1005 = vrot.slane %v1004, 2
      %v1006 = vmax.f32 %v1004, %v1005
      %v1007 = vrot.slane %v1006, 1
      %v1008 = vmax.f32 %v1006, %v1007
      %v1009 = vsel %vm245, %v226, -inf
      %v1010 = vrot.slane %v1009, 4
      %v1011 = vmax.f32 %v1009, %v1010
      %v1012 = vrot.slane %v1011, 2
      %v1013 = vmax.f32 %v1011, %v1012
      %v1014 = vrot.slane %v1013, 1
      %v1015 = vmax.f32 %v1013, %v1014
      %v1016 = vsel %vm245, %v227, -inf
      %v1017 = vrot.slane %v1016, 4
      %v1018 = vmax.f32 %v1016, %v1017
      %v1019 = vrot.slane %v1018, 2
      %v1020 = vmax.f32 %v1018, %v1019
      %v1021 = vrot.slane %v1020, 1
      %v1022 = vmax.f32 %v1020, %v1021
      %v1023 = vsel %vm245, %v228, -inf
      %v1024 = vrot.slane %v1023, 4
      %v1025 = vmax.f32 %v1023, %v1024
      %v1026 = vrot.slane %v1025, 2
      %v1027 = vmax.f32 %v1025, %v1026
      %v1028 = vrot.slane %v1027, 1
      %v1029 = vmax.f32 %v1027, %v1028
      %v1030 = vsel %vm245, %v229, -inf
      %v1031 = vrot.slane %v1030, 4
      %v1032 = vmax.f32 %v1030, %v1031
      %v1033 = vrot.slane %v1032, 2
      %v1034 = vmax.f32 %v1032, %v1033
      %v1035 = vrot.slane %v1034, 1
      %v1036 = vmax.f32 %v1034, %v1035
      %v1037 = vsel %vm245, %v230, -inf
      %v1038 = vrot.slane %v1037, 4
      %v1039 = vmax.f32 %v1037, %v1038
      %v1040 = vrot.slane %v1039, 2
      %v1041 = vmax.f32 %v1039, %v1040
      %v1042 = vrot.slane %v1041, 1
      %v1043 = vmax.f32 %v1041, %v1042
      %v1044 = vsel %vm245, %v231, -inf
      %v1045 = vrot.slane %v1044, 4
      %v1046 = vmax.f32 %v1044, %v1045
      %v1047 = vrot.slane %v1046, 2
      %v1048 = vmax.f32 %v1046, %v1047
      %v1049 = vrot.slane %v1048, 1
      %v1050 = vmax.f32 %v1048, %v1049
      %v1051 = vsel %vm245, %v232, -inf
      %v1052 = vrot.slane %v1051, 4
      %v1053 = vmax.f32 %v1051, %v1052
      %v1054 = vrot.slane %v1053, 2
      %v1055 = vmax.f32 %v1053, %v1054
      %v1056 = vrot.slane %v1055, 1
      %v1057 = vmax.f32 %v1055, %v1056
      %v1058 = vsel %vm245, %v233, -inf
      %v1059 = vrot.slane %v1058, 4
      %v1060 = vmax.f32 %v1058, %v1059
      %v1061 = vrot.slane %v1060, 2
      %v1062 = vmax.f32 %v1060, %v1061
      %v1063 = vrot.slane %v1062, 1
      %v1064 = vmax.f32 %v1062, %v1063
      %v1065 = vsel %vm245, %v234, -inf
      %v1066 = vrot.slane %v1065, 4
      %v1067 = vmax.f32 %v1065, %v1066
      %v1068 = vrot.slane %v1067, 2
      %v1069 = vmax.f32 %v1067, %v1068
      %v1070 = vrot.slane %v1069, 1
      %v1071 = vmax.f32 %v1069, %v1070
      %v1072 = vsel %vm245, %v235, -inf
      %v1073 = vrot.slane %v1072, 4
      %v1074 = vmax.f32 %v1072, %v1073
      %v1075 = vrot.slane %v1074, 2
      %v1076 = vmax.f32 %v1074, %v1075
      %v1077 = vrot.slane %v1076, 1
      %v1078 = vmax.f32 %v1076, %v1077
      %v1079 = vsel %vm245, %v236, -inf
      %v1080 = vrot.slane %v1079, 4
      %v1081 = vmax.f32 %v1079, %v1080
      %v1082 = vrot.slane %v1081, 2
      %v1083 = vmax.f32 %v1081, %v1082
      %v1084 = vrot.slane %v1083, 1
      %v1085 = vmax.f32 %v1083, %v1084
      %v1086 = vsel %vm245, %v237, -inf
      %v1087 = vrot.slane %v1086, 4
      %v1088 = vmax.f32 %v1086, %v1087
      %v1089 = vrot.slane %v1088, 2
      %v1090 = vmax.f32 %v1088, %v1089
      %v1091 = vrot.slane %v1090, 1
      %v1092 = vmax.f32 %v1090, %v1091
      %v1093 = vsel %vm245, %v238, -inf
      %v1094 = vrot.slane %v1093, 4
      %v1095 = vmax.f32 %v1093, %v1094
      %v1096 = vrot.slane %v1095, 2
      %v1097 = vmax.f32 %v1095, %v1096
      %v1098 = vrot.slane %v1097, 1
      %v1099 = vmax.f32 %v1097, %v1098
      %v1100 = vsel %vm245, %v239, -inf
      %v1101 = vrot.slane %v1100, 4
      %v1102 = vmax.f32 %v1100, %v1101
      %v1103 = vrot.slane %v1102, 2
      %v1104 = vmax.f32 %v1102, %v1103
      %v1105 = vrot.slane %v1104, 1
      %v1106 = vmax.f32 %v1104, %v1105
      %v1107 = vsel %vm245, %v240, -inf
      %v1108 = vrot.slane %v1107, 4
      %v1109 = vmax.f32 %v1107, %v1108
      %v1110 = vrot.slane %v1109, 2
      %v1111 = vmax.f32 %v1109, %v1110
      %v1112 = vrot.slane %v1111, 1
      %v1113 = vmax.f32 %v1111, %v1112
      %v1114 = vsel %vm245, %v241, -inf
      %v1115 = vrot.slane %v1114, 4
      %v1116 = vmax.f32 %v1114, %v1115
      %v1117 = vrot.slane %v1116, 2
      %v1118 = vmax.f32 %v1116, %v1117
      %v1119 = vrot.slane %v1118, 1
      %v1120 = vmax.f32 %v1118, %v1119
      %v1121 = vsel %vm245, %v242, -inf
      %v1122 = vrot.slane %v1121, 4
      %v1123 = vmax.f32 %v1121, %v1122
      %v1124 = vrot.slane %v1123, 2
      %v1125 = vmax.f32 %v1123, %v1124
      %v1126 = vrot.slane %v1125, 1
      %v1127 = vmax.f32 %v1125, %v1126
      %v1128 = vsel %vm245, %v243, -inf
      %v1129 = vrot.slane %v1128, 4
      %v1130 = vmax.f32 %v1128, %v1129
      %v1131 = vrot.slane %v1130, 2
      %v1132 = vmax.f32 %v1130, %v1131
      %v1133 = vrot.slane %v1132, 1
      %v1134 = vmax.f32 %v1132, %v1133
      %v1135 = vsel %vm245, %v244, -inf
      %v1136 = vrot.slane %v1135, 4
      %v1137 = vmax.f32 %v1135, %v1136
      %v1138 = vrot.slane %v1137, 2
      %v1139 = vmax.f32 %v1137, %v1138
      %v1140 = vrot.slane %v1139, 1
      %v1141 = vmax.f32 %v1139, %v1140
      %v1142 = vmax.f32 %v252, %v308
      %v1143 = vmax.f32 %v259, %v315
      %v1144 = vmax.f32 %v266, %v322
      %v1145 = vmax.f32 %v273, %v329
      %v1146 = vmax.f32 %v280, %v336
      %v1147 = vmax.f32 %v287, %v343
      %v1148 = vmax.f32 %v294, %v350
      %v1149 = vmax.f32 %v301, %v357
      %v1150 = vmax.f32 %v364, %v420
      %v1151 = vmax.f32 %v371, %v427
      %v1152 = vmax.f32 %v378, %v434
      %v1153 = vmax.f32 %v385, %v441
      %v1154 = vmax.f32 %v392, %v448
      %v1155 = vmax.f32 %v399, %v455
      %v1156 = vmax.f32 %v406, %v462
      %v1157 = vmax.f32 %v413, %v469
      %v1158 = vmax.f32 %v476, %v532
      %v1159 = vmax.f32 %v483, %v539
      %v1160 = vmax.f32 %v490, %v546
      %v1161 = vmax.f32 %v497, %v553
      %v1162 = vmax.f32 %v504, %v560
      %v1163 = vmax.f32 %v511, %v567
      %v1164 = vmax.f32 %v518, %v574
      %v1165 = vmax.f32 %v525, %v581
      %v1166 = vmax.f32 %v588, %v644
      %v1167 = vmax.f32 %v595, %v651
      %v1168 = vmax.f32 %v602, %v658
      %v1169 = vmax.f32 %v609, %v665
      %v1170 = vmax.f32 %v616, %v672
      %v1171 = vmax.f32 %v623, %v679
      %v1172 = vmax.f32 %v630, %v686
      %v1173 = vmax.f32 %v637, %v693
      %v1174 = vmax.f32 %v700, %v756
      %v1175 = vmax.f32 %v707, %v763
      %v1176 = vmax.f32 %v714, %v770
      %v1177 = vmax.f32 %v721, %v777
      %v1178 = vmax.f32 %v728, %v784
      %v1179 = vmax.f32 %v735, %v791
      %v1180 = vmax.f32 %v742, %v798
      %v1181 = vmax.f32 %v749, %v805
      %v1182 = vmax.f32 %v812, %v868
      %v1183 = vmax.f32 %v819, %v875
      %v1184 = vmax.f32 %v826, %v882
      %v1185 = vmax.f32 %v833, %v889
      %v1186 = vmax.f32 %v840, %v896
      %v1187 = vmax.f32 %v847, %v903
      %v1188 = vmax.f32 %v854, %v910
      %v1189 = vmax.f32 %v861, %v917
      %v1190 = vmax.f32 %v924, %v980
      %v1191 = vmax.f32 %v931, %v987
      %v1192 = vmax.f32 %v938, %v994
      %v1193 = vmax.f32 %v945, %v1001
      %v1194 = vmax.f32 %v952, %v1008
      %v1195 = vmax.f32 %v959, %v1015
      %v1196 = vmax.f32 %v966, %v1022
      %v1197 = vmax.f32 %v973, %v1029
      %v1198 = vmax.f32 %v1036, %v1092
      %v1199 = vmax.f32 %v1043, %v1099
      %v1200 = vmax.f32 %v1050, %v1106
      %v1201 = vmax.f32 %v1057, %v1113
      %v1202 = vmax.f32 %v1064, %v1120
      %v1203 = vmax.f32 %v1071, %v1127
      %v1204 = vmax.f32 %v1078, %v1134
      %v1205 = vmax.f32 %v1085, %v1141
      %vm1270 = vcmask 1041409
      %v1271 = vsel %vm1270, %v1143, %v1142
      %vm1272 = vcmask 1042434
      %v1273 = vsel %vm1272, %v1144, %v1271
      %vm1274 = vcmask 1043459
      %v1275 = vsel %vm1274, %v1145, %v1273
      %vm1276 = vcmask 1044484
      %v1277 = vsel %vm1276, %v1146, %v1275
      %vm1278 = vcmask 1045509
      %v1279 = vsel %vm1278, %v1147, %v1277
      %vm1280 = vcmask 1046534
      %v1281 = vsel %vm1280, %v1148, %v1279
      %vm1282 = vcmask 1047559
      %v1283 = vsel %vm1282, %v1149, %v1281
      %v1284 = vsel %vm1270, %v1151, %v1150
      %v1285 = vsel %vm1272, %v1152, %v1284
      %v1286 = vsel %vm1274, %v1153, %v1285
      %v1287 = vsel %vm1276, %v1154, %v1286
      %v1288 = vsel %vm1278, %v1155, %v1287
      %v1289 = vsel %vm1280, %v1156, %v1288
      %v1290 = vsel %vm1282, %v1157, %v1289
      %v1291 = vsel %vm1270, %v1159, %v1158
      %v1292 = vsel %vm1272, %v1160, %v1291
      %v1293 = vsel %vm1274, %v1161, %v1292
      %v1294 = vsel %vm1276, %v1162, %v1293
      %v1295 = vsel %vm1278, %v1163, %v1294
      %v1296 = vsel %vm1280, %v1164, %v1295
      %v1297 = vsel %vm1282, %v1165, %v1296
      %v1298 = vsel %vm1270, %v1167, %v1166
      %v1299 = vsel %vm1272, %v1168, %v1298
      %v1300 = vsel %vm1274, %v1169, %v1299
      %v1301 = vsel %vm1276, %v1170, %v1300
      %v1302 = vsel %vm1278, %v1171, %v1301
      %v1303 = vsel %vm1280, %v1172, %v1302
      %v1304 = vsel %vm1282, %v1173, %v1303
      %v1305 = vsel %vm1270, %v1175, %v1174
      %v1306 = vsel %vm1272, %v1176, %v1305
      %v1307 = vsel %vm1274, %v1177, %v1306
      %v1308 = vsel %vm1276, %v1178, %v1307
      %v1309 = vsel %vm1278, %v1179, %v1308
      %v1310 = vsel %vm1280, %v1180, %v1309
      %v1311 = vsel %vm1282, %v1181, %v1310
      %v1312 = vsel %vm1270, %v1183, %v1182
      %v1313 = vsel %vm1272, %v1184, %v1312
      %v1314 = vsel %vm1274, %v1185, %v1313
      %v1315 = vsel %vm1276, %v1186, %v1314
      %v1316 = vsel %vm1278, %v1187, %v1315
      %v1317 = vsel %vm1280, %v1188, %v1316
      %v1318 = vsel %vm1282, %v1189, %v1317
      %v1319 = vsel %vm1270, %v1191, %v1190
      %v1320 = vsel %vm1272, %v1192, %v1319
      %v1321 = vsel %vm1274, %v1193, %v1320
      %v1322 = vsel %vm1276, %v1194, %v1321
      %v1323 = vsel %vm1278, %v1195, %v1322
      %v1324 = vsel %vm1280, %v1196, %v1323
      %v1325 = vsel %vm1282, %v1197, %v1324
      %v1326 = vsel %vm1270, %v1199, %v1198
      %v1327 = vsel %vm1272, %v1200, %v1326
      %v1328 = vsel %vm1274, %v1201, %v1327
      %v1329 = vsel %vm1276, %v1202, %v1328
      %v1330 = vsel %vm1278, %v1203, %v1329
      %v1331 = vsel %vm1280, %v1204, %v1330
      %v1332 = vsel %vm1282, %v1205, %v1331
      %1341 = vst [vmem:[%s116] sm:$0xff] %v1283
      %1342 = vst [vmem:[%s116 + $0x8] sm:$0xff] %v1290
      %1343 = vst [vmem:[%s116 + $0x10] sm:$0xff] %v1297
      %1344 = vst [vmem:[%s116 + $0x18] sm:$0xff] %v1304
      %1345 = vst [vmem:[%s116 + $0x20] sm:$0xff] %v1311
      %1346 = vst [vmem:[%s116 + $0x28] sm:$0xff] %v1318
      %1347 = vst [vmem:[%s116 + $0x30] sm:$0xff] %v1325
      %1348 = vst [vmem:[%s116 + $0x38] sm:$0xff] %v1332
      %p1349 = scmp.lt.s32.totalorder %s12, 1
      %s1350 = scalar_select %p1349, %s12, 1
      %s1351 = smul.addr %s1350, 8
      %s1352 = smul.addr %s1351, 8
      %s1353 = scalar_lea.vmem %s1, %s1352
      // Predicated region
      $region25: #{downsample_forward.15} parent=23 // pred_check
        %p1354 = pneg %p56
      $region26: #{downsample_forward.15} parent=23 // pred_check_branch
        %1356 = sbr.rel (%p1354) target = $region28
      $region27: #{downsample_forward.15} parent=23 // pred_region
        _
      $region28: #{downsample_forward.15} parent=23 // pred_fallthru
        _
    $region24: #{downsample_forward.15} parent=5 // pred_fallthru
      _
    %p1357 = scmp.le.s32.totalorder 2, %s7
    // Predicated region
    $region29: #{downsample_forward.15} parent=5 // pred_check
      %p1358 = pneg %p1357
    $region30: #{downsample_forward.15} parent=5 // pred_check_branch
      %1360 = sbr.rel (%p1358) target = $region32
    $region31: #{downsample_forward.15} parent=5 // pred_region
      %s1361 = ssub.s32 %s7, 2
      // Predicated region
      $region33: #{downsample_forward.15} parent=31 // pred_check
        %p1362 = pneg %p62
      $region34: #{downsample_forward.15} parent=31 // pred_check_branch
        %1364 = sbr.rel (%p1362) target = $region36
      $region35: #{downsample_forward.15} parent=31 // pred_region
        %p1365 = scmp.lt.s32.totalorder %s13, 1
        %s1366 = scalar_select %p1365, %s13, 1
        %s1367 = smul.addr %s1366, 8
        %s1368 = smul.addr %s1367, 8
        %s1369 = scalar_lea.vmem %s1, %s1368
      $region36: #{downsample_forward.15} parent=31 // pred_fallthru
        _
    $region32: #{downsample_forward.15} parent=5 // pred_fallthru
      _
  $region6: #{downsample_forward.15} parent=0 // loop_footer
    %s11 = sadd.s32 1, %s7
  $region7: #{downsample_forward.15} parent=0 // loop_footer_branch
    %6 = sbr.rel target = $region3
  $region8: #{downsample_forward.15} parent=0 // loop_exit
    _

// kernel: downsample_forward.8
$region0: #{downsample_forward.8}
  #allocation0 [shape = 'u32[]', space=smem, size = 0x4, offset = 0x4, fixed_abs, tag = 'smem constant byte address 0x4 - core index']
  #allocation1 [shape = 'u32[144,128]{1,0:T(1,128)}', space=vmem, size = 0x12000, scoped, tag = 'internal scratch']
  #allocation2 [shape = 'f32[18,18,128]{2,1,0:T(8,128)}', space=vmem, size = 0x36000, scoped, tag = 'scratch operand']
  #allocation3 [shape = 'bf16[256,1152]{1,0:T(16,128)(2,1)}', space=vmem, size = 0x90000, scoped, tag = 'scratch operand']
  %s0 = inlined_call_operand.vmem [shape: f32[2,16,16,128], index: 0, kind: input, shape index: {}]
  %s1 = inlined_call_operand.vmem [shape: bf16[1152,128], index: 1, kind: input, shape index: {}]
  %s2 = inlined_call_operand.vmem [shape: f32[1,128], index: 2, kind: input, shape index: {}]
  %s3 = inlined_call_operand.vmem [shape: f32[2,16,16,128], index: 3, kind: output, shape index: {}]
  %s4 = sld [smem:[#allocation0]]
  $region45: #{downsample_forward.8} parent=0
    _
  %s6 = ssub.s32 1, %s4
  %s7 = scalar_select 0, %s6, %s4
  loop: start=0, step=1, limit=4
  $region2: #{downsample_forward.8} parent=0 // loop_pre_header
    _
  $region3: #{downsample_forward.8} parent=0 // loop_header
    %s9 = sphi 0, %s13
    %p10 = scmp.ge.s32.totalorder %s9, 4
    %s19 = sphi 0, %s21
    %s22 = sphi 0, %s19
    %s23 = sphi 0, %s22
    %s39 = sphi 0, %s23
    %s43 = sphi 0, %s43
    %s45 = sphi 0, %s43
    %s46 = sphi 0, %s45
    %s60 = sphi 0, %s46
    %s64 = sphi 0, %s64
    %s66 = sphi 0, %s64
    %s67 = sphi 0, %s66
    %s81 = sphi 0, %s67
    %s87 = sphi 0, %s89
    %s90 = sphi 0, %s87
    %s91 = sphi 0, %s90
    %s107 = sphi 0, %s91
  $region4: #{downsample_forward.8} parent=0 // loop_header_branch
    %12 = sbr.rel (%p10) target = $region8
  $region5: #{downsample_forward.8} parent=0 // loop_body
    %s14 = ssub.s32 %s9, 1
    %s15 = ssub.s32 %s9, 2
    %s16 = sadd.s32 %s9, 1
    %s17 = ssub.s32 %s9, %s16
    %p18 = scmp.eq.s32.totalorder %s17, 0
    %s20 = sadd.s32 %s19, 1
    %s21 = scalar_select %p18, %s19, %s20
    %p24 = pneg %p18
    %p25 = scmp.eq.s32.totalorder %s9, 1
    %p26 = por %p24, %p25
    %p27 = scmp.ne.s32.totalorder %s19, %s22
    %p28 = scmp.eq.s32.totalorder %s9, 0
    %p29 = por %p27, %p28
    %p30 = scmp.ne.s32.totalorder %s19, %s22
    %p31 = scmp.eq.s32.totalorder %s14, 1
    %p32 = por %p30, %p31
    %p33 = scmp.ne.s32.totalorder %s22, %s23
    %p34 = scmp.eq.s32.totalorder %s14, 0
    %p35 = por %p33, %p34
    %p36 = scmp.ne.s32.totalorder %s22, %s23
    %p37 = scmp.eq.s32.totalorder %s15, 1
    %p38 = por %p36, %p37
    %p40 = scmp.ne.s32.totalorder %s23, %s39
    %p41 = scmp.eq.s32.totalorder %s15, 0
    %p42 = por %p40, %p41
    %s44 = sadd.s32 %s43, 1
    %p47 = scmp.eq.s32.totalorder %s9, 1
    %p48 = scmp.ne.s32.totalorder %s43, %s45
    %p49 = scmp.eq.s32.totalorder %s9, 0
    %p50 = por %p48, %p49
    %p51 = scmp.ne.s32.totalorder %s43, %s45
    %p52 = scmp.eq.s32.totalorder %s14, 1
    %p53 = por %p51, %p52
    %p54 = scmp.ne.s32.totalorder %s45, %s46
    %p55 = scmp.eq.s32.totalorder %s14, 0
    %p56 = por %p54, %p55
    %p57 = scmp.ne.s32.totalorder %s45, %s46
    %p58 = scmp.eq.s32.totalorder %s15, 1
    %p59 = por %p57, %p58
    %p61 = scmp.ne.s32.totalorder %s46, %s60
    %p62 = scmp.eq.s32.totalorder %s15, 0
    %p63 = por %p61, %p62
    %s65 = sadd.s32 %s64, 1
    %p68 = scmp.eq.s32.totalorder %s9, 1
    %p69 = scmp.ne.s32.totalorder %s64, %s66
    %p70 = scmp.eq.s32.totalorder %s9, 0
    %p71 = por %p69, %p70
    %p72 = scmp.ne.s32.totalorder %s64, %s66
    %p73 = scmp.eq.s32.totalorder %s14, 1
    %p74 = por %p72, %p73
    %p75 = scmp.ne.s32.totalorder %s66, %s67
    %p76 = scmp.eq.s32.totalorder %s14, 0
    %p77 = por %p75, %p76
    %p78 = scmp.ne.s32.totalorder %s66, %s67
    %p79 = scmp.eq.s32.totalorder %s15, 1
    %p80 = por %p78, %p79
    %p82 = scmp.ne.s32.totalorder %s67, %s81
    %p83 = scmp.eq.s32.totalorder %s15, 0
    %p84 = por %p82, %p83
    %s85 = ssub.s32 %s9, %s16
    %p86 = scmp.eq.s32.totalorder %s85, 0
    %s88 = sadd.s32 %s87, 1
    %s89 = scalar_select %p86, %s87, %s88
    %p92 = pneg %p86
    %p93 = scmp.eq.s32.totalorder %s9, 1
    %p94 = por %p92, %p93
    %p95 = scmp.ne.s32.totalorder %s87, %s90
    %p96 = scmp.eq.s32.totalorder %s9, 0
    %p97 = por %p95, %p96
    %p98 = scmp.ne.s32.totalorder %s87, %s90
    %p99 = scmp.eq.s32.totalorder %s14, 1
    %p100 = por %p98, %p99
    %p101 = scmp.ne.s32.totalorder %s90, %s91
    %p102 = scmp.eq.s32.totalorder %s14, 0
    %p103 = por %p101, %p102
    %p104 = scmp.ne.s32.totalorder %s90, %s91
    %p105 = scmp.eq.s32.totalorder %s15, 1
    %p106 = por %p104, %p105
    %p108 = scmp.ne.s32.totalorder %s91, %s107
    %p109 = scmp.eq.s32.totalorder %s15, 0
    %p110 = por %p108, %p109
    %p111 = scmp.le.s32.totalorder 1, %s9
    %p112 = scmp.lt.s32.totalorder %s9, 3
    %p113 = pnand %p111, %p112
    %p114 = pneg %p113
    // Predicated region
    $region9: #{downsample_forward.8} parent=5 // pred_check
      _
    $region10: #{downsample_forward.8} parent=5 // pred_check_branch
      %116 = sbr.rel (%p113) target = $region12
    $region11: #{downsample_forward.8} parent=5 // pred_region
      %s117 = ssub.s32 %s9, 1
      // Predicated region
      $region13: #{downsample_forward.8} parent=11 // pred_check
        %p118 = pneg %p56
      $region14: #{downsample_forward.8} parent=11 // pred_check_branch
        %120 = sbr.rel (%p118) target = $region16
      $region15: #{downsample_forward.8} parent=11 // pred_region
        _
      $region16: #{downsample_forward.8} parent=11 // pred_fallthru
        _
      // Predicated region
      $region17: #{downsample_forward.8} parent=11 // pred_check
        %p121 = pneg %p77
      $region18: #{downsample_forward.8} parent=11 // pred_check_branch
        %123 = sbr.rel (%p121) target = $region20
      $region19: #{downsample_forward.8} parent=11 // pred_region
        _
      $region20: #{downsample_forward.8} parent=11 // pred_fallthru
        _
    $region12: #{downsample_forward.8} parent=5 // pred_fallthru
      _
    %p124 = scmp.lt.s32.totalorder %s9, 2
    // Predicated region
    $region21: #{downsample_forward.8} parent=5 // pred_check
      %p125 = pneg %p124
    $region22: #{downsample_forward.8} parent=5 // pred_check_branch
      %127 = sbr.rel (%p125) target = $region24
    $region23: #{downsample_forward.8} parent=5 // pred_region
      // Predicated region
      $region25: #{downsample_forward.8} parent=23 // pred_check
        %p128 = pneg %p29
      $region26: #{downsample_forward.8} parent=23 // pred_check_branch
        %130 = sbr.rel (%p128) target = $region28
      $region27: #{downsample_forward.8} parent=23 // pred_region
        %p131 = scmp.lt.s32.totalorder %s9, 1
        %s132 = scalar_select %p131, %s9, 1
        %s133 = smul.addr %s132, 32
        %s134 = smul.addr %s133, 8
        %s135 = scalar_lea.vmem %s0, %s134
      $region28: #{downsample_forward.8} parent=23 // pred_fallthru
        _
    $region24: #{downsample_forward.8} parent=5 // pred_fallthru
      _
    %p136 = scmp.le.s32.totalorder 1, %s9
    %p137 = scmp.lt.s32.totalorder %s9, 3
    %p138 = pnand %p136, %p137
    %p139 = pneg %p138
    // Predicated region
    $region29: #{downsample_forward.8} parent=5 // pred_check
      _
    $region30: #{downsample_forward.8} parent=5 // pred_check_branch
      %141 = sbr.rel (%p138) target = $region32
    $region31: #{downsample_forward.8} parent=5 // pred_region
      %s142 = ssub.s32 %s9, 1
      %p143 = scmp.lt.s32.totalorder %s14, 1
      %s144 = scalar_select %p143, %s14, 1
      %s145 = smul.addr %s144, 32
      %s146 = smul.addr %s145, 8
      %s147 = scalar_lea.vmem %s0, %s146
      %p148 = pneg %p35
      %p149 = pneg %p32
      %p150 = pneg %p56
      %p151 = pneg %p53
      %p152 = pneg %p77
      %p153 = pneg %p74
      %p154 = pneg %p103
      %p155 = pneg %p100
      %p156 = scmp.lt.s32.totalorder %s14, 1
      %s157 = scalar_select %p156, %s14, 1
      %s158 = smul.addr %s157, 32
      %s159 = smul.addr %s158, 8
      %s160 = scalar_lea.vmem %s3, %s159
      %p161 = scmp.lt.s32.totalorder %s14, 1
      %s162 = scalar_select %p161, %s14, 1
      %s163 = smul.addr %s162, 32
      %s164 = smul.addr %s163, 8
      %s165 = scalar_lea.vmem %s0, %s164
      %p166 = scmp.lt.s32.totalorder %s14, 1
      %s167 = scalar_select %p166, %s14, 1
      %s168 = smul.addr %s167, 32
      %s169 = smul.addr %s168, 8
      %s170 = scalar_lea.vmem %s3, %s169
      %v172 = vld [vmem:[%s165] sm:$0xff]
      %v173 = vld [vmem:[%s165 + $0x8] sm:$0xff]
      %v174 = vld [vmem:[%s165 + $0x10] sm:$0xff]
      %v175 = vld [vmem:[%s165 + $0x18] sm:$0xff]
      %v176 = vld [vmem:[%s165 + $0x20] sm:$0xff]
      %v177 = vld [vmem:[%s165 + $0x28] sm:$0xff]
      %v178 = vld [vmem:[%s165 + $0x30] sm:$0xff]
      %v179 = vld [vmem:[%s165 + $0x38] sm:$0xff]
      %v180 = vld [vmem:[%s165 + $0x40] sm:$0xff]
      %v181 = vld [vmem:[%s165 + $0x48] sm:$0xff]
      %v182 = vld [vmem:[%s165 + $0x50] sm:$0xff]
      %v183 = vld [vmem:[%s165 + $0x58] sm:$0xff]
      %v184 = vld [vmem:[%s165 + $0x60] sm:$0xff]
      %v185 = vld [vmem:[%s165 + $0x68] sm:$0xff]
      %v186 = vld [vmem:[%s165 + $0x70] sm:$0xff]
      %v187 = vld [vmem:[%s165 + $0x78] sm:$0xff]
      %v188 = vld [vmem:[%s165 + $0x80] sm:$0xff]
      %v189 = vld [vmem:[%s165 + $0x88] sm:$0xff]
      %v190 = vld [vmem:[%s165 + $0x90] sm:$0xff]
      %v191 = vld [vmem:[%s165 + $0x98] sm:$0xff]
      %v192 = vld [vmem:[%s165 + $0xa0] sm:$0xff]
      %v193 = vld [vmem:[%s165 + $0xa8] sm:$0xff]
      %v194 = vld [vmem:[%s165 + $0xb0] sm:$0xff]
      %v195 = vld [vmem:[%s165 + $0xb8] sm:$0xff]
      %v196 = vld [vmem:[%s165 + $0xc0] sm:$0xff]
      %v197 = vld [vmem:[%s165 + $0xc8] sm:$0xff]
      %v198 = vld [vmem:[%s165 + $0xd0] sm:$0xff]
      %v199 = vld [vmem:[%s165 + $0xd8] sm:$0xff]
      %v200 = vld [vmem:[%s165 + $0xe0] sm:$0xff]
      %v201 = vld [vmem:[%s165 + $0xe8] sm:$0xff]
      %v202 = vld [vmem:[%s165 + $0xf0] sm:$0xff]
      %v203 = vld [vmem:[%s165 + $0xf8] sm:$0xff]
      %204 = vst [vmem:[#allocation2] sm:$0xff] 0.0
      %205 = vst [vmem:[#allocation2 + $0x8] sm:$0xff] 0.0
      %206 = vst [vmem:[#allocation2 + $0x10] sm:$0x3] 0.0
      %207 = vst [vmem:[#allocation2 + $0x18] sm:$0xff] 0.0
      %208 = vst [vmem:[#allocation2 + $0x20] sm:$0xff] 0.0
      %209 = vst [vmem:[#allocation2 + $0x28] sm:$0x3] 0.0
      %210 = vst [vmem:[#allocation2 + $0x30] sm:$0xff] 0.0
      %211 = vst [vmem:[#allocation2 + $0x38] sm:$0xff] 0.0
      %212 = vst [vmem:[#allocation2 + $0x40] sm:$0x3] 0.0
      %213 = vst [vmem:[#allocation2 + $0x48] sm:$0xff] 0.0
      %214 = vst [vmem:[#allocation2 + $0x50] sm:$0xff] 0.0
      %215 = vst [vmem:[#allocation2 + $0x58] sm:$0x3] 0.0
      %216 = vst [vmem:[#allocation2 + $0x60] sm:$0xff] 0.0
      %217 = vst [vmem:[#allocation2 + $0x68] sm:$0xff] 0.0
      %218 = vst [vmem:[#allocation2 + $0x70] sm:$0x3] 0.0
      %219 = vst [vmem:[#allocation2 + $0x78] sm:$0xff] 0.0
      %220 = vst [vmem:[#allocation2 + $0x80] sm:$0xff] 0.0
      %221 = vst [vmem:[#allocation2 + $0x88] sm:$0x3] 0.0
      %222 = vst [vmem:[#allocation2 + $0x90] sm:$0xff] 0.0
      %223 = vst [vmem:[#allocation2 + $0x98] sm:$0xff] 0.0
      %224 = vst [vmem:[#allocation2 + $0xa0] sm:$0x3] 0.0
      %225 = vst [vmem:[#allocation2 + $0xa8] sm:$0xff] 0.0
      %226 = vst [vmem:[#allocation2 + $0xb0] sm:$0xff] 0.0
      %227 = vst [vmem:[#allocation2 + $0xb8] sm:$0x3] 0.0
      %228 = vst [vmem:[#allocation2 + $0xc0] sm:$0xff] 0.0
      %229 = vst [vmem:[#allocation2 + $0xc8] sm:$0xff] 0.0
      %230 = vst [vmem:[#allocation2 + $0xd0] sm:$0x3] 0.0
      %231 = vst [vmem:[#allocation2 + $0xd8] sm:$0xff] 0.0
      %232 = vst [vmem:[#allocation2 + $0xe0] sm:$0xff] 0.0
      %233 = vst [vmem:[#allocation2 + $0xe8] sm:$0x3] 0.0
      %234 = vst [vmem:[#allocation2 + $0xf0] sm:$0xff] 0.0
      %235 = vst [vmem:[#allocation2 + $0xf8] sm:$0xff] 0.0
      %236 = vst [vmem:[#allocation2 + $0x100] sm:$0x3] 0.0
      %237 = vst [vmem:[#allocation2 + $0x108] sm:$0xff] 0.0
      %238 = vst [vmem:[#allocation2 + $0x110] sm:$0xff] 0.0
      %239 = vst [vmem:[#allocation2 + $0x118] sm:$0x3] 0.0
      %240 = vst [vmem:[#allocation2 + $0x120] sm:$0xff] 0.0
      %241 = vst [vmem:[#allocation2 + $0x128] sm:$0xff] 0.0
      %242 = vst [vmem:[#allocation2 + $0x130] sm:$0x3] 0.0
      %243 = vst [vmem:[#allocation2 + $0x138] sm:$0xff] 0.0
      %244 = vst [vmem:[#allocation2 + $0x140] sm:$0xff] 0.0
      %245 = vst [vmem:[#allocation2 + $0x148] sm:$0x3] 0.0
      %246 = vst [vmem:[#allocation2 + $0x150] sm:$0xff] 0.0
      %247 = vst [vmem:[#allocation2 + $0x158] sm:$0xff] 0.0
      %248 = vst [vmem:[#allocation2 + $0x160] sm:$0x3] 0.0
      %249 = vst [vmem:[#allocation2 + $0x168] sm:$0xff] 0.0
      %250 = vst [vmem:[#allocation2 + $0x170] sm:$0xff] 0.0
      %251 = vst [vmem:[#allocation2 + $0x178] sm:$0x3] 0.0
      %252 = vst [vmem:[#allocation2 + $0x180] sm:$0xff] 0.0
      %253 = vst [vmem:[#allocation2 + $0x188] sm:$0xff] 0.0
      %254 = vst [vmem:[#allocation2 + $0x190] sm:$0x3] 0.0
      %255 = vst [vmem:[#allocation2 + $0x198] sm:$0xff] 0.0
      %256 = vst [vmem:[#allocation2 + $0x1a0] sm:$0xff] 0.0
      %257 = vst [vmem:[#allocation2 + $0x1a8] sm:$0x3] 0.0
      %s258 = scalar_lea.vmem [#allocation2], 24
      %259 = vst [vmem:[%s258 + $0x1] sm:$0xff] %v172
      %260 = vst [vmem:[%s258 + $0x9] sm:$0xff] %v173
      %261 = vst [vmem:[%s258 + $0x19] sm:$0xff] %v174
      %262 = vst [vmem:[%s258 + $0x21] sm:$0xff] %v175
      %263 = vst [vmem:[%s258 + $0x31] sm:$0xff] %v176
      %264 = vst [vmem:[%s258 + $0x39] sm:$0xff] %v177
      %265 = vst [vmem:[%s258 + $0x49] sm:$0xff] %v178
      %266 = vst [vmem:[%s258 + $0x51] sm:$0xff] %v179
      %267 = vst [vmem:[%s258 + $0x61] sm:$0xff] %v180
      %268 = vst [vmem:[%s258 + $0x69] sm:$0xff] %v181
      %269 = vst [vmem:[%s258 + $0x79] sm:$0xff] %v182
      %270 = vst [vmem:[%s258 + $0x81] sm:$0xff] %v183
      %271 = vst [vmem:[%s258 + $0x91] sm:$0xff] %v184
      %272 = vst [vmem:[%s258 + $0x99] sm:$0xff] %v185
      %273 = vst [vmem:[%s258 + $0xa9] sm:$0xff] %v186
      %274 = vst [vmem:[%s258 + $0xb1] sm:$0xff] %v187
      %275 = vst [vmem:[%s258 + $0xc1] sm:$0xff] %v188
      %276 = vst [vmem:[%s258 + $0xc9] sm:$0xff] %v189
      %277 = vst [vmem:[%s258 + $0xd9] sm:$0xff] %v190
      %278 = vst [vmem:[%s258 + $0xe1] sm:$0xff] %v191
      %279 = vst [vmem:[%s258 + $0xf1] sm:$0xff] %v192
      %280 = vst [vmem:[%s258 + $0xf9] sm:$0xff] %v193
      %281 = vst [vmem:[%s258 + $0x109] sm:$0xff] %v194
      %282 = vst [vmem:[%s258 + $0x111] sm:$0xff] %v195
      %283 = vst [vmem:[%s258 + $0x121] sm:$0xff] %v196
      %284 = vst [vmem:[%s258 + $0x129] sm:$0xff] %v197
      %285 = vst [vmem:[%s258 + $0x139] sm:$0xff] %v198
      %286 = vst [vmem:[%s258 + $0x141] sm:$0xff] %v199
      %287 = vst [vmem:[%s258 + $0x151] sm:$0xff] %v200
      %288 = vst [vmem:[%s258 + $0x159] sm:$0xff] %v201
      %289 = vst [vmem:[%s258 + $0x169] sm:$0xff] %v202
      %290 = vst [vmem:[%s258 + $0x171] sm:$0xff] %v203
      %v291 = vld [vmem:[#allocation2] sm:$0xff]
      %v292 = vld [vmem:[#allocation2 + $0x8] sm:$0xff]
      %v293 = vld [vmem:[#allocation2 + $0x18] sm:$0xff]
      %v294 = vld [vmem:[#allocation2 + $0x20] sm:$0xff]
      %v295 = vld [vmem:[#allocation2 + $0x30] sm:$0xff]
      %v296 = vld [vmem:[#allocation2 + $0x38] sm:$0xff]
      %v297 = vld [vmem:[#allocation2 + $0x48] sm:$0xff]
      %v298 = vld [vmem:[#allocation2 + $0x50] sm:$0xff]
      %v299 = vld [vmem:[#allocation2 + $0x60] sm:$0xff]
      %v300 = vld [vmem:[#allocation2 + $0x68] sm:$0xff]
      %v301 = vld [vmem:[#allocation2 + $0x78] sm:$0xff]
      %v302 = vld [vmem:[#allocation2 + $0x80] sm:$0xff]
      %v303 = vld [vmem:[#allocation2 + $0x90] sm:$0xff]
      %v304 = vld [vmem:[#allocation2 + $0x98] sm:$0xff]
      %v305 = vld [vmem:[#allocation2 + $0xa8] sm:$0xff]
      %v306 = vld [vmem:[#allocation2 + $0xb0] sm:$0xff]
      %v307 = vld [vmem:[#allocation2 + $0xc0] sm:$0xff]
      %v308 = vld [vmem:[#allocation2 + $0xc8] sm:$0xff]
      %v309 = vld [vmem:[#allocation2 + $0xd8] sm:$0xff]
      %v310 = vld [vmem:[#allocation2 + $0xe0] sm:$0xff]
      %v311 = vld [vmem:[#allocation2 + $0xf0] sm:$0xff]
      %v312 = vld [vmem:[#allocation2 + $0xf8] sm:$0xff]
      %v313 = vld [vmem:[#allocation2 + $0x108] sm:$0xff]
      %v314 = vld [vmem:[#allocation2 + $0x110] sm:$0xff]
      %v315 = vld [vmem:[#allocation2 + $0x120] sm:$0xff]
      %v316 = vld [vmem:[#allocation2 + $0x128] sm:$0xff]
      %v317 = vld [vmem:[#allocation2 + $0x138] sm:$0xff]
      %v318 = vld [vmem:[#allocation2 + $0x140] sm:$0xff]
      %v319 = vld [vmem:[#allocation2 + $0x150] sm:$0xff]
      %v320 = vld [vmem:[#allocation2 + $0x158] sm:$0xff]
      %v321 = vld [vmem:[#allocation2 + $0x168] sm:$0xff]
      %v322 = vld [vmem:[#allocation2 + $0x170] sm:$0xff]
      %v323 = vpack.c.bf16 %v292, %v291
      %v324 = vpack.c.bf16 %v294, %v293
      %v325 = vpack.c.bf16 %v296, %v295
      %v326 = vpack.c.bf16 %v298, %v297
      %v327 = vpack.c.bf16 %v300, %v299
      %v328 = vpack.c.bf16 %v302, %v301
      %v329 = vpack.c.bf16 %v304, %v303
      %v330 = vpack.c.bf16 %v306, %v305
      %v331 = vpack.c.bf16 %v308, %v307
      %v332 = vpack.c.bf16 %v310, %v309
      %v333 = vpack.c.bf16 %v312, %v311
      %v334 = vpack.c.bf16 %v314, %v313
      %v335 = vpack.c.bf16 %v316, %v315
      %v336 = vpack.c.bf16 %v318, %v317
      %v337 = vpack.c.bf16 %v320, %v319
      %v338 = vpack.c.bf16 %v322, %v321
      %339 = vst [vmem:[#allocation3] sm:$0xff] %v323
      %340 = vst [vmem:[#allocation3 + $0x48] sm:$0xff] %v324
      %341 = vst [vmem:[#allocation3 + $0x90] sm:$0xff] %v325
      %342 = vst [vmem:[#allocation3 + $0xd8] sm:$0xff] %v326
      %343 = vst [vmem:[#allocation3 + $0x120] sm:$0xff] %v327
      %344 = vst [vmem:[#allocation3 + $0x168] sm:$0xff] %v328
      %345 = vst [vmem:[#allocation3 + $0x1b0] sm:$0xff] %v329
      %346 = vst [vmem:[#allocation3 + $0x1f8] sm:$0xff] %v330
      %347 = vst [vmem:[#allocation3 + $0x240] sm:$0xff] %v331
      %348 = vst [vmem:[#allocation3 + $0x288] sm:$0xff] %v332
      %349 = vst [vmem:[#allocation3 + $0x2d0] sm:$0xff] %v333
      %350 = vst [vmem:[#allocation3 + $0x318] sm:$0xff] %v334
      %351 = vst [vmem:[#allocation3 + $0x360] sm:$0xff] %v335
      %352 = vst [vmem:[#allocation3 + $0x3a8] sm:$0xff] %v336
      %353 = vst [vmem:[#allocation3 + $0x3f0] sm:$0xff] %v337
      %354 = vst [vmem:[#allocation3 + $0x438] sm:$0xff] %v338
      %v355 = vld [vmem:[#allocation2 + $0x1] sm:$0xff]
      %v356 = vld [vmem:[#allocation2 + $0x9] sm:$0xff]
      %v357 = vld [vmem:[#allocation2 + $0x19] sm:$0xff]
      %v358 = vld [vmem:[#allocation2 + $0x21] sm:$0xff]
      %v359 = vld [vmem:[#allocation2 + $0x31] sm:$0xff]
      %v360 = vld [vmem:[#allocation2 + $0x39] sm:$0xff]
      %v361 = vld [vmem:[#allocation2 + $0x49] sm:$0xff]
      %v362 = vld [vmem:[#allocation2 + $0x51] sm:$0xff]
      %v363 = vld [vmem:[#allocation2 + $0x61] sm:$0xff]
      %v364 = vld [vmem:[#allocation2 + $0x69] sm:$0xff]
      %v365 = vld [vmem:[#allocation2 + $0x79] sm:$0xff]
      %v366 = vld [vmem:[#allocation2 + $0x81] sm:$0xff]
      %v367 = vld [vmem:[#allocation2 + $0x91] sm:$0xff]
      %v368 = vld [vmem:[#allocation2 + $0x99] sm:$0xff]
      %v369 = vld [vmem:[#allocation2 + $0xa9] sm:$0xff]
      %v370 = vld [vmem:[#allocation2 + $0xb1] sm:$0xff]
      %v371 = vld [vmem:[#allocation2 + $0xc1] sm:$0xff]
      %v372 = vld [vmem:[#allocation2 + $0xc9] sm:$0xff]
      %v373 = vld [vmem:[#allocation2 + $0xd9] sm:$0xff]
      %v374 = vld [vmem:[#allocation2 + $0xe1] sm:$0xff]
      %v375 = vld [vmem:[#allocation2 + $0xf1] sm:$0xff]
      %v376 = vld [vmem:[#allocation2 + $0xf9] sm:$0xff]
      %v377 = vld [vmem:[#allocation2 + $0x109] sm:$0xff]
      %v378 = vld [vmem:[#allocation2 + $0x111] sm:$0xff]
      %v379 = vld [vmem:[#allocation2 + $0x121] sm:$0xff]
      %v380 = vld [vmem:[#allocation2 + $0x129] sm:$0xff]
      %v381 = vld [vmem:[#allocation2 + $0x139] sm:$0xff]
      %v382 = vld [vmem:[#allocation2 + $0x141] sm:$0xff]
      %v383 = vld [vmem:[#allocation2 + $0x151] sm:$0xff]
      %v384 = vld [vmem:[#allocation2 + $0x159] sm:$0xff]
      %v385 = vld [vmem:[#allocation2 + $0x169] sm:$0xff]
      %v386 = vld [vmem:[#allocation2 + $0x171] sm:$0xff]
      %v387 = vpack.c.bf16 %v356, %v355
      %v388 = vpack.c.bf16 %v358, %v357
      %v389 = vpack.c.bf16 %v360, %v359
      %v390 = vpack.c.bf16 %v362, %v361
      %v391 = vpack.c.bf16 %v364, %v363
      %v392 = vpack.c.bf16 %v366, %v365
      %v393 = vpack.c.bf16 %v368, %v367
      %v394 = vpack.c.bf16 %v370, %v369
      %v395 = vpack.c.bf16 %v372, %v371
      %v396 = vpack.c.bf16 %v374, %v373
      %v397 = vpack.c.bf16 %v376, %v375
      %v398 = vpack.c.bf16 %v378, %v377
      %v399 = vpack.c.bf16 %v380, %v379
      %v400 = vpack.c.bf16 %v382, %v381
      %v401 = vpack.c.bf16 %v384, %v383
      %v402 = vpack.c.bf16 %v386, %v385
      %403 = vst [vmem:[#allocation3 + $0x8] sm:$0xff] %v387
      %404 = vst [vmem:[#allocation3 + $0x50] sm:$0xff] %v388
      %405 = vst [vmem:[#allocation3 + $0x98] sm:$0xff] %v389
      %406 = vst [vmem:[#allocation3 + $0xe0] sm:$0xff] %v390
      %407 = vst [vmem:[#allocation3 + $0x128] sm:$0xff] %v391
      %408 = vst [vmem:[#allocation3 + $0x170] sm:$0xff] %v392
      %409 = vst [vmem:[#allocation3 + $0x1b8] sm:$0xff] %v393
      %410 = vst [vmem:[#allocation3 + $0x200] sm:$0xff] %v394
      %411 = vst [vmem:[#allocation3 + $0x248] sm:$0xff] %v395
      %412 = vst [vmem:[#allocation3 + $0x290] sm:$0xff] %v396
      %413 = vst [vmem:[#allocation3 + $0x2d8] sm:$0xff] %v397
      %414 = vst [vmem:[#allocation3 + $0x320] sm:$0xff] %v398
      %415 = vst [vmem:[#allocation3 + $0x368] sm:$0xff] %v399
      %416 = vst [vmem:[#allocation3 + $0x3b0] sm:$0xff] %v400
      %417 = vst [vmem:[#allocation3 + $0x3f8] sm:$0xff] %v401
      %418 = vst [vmem:[#allocation3 + $0x440] sm:$0xff] %v402
      %v419 = vld [vmem:[#allocation2 + $0x2] sm:$0xff]
      %v420 = vld [vmem:[#allocation2 + $0xa] sm:$0xff]
      %v421 = vld [vmem:[#allocation2 + $0x1a] sm:$0xff]
      %v422 = vld [vmem:[#allocation2 + $0x22] sm:$0xff]
      %v423 = vld [vmem:[#allocation2 + $0x32] sm:$0xff]
      %v424 = vld [vmem:[#allocation2 + $0x3a] sm:$0xff]
      %v425 = vld [vmem:[#allocation2 + $0x4a] sm:$0xff]
      %v426 = vld [vmem:[#allocation2 + $0x52] sm:$0xff]
      %v427 = vld [vmem:[#allocation2 + $0x62] sm:$0xff]
      %v428 = vld [vmem:[#allocation2 + $0x6a] sm:$0xff]
      %v429 = vld [vmem:[#allocation2 + $0x7a] sm:$0xff]
      %v430 = vld [vmem:[#allocation2 + $0x82] sm:$0xff]
      %v431 = vld [vmem:[#allocation2 + $0x92] sm:$0xff]
      %v432 = vld [vmem:[#allocation2 + $0x9a] sm:$0xff]
      %v433 = vld [vmem:[#allocation2 + $0xaa] sm:$0xff]
      %v434 = vld [vmem:[#allocation2 + $0xb2] sm:$0xff]
      %v435 = vld [vmem:[#allocation2 + $0xc2] sm:$0xff]
      %v436 = vld [vmem:[#allocation2 + $0xca] sm:$0xff]
      %v437 = vld [vmem:[#allocation2 + $0xda] sm:$0xff]
      %v438 = vld [vmem:[#allocation2 + $0xe2] sm:$0xff]
      %v439 = vld [vmem:[#allocation2 + $0xf2] sm:$0xff]
      %v440 = vld [vmem:[#allocation2 + $0xfa] sm:$0xff]
      %v441 = vld [vmem:[#allocation2 + $0x10a] sm:$0xff]
      %v442 = vld [vmem:[#allocation2 + $0x112] sm:$0xff]
      %v443 = vld [vmem:[#allocation2 + $0x122] sm:$0xff]
      %v444 = vld [vmem:[#allocation2 + $0x12a] sm:$0xff]
      %v445 = vld [vmem:[#allocation2 + $0x13a] sm:$0xff]
      %v446 = vld [vmem:[#allocation2 + $0x142] sm:$0xff]
      %v447 = vld [vmem:[#allocation2 + $0x152] sm:$0xff]
      %v448 = vld [vmem:[#allocation2 + $0x15a] sm:$0xff]
      %v449 = vld [vmem:[#allocation2 + $0x16a] sm:$0xff]
      %v450 = vld [vmem:[#allocation2 + $0x172] sm:$0xff]
      %v451 = vpack.c.bf16 %v420, %v419
      %v452 = vpack.c.bf16 %v422, %v421
      %v453 = vpack.c.bf16 %v424, %v423
      %v454 = vpack.c.bf16 %v426, %v425
      %v455 = vpack.c.bf16 %v428, %v427
      %v456 = vpack.c.bf16 %v430, %v429
      %v457 = vpack.c.bf16 %v432, %v431
      %v458 = vpack.c.bf16 %v434, %v433
      %v459 = vpack.c.bf16 %v436, %v435
      %v460 = vpack.c.bf16 %v438, %v437
      %v461 = vpack.c.bf16 %v440, %v439
      %v462 = vpack.c.bf16 %v442, %v441
      %v463 = vpack.c.bf16 %v444, %v443
      %v464 = vpack.c.bf16 %v446, %v445
      %v465 = vpack.c.bf16 %v448, %v447
      %v466 = vpack.c.bf16 %v450, %v449
      %467 = vst [vmem:[#allocation3 + $0x10] sm:$0xff] %v451
      %468 = vst [vmem:[#allocation3 + $0x58] sm:$0xff] %v452
      %469 = vst [vmem:[#allocation3 + $0xa0] sm:$0xff] %v453
      %470 = vst [vmem:[#allocation3 + $0xe8] sm:$0xff] %v454
      %471 = vst [vmem:[#allocation3 + $0x130] sm:$0xff] %v455
      %472 = vst [vmem:[#allocation3 + $0x178] sm:$0xff] %v456
      %473 = vst [vmem:[#allocation3 + $0x1c0] sm:$0xff] %v457
      %474 = vst [vmem:[#allocation3 + $0x208] sm:$0xff] %v458
      %475 = vst [vmem:[#allocation3 + $0x250] sm:$0xff] %v459
      %476 = vst [vmem:[#allocation3 + $0x298] sm:$0xff] %v460
      %477 = vst [vmem:[#allocation3 + $0x2e0] sm:$0xff] %v461
      %478 = vst [vmem:[#allocation3 + $0x328] sm:$0xff] %v462
      %479 = vst [vmem:[#allocation3 + $0x370] sm:$0xff] %v463
      %480 = vst [vmem:[#allocation3 + $0x3b8] sm:$0xff] %v464
      %481 = vst [vmem:[#allocation3 + $0x400] sm:$0xff] %v465
      %482 = vst [vmem:[#allocation3 + $0x448] sm:$0xff] %v466
      %v483 = vld [vmem:[%s258] sm:$0xff]
      %v484 = vld [vmem:[%s258 + $0x8] sm:$0xff]
      %v485 = vld [vmem:[%s258 + $0x18] sm:$0xff]
      %v486 = vld [vmem:[%s258 + $0x20] sm:$0xff]
      %v487 = vld [vmem:[%s258 + $0x30] sm:$0xff]
      %v488 = vld [vmem:[%s258 + $0x38] sm:$0xff]
      %v489 = vld [vmem:[%s258 + $0x48] sm:$0xff]
      %v490 = vld [vmem:[%s258 + $0x50] sm:$0xff]
      %v491 = vld [vmem:[%s258 + $0x60] sm:$0xff]
      %v492 = vld [vmem:[%s258 + $0x68] sm:$0xff]
      %v493 = vld [vmem:[%s258 + $0x78] sm:$0xff]
      %v494 = vld [vmem:[%s258 + $0x80] sm:$0xff]
      %v495 = vld [vmem:[%s258 + $0x90] sm:$0xff]
      %v496 = vld [vmem:[%s258 + $0x98] sm:$0xff]
      %v497 = vld [vmem:[%s258 + $0xa8] sm:$0xff]
      %v498 = vld [vmem:[%s258 + $0xb0] sm:$0xff]
      %v499 = vld [vmem:[%s258 + $0xc0] sm:$0xff]
      %v500 = vld [vmem:[%s258 + $0xc8] sm:$0xff]
      %v501 = vld [vmem:[%s258 + $0xd8] sm:$0xff]
      %v502 = vld [vmem:[%s258 + $0xe0] sm:$0xff]
      %v503 = vld [vmem:[%s258 + $0xf0] sm:$0xff]
      %v504 = vld [vmem:[%s258 + $0xf8] sm:$0xff]
      %v505 = vld [vmem:[%s258 + $0x108] sm:$0xff]
      %v506 = vld [vmem:[%s258 + $0x110] sm:$0xff]
      %v507 = vld [vmem:[%s258 + $0x120] sm:$0xff]
      %v508 = vld [vmem:[%s258 + $0x128] sm:$0xff]
      %v509 = vld [vmem:[%s258 + $0x138] sm:$0xff]
      %v510 = vld [vmem:[%s258 + $0x140] sm:$0xff]
      %v511 = vld [vmem:[%s258 + $0x150] sm:$0xff]
      %v512 = vld [vmem:[%s258 + $0x158] sm:$0xff]
      %v513 = vld [vmem:[%s258 + $0x168] sm:$0xff]
      %v514 = vld [vmem:[%s258 + $0x170] sm:$0xff]
      %v515 = vpack.c.bf16 %v484, %v483
      %v516 = vpack.c.bf16 %v486, %v485
      %v517 = vpack.c.bf16 %v488, %v487
      %v518 = vpack.c.bf16 %v490, %v489
      %v519 = vpack.c.bf16 %v492, %v491
      %v520 = vpack.c.bf16 %v494, %v493
      %v521 = vpack.c.bf16 %v496, %v495
      %v522 = vpack.c.bf16 %v498, %v497
      %v523 = vpack.c.bf16 %v500, %v499
      %v524 = vpack.c.bf16 %v502, %v501
      %v525 = vpack.c.bf16 %v504, %v503
      %v526 = vpack.c.bf16 %v506, %v505
      %v527 = vpack.c.bf16 %v508, %v507
      %v528 = vpack.c.bf16 %v510, %v509
      %v529 = vpack.c.bf16 %v512, %v511
      %v530 = vpack.c.bf16 %v514, %v513
      %531 = vst [vmem:[#allocation3 + $0x18] sm:$0xff] %v515
      %532 = vst [vmem:[#allocation3 + $0x60] sm:$0xff] %v516
      %533 = vst [vmem:[#allocation3 + $0xa8] sm:$0xff] %v517
      %534 = vst [vmem:[#allocation3 + $0xf0] sm:$0xff] %v518
      %535 = vst [vmem:[#allocation3 + $0x138] sm:$0xff] %v519
      %536 = vst [vmem:[#allocation3 + $0x180] sm:$0xff] %v520
      %537 = vst [vmem:[#allocation3 + $0x1c8] sm:$0xff] %v521
      %538 = vst [vmem:[#allocation3 + $0x210] sm:$0xff] %v522
      %539 = vst [vmem:[#allocation3 + $0x258] sm:$0xff] %v523
      %540 = vst [vmem:[#allocation3 + $0x2a0] sm:$0xff] %v524
      %541 = vst [vmem:[#allocation3 + $0x2e8] sm:$0xff] %v525
      %542 = vst [vmem:[#allocation3 + $0x330] sm:$0xff] %v526
      %543 = vst [vmem:[#allocation3 + $0x378] sm:$0xff] %v527
      %544 = vst [vmem:[#allocation3 + $0x3c0] sm:$0xff] %v528
      %545 = vst [vmem:[#allocation3 + $0x408] sm:$0xff] %v529
      %546 = vst [vmem:[#allocation3 + $0x450] sm:$0xff] %v530
      %v547 = vld [vmem:[%s258 + $0x1] sm:$0xff]
      %v548 = vld [vmem:[%s258 + $0x9] sm:$0xff]
      %v549 = vld [vmem:[%s258 + $0x19] sm:$0xff]
      %v550 = vld [vmem:[%s258 + $0x21] sm:$0xff]
      %v551 = vld [vmem:[%s258 + $0x31] sm:$0xff]
      %v552 = vld [vmem:[%s258 + $0x39] sm:$0xff]
      %v553 = vld [vmem:[%s258 + $0x49] sm:$0xff]
      %v554 = vld [vmem:[%s258 + $0x51] sm:$0xff]
      %v555 = vld [vmem:[%s258 + $0x61] sm:$0xff]
      %v556 = vld [vmem:[%s258 + $0x69] sm:$0xff]
      %v557 = vld [vmem:[%s258 + $0x79] sm:$0xff]
      %v558 = vld [vmem:[%s258 + $0x81] sm:$0xff]
      %v559 = vld [vmem:[%s258 + $0x91] sm:$0xff]
      %v560 = vld [vmem:[%s258 + $0x99] sm:$0xff]
      %v561 = vld [vmem:[%s258 + $0xa9] sm:$0xff]
      %v562 = vld [vmem:[%s258 + $0xb1] sm:$0xff]
      %v563 = vld [vmem:[%s258 + $0xc1] sm:$0xff]
      %v564 = vld [vmem:[%s258 + $0xc9] sm:$0xff]
      %v565 = vld [vmem:[%s258 + $0xd9] sm:$0xff]
      %v566 = vld [vmem:[%s258 + $0xe1] sm:$0xff]
      %v567 = vld [vmem:[%s258 + $0xf1] sm:$0xff]
      %v568 = vld [vmem:[%s258 + $0xf9] sm:$0xff]
      %v569 = vld [vmem:[%s258 + $0x109] sm:$0xff]
      %v570 = vld [vmem:[%s258 + $0x111] sm:$0xff]
      %v571 = vld [vmem:[%s258 + $0x121] sm:$0xff]
      %v572 = vld [vmem:[%s258 + $0x129] sm:$0xff]
      %v573 = vld [vmem:[%s258 + $0x139] sm:$0xff]
      %v574 = vld [vmem:[%s258 + $0x141] sm:$0xff]
      %v575 = vld [vmem:[%s258 + $0x151] sm:$0xff]
      %v576 = vld [vmem:[%s258 + $0x159] sm:$0xff]
      %v577 = vld [vmem:[%s258 + $0x169] sm:$0xff]
      %v578 = vld [vmem:[%s258 + $0x171] sm:$0xff]
      %v579 = vpack.c.bf16 %v548, %v547
      %v580 = vpack.c.bf16 %v550, %v549
      %v581 = vpack.c.bf16 %v552, %v551
      %v582 = vpack.c.bf16 %v554, %v553
      %v583 = vpack.c.bf16 %v556, %v555
      %v584 = vpack.c.bf16 %v558, %v557
      %v585 = vpack.c.bf16 %v560, %v559
      %v586 = vpack.c.bf16 %v562, %v561
      %v587 = vpack.c.bf16 %v564, %v563
      %v588 = vpack.c.bf16 %v566, %v565
      %v589 = vpack.c.bf16 %v568, %v567
      %v590 = vpack.c.bf16 %v570, %v569
      %v591 = vpack.c.bf16 %v572, %v571
      %v592 = vpack.c.bf16 %v574, %v573
      %v593 = vpack.c.bf16 %v576, %v575
      %v594 = vpack.c.bf16 %v578, %v577
      %595 = vst [vmem:[#allocation3 + $0x20] sm:$0xff] %v579
      %596 = vst [vmem:[#allocation3 + $0x68] sm:$0xff] %v580
      %597 = vst [vmem:[#allocation3 + $0xb0] sm:$0xff] %v581
      %598 = vst [vmem:[#allocation3 + $0xf8] sm:$0xff] %v582
      %599 = vst [vmem:[#allocation3 + $0x140] sm:$0xff] %v583
      %600 = vst [vmem:[#allocation3 + $0x188] sm:$0xff] %v584
      %601 = vst [vmem:[#allocation3 + $0x1d0] sm:$0xff] %v585
      %602 = vst [vmem:[#allocation3 + $0x218] sm:$0xff] %v586
      %603 = vst [vmem:[#allocation3 + $0x260] sm:$0xff] %v587
      %604 = vst [vmem:[#allocation3 + $0x2a8] sm:$0xff] %v588
      %605 = vst [vmem:[#allocation3 + $0x2f0] sm:$0xff] %v589
      %606 = vst [vmem:[#allocation3 + $0x338] sm:$0xff] %v590
      %607 = vst [vmem:[#allocation3 + $0x380] sm:$0xff] %v591
      %608 = vst [vmem:[#allocation3 + $0x3c8] sm:$0xff] %v592
      %609 = vst [vmem:[#allocation3 + $0x410] sm:$0xff] %v593
      %610 = vst [vmem:[#allocation3 + $0x458] sm:$0xff] %v594
      %v611 = vld [vmem:[%s258 + $0x2] sm:$0xff]
      %v612 = vld [vmem:[%s258 + $0xa] sm:$0xff]
      %v613 = vld [vmem:[%s258 + $0x1a] sm:$0xff]
      %v614 = vld [vmem:[%s258 + $0x22] sm:$0xff]
      %v615 = vld [vmem:[%s258 + $0x32] sm:$0xff]
      %v616 = vld [vmem:[%s258 + $0x3a] sm:$0xff]
      %v617 = vld [vmem:[%s258 + $0x4a] sm:$0xff]
      %v618 = vld [vmem:[%s258 + $0x52] sm:$0xff]
      %v619 = vld [vmem:[%s258 + $0x62] sm:$0xff]
      %v620 = vld [vmem:[%s258 + $0x6a] sm:$0xff]
      %v621 = vld [vmem:[%s258 + $0x7a] sm:$0xff]
      %v622 = vld [vmem:[%s258 + $0x82] sm:$0xff]
      %v623 = vld [vmem:[%s258 + $0x92] sm:$0xff]
      %v624 = vld [vmem:[%s258 + $0x9a] sm:$0xff]
      %v625 = vld [vmem:[%s258 + $0xaa] sm:$0xff]
      %v626 = vld [vmem:[%s258 + $0xb2] sm:$0xff]
      %v627 = vld [vmem:[%s258 + $0xc2] sm:$0xff]
      %v628 = vld [vmem:[%s258 + $0xca] sm:$0xff]
      %v629 = vld [vmem:[%s258 + $0xda] sm:$0xff]
      %v630 = vld [vmem:[%s258 + $0xe2] sm:$0xff]
      %v631 = vld [vmem:[%s258 + $0xf2] sm:$0xff]
      %v632 = vld [vmem:[%s258 + $0xfa] sm:$0xff]
      %v633 = vld [vmem:[%s258 + $0x10a] sm:$0xff]
      %v634 = vld [vmem:[%s258 + $0x112] sm:$0xff]
      %v635 = vld [vmem:[%s258 + $0x122] sm:$0xff]
      %v636 = vld [vmem:[%s258 + $0x12a] sm:$0xff]
      %v637 = vld [vmem:[%s258 + $0x13a] sm:$0xff]
      %v638 = vld [vmem:[%s258 + $0x142] sm:$0xff]
      %v639 = vld [vmem:[%s258 + $0x152] sm:$0xff]
      %v640 = vld [vmem:[%s258 + $0x15a] sm:$0xff]
      %v641 = vld [vmem:[%s258 + $0x16a] sm:$0xff]
      %v642 = vld [vmem:[%s258 + $0x172] sm:$0xff]
      %v643 = vpack.c.bf16 %v612, %v611
      %v644 = vpack.c.bf16 %v614, %v613
      %v645 = vpack.c.bf16 %v616, %v615
      %v646 = vpack.c.bf16 %v618, %v617
      %v647 = vpack.c.bf16 %v620, %v619
      %v648 = vpack.c.bf16 %v622, %v621
      %v649 = vpack.c.bf16 %v624, %v623
      %v650 = vpack.c.bf16 %v626, %v625
      %v651 = vpack.c.bf16 %v628, %v627
      %v652 = vpack.c.bf16 %v630, %v629
      %v653 = vpack.c.bf16 %v632, %v631
      %v654 = vpack.c.bf16 %v634, %v633
      %v655 = vpack.c.bf16 %v636, %v635
      %v656 = vpack.c.bf16 %v638, %v637
      %v657 = vpack.c.bf16 %v640, %v639
      %v658 = vpack.c.bf16 %v642, %v641
      %659 = vst [vmem:[#allocation3 + $0x28] sm:$0xff] %v643
      %660 = vst [vmem:[#allocation3 + $0x70] sm:$0xff] %v644
      %661 = vst [vmem:[#allocation3 + $0xb8] sm:$0xff] %v645
      %662 = vst [vmem:[#allocation3 + $0x100] sm:$0xff] %v646
      %663 = vst [vmem:[#allocation3 + $0x148] sm:$0xff] %v647
      %664 = vst [vmem:[#allocation3 + $0x190] sm:$0xff] %v648
      %665 = vst [vmem:[#allocation3 + $0x1d8] sm:$0xff] %v649
      %666 = vst [vmem:[#allocation3 + $0x220] sm:$0xff] %v650
      %667 = vst [vmem:[#allocation3 + $0x268] sm:$0xff] %v651
      %668 = vst [vmem:[#allocation3 + $0x2b0] sm:$0xff] %v652
      %669 = vst [vmem:[#allocation3 + $0x2f8] sm:$0xff] %v653
      %670 = vst [vmem:[#allocation3 + $0x340] sm:$0xff] %v654
      %671 = vst [vmem:[#allocation3 + $0x388] sm:$0xff] %v655
      %672 = vst [vmem:[#allocation3 + $0x3d0] sm:$0xff] %v656
      %673 = vst [vmem:[#allocation3 + $0x418] sm:$0xff] %v657
      %674 = vst [vmem:[#allocation3 + $0x460] sm:$0xff] %v658
      %s675 = scalar_lea.vmem [#allocation2], 48
      %v676 = vld [vmem:[%s675] sm:$0xff]
      %v677 = vld [vmem:[%s675 + $0x8] sm:$0xff]
      %v678 = vld [vmem:[%s675 + $0x18] sm:$0xff]
      %v679 = vld [vmem:[%s675 + $0x20] sm:$0xff]
      %v680 = vld [vmem:[%s675 + $0x30] sm:$0xff]
      %v681 = vld [vmem:[%s675 + $0x38] sm:$0xff]
      %v682 = vld [vmem:[%s675 + $0x48] sm:$0xff]
      %v683 = vld [vmem:[%s675 + $0x50] sm:$0xff]
      %v684 = vld [vmem:[%s675 + $0x60] sm:$0xff]
      %v685 = vld [vmem:[%s675 + $0x68] sm:$0xff]
      %v686 = vld [vmem:[%s675 + $0x78] sm:$0xff]
      %v687 = vld [vmem:[%s675 + $0x80] sm:$0xff]
      %v688 = vld [vmem:[%s675 + $0x90] sm:$0xff]
      %v689 = vld [vmem:[%s675 + $0x98] sm:$0xff]
      %v690 = vld [vmem:[%s675 + $0xa8] sm:$0xff]
      %v691 = vld [vmem:[%s675 + $0xb0] sm:$0xff]
      %v692 = vld [vmem:[%s675 + $0xc0] sm:$0xff]
      %v693 = vld [vmem:[%s675 + $0xc8] sm:$0xff]
      %v694 = vld [vmem:[%s675 + $0xd8] sm:$0xff]
      %v695 = vld [vmem:[%s675 + $0xe0] sm:$0xff]
      %v696 = vld [vmem:[%s675 + $0xf0] sm:$0xff]
      %v697 = vld [vmem:[%s675 + $0xf8] sm:$0xff]
      %v698 = vld [vmem:[%s675 + $0x108] sm:$0xff]
      %v699 = vld [vmem:[%s675 + $0x110] sm:$0xff]
      %v700 = vld [vmem:[%s675 + $0x120] sm:$0xff]
      %v701 = vld [vmem:[%s675 + $0x128] sm:$0xff]
      %v702 = vld [vmem:[%s675 + $0x138] sm:$0xff]
      %v703 = vld [vmem:[%s675 + $0x140] sm:$0xff]
      %v704 = vld [vmem:[%s675 + $0x150] sm:$0xff]
      %v705 = vld [vmem:[%s675 + $0x158] sm:$0xff]
      %v706 = vld [vmem:[%s675 + $0x168] sm:$0xff]
      %v707 = vld [vmem:[%s675 + $0x170] sm:$0xff]
      %v708 = vpack.c.bf16 %v677, %v676
      %v709 = vpack.c.bf16 %v679, %v678
      %v710 = vpack.c.bf16 %v681, %v680
      %v711 = vpack.c.bf16 %v683, %v682
      %v712 = vpack.c.bf16 %v685, %v684
      %v713 = vpack.c.bf16 %v687, %v686
      %v714 = vpack.c.bf16 %v689, %v688
      %v715 = vpack.c.bf16 %v691, %v690
      %v716 = vpack.c.bf16 %v693, %v692
      %v717 = vpack.c.bf16 %v695, %v694
      %v718 = vpack.c.bf16 %v697, %v696
      %v719 = vpack.c.bf16 %v699, %v698
      %v720 = vpack.c.bf16 %v701, %v700
      %v721 = vpack.c.bf16 %v703, %v702
      %v722 = vpack.c.bf16 %v705, %v704
      %v723 = vpack.c.bf16 %v707, %v706
      %724 = vst [vmem:[#allocation3 + $0x30] sm:$0xff] %v708
      %725 = vst [vmem:[#allocation3 + $0x78] sm:$0xff] %v709
      %726 = vst [vmem:[#allocation3 + $0xc0] sm:$0xff] %v710
      %727 = vst [vmem:[#allocation3 + $0x108] sm:$0xff] %v711
      %728 = vst [vmem:[#allocation3 + $0x150] sm:$0xff] %v712
      %729 = vst [vmem:[#allocation3 + $0x198] sm:$0xff] %v713
      %730 = vst [vmem:[#allocation3 + $0x1e0] sm:$0xff] %v714
      %731 = vst [vmem:[#allocation3 + $0x228] sm:$0xff] %v715
      %732 = vst [vmem:[#allocation3 + $0x270] sm:$0xff] %v716
      %733 = vst [vmem:[#allocation3 + $0x2b8] sm:$0xff] %v717
      %734 = vst [vmem:[#allocation3 + $0x300] sm:$0xff] %v718
      %735 = vst [vmem:[#allocation3 + $0x348] sm:$0xff] %v719
      %736 = vst [vmem:[#allocation3 + $0x390] sm:$0xff] %v720
      %737 = vst [vmem:[#allocation3 + $0x3d8] sm:$0xff] %v721
      %738 = vst [vmem:[#allocation3 + $0x420] sm:$0xff] %v722
      %739 = vst [vmem:[#allocation3 + $0x468] sm:$0xff] %v723
      %v740 = vld [vmem:[%s675 + $0x1] sm:$0xff]
      %v741 = vld [vmem:[%s675 + $0x9] sm:$0xff]
      %v742 = vld [vmem:[%s675 + $0x19] sm:$0xff]
      %v743 = vld [vmem:[%s675 + $0x21] sm:$0xff]
      %v744 = vld [vmem:[%s675 + $0x31] sm:$0xff]
      %v745 = vld [vmem:[%s675 + $0x39] sm:$0xff]
      %v746 = vld [vmem:[%s675 + $0x49] sm:$0xff]
      %v747 = vld [vmem:[%s675 + $0x51] sm:$0xff]
      %v748 = vld [vmem:[%s675 + $0x61] sm:$0xff]
      %v749 = vld [vmem:[%s675 + $0x69] sm:$0xff]
      %v750 = vld [vmem:[%s675 + $0x79] sm:$0xff]
      %v751 = vld [vmem:[%s675 + $0x81] sm:$0xff]
      %v752 = vld [vmem:[%s675 + $0x91] sm:$0xff]
      %v753 = vld [vmem:[%s675 + $0x99] sm:$0xff]
      %v754 = vld [vmem:[%s675 + $0xa9] sm:$0xff]
      %v755 = vld [vmem:[%s675 + $0xb1] sm:$0xff]
      %v756 = vld [vmem:[%s675 + $0xc1] sm:$0xff]
      %v757 = vld [vmem:[%s675 + $0xc9] sm:$0xff]
      %v758 = vld [vmem:[%s675 + $0xd9] sm:$0xff]
      %v759 = vld [vmem:[%s675 + $0xe1] sm:$0xff]
      %v760 = vld [vmem:[%s675 + $0xf1] sm:$0xff]
      %v761 = vld [vmem:[%s675 + $0xf9] sm:$0xff]
      %v762 = vld [vmem:[%s675 + $0x109] sm:$0xff]
      %v763 = vld [vmem:[%s675 + $0x111] sm:$0xff]
      %v764 = vld [vmem:[%s675 + $0x121] sm:$0xff]
      %v765 = vld [vmem:[%s675 + $0x129] sm:$0xff]
      %v766 = vld [vmem:[%s675 + $0x139] sm:$0xff]
      %v767 = vld [vmem:[%s675 + $0x141] sm:$0xff]
      %v768 = vld [vmem:[%s675 + $0x151] sm:$0xff]
      %v769 = vld [vmem:[%s675 + $0x159] sm:$0xff]
      %v770 = vld [vmem:[%s675 + $0x169] sm:$0xff]
      %v771 = vld [vmem:[%s675 + $0x171] sm:$0xff]
      %v772 = vpack.c.bf16 %v741, %v740
      %v773 = vpack.c.bf16 %v743, %v742
      %v774 = vpack.c.bf16 %v745, %v744
      %v775 = vpack.c.bf16 %v747, %v746
      %v776 = vpack.c.bf16 %v749, %v748
      %v777 = vpack.c.bf16 %v751, %v750
      %v778 = vpack.c.bf16 %v753, %v752
      %v779 = vpack.c.bf16 %v755, %v754
      %v780 = vpack.c.bf16 %v757, %v756
      %v781 = vpack.c.bf16 %v759, %v758
      %v782 = vpack.c.bf16 %v761, %v760
      %v783 = vpack.c.bf16 %v763, %v762
      %v784 = vpack.c.bf16 %v765, %v764
      %v785 = vpack.c.bf16 %v767, %v766
      %v786 = vpack.c.bf16 %v769, %v768
      %v787 = vpack.c.bf16 %v771, %v770
      %788 = vst [vmem:[#allocation3 + $0x38] sm:$0xff] %v772
      %789 = vst [vmem:[#allocation3 + $0x80] sm:$0xff] %v773
      %790 = vst [vmem:[#allocation3 + $0xc8] sm:$0xff] %v774
      %791 = vst [vmem:[#allocation3 + $0x110] sm:$0xff] %v775
      %792 = vst [vmem:[#allocation3 + $0x158] sm:$0xff] %v776
      %793 = vst [vmem:[#allocation3 + $0x1a0] sm:$0xff] %v777
      %794 = vst [vmem:[#allocation3 + $0x1e8] sm:$0xff] %v778
      %795 = vst [vmem:[#allocation3 + $0x230] sm:$0xff] %v779
      %796 = vst [vmem:[#allocation3 + $0x278] sm:$0xff] %v780
      %797 = vst [vmem:[#allocation3 + $0x2c0] sm:$0xff] %v781
      %798 = vst [vmem:[#allocation3 + $0x308] sm:$0xff] %v782
      %799 = vst [vmem:[#allocation3 + $0x350] sm:$0xff] %v783
      %800 = vst [vmem:[#allocation3 + $0x398] sm:$0xff] %v784
      %801 = vst [vmem:[#allocation3 + $0x3e0] sm:$0xff] %v785
      %802 = vst [vmem:[#allocation3 + $0x428] sm:$0xff] %v786
      %803 = vst [vmem:[#allocation3 + $0x470] sm:$0xff] %v787
      %v804 = vld [vmem:[%s675 + $0x2] sm:$0xff]
      %v805 = vld [vmem:[%s675 + $0xa] sm:$0xff]
      %v806 = vld [vmem:[%s675 + $0x1a] sm:$0xff]
      %v807 = vld [vmem:[%s675 + $0x22] sm:$0xff]
      %v808 = vld [vmem:[%s675 + $0x32] sm:$0xff]
      %v809 = vld [vmem:[%s675 + $0x3a] sm:$0xff]
      %v810 = vld [vmem:[%s675 + $0x4a] sm:$0xff]
      %v811 = vld [vmem:[%s675 + $0x52] sm:$0xff]
      %v812 = vld [vmem:[%s675 + $0x62] sm:$0xff]
      %v813 = vld [vmem:[%s675 + $0x6a] sm:$0xff]
      %v814 = vld [vmem:[%s675 + $0x7a] sm:$0xff]
      %v815 = vld [vmem:[%s675 + $0x82] sm:$0xff]
      %v816 = vld [vmem:[%s675 + $0x92] sm:$0xff]
      %v817 = vld [vmem:[%s675 + $0x9a] sm:$0xff]
      %v818 = vld [vmem:[%s675 + $0xaa] sm:$0xff]
      %v819 = vld [vmem:[%s675 + $0xb2] sm:$0xff]
      %v820 = vld [vmem:[%s675 + $0xc2] sm:$0xff]
      %v821 = vld [vmem:[%s675 + $0xca] sm:$0xff]
      %v822 = vld [vmem:[%s675 + $0xda] sm:$0xff]
      %v823 = vld [vmem:[%s675 + $0xe2] sm:$0xff]
      %v824 = vld [vmem:[%s675 + $0xf2] sm:$0xff]
      %v825 = vld [vmem:[%s675 + $0xfa] sm:$0xff]
      %v826 = vld [vmem:[%s675 + $0x10a] sm:$0xff]
      %v827 = vld [vmem:[%s675 + $0x112] sm:$0xff]
      %v828 = vld [vmem:[%s675 + $0x122] sm:$0xff]
      %v829 = vld [vmem:[%s675 + $0x12a] sm:$0xff]
      %v830 = vld [vmem:[%s675 + $0x13a] sm:$0xff]
      %v831 = vld [vmem:[%s675 + $0x142] sm:$0xff]
      %v832 = vld [vmem:[%s675 + $0x152] sm:$0xff]
      %v833 = vld [vmem:[%s675 + $0x15a] sm:$0xff]
      %v834 = vld [vmem:[%s675 + $0x16a] sm:$0xff]
      %v835 = vld [vmem:[%s675 + $0x172] sm:$0xff]
      %v836 = vpack.c.bf16 %v805, %v804
      %v837 = vpack.c.bf16 %v807, %v806
      %v838 = vpack.c.bf16 %v809, %v808
      %v839 = vpack.c.bf16 %v811, %v810
      %v840 = vpack.c.bf16 %v813, %v812
      %v841 = vpack.c.bf16 %v815, %v814
      %v842 = vpack.c.bf16 %v817, %v816
      %v843 = vpack.c.bf16 %v819, %v818
      %v844 = vpack.c.bf16 %v821, %v820
      %v845 = vpack.c.bf16 %v823, %v822
      %v846 = vpack.c.bf16 %v825, %v824
      %v847 = vpack.c.bf16 %v827, %v826
      %v848 = vpack.c.bf16 %v829, %v828
      %v849 = vpack.c.bf16 %v831, %v830
      %v850 = vpack.c.bf16 %v833, %v832
      %v851 = vpack.c.bf16 %v835, %v834
      %852 = vst [vmem:[#allocation3 + $0x40] sm:$0xff] %v836
      %853 = vst [vmem:[#allocation3 + $0x88] sm:$0xff] %v837
      %854 = vst [vmem:[#allocation3 + $0xd0] sm:$0xff] %v838
      %855 = vst [vmem:[#allocation3 + $0x118] sm:$0xff] %v839
      %856 = vst [vmem:[#allocation3 + $0x160] sm:$0xff] %v840
      %857 = vst [vmem:[#allocation3 + $0x1a8] sm:$0xff] %v841
      %858 = vst [vmem:[#allocation3 + $0x1f0] sm:$0xff] %v842
      %859 = vst [vmem:[#allocation3 + $0x238] sm:$0xff] %v843
      %860 = vst [vmem:[#allocation3 + $0x280] sm:$0xff] %v844
      %861 = vst [vmem:[#allocation3 + $0x2c8] sm:$0xff] %v845
      %862 = vst [vmem:[#allocation3 + $0x310] sm:$0xff] %v846
      %863 = vst [vmem:[#allocation3 + $0x358] sm:$0xff] %v847
      %864 = vst [vmem:[#allocation3 + $0x3a0] sm:$0xff] %v848
      %865 = vst [vmem:[#allocation3 + $0x3e8] sm:$0xff] %v849
      %866 = vst [vmem:[#allocation3 + $0x430] sm:$0xff] %v850
      %867 = vst [vmem:[#allocation3 + $0x478] sm:$0xff] %v851
      %v868 = vld [vmem:[#allocation3] sm:$0xff]
      %v869 = vld [vmem:[#allocation3 + $0x8] sm:$0xff]
      %v870 = vld [vmem:[#allocation3 + $0x10] sm:$0xff]
      %v871 = vld [vmem:[#allocation3 + $0x18] sm:$0xff]
      %v872 = vld [vmem:[#allocation3 + $0x20] sm:$0xff]
      %v873 = vld [vmem:[#allocation3 + $0x28] sm:$0xff]
      %v874 = vld [vmem:[#allocation3 + $0x30] sm:$0xff]
      %v875 = vld [vmem:[#allocation3 + $0x38] sm:$0xff]
      %v876 = vld [vmem:[#allocation3 + $0x40] sm:$0xff]
      %v877 = vld [vmem:[#allocation3 + $0x48] sm:$0xff]
      %v878 = vld [vmem:[#allocation3 + $0x50] sm:$0xff]
      %v879 = vld [vmem:[#allocation3 + $0x58] sm:$0xff]
      %v880 = vld [vmem:[#allocation3 + $0x60] sm:$0xff]
      %v881 = vld [vmem:[#allocation3 + $0x68] sm:$0xff]
      %v882 = vld [vmem:[#allocation3 + $0x70] sm:$0xff]
      %v883 = vld [vmem:[#allocation3 + $0x78] sm:$0xff]
      %v884 = vld [vmem:[#allocation3 + $0x80] sm:$0xff]
      %v885 = vld [vmem:[#allocation3 + $0x88] sm:$0xff]
      %v886 = vld [vmem:[#allocation3 + $0x90] sm:$0xff]
      %v887 = vld [vmem:[#allocation3 + $0x98] sm:$0xff]
      %v888 = vld [vmem:[#allocation3 + $0xa0] sm:$0xff]
      %v889 = vld [vmem:[#allocation3 + $0xa8] sm:$0xff]
      %v890 = vld [vmem:[#allocation3 + $0xb0] sm:$0xff]
      %v891 = vld [vmem:[#allocation3 + $0xb8] sm:$0xff]
      %v892 = vld [vmem:[#allocation3 + $0xc0] sm:$0xff]
      %v893 = vld [vmem:[#allocation3 + $0xc8] sm:$0xff]
      %v894 = vld [vmem:[#allocation3 + $0xd0] sm:$0xff]
      %v895 = vld [vmem:[#allocation3 + $0xd8] sm:$0xff]
      %v896 = vld [vmem:[#allocation3 + $0xe0] sm:$0xff]
      %v897 = vld [vmem:[#allocation3 + $0xe8] sm:$0xff]
      %v898 = vld [vmem:[#allocation3 + $0xf0] sm:$0xff]
      %v899 = vld [vmem:[#allocation3 + $0xf8] sm:$0xff]
      %v900 = vld [vmem:[#allocation3 + $0x100] sm:$0xff]
      %v901 = vld [vmem:[#allocation3 + $0x108] sm:$0xff]
      %v902 = vld [vmem:[#allocation3 + $0x110] sm:$0xff]
      %v903 = vld [vmem:[#allocation3 + $0x118] sm:$0xff]
      %v904 = vld [vmem:[#allocation3 + $0x120] sm:$0xff]
      %v905 = vld [vmem:[#allocation3 + $0x128] sm:$0xff]
      %v906 = vld [vmem:[#allocation3 + $0x130] sm:$0xff]
      %v907 = vld [vmem:[#allocation3 + $0x138] sm:$0xff]
      %v908 = vld [vmem:[#allocation3 + $0x140] sm:$0xff]
      %v909 = vld [vmem:[#allocation3 + $0x148] sm:$0xff]
      %v910 = vld [vmem:[#allocation3 + $0x150] sm:$0xff]
      %v911 = vld [vmem:[#allocation3 + $0x158] sm:$0xff]
      %v912 = vld [vmem:[#allocation3 + $0x160] sm:$0xff]
      %v913 = vld [vmem:[#allocation3 + $0x168] sm:$0xff]
      %v914 = vld [vmem:[#allocation3 + $0x170] sm:$0xff]
      %v915 = vld [vmem:[#allocation3 + $0x178] sm:$0xff]
      %v916 = vld [vmem:[#allocation3 + $0x180] sm:$0xff]
      %v917 = vld [vmem:[#allocation3 + $0x188] sm:$0xff]
      %v918 = vld [vmem:[#allocation3 + $0x190] sm:$0xff]
      %v919 = vld [vmem:[#allocation3 + $0x198] sm:$0xff]
      %v920 = vld [vmem:[#allocation3 + $0x1a0] sm:$0xff]
      %v921 = vld [vmem:[#allocation3 + $0x1a8] sm:$0xff]
      %v922 = vld [vmem:[#allocation3 + $0x1b0] sm:$0xff]
      %v923 = vld [vmem:[#allocation3 + $0x1b8] sm:$0xff]
      %v924 = vld [vmem:[#allocation3 + $0x1c0] sm:$0xff]
      %v925 = vld [vmem:[#allocation3 + $0x1c8] sm:$0xff]
      %v926 = vld [vmem:[#allocation3 + $0x1d0] sm:$0xff]
      %v927 = vld [vmem:[#allocation3 + $0x1d8] sm:$0xff]
      %v928 = vld [vmem:[#allocation3 + $0x1e0] sm:$0xff]
      %v929 = vld [vmem:[#allocation3 + $0x1e8] sm:$0xff]
      %v930 = vld [vmem:[#allocation3 + $0x1f0] sm:$0xff]
      %v931 = vld [vmem:[#allocation3 + $0x1f8] sm:$0xff]
      %v932 = vld [vmem:[#allocation3 + $0x200] sm:$0xff]
      %v933 = vld [vmem:[#allocation3 + $0x208] sm:$0xff]
      %v934 = vld [vmem:[#allocation3 + $0x210] sm:$0xff]
      %v935 = vld [vmem:[#allocation3 + $0x218] sm:$0xff]
      %v936 = vld [vmem:[#allocation3 + $0x220] sm:$0xff]
      %v937 = vld [vmem:[#allocation3 + $0x228] sm:$0xff]
      %v938 = vld [vmem:[#allocation3 + $0x230] sm:$0xff]
      %v939 = vld [vmem:[#allocation3 + $0x238] sm:$0xff]
      %v940 = vld [vmem:[#allocation3 + $0x240] sm:$0xff]
      %v941 = vld [vmem:[#allocation3 + $0x248] sm:$0xff]
      %v942 = vld [vmem:[#allocation3 + $0x250] sm:$0xff]
      %v943 = vld [vmem:[#allocation3 + $0x258] sm:$0xff]
      %v944 = vld [vmem:[#allocation3 + $0x260] sm:$0xff]
      %v945 = vld [vmem:[#allocation3 + $0x268] sm:$0xff]
      %v946 = vld [vmem:[#allocation3 + $0x270] sm:$0xff]
      %v947 = vld [vmem:[#allocation3 + $0x278] sm:$0xff]
      %v948 = vld [vmem:[#allocation3 + $0x280] sm:$0xff]
      %v949 = vld [vmem:[#allocation3 + $0x288] sm:$0xff]
      %v950 = vld [vmem:[#allocation3 + $0x290] sm:$0xff]
      %v951 = vld [vmem:[#allocation3 + $0x298] sm:$0xff]
      %v952 = vld [vmem:[#allocation3 + $0x2a0] sm:$0xff]
      %v953 = vld [vmem:[#allocation3 + $0x2a8] sm:$0xff]
      %v954 = vld [vmem:[#allocation3 + $0x2b0] sm:$0xff]
      %v955 = vld [vmem:[#allocation3 + $0x2b8] sm:$0xff]
      %v956 = vld [vmem:[#allocation3 + $0x2c0] sm:$0xff]
      %v957 = vld [vmem:[#allocation3 + $0x2c8] sm:$0xff]
      %v958 = vld [vmem:[#allocation3 + $0x2d0] sm:$0xff]
      %v959 = vld [vmem:[#allocation3 + $0x2d8] sm:$0xff]
      %v960 = vld [vmem:[#allocation3 + $0x2e0] sm:$0xff]
      %v961 = vld [vmem:[#allocation3 + $0x2e8] sm:$0xff]
      %v962 = vld [vmem:[#allocation3 + $0x2f0] sm:$0xff]
      %v963 = vld [vmem:[#allocation3 + $0x2f8] sm:$0xff]
      %v964 = vld [vmem:[#allocation3 + $0x300] sm:$0xff]
      %v965 = vld [vmem:[#allocation3 + $0x308] sm:$0xff]
      %v966 = vld [vmem:[#allocation3 + $0x310] sm:$0xff]
      %v967 = vld [vmem:[#allocation3 + $0x318] sm:$0xff]
      %v968 = vld [vmem:[#allocation3 + $0x320] sm:$0xff]
      %v969 = vld [vmem:[#allocation3 + $0x328] sm:$0xff]
      %v970 = vld [vmem:[#allocation3 + $0x330] sm:$0xff]
      %v971 = vld [vmem:[#allocation3 + $0x338] sm:$0xff]
      %v972 = vld [vmem:[#allocation3 + $0x340] sm:$0xff]
      %v973 = vld [vmem:[#allocation3 + $0x348] sm:$0xff]
      %v974 = vld [vmem:[#allocation3 + $0x350] sm:$0xff]
      %v975 = vld [vmem:[#allocation3 + $0x358] sm:$0xff]
      %v976 = vld [vmem:[#allocation3 + $0x360] sm:$0xff]
      %v977 = vld [vmem:[#allocation3 + $0x368] sm:$0xff]
      %v978 = vld [vmem:[#allocation3 + $0x370] sm:$0xff]
      %v979 = vld [vmem:[#allocation3 + $0x378] sm:$0xff]
      %v980 = vld [vmem:[#allocation3 + $0x380] sm:$0xff]
      %v981 = vld [vmem:[#allocation3 + $0x388] sm:$0xff]
      %v982 = vld [vmem:[#allocation3 + $0x390] sm:$0xff]
      %v983 = vld [vmem:[#allocation3 + $0x398] sm:$0xff]
      %v984 = vld [vmem:[#allocation3 + $0x3a0] sm:$0xff]
      %v985 = vld [vmem:[#allocation3 + $0x3a8] sm:$0xff]
      %v986 = vld [vmem:[#allocation3 + $0x3b0] sm:$0xff]
      %v987 = vld [vmem:[#allocation3 + $0x3b8] sm:$0xff]
      %v988 = vld [vmem:[#allocation3 + $0x3c0] sm:$0xff]
      %v989 = vld [vmem:[#allocation3 + $0x3c8] sm:$0xff]
      %v990 = vld [vmem:[#allocation3 + $0x3d0] sm:$0xff]
      %v991 = vld [vmem:[#allocation3 + $0x3d8] sm:$0xff]
      %v992 = vld [vmem:[#allocation3 + $0x3e0] sm:$0xff]
      %v993 = vld [vmem:[#allocation3 + $0x3e8] sm:$0xff]
      %v994 = vld [vmem:[#allocation3 + $0x3f0] sm:$0xff]
      %v995 = vld [vmem:[#allocation3 + $0x3f8] sm:$0xff]
      %v996 = vld [vmem:[#allocation3 + $0x400] sm:$0xff]
      %v997 = vld [vmem:[#allocation3 + $0x408] sm:$0xff]
      %v998 = vld [vmem:[#allocation3 + $0x410] sm:$0xff]
      %v999 = vld [vmem:[#allocation3 + $0x418] sm:$0xff]
      %v1000 = vld [vmem:[#allocation3 + $0x420] sm:$0xff]
      %v1001 = vld [vmem:[#allocation3 + $0x428] sm:$0xff]
      %v1002 = vld [vmem:[#allocation3 + $0x430] sm:$0xff]
      %v1003 = vld [vmem:[#allocation3 + $0x438] sm:$0xff]
      %v1004 = vld [vmem:[#allocation3 + $0x440] sm:$0xff]
      %v1005 = vld [vmem:[#allocation3 + $0x448] sm:$0xff]
      %v1006 = vld [vmem:[#allocation3 + $0x450] sm:$0xff]
      %v1007 = vld [vmem:[#allocation3 + $0x458] sm:$0xff]
      %v1008 = vld [vmem:[#allocation3 + $0x460] sm:$0xff]
      %v1009 = vld [vmem:[#allocation3 + $0x468] sm:$0xff]
      %v1010 = vld [vmem:[#allocation3 + $0x470] sm:$0xff]
      %v1011 = vld [vmem:[#allocation3 + $0x478] sm:$0xff]
      %v1012 = vld [vmem:[%s1] sm:$0xf]
      %v1013 = vld [vmem:[%s1 + $0x4] sm:$0xf]
      %v1014 = vld [vmem:[%s1 + $0x8] sm:$0xf]
      %v1015 = vld [vmem:[%s1 + $0xc] sm:$0xf]
      %v1016 = vld [vmem:[%s1 + $0x10] sm:$0xf]
      %v1017 = vld [vmem:[%s1 + $0x14] sm:$0xf]
      %v1018 = vld [vmem:[%s1 + $0x18] sm:$0xf]
      %v1019 = vld [vmem:[%s1 + $0x1c] sm:$0xf]
      %v1020 = vld [vmem:[%s1 + $0x20] sm:$0xf]
      %v1021 = vld [vmem:[%s1 + $0x24] sm:$0xf]
      %v1022 = vld [vmem:[%s1 + $0x28] sm:$0xf]
      %v1023 = vld [vmem:[%s1 + $0x2c] sm:$0xf]
      %v1024 = vld [vmem:[%s1 + $0x30] sm:$0xf]
      %v1025 = vld [vmem:[%s1 + $0x34] sm:$0xf]
      %v1026 = vld [vmem:[%s1 + $0x38] sm:$0xf]
      %v1027 = vld [vmem:[%s1 + $0x3c] sm:$0xf]
      %v1028 = vld [vmem:[%s1 + $0x40] sm:$0xf]
      %v1029 = vld [vmem:[%s1 + $0x44] sm:$0xf]
      %v1030 = vld [vmem:[%s1 + $0x48] sm:$0xf]
      %v1031 = vld [vmem:[%s1 + $0x4c] sm:$0xf]
      %v1032 = vld [vmem:[%s1 + $0x50] sm:$0xf]
      %v1033 = vld [vmem:[%s1 + $0x54] sm:$0xf]
      %v1034 = vld [vmem:[%s1 + $0x58] sm:$0xf]
      %v1035 = vld [vmem:[%s1 + $0x5c] sm:$0xf]
      %v1036 = vld [vmem:[%s1 + $0x60] sm:$0xf]
      %v1037 = vld [vmem:[%s1 + $0x64] sm:$0xf]
      %v1038 = vld [vmem:[%s1 + $0x68] sm:$0xf]
      %v1039 = vld [vmem:[%s1 + $0x6c] sm:$0xf]
      %v1040 = vld [vmem:[%s1 + $0x70] sm:$0xf]
      %v1041 = vld [vmem:[%s1 + $0x74] sm:$0xf]
      %v1042 = vld [vmem:[%s1 + $0x78] sm:$0xf]
      %v1043 = vld [vmem:[%s1 + $0x7c] sm:$0xf]
      %v1044 = vld [vmem:[%s1 + $0x80] sm:$0xf]
      %v1045 = vld [vmem:[%s1 + $0x84] sm:$0xf]
      %v1046 = vld [vmem:[%s1 + $0x88] sm:$0xf]
      %v1047 = vld [vmem:[%s1 + $0x8c] sm:$0xf]
      %v1048 = vld [vmem:[%s1 + $0x90] sm:$0xf]
      %v1049 = vld [vmem:[%s1 + $0x94] sm:$0xf]
      %v1050 = vld [vmem:[%s1 + $0x98] sm:$0xf]
      %v1051 = vld [vmem:[%s1 + $0x9c] sm:$0xf]
      %v1052 = vld [vmem:[%s1 + $0xa0] sm:$0xf]
      %v1053 = vld [vmem:[%s1 + $0xa4] sm:$0xf]
      %v1054 = vld [vmem:[%s1 + $0xa8] sm:$0xf]
      %v1055 = vld [vmem:[%s1 + $0xac] sm:$0xf]
      %v1056 = vld [vmem:[%s1 + $0xb0] sm:$0xf]
      %v1057 = vld [vmem:[%s1 + $0xb4] sm:$0xf]
      %v1058 = vld [vmem:[%s1 + $0xb8] sm:$0xf]
      %v1059 = vld [vmem:[%s1 + $0xbc] sm:$0xf]
      %v1060 = vld [vmem:[%s1 + $0xc0] sm:$0xf]
      %v1061 = vld [vmem:[%s1 + $0xc4] sm:$0xf]
      %v1062 = vld [vmem:[%s1 + $0xc8] sm:$0xf]
      %v1063 = vld [vmem:[%s1 + $0xcc] sm:$0xf]
      %v1064 = vld [vmem:[%s1 + $0xd0] sm:$0xf]
      %v1065 = vld [vmem:[%s1 + $0xd4] sm:$0xf]
      %v1066 = vld [vmem:[%s1 + $0xd8] sm:$0xf]
      %v1067 = vld [vmem:[%s1 + $0xdc] sm:$0xf]
      %v1068 = vld [vmem:[%s1 + $0xe0] sm:$0xf]
      %v1069 = vld [vmem:[%s1 + $0xe4] sm:$0xf]
      %v1070 = vld [vmem:[%s1 + $0xe8] sm:$0xf]
      %v1071 = vld [vmem:[%s1 + $0xec] sm:$0xf]
      %v1072 = vld [vmem:[%s1 + $0xf0] sm:$0xf]
      %v1073 = vld [vmem:[%s1 + $0xf4] sm:$0xf]
      %v1074 = vld [vmem:[%s1 + $0xf8] sm:$0xf]
      %v1075 = vld [vmem:[%s1 + $0xfc] sm:$0xf]
      %v1076 = vld [vmem:[%s1 + $0x100] sm:$0xf]
      %v1077 = vld [vmem:[%s1 + $0x104] sm:$0xf]
      %v1078 = vld [vmem:[%s1 + $0x108] sm:$0xf]
      %v1079 = vld [vmem:[%s1 + $0x10c] sm:$0xf]
      %v1080 = vld [vmem:[%s1 + $0x110] sm:$0xf]
      %v1081 = vld [vmem:[%s1 + $0x114] sm:$0xf]
      %v1082 = vld [vmem:[%s1 + $0x118] sm:$0xf]
      %v1083 = vld [vmem:[%s1 + $0x11c] sm:$0xf]
      %v1084 = vld [vmem:[%s1 + $0x120] sm:$0xf]
      %v1085 = vld [vmem:[%s1 + $0x124] sm:$0xf]
      %v1086 = vld [vmem:[%s1 + $0x128] sm:$0xf]
      %v1087 = vld [vmem:[%s1 + $0x12c] sm:$0xf]
      %v1088 = vld [vmem:[%s1 + $0x130] sm:$0xf]
      %v1089 = vld [vmem:[%s1 + $0x134] sm:$0xf]
      %v1090 = vld [vmem:[%s1 + $0x138] sm:$0xf]
      %v1091 = vld [vmem:[%s1 + $0x13c] sm:$0xf]
      %v1092 = vld [vmem:[%s1 + $0x140] sm:$0xf]
      %v1093 = vld [vmem:[%s1 + $0x144] sm:$0xf]
      %v1094 = vld [vmem:[%s1 + $0x148] sm:$0xf]
      %v1095 = vld [vmem:[%s1 + $0x14c] sm:$0xf]
      %v1096 = vld [vmem:[%s1 + $0x150] sm:$0xf]
      %v1097 = vld [vmem:[%s1 + $0x154] sm:$0xf]
      %v1098 = vld [vmem:[%s1 + $0x158] sm:$0xf]
      %v1099 = vld [vmem:[%s1 + $0x15c] sm:$0xf]
      %v1100 = vld [vmem:[%s1 + $0x160] sm:$0xf]
      %v1101 = vld [vmem:[%s1 + $0x164] sm:$0xf]
      %v1102 = vld [vmem:[%s1 + $0x168] sm:$0xf]
      %v1103 = vld [vmem:[%s1 + $0x16c] sm:$0xf]
      %v1104 = vld [vmem:[%s1 + $0x170] sm:$0xf]
      %v1105 = vld [vmem:[%s1 + $0x174] sm:$0xf]
      %v1106 = vld [vmem:[%s1 + $0x178] sm:$0xf]
      %v1107 = vld [vmem:[%s1 + $0x17c] sm:$0xf]
      %v1108 = vld [vmem:[%s1 + $0x180] sm:$0xf]
      %v1109 = vld [vmem:[%s1 + $0x184] sm:$0xf]
      %v1110 = vld [vmem:[%s1 + $0x188] sm:$0xf]
      %v1111 = vld [vmem:[%s1 + $0x18c] sm:$0xf]
      %v1112 = vld [vmem:[%s1 + $0x190] sm:$0xf]
      %v1113 = vld [vmem:[%s1 + $0x194] sm:$0xf]
      %v1114 = vld [vmem:[%s1 + $0x198] sm:$0xf]
      %v1115 = vld [vmem:[%s1 + $0x19c] sm:$0xf]
      %v1116 = vld [vmem:[%s1 + $0x1a0] sm:$0xf]
      %v1117 = vld [vmem:[%s1 + $0x1a4] sm:$0xf]
      %v1118 = vld [vmem:[%s1 + $0x1a8] sm:$0xf]
      %v1119 = vld [vmem:[%s1 + $0x1ac] sm:$0xf]
      %v1120 = vld [vmem:[%s1 + $0x1b0] sm:$0xf]
      %v1121 = vld [vmem:[%s1 + $0x1b4] sm:$0xf]
      %v1122 = vld [vmem:[%s1 + $0x1b8] sm:$0xf]
      %v1123 = vld [vmem:[%s1 + $0x1bc] sm:$0xf]
      %v1124 = vld [vmem:[%s1 + $0x1c0] sm:$0xf]
      %v1125 = vld [vmem:[%s1 + $0x1c4] sm:$0xf]
      %v1126 = vld [vmem:[%s1 + $0x1c8] sm:$0xf]
      %v1127 = vld [vmem:[%s1 + $0x1cc] sm:$0xf]
      %v1128 = vld [vmem:[%s1 + $0x1d0] sm:$0xf]
      %v1129 = vld [vmem:[%s1 + $0x1d4] sm:$0xf]
      %v1130 = vld [vmem:[%s1 + $0x1d8] sm:$0xf]
      %v1131 = vld [vmem:[%s1 + $0x1dc] sm:$0xf]
      %v1132 = vld [vmem:[%s1 + $0x1e0] sm:$0xf]
      %v1133 = vld [vmem:[%s1 + $0x1e4] sm:$0xf]
      %v1134 = vld [vmem:[%s1 + $0x1e8] sm:$0xf]
      %v1135 = vld [vmem:[%s1 + $0x1ec] sm:$0xf]
      %v1136 = vld [vmem:[%s1 + $0x1f0] sm:$0xf]
      %v1137 = vld [vmem:[%s1 + $0x1f4] sm:$0xf]
      %v1138 = vld [vmem:[%s1 + $0x1f8] sm:$0xf]
      %v1139 = vld [vmem:[%s1 + $0x1fc] sm:$0xf]
      %v1140 = vld [vmem:[%s1 + $0x200] sm:$0xf]
      %v1141 = vld [vmem:[%s1 + $0x204] sm:$0xf]
      %v1142 = vld [vmem:[%s1 + $0x208] sm:$0xf]
      %v1143 = vld [vmem:[%s1 + $0x20c] sm:$0xf]
      %v1144 = vld [vmem:[%s1 + $0x210] sm:$0xf]
      %v1145 = vld [vmem:[%s1 + $0x214] sm:$0xf]
      %v1146 = vld [vmem:[%s1 + $0x218] sm:$0xf]
      %v1147 = vld [vmem:[%s1 + $0x21c] sm:$0xf]
      %v1148 = vld [vmem:[%s1 + $0x220] sm:$0xf]
      %v1149 = vld [vmem:[%s1 + $0x224] sm:$0xf]
      %v1150 = vld [vmem:[%s1 + $0x228] sm:$0xf]
      %v1151 = vld [vmem:[%s1 + $0x22c] sm:$0xf]
      %v1152 = vld [vmem:[%s1 + $0x230] sm:$0xf]
      %v1153 = vld [vmem:[%s1 + $0x234] sm:$0xf]
      %v1154 = vld [vmem:[%s1 + $0x238] sm:$0xf]
      %v1155 = vld [vmem:[%s1 + $0x23c] sm:$0xf]
      %v1156 = vld [vmem:[%s2] sm:$0x1]
      %v1158 = vlaneseq
      %v1159 = vshrl.u32 %v1158, 7
      %v1160 = vsub.s32 0, %v1159
      %v1161 = vrot.slane %v1156, %v1160
      %v1307 = vunpack.c.l.b16 %v1012
      %v1308 = vunpack.c.l.b16 %v1013
      %v1309 = vunpack.c.l.b16 %v1014
      %v1310 = vunpack.c.l.b16 %v1015
      %v1311 = vunpack.c.l.b16 %v1016
      %v1312 = vunpack.c.l.b16 %v1017
      %v1313 = vunpack.c.l.b16 %v1018
      %v1314 = vunpack.c.l.b16 %v1019
      %v1315 = vunpack.c.l.b16 %v1020
      %v1316 = vunpack.c.l.b16 %v1021
      %v1317 = vunpack.c.l.b16 %v1022
      %v1318 = vunpack.c.l.b16 %v1023
      %v1319 = vunpack.c.l.b16 %v1024
      %v1320 = vunpack.c.l.b16 %v1025
      %v1321 = vunpack.c.l.b16 %v1026
      %v1322 = vunpack.c.l.b16 %v1027
      %v1323 = vunpack.c.l.b16 %v1028
      %v1324 = vunpack.c.l.b16 %v1029
      %v1325 = vunpack.c.l.b16 %v1030
      %v1326 = vunpack.c.l.b16 %v1031
      %v1327 = vunpack.c.l.b16 %v1032
      %v1328 = vunpack.c.l.b16 %v1033
      %v1329 = vunpack.c.l.b16 %v1034
      %v1330 = vunpack.c.l.b16 %v1035
      %v1331 = vunpack.c.l.b16 %v1036
      %v1332 = vunpack.c.l.b16 %v1037
      %v1333 = vunpack.c.l.b16 %v1038
      %v1334 = vunpack.c.l.b16 %v1039
      %v1335 = vunpack.c.l.b16 %v1040
      %v1336 = vunpack.c.l.b16 %v1041
      %v1337 = vunpack.c.l.b16 %v1042
      %v1338 = vunpack.c.l.b16 %v1043
      %v1339 = vunpack.c.l.b16 %v1044
      %v1340 = vunpack.c.l.b16 %v1045
      %v1341 = vunpack.c.l.b16 %v1046
      %v1342 = vunpack.c.l.b16 %v1047
      %v1343 = vunpack.c.l.b16 %v1048
      %v1344 = vunpack.c.l.b16 %v1049
      %v1345 = vunpack.c.l.b16 %v1050
      %v1346 = vunpack.c.l.b16 %v1051
      %v1347 = vunpack.c.l.b16 %v1052
      %v1348 = vunpack.c.l.b16 %v1053
      %v1349 = vunpack.c.l.b16 %v1054
      %v1350 = vunpack.c.l.b16 %v1055
      %v1351 = vunpack.c.l.b16 %v1056
      %v1352 = vunpack.c.l.b16 %v1057
      %v1353 = vunpack.c.l.b16 %v1058
      %v1354 = vunpack.c.l.b16 %v1059
      %v1355 = vunpack.c.l.b16 %v1060
      %v1356 = vunpack.c.l.b16 %v1061
      %v1357 = vunpack.c.l.b16 %v1062
      %v1358 = vunpack.c.l.b16 %v1063
      %v1359 = vunpack.c.l.b16 %v1064
      %v1360 = vunpack.c.l.b16 %v1065
      %v1361 = vunpack.c.l.b16 %v1066
      %v1362 = vunpack.c.l.b16 %v1067
      %v1363 = vunpack.c.l.b16 %v1068
      %v1364 = vunpack.c.l.b16 %v1069
      %v1365 = vunpack.c.l.b16 %v1070
      %v1366 = vunpack.c.l.b16 %v1071
      %v1367 = vunpack.c.l.b16 %v1072
      %v1368 = vunpack.c.l.b16 %v1073
      %v1369 = vunpack.c.l.b16 %v1074
      %v1370 = vunpack.c.l.b16 %v1075
      %v1371 = vunpack.c.l.b16 %v1076
      %v1372 = vunpack.c.l.b16 %v1077
      %v1373 = vunpack.c.l.b16 %v1078
      %v1374 = vunpack.c.l.b16 %v1079
      %v1375 = vunpack.c.l.b16 %v1080
      %v1376 = vunpack.c.l.b16 %v1081
      %v1377 = vunpack.c.l.b16 %v1082
      %v1378 = vunpack.c.l.b16 %v1083
      %v1379 = vunpack.c.l.b16 %v1084
      %v1380 = vunpack.c.l.b16 %v1085
      %v1381 = vunpack.c.l.b16 %v1086
      %v1382 = vunpack.c.l.b16 %v1087
      %v1383 = vunpack.c.l.b16 %v1088
      %v1384 = vunpack.c.l.b16 %v1089
      %v1385 = vunpack.c.l.b16 %v1090
      %v1386 = vunpack.c.l.b16 %v1091
      %v1387 = vunpack.c.l.b16 %v1092
      %v1388 = vunpack.c.l.b16 %v1093
      %v1389 = vunpack.c.l.b16 %v1094
      %v1390 = vunpack.c.l.b16 %v1095
      %v1391 = vunpack.c.l.b16 %v1096
      %v1392 = vunpack.c.l.b16 %v1097
      %v1393 = vunpack.c.l.b16 %v1098
      %v1394 = vunpack.c.l.b16 %v1099
      %v1395 = vunpack.c.l.b16 %v1100
      %v1396 = vunpack.c.l.b16 %v1101
      %v1397 = vunpack.c.l.b16 %v1102
      %v1398 = vunpack.c.l.b16 %v1103
      %v1399 = vunpack.c.l.b16 %v1104
      %v1400 = vunpack.c.l.b16 %v1105
      %v1401 = vunpack.c.l.b16 %v1106
      %v1402 = vunpack.c.l.b16 %v1107
      %v1403 = vunpack.c.l.b16 %v1108
      %v1404 = vunpack.c.l.b16 %v1109
      %v1405 = vunpack.c.l.b16 %v1110
      %v1406 = vunpack.c.l.b16 %v1111
      %v1407 = vunpack.c.l.b16 %v1112
      %v1408 = vunpack.c.l.b16 %v1113
      %v1409 = vunpack.c.l.b16 %v1114
      %v1410 = vunpack.c.l.b16 %v1115
      %v1411 = vunpack.c.l.b16 %v1116
      %v1412 = vunpack.c.l.b16 %v1117
      %v1413 = vunpack.c.l.b16 %v1118
      %v1414 = vunpack.c.l.b16 %v1119
      %v1415 = vunpack.c.l.b16 %v1120
      %v1416 = vunpack.c.l.b16 %v1121
      %v1417 = vunpack.c.l.b16 %v1122
      %v1418 = vunpack.c.l.b16 %v1123
      %v1419 = vunpack.c.l.b16 %v1124
      %v1420 = vunpack.c.l.b16 %v1125
      %v1421 = vunpack.c.l.b16 %v1126
      %v1422 = vunpack.c.l.b16 %v1127
      %v1423 = vunpack.c.l.b16 %v1128
      %v1424 = vunpack.c.l.b16 %v1129
      %v1425 = vunpack.c.l.b16 %v1130
      %v1426 = vunpack.c.l.b16 %v1131
      %v1427 = vunpack.c.l.b16 %v1132
      %v1428 = vunpack.c.l.b16 %v1133
      %v1429 = vunpack.c.l.b16 %v1134
      %v1430 = vunpack.c.l.b16 %v1135
      %v1431 = vunpack.c.l.b16 %v1136
      %v1432 = vunpack.c.l.b16 %v1137
      %v1433 = vunpack.c.l.b16 %v1138
      %v1434 = vunpack.c.l.b16 %v1139
      %v1435 = vunpack.c.l.b16 %v1140
      %v1436 = vunpack.c.l.b16 %v1141
      %v1437 = vunpack.c.l.b16 %v1142
      %v1438 = vunpack.c.l.b16 %v1143
      %v1439 = vunpack.c.l.b16 %v1144
      %v1440 = vunpack.c.l.b16 %v1145
      %v1441 = vunpack.c.l.b16 %v1146
      %v1442 = vunpack.c.l.b16 %v1147
      %v1443 = vunpack.c.l.b16 %v1148
      %v1444 = vunpack.c.l.b16 %v1149
      %v1445 = vunpack.c.l.b16 %v1150
      %v1446 = vunpack.c.l.b16 %v1151
      %v1447 = vunpack.c.l.b16 %v1152
      %v1448 = vunpack.c.l.b16 %v1153
      %v1449 = vunpack.c.l.b16 %v1154
      %v1450 = vunpack.c.l.b16 %v1155
      %v1451 = vpack.c.b16 %v1308, %v1307
      %v1452 = vpack.c.b16 %v1310, %v1309
      %v1453 = vpack.c.b16 %v1312, %v1311
      %v1454 = vpack.c.b16 %v1314, %v1313
      %v1455 = vpack.c.b16 %v1316, %v1315
      %v1456 = vpack.c.b16 %v1318, %v1317
      %v1457 = vpack.c.b16 %v1320, %v1319
      %v1458 = vpack.c.b16 %v1322, %v1321
      %v1459 = vpack.c.b16 %v1324, %v1323
      %v1460 = vpack.c.b16 %v1326, %v1325
      %v1461 = vpack.c.b16 %v1328, %v1327
      %v1462 = vpack.c.b16 %v1330, %v1329
      %v1463 = vpack.c.b16 %v1332, %v1331
      %v1464 = vpack.c.b16 %v1334, %v1333
      %v1465 = vpack.c.b16 %v1336, %v1335
      %v1466 = vpack.c.b16 %v1338, %v1337
      %v1467 = vpack.c.b16 %v1340, %v1339
      %v1468 = vpack.c.b16 %v1342, %v1341
      %v1469 = vpack.c.b16 %v1344, %v1343
      %v1470 = vpack.c.b16 %v1346, %v1345
      %v1471 = vpack.c.b16 %v1348, %v1347
      %v1472 = vpack.c.b16 %v1350, %v1349
      %v1473 = vpack.c.b16 %v1352, %v1351
      %v1474 = vpack.c.b16 %v1354, %v1353
      %v1475 = vpack.c.b16 %v1356, %v1355
      %v1476 = vpack.c.b16 %v1358, %v1357
      %v1477 = vpack.c.b16 %v1360, %v1359
      %v1478 = vpack.c.b16 %v1362, %v1361
      %v1479 = vpack.c.b16 %v1364, %v1363
      %v1480 = vpack.c.b16 %v1366, %v1365
      %v1481 = vpack.c.b16 %v1368, %v1367
      %v1482 = vpack.c.b16 %v1370, %v1369
      %v1483 = vpack.c.b16 %v1372, %v1371
      %v1484 = vpack.c.b16 %v1374, %v1373
      %v1485 = vpack.c.b16 %v1376, %v1375
      %v1486 = vpack.c.b16 %v1378, %v1377
      %v1487 = vpack.c.b16 %v1380, %v1379
      %v1488 = vpack.c.b16 %v1382, %v1381
      %v1489 = vpack.c.b16 %v1384, %v1383
      %v1490 = vpack.c.b16 %v1386, %v1385
      %v1491 = vpack.c.b16 %v1388, %v1387
      %v1492 = vpack.c.b16 %v1390, %v1389
      %v1493 = vpack.c.b16 %v1392, %v1391
      %v1494 = vpack.c.b16 %v1394, %v1393
      %v1495 = vpack.c.b16 %v1396, %v1395
      %v1496 = vpack.c.b16 %v1398, %v1397
      %v1497 = vpack.c.b16 %v1400, %v1399
      %v1498 = vpack.c.b16 %v1402, %v1401
      %v1499 = vpack.c.b16 %v1404, %v1403
      %v1500 = vpack.c.b16 %v1406, %v1405
      %v1501 = vpack.c.b16 %v1408, %v1407
      %v1502 = vpack.c.b16 %v1410, %v1409
      %v1503 = vpack.c.b16 %v1412, %v1411
      %v1504 = vpack.c.b16 %v1414, %v1413
      %v1505 = vpack.c.b16 %v1416, %v1415
      %v1506 = vpack.c.b16 %v1418, %v1417
      %v1507 = vpack.c.b16 %v1420, %v1419
      %v1508 = vpack.c.b16 %v1422, %v1421
      %v1509 = vpack.c.b16 %v1424, %v1423
      %v1510 = vpack.c.b16 %v1426, %v1425
      %v1511 = vpack.c.b16 %v1428, %v1427
      %v1512 = vpack.c.b16 %v1430, %v1429
      %v1513 = vpack.c.b16 %v1432, %v1431
      %v1514 = vpack.c.b16 %v1434, %v1433
      %v1515 = vpack.c.b16 %v1436, %v1435
      %v1516 = vpack.c.b16 %v1438, %v1437
      %v1517 = vpack.c.b16 %v1440, %v1439
      %v1518 = vpack.c.b16 %v1442, %v1441
      %v1519 = vpack.c.b16 %v1444, %v1443
      %v1520 = vpack.c.b16 %v1446, %v1445
      %v1521 = vpack.c.b16 %v1448, %v1447
      %v1522 = vpack.c.b16 %v1450, %v1449
      %1595 = vmatprep.subr.bf16.mxu0 0
      %1596 = vmatpush1.bf16.msra.mxu0 %v1451
      %1597 = vmatprep.subr.bf16.mxu0 0
      %1598 = vmatpush1.bf16.msra.mxu0 %v1452
      %1599 = vmatprep.subr.bf16.mxu0 0
      %1600 = vmatpush1.bf16.msra.mxu0 %v1453
      %1601 = vmatprep.subr.bf16.mxu0 0
      %1602 = vmatpush1.bf16.msra.mxu0 %v1454
      %1603 = vmatprep.subr.bf16.mxu0 0
      %1604 = vmatpush1.bf16.msra.mxu0 %v1455
      %1605 = vmatprep.subr.bf16.mxu0 0
      %1606 = vmatpush1.bf16.msra.mxu0 %v1456
      %1607 = vmatprep.subr.bf16.mxu0 0
      %1608 = vmatpush1.bf16.msra.mxu0 %v1457
      %1609 = vmatprep.subr.bf16.mxu0 0
      %1610 = vmatpush1.bf16.msra.mxu0 %v1458
      %1611 = vmatprep.subr.bf16.mxu0 0
      %1612 = vmatpush1.bf16.msra.mxu0 %v1459
      %1613 = vmatprep.subr.bf16.mxu0 0
      %1614 = vmatpush1.bf16.msra.mxu0 %v1460
      %1615 = vmatprep.subr.bf16.mxu0 0
      %1616 = vmatpush1.bf16.msra.mxu0 %v1461
      %1617 = vmatprep.subr.bf16.mxu0 0
      %1618 = vmatpush1.bf16.msra.mxu0 %v1462
      %1619 = vmatprep.subr.bf16.mxu0 0
      %1620 = vmatpush1.bf16.msra.mxu0 %v1463
      %1621 = vmatprep.subr.bf16.mxu0 0
      %1622 = vmatpush1.bf16.msra.mxu0 %v1464
      %1623 = vmatprep.subr.bf16.mxu0 0
      %1624 = vmatpush1.bf16.msra.mxu0 %v1465
      %1625 = vmatprep.subr.bf16.mxu0 0
      %1626 = vmatpush1.bf16.msra.mxu0 %v1466
      %1627 = vmatprep.mubr.bf16.mxu0 %v869
      %1628 = vmatmul.mubr.bf16.gmra.mrb[0].mxu0 %v868
      %v1629 = vpop.f32.mrb[0].mxu0
      %v1630 = vadd.f32 %v1161, %v1629
      %v1631 = vpop.f32.mrb[0].mxu0
      %v1632 = vpop.f32.mrb[0].mxu0
      %v1633 = vadd.f32 %v1161, %v1632
      %v1634 = vpop.f32.mrb[0].mxu0
      %1635 = vmatprep.mubr.bf16.mxu0 %v878
      %1636 = vmatmul.mubr.bf16.gmra.mrb[0].mxu0 %v877
      %v1637 = vpop.f32.mrb[0].mxu0
      %v1638 = vadd.f32 %v1161, %v1637
      %v1639 = vpop.f32.mrb[0].mxu0
      %v1640 = vpop.f32.mrb[0].mxu0
      %v1641 = vadd.f32 %v1161, %v1640
      %v1642 = vpop.f32.mrb[0].mxu0
      %1643 = vmatprep.mubr.bf16.mxu0 %v887
      %1644 = vmatmul.mubr.bf16.gmra.mrb[0].mxu0 %v886
      %v1645 = vpop.f32.mrb[0].mxu0
      %v1646 = vadd.f32 %v1161, %v1645
      %v1647 = vpop.f32.mrb[0].mxu0
      %v1648 = vpop.f32.mrb[0].mxu0
      %v1649 = vadd.f32 %v1161, %v1648
      %v1650 = vpop.f32.mrb[0].mxu0
      %1651 = vmatprep.mubr.bf16.mxu0 %v896
      %1652 = vmatmul.mubr.bf16.gmra.mrb[0].mxu0 %v895
      %v1653 = vpop.f32.mrb[0].mxu0
      %v1654 = vadd.f32 %v1161, %v1653
      %v1655 = vpop.f32.mrb[0].mxu0
      %v1656 = vpop.f32.mrb[0].mxu0
      %v1657 = vadd.f32 %v1161, %v1656
      %v1658 = vpop.f32.mrb[0].mxu0
      %1659 = vmatprep.mubr.bf16.mxu0 %v905
      %1660 = vmatmul.mubr.bf16.gmra.mrb[0].mxu0 %v904
      %v1661 = vpop.f32.mrb[0].mxu0
      %v1662 = vadd.f32 %v1161, %v1661
      %v1663 = vpop.f32.mrb[0].mxu0
      %v1664 = vpop.f32.mrb[0].mxu0
      %v1665 = vadd.f32 %v1161, %v1664
      %v1666 = vpop.f32.mrb[0].mxu0
      %1667 = vmatprep.mubr.bf16.mxu0 %v914
      %1668 = vmatmul.mubr.bf16.gmra.mrb[0].mxu0 %v913
      %v1669 = vpop.f32.mrb[0].mxu0
      %v1670 = vadd.f32 %v1161, %v1669
      %v1671 = vpop.f32.mrb[0].mxu0
      %v1672 = vpop.f32.mrb[0].mxu0
      %v1673 = vadd.f32 %v1161, %v1672
      %v1674 = vpop.f32.mrb[0].mxu0
      %1675 = vmatprep.mubr.bf16.mxu0 %v923
      %1676 = vmatmul.mubr.bf16.gmra.mrb[0].mxu0 %v922
      %v1677 = vpop.f32.mrb[0].mxu0
      %v1678 = vadd.f32 %v1161, %v1677
      %v1679 = vpop.f32.mrb[0].mxu0
      %v1680 = vpop.f32.mrb[0].mxu0
      %v1681 = vadd.f32 %v1161, %v1680
      %v1682 = vpop.f32.mrb[0].mxu0
      %1683 = vmatprep.mubr.bf16.mxu0 %v932
      %1684 = vmatmul.mubr.bf16.gmra.mrb[0].mxu0 %v931
      %v1685 = vpop.f32.mrb[0].mxu0
      %v1686 = vadd.f32 %v1161, %v1685
      %v1687 = vpop.f32.mrb[0].mxu0
      %v1688 = vpop.f32.mrb[0].mxu0
      %v1689 = vadd.f32 %v1161, %v1688
      %v1690 = vpop.f32.mrb[0].mxu0
      %1691 = vmatprep.mubr.bf16.mxu0 %v941
      %1692 = vmatmul.mubr.bf16.gmra.mrb[0].mxu0 %v940
      %v1693 = vpop.f32.mrb[0].mxu0
      %v1694 = vadd.f32 %v1161, %v1693
      %v1695 = vpop.f32.mrb[0].mxu0
      %v1696 = vpop.f32.mrb[0].mxu0
      %v1697 = vadd.f32 %v1161, %v1696
      %v1698 = vpop.f32.mrb[0].mxu0
      %1699 = vmatprep.mubr.bf16.mxu0 %v950
      %1700 = vmatmul.mubr.bf16.gmra.mrb[0].mxu0 %v949
      %v1701 = vpop.f32.mrb[0].mxu0
      %v1702 = vadd.f32 %v1161, %v1701
      %v1703 = vpop.f32.mrb[0].mxu0
      %v1704 = vpop.f32.mrb[0].mxu0
      %v1705 = vadd.f32 %v1161, %v1704
      %v1706 = vpop.f32.mrb[0].mxu0
      %1707 = vmatprep.mubr.bf16.mxu0 %v959
      %1708 = vmatmul.mubr.bf16.gmra.mrb[0].mxu0 %v958
      %v1709 = vpop.f32.mrb[0].mxu0
      %v1710 = vadd.f32 %v1161, %v1709
      %v1711 = vpop.f32.mrb[0].mxu0
      %v1712 = vpop.f32.mrb[0].mxu0
      %v1713 = vadd.f32 %v1161, %v1712
      %v1714 = vpop.f32.mrb[0].mxu0
      %1715 = vmatprep.mubr.bf16.mxu0 %v968
      %1716 = vmatmul.mubr.bf16.gmra.mrb[0].mxu0 %v967
      %v1717 = vpop.f32.mrb[0].mxu0
      %v1718 = vadd.f32 %v1161, %v1717
      %v1719 = vpop.f32.mrb[0].mxu0
      %v1720 = vpop.f32.mrb[0].mxu0
      %v1721 = vadd.f32 %v1161, %v1720
      %v1722 = vpop.f32.mrb[0].mxu0
      %1723 = vmatprep.mubr.bf16.mxu0 %v977
      %1724 = vmatmul.mubr.bf16.gmra.mrb[0].mxu0 %v976
      %v1725 = vpop.f32.mrb[0].mxu0
      %v1726 = vadd.f32 %v1161, %v1725
      %v1727 = vpop.f32.mrb[0].mxu0
      %v1728 = vpop.f32.mrb[0].mxu0
      %v1729 = vadd.f32 %v1161, %v1728
      %v1730 = vpop.f32.mrb[0].mxu0
      %1731 = vmatprep.mubr.bf16.mxu0 %v986
      %1732 = vmatmul.mubr.bf16.gmra.mrb[0].mxu0 %v985
      %v1733 = vpop.f32.mrb[0].mxu0
      %v1734 = vadd.f32 %v1161, %v1733
      %v1735 = vpop.f32.mrb[0].mxu0
      %v1736 = vpop.f32.mrb[0].mxu0
      %v1737 = vadd.f32 %v1161, %v1736
      %v1738 = vpop.f32.mrb[0].mxu0
      %1739 = vmatprep.mubr.bf16.mxu0 %v995
      %1740 = vmatmul.mubr.bf16.gmra.mrb[0].mxu0 %v994
      %v1741 = vpop.f32.mrb[0].mxu0
      %v1742 = vadd.f32 %v1161, %v1741
      %v1743 = vpop.f32.mrb[0].mxu0
      %v1744 = vpop.f32.mrb[0].mxu0
      %v1745 = vadd.f32 %v1161, %v1744
      %v1746 = vpop.f32.mrb[0].mxu0
      %1747 = vmatprep.mubr.bf16.mxu0 %v1004
      %1748 = vmatmul.mubr.bf16.gmra.mrb[0].mxu0 %v1003
      %v1749 = vpop.f32.mrb[0].mxu0
      %v1750 = vadd.f32 %v1161, %v1749
      %v1751 = vpop.f32.mrb[0].mxu0
      %v1752 = vpop.f32.mrb[0].mxu0
      %v1753 = vadd.f32 %v1161, %v1752
      %v1754 = vpop.f32.mrb[0].mxu0
      %1755 = vdwg.mxu0
      %1756 = vmatprep.subr.bf16.mxu0 0
      %1757 = vmatpush1.bf16.msra.mxu0 %v1467
      %1758 = vmatprep.subr.bf16.mxu0 0
      %1759 = vmatpush1.bf16.msra.mxu0 %v1468
      %1760 = vmatprep.subr.bf16.mxu0 0
      %1761 = vmatpush1.bf16.msra.mxu0 %v1469
      %1762 = vmatprep.subr.bf16.mxu0 0
      %1763 = vmatpush1.bf16.msra.mxu0 %v1470
      %1764 = vmatprep.subr.bf16.mxu0 0
      %1765 = vmatpush1.bf16.msra.mxu0 %v1471
      %1766 = vmatprep.subr.bf16.mxu0 0
      %1767 = vmatpush1.bf16.msra.mxu0 %v1472
      %1768 = vmatprep.subr.bf16.mxu0 0
      %1769 = vmatpush1.bf16.msra.mxu0 %v1473
      %1770 = vmatprep.subr.bf16.mxu0 0
      %1771 = vmatpush1.bf16.msra.mxu0 %v1474
      %1772 = vmatprep.subr.bf16.mxu0 0
      %1773 = vmatpush1.bf16.msra.mxu0 %v1475
      %1774 = vmatprep.subr.bf16.mxu0 0
      %1775 = vmatpush1.bf16.msra.mxu0 %v1476
      %1776 = vmatprep.subr.bf16.mxu0 0
      %1777 = vmatpush1.bf16.msra.mxu0 %v1477
      %1778 = vmatprep.subr.bf16.mxu0 0
      %1779 = vmatpush1.bf16.msra.mxu0 %v1478
      %1780 = vmatprep.subr.bf16.mxu0 0
      %1781 = vmatpush1.bf16.msra.mxu0 %v1479
      %1782 = vmatprep.subr.bf16.mxu0 0
      %1783 = vmatpush1.bf16.msra.mxu0 %v1480
      %1784 = vmatprep.subr.bf16.mxu0 0
      %1785 = vmatpush1.bf16.msra.mxu0 %v1481
      %1786 = vmatprep.subr.bf16.mxu0 0
      %1787 = vmatpush1.bf16.msra.mxu0 %v1482
      %1788 = vmatprep.mubr.bf16.mxu0 %v871
      %1789 = vmatmul.mubr.bf16.gmra.mrb[0].mxu0 %v870
      %v1790 = vpop.f32.mrb[0].mxu0
      %v1791 = vadd.f32 %v1630, %v1790
      %v1792 = vpop.f32.mrb[0].mxu0
      %v1793 = vpop.f32.mrb[0].mxu0
      %v1794 = vadd.f32 %v1633, %v1793
      %v1795 = vpop.f32.mrb[0].mxu0
      %1796 = vmatprep.mubr.bf16.mxu0 %v880
      %1797 = vmatmul.mubr.bf16.gmra.mrb[0].mxu0 %v879
      %v1798 = vpop.f32.mrb[0].mxu0
      %v1799 = vadd.f32 %v1638, %v1798
      %v1800 = vpop.f32.mrb[0].mxu0
      %v1801 = vpop.f32.mrb[0].mxu0
      %v1802 = vadd.f32 %v1641, %v1801
      %v1803 = vpop.f32.mrb[0].mxu0
      %1804 = vmatprep.mubr.bf16.mxu0 %v889
      %1805 = vmatmul.mubr.bf16.gmra.mrb[0].mxu0 %v888
      %v1806 = vpop.f32.mrb[0].mxu0
      %v1807 = vadd.f32 %v1646, %v1806
      %v1808 = vpop.f32.mrb[0].mxu0
      %v1809 = vpop.f32.mrb[0].mxu0
      %v1810 = vadd.f32 %v1649, %v1809
      %v1811 = vpop.f32.mrb[0].mxu0
      %1812 = vmatprep.mubr.bf16.mxu0 %v898
      %1813 = vmatmul.mubr.bf16.gmra.mrb[0].mxu0 %v897
      %v1814 = vpop.f32.mrb[0].mxu0
      %v1815 = vadd.f32 %v1654, %v1814
      %v1816 = vpop.f32.mrb[0].mxu0
      %v1817 = vpop.f32.mrb[0].mxu0
      %v1818 = vadd.f32 %v1657, %v1817
      %v1819 = vpop.f32.mrb[0].mxu0
      %1820 = vmatprep.mubr.bf16.mxu0 %v907
      %1821 = vmatmul.mubr.bf16.gmra.mrb[0].mxu0 %v906
      %v1822 = vpop.f32.mrb[0].mxu0
      %v1823 = vadd.f32 %v1662, %v1822
      %v1824 = vpop.f32.mrb[0].mxu0
      %v1825 = vpop.f32.mrb[0].mxu0
      %v1826 = vadd.f32 %v1665, %v1825
      %v1827 = vpop.f32.mrb[0].mxu0
      %1828 = vmatprep.mubr.bf16.mxu0 %v916
      %1829 = vmatmul.mubr.bf16.gmra.mrb[0].mxu0 %v915
      %v1830 = vpop.f32.mrb[0].mxu0
      %v1831 = vadd.f32 %v1670, %v1830
      %v1832 = vpop.f32.mrb[0].mxu0
      %v1833 = vpop.f32.mrb[0].mxu0
      %v1834 = vadd.f32 %v1673, %v1833
      %v1835 = vpop.f32.mrb[0].mxu0
      %1836 = vmatprep.mubr.bf16.mxu0 %v925
      %1837 = vmatmul.mubr.bf16.gmra.mrb[0].mxu0 %v924
      %v1838 = vpop.f32.mrb[0].mxu0
      %v1839 = vadd.f32 %v1678, %v1838
      %v1840 = vpop.f32.mrb[0].mxu0
      %v1841 = vpop.f32.mrb[0].mxu0
      %v1842 = vadd.f32 %v1681, %v1841
      %v1843 = vpop.f32.mrb[0].mxu0
      %1844 = vmatprep.mubr.bf16.mxu0 %v934
      %1845 = vmatmul.mubr.bf16.gmra.mrb[0].mxu0 %v933
      %v1846 = vpop.f32.mrb[0].mxu0
      %v1847 = vadd.f32 %v1686, %v1846
      %v1848 = vpop.f32.mrb[0].mxu0
      %v1849 = vpop.f32.mrb[0].mxu0
      %v1850 = vadd.f32 %v1689, %v1849
      %v1851 = vpop.f32.mrb[0].mxu0
      %1852 = vmatprep.mubr.bf16.mxu0 %v943
      %1853 = vmatmul.mubr.bf16.gmra.mrb[0].mxu0 %v942
      %v1854 = vpop.f32.mrb[0].mxu0
      %v1855 = vadd.f32 %v1694, %v1854
      %v1856 = vpop.f32.mrb[0].mxu0
      %v1857 = vpop.f32.mrb[0].mxu0
      %v1858 = vadd.f32 %v1697, %v1857
      %v1859 = vpop.f32.mrb[0].mxu0
      %1860 = vmatprep.mubr.bf16.mxu0 %v952
      %1861 = vmatmul.mubr.bf16.gmra.mrb[0].mxu0 %v951
      %v1862 = vpop.f32.mrb[0].mxu0
      %v1863 = vadd.f32 %v1702, %v1862
      %v1864 = vpop.f32.mrb[0].mxu0
      %v1865 = vpop.f32.mrb[0].mxu0
      %v1866 = vadd.f32 %v1705, %v1865
      %v1867 = vpop.f32.mrb[0].mxu0
      %1868 = vmatprep.mubr.bf16.mxu0 %v961
      %1869 = vmatmul.mubr.bf16.gmra.mrb[0].mxu0 %v960
      %v1870 = vpop.f32.mrb[0].mxu0
      %v1871 = vadd.f32 %v1710, %v1870
      %v1872 = vpop.f32.mrb[0].mxu0
      %v1873 = vpop.f32.mrb[0].mxu0
      %v1874 = vadd.f32 %v1713, %v1873
      %v1875 = vpop.f32.mrb[0].mxu0
      %1876 = vmatprep.mubr.bf16.mxu0 %v970
      %1877 = vmatmul.mubr.bf16.gmra.mrb[0].mxu0 %v969
      %v1878 = vpop.f32.mrb[0].mxu0
      %v1879 = vadd.f32 %v1718, %v1878
      %v1880 = vpop.f32.mrb[0].mxu0
      %v1881 = vpop.f32.mrb[0].mxu0
      %v1882 = vadd.f32 %v1721, %v1881
      %v1883 = vpop.f32.mrb[0].mxu0
      %1884 = vmatprep.mubr.bf16.mxu0 %v979
      %1885 = vmatmul.mubr.bf16.gmra.mrb[0].mxu0 %v978
      %v1886 = vpop.f32.mrb[0].mxu0
      %v1887 = vadd.f32 %v1726, %v1886
      %v1888 = vpop.f32.mrb[0].mxu0
      %v1889 = vpop.f32.mrb[0].mxu0
      %v1890 = vadd.f32 %v1729, %v1889
      %v1891 = vpop.f32.mrb[0].mxu0
      %1892 = vmatprep.mubr.bf16.mxu0 %v988
      %1893 = vmatmul.mubr.bf16.gmra.mrb[0].mxu0 %v987
      %v1894 = vpop.f32.mrb[0].mxu0
      %v1895 = vadd.f32 %v1734, %v1894
      %v1896 = vpop.f32.mrb[0].mxu0
      %v1897 = vpop.f32.mrb[0].mxu0
      %v1898 = vadd.f32 %v1737, %v1897
      %v1899 = vpop.f32.mrb[0].mxu0
      %1900 = vmatprep.mubr.bf16.mxu0 %v997
      %1901 = vmatmul.mubr.bf16.gmra.mrb[0].mxu0 %v996
      %v1902 = vpop.f32.mrb[0].mxu0
      %v1903 = vadd.f32 %v1742, %v1902
      %v1904 = vpop.f32.mrb[0].mxu0
      %v1905 = vpop.f32.mrb[0].mxu0
      %v1906 = vadd.f32 %v1745, %v1905
      %v1907 = vpop.f32.mrb[0].mxu0
      %1908 = vmatprep.mubr.bf16.mxu0 %v1006
      %1909 = vmatmul.mubr.bf16.gmra.mrb[0].mxu0 %v1005
      %v1910 = vpop.f32.mrb[0].mxu0
      %v1911 = vadd.f32 %v1750, %v1910
      %v1912 = vpop.f32.mrb[0].mxu0
      %v1913 = vpop.f32.mrb[0].mxu0
      %v1914 = vadd.f32 %v1753, %v1913
      %v1915 = vpop.f32.mrb[0].mxu0
      %1916 = vdwg.mxu0
      %1917 = vmatprep.subr.bf16.mxu0 0
      %1918 = vmatpush1.bf16.msra.mxu0 %v1483
      %1919 = vmatprep.subr.bf16.mxu0 0
      %1920 = vmatpush1.bf16.msra.mxu0 %v1484
      %1921 = vmatprep.subr.bf16.mxu0 0
      %1922 = vmatpush1.bf16.msra.mxu0 %v1485
      %1923 = vmatprep.subr.bf16.mxu0 0
      %1924 = vmatpush1.bf16.msra.mxu0 %v1486
      %1925 = vmatprep.subr.bf16.mxu0 0
      %1926 = vmatpush1.bf16.msra.mxu0 %v1487
      %1927 = vmatprep.subr.bf16.mxu0 0
      %1928 = vmatpush1.bf16.msra.mxu0 %v1488
      %1929 = vmatprep.subr.bf16.mxu0 0
      %1930 = vmatpush1.bf16.msra.mxu0 %v1489
      %1931 = vmatprep.subr.bf16.mxu0 0
      %1932 = vmatpush1.bf16.msra.mxu0 %v1490
      %1933 = vmatprep.subr.bf16.mxu0 0
      %1934 = vmatpush1.bf16.msra.mxu0 %v1491
      %1935 = vmatprep.subr.bf16.mxu0 0
      %1936 = vmatpush1.bf16.msra.mxu0 %v1492
      %1937 = vmatprep.subr.bf16.mxu0 0
      %1938 = vmatpush1.bf16.msra.mxu0 %v1493
      %1939 = vmatprep.subr.bf16.mxu0 0
      %1940 = vmatpush1.bf16.msra.mxu0 %v1494
      %1941 = vmatprep.subr.bf16.mxu0 0
      %1942 = vmatpush1.bf16.msra.mxu0 %v1495
      %1943 = vmatprep.subr.bf16.mxu0 0
      %1944 = vmatpush1.bf16.msra.mxu0 %v1496
      %1945 = vmatprep.subr.bf16.mxu0 0
      %1946 = vmatpush1.bf16.msra.mxu0 %v1497
      %1947 = vmatprep.subr.bf16.mxu0 0
      %1948 = vmatpush1.bf16.msra.mxu0 %v1498
      %1949 = vmatprep.mubr.bf16.mxu0 %v873
      %1950 = vmatmul.mubr.bf16.gmra.mrb[0].mxu0 %v872
      %v1951 = vpop.f32.mrb[0].mxu0
      %v1952 = vadd.f32 %v1791, %v1951
      %v1953 = vpop.f32.mrb[0].mxu0
      %v1954 = vpop.f32.mrb[0].mxu0
      %v1955 = vadd.f32 %v1794, %v1954
      %v1956 = vpop.f32.mrb[0].mxu0
      %1957 = vmatprep.mubr.bf16.mxu0 %v882
      %1958 = vmatmul.mubr.bf16.gmra.mrb[0].mxu0 %v881
      %v1959 = vpop.f32.mrb[0].mxu0
      %v1960 = vadd.f32 %v1799, %v1959
      %v1961 = vpop.f32.mrb[0].mxu0
      %v1962 = vpop.f32.mrb[0].mxu0
      %v1963 = vadd.f32 %v1802, %v1962
      %v1964 = vpop.f32.mrb[0].mxu0
      %1965 = vmatprep.mubr.bf16.mxu0 %v891
      %1966 = vmatmul.mubr.bf16.gmra.mrb[0].mxu0 %v890
      %v1967 = vpop.f32.mrb[0].mxu0
      %v1968 = vadd.f32 %v1807, %v1967
      %v1969 = vpop.f32.mrb[0].mxu0
      %v1970 = vpop.f32.mrb[0].mxu0
      %v1971 = vadd.f32 %v1810, %v1970
      %v1972 = vpop.f32.mrb[0].mxu0
      %1973 = vmatprep.mubr.bf16.mxu0 %v900
      %1974 = vmatmul.mubr.bf16.gmra.mrb[0].mxu0 %v899
      %v1975 = vpop.f32.mrb[0].mxu0
      %v1976 = vadd.f32 %v1815, %v1975
      %v1977 = vpop.f32.mrb[0].mxu0
      %v1978 = vpop.f32.mrb[0].mxu0
      %v1979 = vadd.f32 %v1818, %v1978
      %v1980 = vpop.f32.mrb[0].mxu0
      %1981 = vmatprep.mubr.bf16.mxu0 %v909
      %1982 = vmatmul.mubr.bf16.gmra.mrb[0].mxu0 %v908
      %v1983 = vpop.f32.mrb[0].mxu0
      %v1984 = vadd.f32 %v1823, %v1983
      %v1985 = vpop.f32.mrb[0].mxu0
      %v1986 = vpop.f32.mrb[0].mxu0
      %v1987 = vadd.f32 %v1826, %v1986
      %v1988 = vpop.f32.mrb[0].mxu0
      %1989 = vmatprep.mubr.bf16.mxu0 %v918
      %1990 = vmatmul.mubr.bf16.gmra.mrb[0].mxu0 %v917
      %v1991 = vpop.f32.mrb[0].mxu0
      %v1992 = vadd.f32 %v1831, %v1991
      %v1993 = vpop.f32.mrb[0].mxu0
      %v1994 = vpop.f32.mrb[0].mxu0
      %v1995 = vadd.f32 %v1834, %v1994
      %v1996 = vpop.f32.mrb[0].mxu0
      %1997 = vmatprep.mubr.bf16.mxu0 %v927
      %1998 = vmatmul.mubr.bf16.gmra.mrb[0].mxu0 %v926
      %v1999 = vpop.f32.mrb[0].mxu0
      %v2000 = vadd.f32 %v1839, %v1999
      %v2001 = vpop.f32.mrb[0].mxu0
      %v2002 = vpop.f32.mrb[0].mxu0
      %v2003 = vadd.f32 %v1842, %v2002
      %v2004 = vpop.f32.mrb[0].mxu0
      %2005 = vmatprep.mubr.bf16.mxu0 %v936
      %2006 = vmatmul.mubr.bf16.gmra.mrb[0].mxu0 %v935
      %v2007 = vpop.f32.mrb[0].mxu0
      %v2008 = vadd.f32 %v1847, %v2007
      %v2009 = vpop.f32.mrb[0].mxu0
      %v2010 = vpop.f32.mrb[0].mxu0
      %v2011 = vadd.f32 %v1850, %v2010
      %v2012 = vpop.f32.mrb[0].mxu0
      %2013 = vmatprep.mubr.bf16.mxu0 %v945
      %2014 = vmatmul.mubr.bf16.gmra.mrb[0].mxu0 %v944
      %v2015 = vpop.f32.mrb[0].mxu0
      %v2016 = vadd.f32 %v1855, %v2015
      %v2017 = vpop.f32.mrb[0].mxu0
      %v2018 = vpop.f32.mrb[0].mxu0
      %v2019 = vadd.f32 %v1858, %v2018
      %v2020 = vpop.f32.mrb[0].mxu0
      %2021 = vmatprep.mubr.bf16.mxu0 %v954
      %2022 = vmatmul.mubr.bf16.gmra.mrb[0].mxu0 %v953
      %v2023 = vpop.f32.mrb[0].mxu0
      %v2024 = vadd.f32 %v1863, %v2023
      %v2025 = vpop.f32.mrb[0].mxu0
      %v2026 = vpop.f32.mrb[0].mxu0
      %v2027 = vadd.f32 %v1866, %v2026
      %v2028 = vpop.f32.mrb[0].mxu0
      %2029 = vmatprep.mubr.bf16.mxu0 %v963
      %2030 = vmatmul.mubr.bf16.gmra.mrb[0].mxu0 %v962
      %v2031 = vpop.f32.mrb[0].mxu0
      %v2032 = vadd.f32 %v1871, %v2031
      %v2033 = vpop.f32.mrb[0].mxu0
      %v2034 = vpop.f32.mrb[0].mxu0
      %v2035 = vadd.f32 %v1874, %v2034
      %v2036 = vpop.f32.mrb[0].mxu0
      %2037 = vmatprep.mubr.bf16.mxu0 %v972
      %2038 = vmatmul.mubr.bf16.gmra.mrb[0].mxu0 %v971
      %v2039 = vpop.f32.mrb[0].mxu0
      %v2040 = vadd.f32 %v1879, %v2039
      %v2041 = vpop.f32.mrb[0].mxu0
      %v2042 = vpop.f32.mrb[0].mxu0
      %v2043 = vadd.f32 %v1882, %v2042
      %v2044 = vpop.f32.mrb[0].mxu0
      %2045 = vmatprep.mubr.bf16.mxu0 %v981
      %2046 = vmatmul.mubr.bf16.gmra.mrb[0].mxu0 %v980
      %v2047 = vpop.f32.mrb[0].mxu0
      %v2048 = vadd.f32 %v1887, %v2047
      %v2049 = vpop.f32.mrb[0].mxu0
      %v2050 = vpop.f32.mrb[0].mxu0
      %v2051 = vadd.f32 %v1890, %v2050
      %v2052 = vpop.f32.mrb[0].mxu0
      %2053 = vmatprep.mubr.bf16.mxu0 %v990
      %2054 = vmatmul.mubr.bf16.gmra.mrb[0].mxu0 %v989
      %v2055 = vpop.f32.mrb[0].mxu0
      %v2056 = vadd.f32 %v1895, %v2055
      %v2057 = vpop.f32.mrb[0].mxu0
      %v2058 = vpop.f32.mrb[0].mxu0
      %v2059 = vadd.f32 %v1898, %v2058
      %v2060 = vpop.f32.mrb[0].mxu0
      %2061 = vmatprep.mubr.bf16.mxu0 %v999
      %2062 = vmatmul.mubr.bf16.gmra.mrb[0].mxu0 %v998
      %v2063 = vpop.f32.mrb[0].mxu0
      %v2064 = vadd.f32 %v1903, %v2063
      %v2065 = vpop.f32.mrb[0].mxu0
      %v2066 = vpop.f32.mrb[0].mxu0
      %v2067 = vadd.f32 %v1906, %v2066
      %v2068 = vpop.f32.mrb[0].mxu0
      %2069 = vmatprep.mubr.bf16.mxu0 %v1008
      %2070 = vmatmul.mubr.bf16.gmra.mrb[0].mxu0 %v1007
      %v2071 = vpop.f32.mrb[0].mxu0
      %v2072 = vadd.f32 %v1911, %v2071
      %v2073 = vpop.f32.mrb[0].mxu0
      %v2074 = vpop.f32.mrb[0].mxu0
      %v2075 = vadd.f32 %v1914, %v2074
      %v2076 = vpop.f32.mrb[0].mxu0
      %2077 = vdwg.mxu0
      %2078 = vmatprep.subr.bf16.mxu0 0
      %2079 = vmatpush1.bf16.msra.mxu0 %v1499
      %2080 = vmatprep.subr.bf16.mxu0 0
      %2081 = vmatpush1.bf16.msra.mxu0 %v1500
      %2082 = vmatprep.subr.bf16.mxu0 0
      %2083 = vmatpush1.bf16.msra.mxu0 %v1501
      %2084 = vmatprep.subr.bf16.mxu0 0
      %2085 = vmatpush1.bf16.msra.mxu0 %v1502
      %2086 = vmatprep.subr.bf16.mxu0 0
      %2087 = vmatpush1.bf16.msra.mxu0 %v1503
      %2088 = vmatprep.subr.bf16.mxu0 0
      %2089 = vmatpush1.bf16.msra.mxu0 %v1504
      %2090 = vmatprep.subr.bf16.mxu0 0
      %2091 = vmatpush1.bf16.msra.mxu0 %v1505
      %2092 = vmatprep.subr.bf16.mxu0 0
      %2093 = vmatpush1.bf16.msra.mxu0 %v1506
      %2094 = vmatprep.subr.bf16.mxu0 0
      %2095 = vmatpush1.bf16.msra.mxu0 %v1507
      %2096 = vmatprep.subr.bf16.mxu0 0
      %2097 = vmatpush1.bf16.msra.mxu0 %v1508
      %2098 = vmatprep.subr.bf16.mxu0 0
      %2099 = vmatpush1.bf16.msra.mxu0 %v1509
      %2100 = vmatprep.subr.bf16.mxu0 0
      %2101 = vmatpush1.bf16.msra.mxu0 %v1510
      %2102 = vmatprep.subr.bf16.mxu0 0
      %2103 = vmatpush1.bf16.msra.mxu0 %v1511
      %2104 = vmatprep.subr.bf16.mxu0 0
      %2105 = vmatpush1.bf16.msra.mxu0 %v1512
      %2106 = vmatprep.subr.bf16.mxu0 0
      %2107 = vmatpush1.bf16.msra.mxu0 %v1513
      %2108 = vmatprep.subr.bf16.mxu0 0
      %2109 = vmatpush1.bf16.msra.mxu0 %v1514
      %2110 = vmatprep.mubr.bf16.mxu0 %v875
      %2111 = vmatmul.mubr.bf16.gmra.mrb[0].mxu0 %v874
      %v2112 = vpop.f32.mrb[0].mxu0
      %v2113 = vadd.f32 %v1952, %v2112
      %v2114 = vpop.f32.mrb[0].mxu0
      %v2115 = vpop.f32.mrb[0].mxu0
      %v2116 = vadd.f32 %v1955, %v2115
      %v2117 = vpop.f32.mrb[0].mxu0
      %2118 = vmatprep.mubr.bf16.mxu0 %v884
      %2119 = vmatmul.mubr.bf16.gmra.mrb[0].mxu0 %v883
      %v2120 = vpop.f32.mrb[0].mxu0
      %v2121 = vadd.f32 %v1960, %v2120
      %v2122 = vpop.f32.mrb[0].mxu0
      %v2123 = vpop.f32.mrb[0].mxu0
      %v2124 = vadd.f32 %v1963, %v2123
      %v2125 = vpop.f32.mrb[0].mxu0
      %2126 = vmatprep.mubr.bf16.mxu0 %v893
      %2127 = vmatmul.mubr.bf16.gmra.mrb[0].mxu0 %v892
      %v2128 = vpop.f32.mrb[0].mxu0
      %v2129 = vadd.f32 %v1968, %v2128
      %v2130 = vpop.f32.mrb[0].mxu0
      %v2131 = vpop.f32.mrb[0].mxu0
      %v2132 = vadd.f32 %v1971, %v2131
      %v2133 = vpop.f32.mrb[0].mxu0
      %2134 = vmatprep.mubr.bf16.mxu0 %v902
      %2135 = vmatmul.mubr.bf16.gmra.mrb[0].mxu0 %v901
      %v2136 = vpop.f32.mrb[0].mxu0
      %v2137 = vadd.f32 %v1976, %v2136
      %v2138 = vpop.f32.mrb[0].mxu0
      %v2139 = vpop.f32.mrb[0].mxu0
      %v2140 = vadd.f32 %v1979, %v2139
      %v2141 = vpop.f32.mrb[0].mxu0
      %2142 = vmatprep.mubr.bf16.mxu0 %v911
      %2143 = vmatmul.mubr.bf16.gmra.mrb[0].mxu0 %v910
      %v2144 = vpop.f32.mrb[0].mxu0
      %v2145 = vadd.f32 %v1984, %v2144
      %v2146 = vpop.f32.mrb[0].mxu0
      %v2147 = vpop.f32.mrb[0].mxu0
      %v2148 = vadd.f32 %v1987, %v2147
      %v2149 = vpop.f32.mrb[0].mxu0
      %2150 = vmatprep.mubr.bf16.mxu0 %v920
      %2151 = vmatmul.mubr.bf16.gmra.mrb[0].mxu0 %v919
      %v2152 = vpop.f32.mrb[0].mxu0
      %v2153 = vadd.f32 %v1992, %v2152
      %v2154 = vpop.f32.mrb[0].mxu0
      %v2155 = vpop.f32.mrb[0].mxu0
      %v2156 = vadd.f32 %v1995, %v2155
      %v2157 = vpop.f32.mrb[0].mxu0
      %2158 = vmatprep.mubr.bf16.mxu0 %v929
      %2159 = vmatmul.mubr.bf16.gmra.mrb[0].mxu0 %v928
      %v2160 = vpop.f32.mrb[0].mxu0
      %v2161 = vadd.f32 %v2000, %v2160
      %v2162 = vpop.f32.mrb[0].mxu0
      %v2163 = vpop.f32.mrb[0].mxu0
      %v2164 = vadd.f32 %v2003, %v2163
      %v2165 = vpop.f32.mrb[0].mxu0
      %2166 = vmatprep.mubr.bf16.mxu0 %v938
      %2167 = vmatmul.mubr.bf16.gmra.mrb[0].mxu0 %v937
      %v2168 = vpop.f32.mrb[0].mxu0
      %v2169 = vadd.f32 %v2008, %v2168
      %v2170 = vpop.f32.mrb[0].mxu0
      %v2171 = vpop.f32.mrb[0].mxu0
      %v2172 = vadd.f32 %v2011, %v2171
      %v2173 = vpop.f32.mrb[0].mxu0
      %2174 = vmatprep.mubr.bf16.mxu0 %v947
      %2175 = vmatmul.mubr.bf16.gmra.mrb[0].mxu0 %v946
      %v2176 = vpop.f32.mrb[0].mxu0
      %v2177 = vadd.f32 %v2016, %v2176
      %v2178 = vpop.f32.mrb[0].mxu0
      %v2179 = vpop.f32.mrb[0].mxu0
      %v2180 = vadd.f32 %v2019, %v2179
      %v2181 = vpop.f32.mrb[0].mxu0
      %2182 = vmatprep.mubr.bf16.mxu0 %v956
      %2183 = vmatmul.mubr.bf16.gmra.mrb[0].mxu0 %v955
      %v2184 = vpop.f32.mrb[0].mxu0
      %v2185 = vadd.f32 %v2024, %v2184
      %v2186 = vpop.f32.mrb[0].mxu0
      %v2187 = vpop.f32.mrb[0].mxu0
      %v2188 = vadd.f32 %v2027, %v2187
      %v2189 = vpop.f32.mrb[0].mxu0
      %2190 = vmatprep.mubr.bf16.mxu0 %v965
      %2191 = vmatmul.mubr.bf16.gmra.mrb[0].mxu0 %v964
      %v2192 = vpop.f32.mrb[0].mxu0
      %v2193 = vadd.f32 %v2032, %v2192
      %v2194 = vpop.f32.mrb[0].mxu0
      %v2195 = vpop.f32.mrb[0].mxu0
      %v2196 = vadd.f32 %v2035, %v2195
      %v2197 = vpop.f32.mrb[0].mxu0
      %2198 = vmatprep.mubr.bf16.mxu0 %v974
      %2199 = vmatmul.mubr.bf16.gmra.mrb[0].mxu0 %v973
      %v2200 = vpop.f32.mrb[0].mxu0
      %v2201 = vadd.f32 %v2040, %v2200
      %v2202 = vpop.f32.mrb[0].mxu0
      %v2203 = vpop.f32.mrb[0].mxu0
      %v2204 = vadd.f32 %v2043, %v2203
      %v2205 = vpop.f32.mrb[0].mxu0
      %2206 = vmatprep.mubr.bf16.mxu0 %v983
      %2207 = vmatmul.mubr.bf16.gmra.mrb[0].mxu0 %v982
      %v2208 = vpop.f32.mrb[0].mxu0
      %v2209 = vadd.f32 %v2048, %v2208
      %v2210 = vpop.f32.mrb[0].mxu0
      %v2211 = vpop.f32.mrb[0].mxu0
      %v2212 = vadd.f32 %v2051, %v2211
      %v2213 = vpop.f32.mrb[0].mxu0
      %2214 = vmatprep.mubr.bf16.mxu0 %v992
      %2215 = vmatmul.mubr.bf16.gmra.mrb[0].mxu0 %v991
      %v2216 = vpop.f32.mrb[0].mxu0
      %v2217 = vadd.f32 %v2056, %v2216
      %v2218 = vpop.f32.mrb[0].mxu0
      %v2219 = vpop.f32.mrb[0].mxu0
      %v2220 = vadd.f32 %v2059, %v2219
      %v2221 = vpop.f32.mrb[0].mxu0
      %2222 = vmatprep.mubr.bf16.mxu0 %v1001
      %2223 = vmatmul.mubr.bf16.gmra.mrb[0].mxu0 %v1000
      %v2224 = vpop.f32.mrb[0].mxu0
      %v2225 = vadd.f32 %v2064, %v2224
      %v2226 = vpop.f32.mrb[0].mxu0
      %v2227 = vpop.f32.mrb[0].mxu0
      %v2228 = vadd.f32 %v2067, %v2227
      %v2229 = vpop.f32.mrb[0].mxu0
      %2230 = vmatprep.mubr.bf16.mxu0 %v1010
      %2231 = vmatmul.mubr.bf16.gmra.mrb[0].mxu0 %v1009
      %v2232 = vpop.f32.mrb[0].mxu0
      %v2233 = vadd.f32 %v2072, %v2232
      %v2234 = vpop.f32.mrb[0].mxu0
      %v2235 = vpop.f32.mrb[0].mxu0
      %v2236 = vadd.f32 %v2075, %v2235
      %v2237 = vpop.f32.mrb[0].mxu0
      %2238 = vdwg.mxu0
      %2239 = vmatprep.subr.bf16.mxu0 0
      %2240 = vmatpush1.bf16.msra.mxu0 %v1515
      %2241 = vmatprep.subr.bf16.mxu0 0
      %2242 = vmatpush1.bf16.msra.mxu0 %v1516
      %2243 = vmatprep.subr.bf16.mxu0 0
      %2244 = vmatpush1.bf16.msra.mxu0 %v1517
      %2245 = vmatprep.subr.bf16.mxu0 0
      %2246 = vmatpush1.bf16.msra.mxu0 %v1518
      %2247 = vmatprep.subr.bf16.mxu0 0
      %2248 = vmatpush1.bf16.msra.mxu0 %v1519
      %2249 = vmatprep.subr.bf16.mxu0 0
      %2250 = vmatpush1.bf16.msra.mxu0 %v1520
      %2251 = vmatprep.subr.bf16.mxu0 0
      %2252 = vmatpush1.bf16.msra.mxu0 %v1521
      %2253 = vmatprep.subr.bf16.mxu0 0
      %2254 = vmatpush1.bf16.msra.mxu0 %v1522
      %2255 = vmatprep.subr.bf16.mxu0 0
      %2256 = vmatpush1.bf16.msra.mxu0 0
      %2257 = vmatprep.subr.bf16.mxu0 0
      %2258 = vmatpush1.bf16.msra.mxu0 0
      %2259 = vmatprep.subr.bf16.mxu0 0
      %2260 = vmatpush1.bf16.msra.mxu0 0
      %2261 = vmatprep.subr.bf16.mxu0 0
      %2262 = vmatpush1.bf16.msra.mxu0 0
      %2263 = vmatprep.subr.bf16.mxu0 0
      %2264 = vmatpush1.bf16.msra.mxu0 0
      %2265 = vmatprep.subr.bf16.mxu0 0
      %2266 = vmatpush1.bf16.msra.mxu0 0
      %2267 = vmatprep.subr.bf16.mxu0 0
      %2268 = vmatpush1.bf16.msra.mxu0 0
      %2269 = vmatprep.subr.bf16.mxu0 0
      %2270 = vmatpush1.bf16.msra.mxu0 0
      %2271 = vmatprep.mubr.bf16.mxu0 0
      %2272 = vmatmul.mubr.bf16.gmra.mrb[0].mxu0 %v876
      %v2273 = vpop.f32.mrb[0].mxu0
      %v2274 = vadd.f32 %v2113, %v2273
      %v2275 = vpop.f32.mrb[0].mxu0
      %v2276 = vpop.f32.mrb[0].mxu0
      %v2277 = vadd.f32 %v2116, %v2276
      %v2278 = vpop.f32.mrb[0].mxu0
      %2279 = vmatprep.mubr.bf16.mxu0 0
      %2280 = vmatmul.mubr.bf16.gmra.mrb[0].mxu0 %v885
      %v2281 = vpop.f32.mrb[0].mxu0
      %v2282 = vadd.f32 %v2121, %v2281
      %v2283 = vpop.f32.mrb[0].mxu0
      %v2284 = vpop.f32.mrb[0].mxu0
      %v2285 = vadd.f32 %v2124, %v2284
      %v2286 = vpop.f32.mrb[0].mxu0
      %2287 = vmatprep.mubr.bf16.mxu0 0
      %2288 = vmatmul.mubr.bf16.gmra.mrb[0].mxu0 %v894
      %v2289 = vpop.f32.mrb[0].mxu0
      %v2290 = vadd.f32 %v2129, %v2289
      %v2291 = vpop.f32.mrb[0].mxu0
      %v2292 = vpop.f32.mrb[0].mxu0
      %v2293 = vadd.f32 %v2132, %v2292
      %v2294 = vpop.f32.mrb[0].mxu0
      %2295 = vmatprep.mubr.bf16.mxu0 0
      %2296 = vmatmul.mubr.bf16.gmra.mrb[0].mxu0 %v903
      %v2297 = vpop.f32.mrb[0].mxu0
      %v2298 = vadd.f32 %v2137, %v2297
      %v2299 = vpop.f32.mrb[0].mxu0
      %v2300 = vpop.f32.mrb[0].mxu0
      %v2301 = vadd.f32 %v2140, %v2300
      %v2302 = vpop.f32.mrb[0].mxu0
      %2303 = vmatprep.mubr.bf16.mxu0 0
      %2304 = vmatmul.mubr.bf16.gmra.mrb[0].mxu0 %v912
      %v2305 = vpop.f32.mrb[0].mxu0
      %v2306 = vadd.f32 %v2145, %v2305
      %v2307 = vpop.f32.mrb[0].mxu0
      %v2308 = vpop.f32.mrb[0].mxu0
      %v2309 = vadd.f32 %v2148, %v2308
      %v2310 = vpop.f32.mrb[0].mxu0
      %2311 = vmatprep.mubr.bf16.mxu0 0
      %2312 = vmatmul.mubr.bf16.gmra.mrb[0].mxu0 %v921
      %v2313 = vpop.f32.mrb[0].mxu0
      %v2314 = vadd.f32 %v2153, %v2313
      %v2315 = vpop.f32.mrb[0].mxu0
      %v2316 = vpop.f32.mrb[0].mxu0
      %v2317 = vadd.f32 %v2156, %v2316
      %v2318 = vpop.f32.mrb[0].mxu0
      %2319 = vmatprep.mubr.bf16.mxu0 0
      %2320 = vmatmul.mubr.bf16.gmra.mrb[0].mxu0 %v930
      %v2321 = vpop.f32.mrb[0].mxu0
      %v2322 = vadd.f32 %v2161, %v2321
      %v2323 = vpop.f32.mrb[0].mxu0
      %v2324 = vpop.f32.mrb[0].mxu0
      %v2325 = vadd.f32 %v2164, %v2324
      %v2326 = vpop.f32.mrb[0].mxu0
      %2327 = vmatprep.mubr.bf16.mxu0 0
      %2328 = vmatmul.mubr.bf16.gmra.mrb[0].mxu0 %v939
      %v2329 = vpop.f32.mrb[0].mxu0
      %v2330 = vadd.f32 %v2169, %v2329
      %v2331 = vpop.f32.mrb[0].mxu0
      %v2332 = vpop.f32.mrb[0].mxu0
      %v2333 = vadd.f32 %v2172, %v2332
      %v2334 = vpop.f32.mrb[0].mxu0
      %2335 = vmatprep.mubr.bf16.mxu0 0
      %2336 = vmatmul.mubr.bf16.gmra.mrb[0].mxu0 %v948
      %v2337 = vpop.f32.mrb[0].mxu0
      %v2338 = vadd.f32 %v2177, %v2337
      %v2339 = vpop.f32.mrb[0].mxu0
      %v2340 = vpop.f32.mrb[0].mxu0
      %v2341 = vadd.f32 %v2180, %v2340
      %v2342 = vpop.f32.mrb[0].mxu0
      %2343 = vmatprep.mubr.bf16.mxu0 0
      %2344 = vmatmul.mubr.bf16.gmra.mrb[0].mxu0 %v957
      %v2345 = vpop.f32.mrb[0].mxu0
      %v2346 = vadd.f32 %v2185, %v2345
      %v2347 = vpop.f32.mrb[0].mxu0
      %v2348 = vpop.f32.mrb[0].mxu0
      %v2349 = vadd.f32 %v2188, %v2348
      %v2350 = vpop.f32.mrb[0].mxu0
      %2351 = vmatprep.mubr.bf16.mxu0 0
      %2352 = vmatmul.mubr.bf16.gmra.mrb[0].mxu0 %v966
      %v2353 = vpop.f32.mrb[0].mxu0
      %v2354 = vadd.f32 %v2193, %v2353
      %v2355 = vpop.f32.mrb[0].mxu0
      %v2356 = vpop.f32.mrb[0].mxu0
      %v2357 = vadd.f32 %v2196, %v2356
      %v2358 = vpop.f32.mrb[0].mxu0
      %2359 = vmatprep.mubr.bf16.mxu0 0
      %2360 = vmatmul.mubr.bf16.gmra.mrb[0].mxu0 %v975
      %v2361 = vpop.f32.mrb[0].mxu0
      %v2362 = vadd.f32 %v2201, %v2361
      %v2363 = vpop.f32.mrb[0].mxu0
      %v2364 = vpop.f32.mrb[0].mxu0
      %v2365 = vadd.f32 %v2204, %v2364
      %v2366 = vpop.f32.mrb[0].mxu0
      %2367 = vmatprep.mubr.bf16.mxu0 0
      %2368 = vmatmul.mubr.bf16.gmra.mrb[0].mxu0 %v984
      %v2369 = vpop.f32.mrb[0].mxu0
      %v2370 = vadd.f32 %v2209, %v2369
      %v2371 = vpop.f32.mrb[0].mxu0
      %v2372 = vpop.f32.mrb[0].mxu0
      %v2373 = vadd.f32 %v2212, %v2372
      %v2374 = vpop.f32.mrb[0].mxu0
      %2375 = vmatprep.mubr.bf16.mxu0 0
      %2376 = vmatmul.mubr.bf16.gmra.mrb[0].mxu0 %v993
      %v2377 = vpop.f32.mrb[0].mxu0
      %v2378 = vadd.f32 %v2217, %v2377
      %v2379 = vpop.f32.mrb[0].mxu0
      %v2380 = vpop.f32.mrb[0].mxu0
      %v2381 = vadd.f32 %v2220, %v2380
      %v2382 = vpop.f32.mrb[0].mxu0
      %2383 = vmatprep.mubr.bf16.mxu0 0
      %2384 = vmatmul.mubr.bf16.gmra.mrb[0].mxu0 %v1002
      %v2385 = vpop.f32.mrb[0].mxu0
      %v2386 = vadd.f32 %v2225, %v2385
      %v2387 = vpop.f32.mrb[0].mxu0
      %v2388 = vpop.f32.mrb[0].mxu0
      %v2389 = vadd.f32 %v2228, %v2388
      %v2390 = vpop.f32.mrb[0].mxu0
      %2391 = vmatprep.mubr.bf16.mxu0 0
      %2392 = vmatmul.mubr.bf16.gmra.mrb[0].mxu0 %v1011
      %v2393 = vpop.f32.mrb[0].mxu0
      %v2394 = vadd.f32 %v2233, %v2393
      %v2395 = vpop.f32.mrb[0].mxu0
      %v2396 = vpop.f32.mrb[0].mxu0
      %v2397 = vadd.f32 %v2236, %v2396
      %v2398 = vpop.f32.mrb[0].mxu0
      %2399 = vdwg.mxu0
      %2400 = vst [vmem:[%s170] sm:$0xff] %v2274
      %2401 = vst [vmem:[%s170 + $0x8] sm:$0xff] %v2277
      %2402 = vst [vmem:[%s170 + $0x10] sm:$0xff] %v2282
      %2403 = vst [vmem:[%s170 + $0x18] sm:$0xff] %v2285
      %2404 = vst [vmem:[%s170 + $0x20] sm:$0xff] %v2290
      %2405 = vst [vmem:[%s170 + $0x28] sm:$0xff] %v2293
      %2406 = vst [vmem:[%s170 + $0x30] sm:$0xff] %v2298
      %2407 = vst [vmem:[%s170 + $0x38] sm:$0xff] %v2301
      %2408 = vst [vmem:[%s170 + $0x40] sm:$0xff] %v2306
      %2409 = vst [vmem:[%s170 + $0x48] sm:$0xff] %v2309
      %2410 = vst [vmem:[%s170 + $0x50] sm:$0xff] %v2314
      %2411 = vst [vmem:[%s170 + $0x58] sm:$0xff] %v2317
      %2412 = vst [vmem:[%s170 + $0x60] sm:$0xff] %v2322
      %2413 = vst [vmem:[%s170 + $0x68] sm:$0xff] %v2325
      %2414 = vst [vmem:[%s170 + $0x70] sm:$0xff] %v2330
      %2415 = vst [vmem:[%s170 + $0x78] sm:$0xff] %v2333
      %2416 = vst [vmem:[%s170 + $0x80] sm:$0xff] %v2338
      %2417 = vst [vmem:[%s170 + $0x88] sm:$0xff] %v2341
      %2418 = vst [vmem:[%s170 + $0x90] sm:$0xff] %v2346
      %2419 = vst [vmem:[%s170 + $0x98] sm:$0xff] %v2349
      %2420 = vst [vmem:[%s170 + $0xa0] sm:$0xff] %v2354
      %2421 = vst [vmem:[%s170 + $0xa8] sm:$0xff] %v2357
      %2422 = vst [vmem:[%s170 + $0xb0] sm:$0xff] %v2362
      %2423 = vst [vmem:[%s170 + $0xb8] sm:$0xff] %v2365
      %2424 = vst [vmem:[%s170 + $0xc0] sm:$0xff] %v2370
      %2425 = vst [vmem:[%s170 + $0xc8] sm:$0xff] %v2373
      %2426 = vst [vmem:[%s170 + $0xd0] sm:$0xff] %v2378
      %2427 = vst [vmem:[%s170 + $0xd8] sm:$0xff] %v2381
      %2428 = vst [vmem:[%s170 + $0xe0] sm:$0xff] %v2386
      %2429 = vst [vmem:[%s170 + $0xe8] sm:$0xff] %v2389
      %2430 = vst [vmem:[%s170 + $0xf0] sm:$0xff] %v2394
      %2431 = vst [vmem:[%s170 + $0xf8] sm:$0xff] %v2397
      %p2432 = scmp.lt.s32.totalorder %s14, 1
      %s2433 = scalar_select %p2432, %s14, 1
      %s2434 = smul.addr %s2433, 32
      %s2435 = smul.addr %s2434, 8
      %s2436 = scalar_lea.vmem %s3, %s2435
      // Predicated region
      $region33: #{downsample_forward.8} parent=31 // pred_check
        %p2437 = pneg %p100
      $region34: #{downsample_forward.8} parent=31 // pred_check_branch
        %2439 = sbr.rel (%p2437) target = $region36
      $region35: #{downsample_forward.8} parent=31 // pred_region
        _
      $region36: #{downsample_forward.8} parent=31 // pred_fallthru
        _
    $region32: #{downsample_forward.8} parent=5 // pred_fallthru
      _
    %p2440 = scmp.le.s32.totalorder 2, %s9
    // Predicated region
    $region37: #{downsample_forward.8} parent=5 // pred_check
      %p2441 = pneg %p2440
    $region38: #{downsample_forward.8} parent=5 // pred_check_branch
      %2443 = sbr.rel (%p2441) target = $region40
    $region39: #{downsample_forward.8} parent=5 // pred_region
      %s2444 = ssub.s32 %s9, 2
      // Predicated region
      $region41: #{downsample_forward.8} parent=39 // pred_check
        %p2445 = pneg %p106
      $region42: #{downsample_forward.8} parent=39 // pred_check_branch
        %2447 = sbr.rel (%p2445) target = $region44
      $region43: #{downsample_forward.8} parent=39 // pred_region
        %p2448 = scmp.lt.s32.totalorder %s15, 1
        %s2449 = scalar_select %p2448, %s15, 1
        %s2450 = smul.addr %s2449, 32
        %s2451 = smul.addr %s2450, 8
        %s2452 = scalar_lea.vmem %s3, %s2451
      $region44: #{downsample_forward.8} parent=39 // pred_fallthru
        _
    $region40: #{downsample_forward.8} parent=5 // pred_fallthru
      _
  $region6: #{downsample_forward.8} parent=0 // loop_footer
    %s13 = sadd.s32 1, %s9
  $region7: #{downsample_forward.8} parent=0 // loop_footer_branch
    %8 = sbr.rel target = $region3
  $region8: #{downsample_forward.8} parent=0 // loop_exit
    _

// kernel: downsample_forward.10
$region0: #{downsample_forward.10}
  #allocation0 [shape = 'u32[]', space=smem, size = 0x4, offset = 0x4, fixed_abs, tag = 'smem constant byte address 0x4 - core index']
  #allocation1 [shape = 'u32[144,128]{1,0:T(1,128)}', space=vmem, size = 0x12000, scoped, tag = 'internal scratch']
  #allocation2 [shape = 'f32[18,18,128]{2,1,0:T(8,128)}', space=vmem, size = 0x36000, scoped, tag = 'scratch operand']
  #allocation3 [shape = 'bf16[256,1152]{1,0:T(16,128)(2,1)}', space=vmem, size = 0x90000, scoped, tag = 'scratch operand']
  %s0 = inlined_call_operand.vmem [shape: f32[2,16,16,128], index: 0, kind: input, shape index: {}]
  %s1 = inlined_call_operand.vmem [shape: f32[1,1,1,128], index: 1, kind: input, shape index: {}]
  %s2 = inlined_call_operand.vmem [shape: f32[1,1,1,128], index: 2, kind: input, shape index: {}]
  %s3 = inlined_call_operand.vmem [shape: bf16[1152,128], index: 3, kind: input, shape index: {}]
  %s4 = inlined_call_operand.vmem [shape: f32[1,128], index: 4, kind: input, shape index: {}]
  %s5 = inlined_call_operand.vmem [shape: f32[2,16,16,128], index: 5, kind: output, shape index: {}]
  %s6 = sld [smem:[#allocation0]]
  $region53: #{downsample_forward.10} parent=0
    _
  %s8 = ssub.s32 1, %s6
  %s9 = scalar_select 0, %s8, %s6
  loop: start=0, step=1, limit=4
  $region2: #{downsample_forward.10} parent=0 // loop_pre_header
    _
  $region3: #{downsample_forward.10} parent=0 // loop_header
    %s11 = sphi 0, %s15
    %p12 = scmp.ge.s32.totalorder %s11, 4
    %s21 = sphi 0, %s23
    %s24 = sphi 0, %s21
    %s25 = sphi 0, %s24
    %s41 = sphi 0, %s25
    %s45 = sphi 0, %s45
    %s47 = sphi 0, %s45
    %s48 = sphi 0, %s47
    %s62 = sphi 0, %s48
    %s66 = sphi 0, %s66
    %s68 = sphi 0, %s66
    %s69 = sphi 0, %s68
    %s83 = sphi 0, %s69
    %s87 = sphi 0, %s87
    %s89 = sphi 0, %s87
    %s90 = sphi 0, %s89
    %s104 = sphi 0, %s90
    %s108 = sphi 0, %s108
    %s110 = sphi 0, %s108
    %s111 = sphi 0, %s110
    %s125 = sphi 0, %s111
    %s131 = sphi 0, %s133
    %s134 = sphi 0, %s131
    %s135 = sphi 0, %s134
    %s151 = sphi 0, %s135
  $region4: #{downsample_forward.10} parent=0 // loop_header_branch
    %14 = sbr.rel (%p12) target = $region8
  $region5: #{downsample_forward.10} parent=0 // loop_body
    %s16 = ssub.s32 %s11, 1
    %s17 = ssub.s32 %s11, 2
    %s18 = sadd.s32 %s11, 1
    %s19 = ssub.s32 %s11, %s18
    %p20 = scmp.eq.s32.totalorder %s19, 0
    %s22 = sadd.s32 %s21, 1
    %s23 = scalar_select %p20, %s21, %s22
    %p26 = pneg %p20
    %p27 = scmp.eq.s32.totalorder %s11, 1
    %p28 = por %p26, %p27
    %p29 = scmp.ne.s32.totalorder %s21, %s24
    %p30 = scmp.eq.s32.totalorder %s11, 0
    %p31 = por %p29, %p30
    %p32 = scmp.ne.s32.totalorder %s21, %s24
    %p33 = scmp.eq.s32.totalorder %s16, 1
    %p34 = por %p32, %p33
    %p35 = scmp.ne.s32.totalorder %s24, %s25
    %p36 = scmp.eq.s32.totalorder %s16, 0
    %p37 = por %p35, %p36
    %p38 = scmp.ne.s32.totalorder %s24, %s25
    %p39 = scmp.eq.s32.totalorder %s17, 1
    %p40 = por %p38, %p39
    %p42 = scmp.ne.s32.totalorder %s25, %s41
    %p43 = scmp.eq.s32.totalorder %s17, 0
    %p44 = por %p42, %p43
    %s46 = sadd.s32 %s45, 1
    %p49 = scmp.eq.s32.totalorder %s11, 1
    %p50 = scmp.ne.s32.totalorder %s45, %s47
    %p51 = scmp.eq.s32.totalorder %s11, 0
    %p52 = por %p50, %p51
    %p53 = scmp.ne.s32.totalorder %s45, %s47
    %p54 = scmp.eq.s32.totalorder %s16, 1
    %p55 = por %p53, %p54
    %p56 = scmp.ne.s32.totalorder %s47, %s48
    %p57 = scmp.eq.s32.totalorder %s16, 0
    %p58 = por %p56, %p57
    %p59 = scmp.ne.s32.totalorder %s47, %s48
    %p60 = scmp.eq.s32.totalorder %s17, 1
    %p61 = por %p59, %p60
    %p63 = scmp.ne.s32.totalorder %s48, %s62
    %p64 = scmp.eq.s32.totalorder %s17, 0
    %p65 = por %p63, %p64
    %s67 = sadd.s32 %s66, 1
    %p70 = scmp.eq.s32.totalorder %s11, 1
    %p71 = scmp.ne.s32.totalorder %s66, %s68
    %p72 = scmp.eq.s32.totalorder %s11, 0
    %p73 = por %p71, %p72
    %p74 = scmp.ne.s32.totalorder %s66, %s68
    %p75 = scmp.eq.s32.totalorder %s16, 1
    %p76 = por %p74, %p75
    %p77 = scmp.ne.s32.totalorder %s68, %s69
    %p78 = scmp.eq.s32.totalorder %s16, 0
    %p79 = por %p77, %p78
    %p80 = scmp.ne.s32.totalorder %s68, %s69
    %p81 = scmp.eq.s32.totalorder %s17, 1
    %p82 = por %p80, %p81
    %p84 = scmp.ne.s32.totalorder %s69, %s83
    %p85 = scmp.eq.s32.totalorder %s17, 0
    %p86 = por %p84, %p85
    %s88 = sadd.s32 %s87, 1
    %p91 = scmp.eq.s32.totalorder %s11, 1
    %p92 = scmp.ne.s32.totalorder %s87, %s89
    %p93 = scmp.eq.s32.totalorder %s11, 0
    %p94 = por %p92, %p93
    %p95 = scmp.ne.s32.totalorder %s87, %s89
    %p96 = scmp.eq.s32.totalorder %s16, 1
    %p97 = por %p95, %p96
    %p98 = scmp.ne.s32.totalorder %s89, %s90
    %p99 = scmp.eq.s32.totalorder %s16, 0
    %p100 = por %p98, %p99
    %p101 = scmp.ne.s32.totalorder %s89, %s90
    %p102 = scmp.eq.s32.totalorder %s17, 1
    %p103 = por %p101, %p102
    %p105 = scmp.ne.s32.totalorder %s90, %s104
    %p106 = scmp.eq.s32.totalorder %s17, 0
    %p107 = por %p105, %p106
    %s109 = sadd.s32 %s108, 1
    %p112 = scmp.eq.s32.totalorder %s11, 1
    %p113 = scmp.ne.s32.totalorder %s108, %s110
    %p114 = scmp.eq.s32.totalorder %s11, 0
    %p115 = por %p113, %p114
    %p116 = scmp.ne.s32.totalorder %s108, %s110
    %p117 = scmp.eq.s32.totalorder %s16, 1
    %p118 = por %p116, %p117
    %p119 = scmp.ne.s32.totalorder %s110, %s111
    %p120 = scmp.eq.s32.totalorder %s16, 0
    %p121 = por %p119, %p120
    %p122 = scmp.ne.s32.totalorder %s110, %s111
    %p123 = scmp.eq.s32.totalorder %s17, 1
    %p124 = por %p122, %p123
    %p126 = scmp.ne.s32.totalorder %s111, %s125
    %p127 = scmp.eq.s32.totalorder %s17, 0
    %p128 = por %p126, %p127
    %s129 = ssub.s32 %s11, %s18
    %p130 = scmp.eq.s32.totalorder %s129, 0
    %s132 = sadd.s32 %s131, 1
    %s133 = scalar_select %p130, %s131, %s132
    %p136 = pneg %p130
    %p137 = scmp.eq.s32.totalorder %s11, 1
    %p138 = por %p136, %p137
    %p139 = scmp.ne.s32.totalorder %s131, %s134
    %p140 = scmp.eq.s32.totalorder %s11, 0
    %p141 = por %p139, %p140
    %p142 = scmp.ne.s32.totalorder %s131, %s134
    %p143 = scmp.eq.s32.totalorder %s16, 1
    %p144 = por %p142, %p143
    %p145 = scmp.ne.s32.totalorder %s134, %s135
    %p146 = scmp.eq.s32.totalorder %s16, 0
    %p147 = por %p145, %p146
    %p148 = scmp.ne.s32.totalorder %s134, %s135
    %p149 = scmp.eq.s32.totalorder %s17, 1
    %p150 = por %p148, %p149
    %p152 = scmp.ne.s32.totalorder %s135, %s151
    %p153 = scmp.eq.s32.totalorder %s17, 0
    %p154 = por %p152, %p153
    %p155 = scmp.le.s32.totalorder 1, %s11
    %p156 = scmp.lt.s32.totalorder %s11, 3
    %p157 = pnand %p155, %p156
    %p158 = pneg %p157
    // Predicated region
    $region9: #{downsample_forward.10} parent=5 // pred_check
      _
    $region10: #{downsample_forward.10} parent=5 // pred_check_branch
      %160 = sbr.rel (%p157) target = $region12
    $region11: #{downsample_forward.10} parent=5 // pred_region
      %s161 = ssub.s32 %s11, 1
      // Predicated region
      $region13: #{downsample_forward.10} parent=11 // pred_check
        %p162 = pneg %p58
      $region14: #{downsample_forward.10} parent=11 // pred_check_branch
        %164 = sbr.rel (%p162) target = $region16
      $region15: #{downsample_forward.10} parent=11 // pred_region
        _
      $region16: #{downsample_forward.10} parent=11 // pred_fallthru
        _
      // Predicated region
      $region17: #{downsample_forward.10} parent=11 // pred_check
        %p165 = pneg %p79
      $region18: #{downsample_forward.10} parent=11 // pred_check_branch
        %167 = sbr.rel (%p165) target = $region20
      $region19: #{downsample_forward.10} parent=11 // pred_region
        _
      $region20: #{downsample_forward.10} parent=11 // pred_fallthru
        _
      // Predicated region
      $region21: #{downsample_forward.10} parent=11 // pred_check
        %p168 = pneg %p100
      $region22: #{downsample_forward.10} parent=11 // pred_check_branch
        %170 = sbr.rel (%p168) target = $region24
      $region23: #{downsample_forward.10} parent=11 // pred_region
        _
      $region24: #{downsample_forward.10} parent=11 // pred_fallthru
        _
      // Predicated region
      $region25: #{downsample_forward.10} parent=11 // pred_check
        %p171 = pneg %p121
      $region26: #{downsample_forward.10} parent=11 // pred_check_branch
        %173 = sbr.rel (%p171) target = $region28
      $region27: #{downsample_forward.10} parent=11 // pred_region
        _
      $region28: #{downsample_forward.10} parent=11 // pred_fallthru
        _
    $region12: #{downsample_forward.10} parent=5 // pred_fallthru
      _
    %p174 = scmp.lt.s32.totalorder %s11, 2
    // Predicated region
    $region29: #{downsample_forward.10} parent=5 // pred_check
      %p175 = pneg %p174
    $region30: #{downsample_forward.10} parent=5 // pred_check_branch
      %177 = sbr.rel (%p175) target = $region32
    $region31: #{downsample_forward.10} parent=5 // pred_region
      // Predicated region
      $region33: #{downsample_forward.10} parent=31 // pred_check
        %p178 = pneg %p31
      $region34: #{downsample_forward.10} parent=31 // pred_check_branch
        %180 = sbr.rel (%p178) target = $region36
      $region35: #{downsample_forward.10} parent=31 // pred_region
        %p181 = scmp.lt.s32.totalorder %s11, 1
        %s182 = scalar_select %p181, %s11, 1
        %s183 = smul.addr %s182, 32
        %s184 = smul.addr %s183, 8
        %s185 = scalar_lea.vmem %s0, %s184
      $region36: #{downsample_forward.10} parent=31 // pred_fallthru
        _
    $region32: #{downsample_forward.10} parent=5 // pred_fallthru
      _
    %p186 = scmp.le.s32.totalorder 1, %s11
    %p187 = scmp.lt.s32.totalorder %s11, 3
    %p188 = pnand %p186, %p187
    %p189 = pneg %p188
    // Predicated region
    $region37: #{downsample_forward.10} parent=5 // pred_check
      _
    $region38: #{downsample_forward.10} parent=5 // pred_check_branch
      %191 = sbr.rel (%p188) target = $region40
    $region39: #{downsample_forward.10} parent=5 // pred_region
      %s192 = ssub.s32 %s11, 1
      %p193 = scmp.lt.s32.totalorder %s16, 1
      %s194 = scalar_select %p193, %s16, 1
      %s195 = smul.addr %s194, 32
      %s196 = smul.addr %s195, 8
      %s197 = scalar_lea.vmem %s0, %s196
      %p198 = pneg %p37
      %p199 = pneg %p34
      %p200 = pneg %p58
      %p201 = pneg %p55
      %p202 = pneg %p79
      %p203 = pneg %p76
      %p204 = pneg %p100
      %p205 = pneg %p97
      %p206 = pneg %p121
      %p207 = pneg %p118
      %p208 = pneg %p147
      %p209 = pneg %p144
      %p210 = scmp.lt.s32.totalorder %s16, 1
      %s211 = scalar_select %p210, %s16, 1
      %s212 = smul.addr %s211, 32
      %s213 = smul.addr %s212, 8
      %s214 = scalar_lea.vmem %s5, %s213
      %p215 = scmp.lt.s32.totalorder %s16, 1
      %s216 = scalar_select %p215, %s16, 1
      %s217 = smul.addr %s216, 32
      %s218 = smul.addr %s217, 8
      %s219 = scalar_lea.vmem %s0, %s218
      %p220 = scmp.lt.s32.totalorder %s16, 1
      %s221 = scalar_select %p220, %s16, 1
      %s222 = smul.addr %s221, 32
      %s223 = smul.addr %s222, 8
      %s224 = scalar_lea.vmem %s5, %s223
      %v226 = vld [vmem:[%s219] sm:$0xff]
      %v227 = vld [vmem:[%s219 + $0x8] sm:$0xff]
      %v228 = vld [vmem:[%s219 + $0x10] sm:$0xff]
      %v229 = vld [vmem:[%s219 + $0x18] sm:$0xff]
      %v230 = vld [vmem:[%s219 + $0x20] sm:$0xff]
      %v231 = vld [vmem:[%s219 + $0x28] sm:$0xff]
      %v232 = vld [vmem:[%s219 + $0x30] sm:$0xff]
      %v233 = vld [vmem:[%s219 + $0x38] sm:$0xff]
      %v234 = vld [vmem:[%s219 + $0x40] sm:$0xff]
      %v235 = vld [vmem:[%s219 + $0x48] sm:$0xff]
      %v236 = vld [vmem:[%s219 + $0x50] sm:$0xff]
      %v237 = vld [vmem:[%s219 + $0x58] sm:$0xff]
      %v238 = vld [vmem:[%s219 + $0x60] sm:$0xff]
      %v239 = vld [vmem:[%s219 + $0x68] sm:$0xff]
      %v240 = vld [vmem:[%s219 + $0x70] sm:$0xff]
      %v241 = vld [vmem:[%s219 + $0x78] sm:$0xff]
      %v242 = vld [vmem:[%s219 + $0x80] sm:$0xff]
      %v243 = vld [vmem:[%s219 + $0x88] sm:$0xff]
      %v244 = vld [vmem:[%s219 + $0x90] sm:$0xff]
      %v245 = vld [vmem:[%s219 + $0x98] sm:$0xff]
      %v246 = vld [vmem:[%s219 + $0xa0] sm:$0xff]
      %v247 = vld [vmem:[%s219 + $0xa8] sm:$0xff]
      %v248 = vld [vmem:[%s219 + $0xb0] sm:$0xff]
      %v249 = vld [vmem:[%s219 + $0xb8] sm:$0xff]
      %v250 = vld [vmem:[%s219 + $0xc0] sm:$0xff]
      %v251 = vld [vmem:[%s219 + $0xc8] sm:$0xff]
      %v252 = vld [vmem:[%s219 + $0xd0] sm:$0xff]
      %v253 = vld [vmem:[%s219 + $0xd8] sm:$0xff]
      %v254 = vld [vmem:[%s219 + $0xe0] sm:$0xff]
      %v255 = vld [vmem:[%s219 + $0xe8] sm:$0xff]
      %v256 = vld [vmem:[%s219 + $0xf0] sm:$0xff]
      %v257 = vld [vmem:[%s219 + $0xf8] sm:$0xff]
      %v258 = vld [vmem:[%s1] sm:$0x1]
      %v260 = vlaneseq
      %v261 = vshrl.u32 %v260, 7
      %v262 = vsub.s32 0, %v261
      %v263 = vrot.slane %v258, %v262
      %v265 = vmul.f32 %v226, %v263
      %v266 = vmul.f32 %v227, %v263
      %v267 = vmul.f32 %v228, %v263
      %v268 = vmul.f32 %v229, %v263
      %v269 = vmul.f32 %v230, %v263
      %v270 = vmul.f32 %v231, %v263
      %v271 = vmul.f32 %v232, %v263
      %v272 = vmul.f32 %v233, %v263
      %v273 = vmul.f32 %v234, %v263
      %v274 = vmul.f32 %v235, %v263
      %v275 = vmul.f32 %v236, %v263
      %v276 = vmul.f32 %v237, %v263
      %v277 = vmul.f32 %v238, %v263
      %v278 = vmul.f32 %v239, %v263
      %v279 = vmul.f32 %v240, %v263
      %v280 = vmul.f32 %v241, %v263
      %v281 = vmul.f32 %v242, %v263
      %v282 = vmul.f32 %v243, %v263
      %v283 = vmul.f32 %v244, %v263
      %v284 = vmul.f32 %v245, %v263
      %v285 = vmul.f32 %v246, %v263
      %v286 = vmul.f32 %v247, %v263
      %v287 = vmul.f32 %v248, %v263
      %v288 = vmul.f32 %v249, %v263
      %v289 = vmul.f32 %v250, %v263
      %v290 = vmul.f32 %v251, %v263
      %v291 = vmul.f32 %v252, %v263
      %v292 = vmul.f32 %v253, %v263
      %v293 = vmul.f32 %v254, %v263
      %v294 = vmul.f32 %v255, %v263
      %v295 = vmul.f32 %v256, %v263
      %v296 = vmul.f32 %v257, %v263
      %v297 = vld [vmem:[%s2] sm:$0x1]
      %v299 = vlaneseq
      %v300 = vshrl.u32 %v299, 7
      %v301 = vsub.s32 0, %v300
      %v302 = vrot.slane %v297, %v301
      %v304 = vadd.f32 %v265, %v302
      %v305 = vadd.f32 %v266, %v302
      %v306 = vadd.f32 %v267, %v302
      %v307 = vadd.f32 %v268, %v302
      %v308 = vadd.f32 %v269, %v302
      %v309 = vadd.f32 %v270, %v302
      %v310 = vadd.f32 %v271, %v302
      %v311 = vadd.f32 %v272, %v302
      %v312 = vadd.f32 %v273, %v302
      %v313 = vadd.f32 %v274, %v302
      %v314 = vadd.f32 %v275, %v302
      %v315 = vadd.f32 %v276, %v302
      %v316 = vadd.f32 %v277, %v302
      %v317 = vadd.f32 %v278, %v302
      %v318 = vadd.f32 %v279, %v302
      %v319 = vadd.f32 %v280, %v302
      %v320 = vadd.f32 %v281, %v302
      %v321 = vadd.f32 %v282, %v302
      %v322 = vadd.f32 %v283, %v302
      %v323 = vadd.f32 %v284, %v302
      %v324 = vadd.f32 %v285, %v302
      %v325 = vadd.f32 %v286, %v302
      %v326 = vadd.f32 %v287, %v302
      %v327 = vadd.f32 %v288, %v302
      %v328 = vadd.f32 %v289, %v302
      %v329 = vadd.f32 %v290, %v302
      %v330 = vadd.f32 %v291, %v302
      %v331 = vadd.f32 %v292, %v302
      %v332 = vadd.f32 %v293, %v302
      %v333 = vadd.f32 %v294, %v302
      %v334 = vadd.f32 %v295, %v302
      %v335 = vadd.f32 %v296, %v302
      %v336 = vmax.f32 %v304, 0.0
      %v337 = vmax.f32 %v305, 0.0
      %v338 = vmax.f32 %v306, 0.0
      %v339 = vmax.f32 %v307, 0.0
      %v340 = vmax.f32 %v308, 0.0
      %v341 = vmax.f32 %v309, 0.0
      %v342 = vmax.f32 %v310, 0.0
      %v343 = vmax.f32 %v311, 0.0
      %v344 = vmax.f32 %v312, 0.0
      %v345 = vmax.f32 %v313, 0.0
      %v346 = vmax.f32 %v314, 0.0
      %v347 = vmax.f32 %v315, 0.0
      %v348 = vmax.f32 %v316, 0.0
      %v349 = vmax.f32 %v317, 0.0
      %v350 = vmax.f32 %v318, 0.0
      %v351 = vmax.f32 %v319, 0.0
      %v352 = vmax.f32 %v320, 0.0
      %v353 = vmax.f32 %v321, 0.0
      %v354 = vmax.f32 %v322, 0.0
      %v355 = vmax.f32 %v323, 0.0
      %v356 = vmax.f32 %v324, 0.0
      %v357 = vmax.f32 %v325, 0.0
      %v358 = vmax.f32 %v326, 0.0
      %v359 = vmax.f32 %v327, 0.0
      %v360 = vmax.f32 %v328, 0.0
      %v361 = vmax.f32 %v329, 0.0
      %v362 = vmax.f32 %v330, 0.0
      %v363 = vmax.f32 %v331, 0.0
      %v364 = vmax.f32 %v332, 0.0
      %v365 = vmax.f32 %v333, 0.0
      %v366 = vmax.f32 %v334, 0.0
      %v367 = vmax.f32 %v335, 0.0
      %368 = vst [vmem:[#allocation2] sm:$0xff] 0.0
      %369 = vst [vmem:[#allocation2 + $0x8] sm:$0xff] 0.0
      %370 = vst [vmem:[#allocation2 + $0x10] sm:$0x3] 0.0
      %371 = vst [vmem:[#allocation2 + $0x18] sm:$0xff] 0.0
      %372 = vst [vmem:[#allocation2 + $0x20] sm:$0xff] 0.0
      %373 = vst [vmem:[#allocation2 + $0x28] sm:$0x3] 0.0
      %374 = vst [vmem:[#allocation2 + $0x30] sm:$0xff] 0.0
      %375 = vst [vmem:[#allocation2 + $0x38] sm:$0xff] 0.0
      %376 = vst [vmem:[#allocation2 + $0x40] sm:$0x3] 0.0
      %377 = vst [vmem:[#allocation2 + $0x48] sm:$0xff] 0.0
      %378 = vst [vmem:[#allocation2 + $0x50] sm:$0xff] 0.0
      %379 = vst [vmem:[#allocation2 + $0x58] sm:$0x3] 0.0
      %380 = vst [vmem:[#allocation2 + $0x60] sm:$0xff] 0.0
      %381 = vst [vmem:[#allocation2 + $0x68] sm:$0xff] 0.0
      %382 = vst [vmem:[#allocation2 + $0x70] sm:$0x3] 0.0
      %383 = vst [vmem:[#allocation2 + $0x78] sm:$0xff] 0.0
      %384 = vst [vmem:[#allocation2 + $0x80] sm:$0xff] 0.0
      %385 = vst [vmem:[#allocation2 + $0x88] sm:$0x3] 0.0
      %386 = vst [vmem:[#allocation2 + $0x90] sm:$0xff] 0.0
      %387 = vst [vmem:[#allocation2 + $0x98] sm:$0xff] 0.0
      %388 = vst [vmem:[#allocation2 + $0xa0] sm:$0x3] 0.0
      %389 = vst [vmem:[#allocation2 + $0xa8] sm:$0xff] 0.0
      %390 = vst [vmem:[#allocation2 + $0xb0] sm:$0xff] 0.0
      %391 = vst [vmem:[#allocation2 + $0xb8] sm:$0x3] 0.0
      %392 = vst [vmem:[#allocation2 + $0xc0] sm:$0xff] 0.0
      %393 = vst [vmem:[#allocation2 + $0xc8] sm:$0xff] 0.0
      %394 = vst [vmem:[#allocation2 + $0xd0] sm:$0x3] 0.0
      %395 = vst [vmem:[#allocation2 + $0xd8] sm:$0xff] 0.0
      %396 = vst [vmem:[#allocation2 + $0xe0] sm:$0xff] 0.0
      %397 = vst [vmem:[#allocation2 + $0xe8] sm:$0x3] 0.0
      %398 = vst [vmem:[#allocation2 + $0xf0] sm:$0xff] 0.0
      %399 = vst [vmem:[#allocation2 + $0xf8] sm:$0xff] 0.0
      %400 = vst [vmem:[#allocation2 + $0x100] sm:$0x3] 0.0
      %401 = vst [vmem:[#allocation2 + $0x108] sm:$0xff] 0.0
      %402 = vst [vmem:[#allocation2 + $0x110] sm:$0xff] 0.0
      %403 = vst [vmem:[#allocation2 + $0x118] sm:$0x3] 0.0
      %404 = vst [vmem:[#allocation2 + $0x120] sm:$0xff] 0.0
      %405 = vst [vmem:[#allocation2 + $0x128] sm:$0xff] 0.0
      %406 = vst [vmem:[#allocation2 + $0x130] sm:$0x3] 0.0
      %407 = vst [vmem:[#allocation2 + $0x138] sm:$0xff] 0.0
      %408 = vst [vmem:[#allocation2 + $0x140] sm:$0xff] 0.0
      %409 = vst [vmem:[#allocation2 + $0x148] sm:$0x3] 0.0
      %410 = vst [vmem:[#allocation2 + $0x150] sm:$0xff] 0.0
      %411 = vst [vmem:[#allocation2 + $0x158] sm:$0xff] 0.0
      %412 = vst [vmem:[#allocation2 + $0x160] sm:$0x3] 0.0
      %413 = vst [vmem:[#allocation2 + $0x168] sm:$0xff] 0.0
      %414 = vst [vmem:[#allocation2 + $0x170] sm:$0xff] 0.0
      %415 = vst [vmem:[#allocation2 + $0x178] sm:$0x3] 0.0
      %416 = vst [vmem:[#allocation2 + $0x180] sm:$0xff] 0.0
      %417 = vst [vmem:[#allocation2 + $0x188] sm:$0xff] 0.0
      %418 = vst [vmem:[#allocation2 + $0x190] sm:$0x3] 0.0
      %419 = vst [vmem:[#allocation2 + $0x198] sm:$0xff] 0.0
      %420 = vst [vmem:[#allocation2 + $0x1a0] sm:$0xff] 0.0
      %421 = vst [vmem:[#allocation2 + $0x1a8] sm:$0x3] 0.0
      %s422 = scalar_lea.vmem [#allocation2], 24
      %423 = vst [vmem:[%s422 + $0x1] sm:$0xff] %v336
      %424 = vst [vmem:[%s422 + $0x9] sm:$0xff] %v337
      %425 = vst [vmem:[%s422 + $0x19] sm:$0xff] %v338
      %426 = vst [vmem:[%s422 + $0x21] sm:$0xff] %v339
      %427 = vst [vmem:[%s422 + $0x31] sm:$0xff] %v340
      %428 = vst [vmem:[%s422 + $0x39] sm:$0xff] %v341
      %429 = vst [vmem:[%s422 + $0x49] sm:$0xff] %v342
      %430 = vst [vmem:[%s422 + $0x51] sm:$0xff] %v343
      %431 = vst [vmem:[%s422 + $0x61] sm:$0xff] %v344
      %432 = vst [vmem:[%s422 + $0x69] sm:$0xff] %v345
      %433 = vst [vmem:[%s422 + $0x79] sm:$0xff] %v346
      %434 = vst [vmem:[%s422 + $0x81] sm:$0xff] %v347
      %435 = vst [vmem:[%s422 + $0x91] sm:$0xff] %v348
      %436 = vst [vmem:[%s422 + $0x99] sm:$0xff] %v349
      %437 = vst [vmem:[%s422 + $0xa9] sm:$0xff] %v350
      %438 = vst [vmem:[%s422 + $0xb1] sm:$0xff] %v351
      %439 = vst [vmem:[%s422 + $0xc1] sm:$0xff] %v352
      %440 = vst [vmem:[%s422 + $0xc9] sm:$0xff] %v353
      %441 = vst [vmem:[%s422 + $0xd9] sm:$0xff] %v354
      %442 = vst [vmem:[%s422 + $0xe1] sm:$0xff] %v355
      %443 = vst [vmem:[%s422 + $0xf1] sm:$0xff] %v356
      %444 = vst [vmem:[%s422 + $0xf9] sm:$0xff] %v357
      %445 = vst [vmem:[%s422 + $0x109] sm:$0xff] %v358
      %446 = vst [vmem:[%s422 + $0x111] sm:$0xff] %v359
      %447 = vst [vmem:[%s422 + $0x121] sm:$0xff] %v360
      %448 = vst [vmem:[%s422 + $0x129] sm:$0xff] %v361
      %449 = vst [vmem:[%s422 + $0x139] sm:$0xff] %v362
      %450 = vst [vmem:[%s422 + $0x141] sm:$0xff] %v363
      %451 = vst [vmem:[%s422 + $0x151] sm:$0xff] %v364
      %452 = vst [vmem:[%s422 + $0x159] sm:$0xff] %v365
      %453 = vst [vmem:[%s422 + $0x169] sm:$0xff] %v366
      %454 = vst [vmem:[%s422 + $0x171] sm:$0xff] %v367
      %v455 = vld [vmem:[#allocation2] sm:$0xff]
      %v456 = vld [vmem:[#allocation2 + $0x8] sm:$0xff]
      %v457 = vld [vmem:[#allocation2 + $0x18] sm:$0xff]
      %v458 = vld [vmem:[#allocation2 + $0x20] sm:$0xff]
      %v459 = vld [vmem:[#allocation2 + $0x30] sm:$0xff]
      %v460 = vld [vmem:[#allocation2 + $0x38] sm:$0xff]
      %v461 = vld [vmem:[#allocation2 + $0x48] sm:$0xff]
      %v462 = vld [vmem:[#allocation2 + $0x50] sm:$0xff]
      %v463 = vld [vmem:[#allocation2 + $0x60] sm:$0xff]
      %v464 = vld [vmem:[#allocation2 + $0x68] sm:$0xff]
      %v465 = vld [vmem:[#allocation2 + $0x78] sm:$0xff]
      %v466 = vld [vmem:[#allocation2 + $0x80] sm:$0xff]
      %v467 = vld [vmem:[#allocation2 + $0x90] sm:$0xff]
      %v468 = vld [vmem:[#allocation2 + $0x98] sm:$0xff]
      %v469 = vld [vmem:[#allocation2 + $0xa8] sm:$0xff]
      %v470 = vld [vmem:[#allocation2 + $0xb0] sm:$0xff]
      %v471 = vld [vmem:[#allocation2 + $0xc0] sm:$0xff]
      %v472 = vld [vmem:[#allocation2 + $0xc8] sm:$0xff]
      %v473 = vld [vmem:[#allocation2 + $0xd8] sm:$0xff]
      %v474 = vld [vmem:[#allocation2 + $0xe0] sm:$0xff]
      %v475 = vld [vmem:[#allocation2 + $0xf0] sm:$0xff]
      %v476 = vld [vmem:[#allocation2 + $0xf8] sm:$0xff]
      %v477 = vld [vmem:[#allocation2 + $0x108] sm:$0xff]
      %v478 = vld [vmem:[#allocation2 + $0x110] sm:$0xff]
      %v479 = vld [vmem:[#allocation2 + $0x120] sm:$0xff]
      %v480 = vld [vmem:[#allocation2 + $0x128] sm:$0xff]
      %v481 = vld [vmem:[#allocation2 + $0x138] sm:$0xff]
      %v482 = vld [vmem:[#allocation2 + $0x140] sm:$0xff]
      %v483 = vld [vmem:[#allocation2 + $0x150] sm:$0xff]
      %v484 = vld [vmem:[#allocation2 + $0x158] sm:$0xff]
      %v485 = vld [vmem:[#allocation2 + $0x168] sm:$0xff]
      %v486 = vld [vmem:[#allocation2 + $0x170] sm:$0xff]
      %v487 = vpack.c.bf16 %v456, %v455
      %v488 = vpack.c.bf16 %v458, %v457
      %v489 = vpack.c.bf16 %v460, %v459
      %v490 = vpack.c.bf16 %v462, %v461
      %v491 = vpack.c.bf16 %v464, %v463
      %v492 = vpack.c.bf16 %v466, %v465
      %v493 = vpack.c.bf16 %v468, %v467
      %v494 = vpack.c.bf16 %v470, %v469
      %v495 = vpack.c.bf16 %v472, %v471
      %v496 = vpack.c.bf16 %v474, %v473
      %v497 = vpack.c.bf16 %v476, %v475
      %v498 = vpack.c.bf16 %v478, %v477
      %v499 = vpack.c.bf16 %v480, %v479
      %v500 = vpack.c.bf16 %v482, %v481
      %v501 = vpack.c.bf16 %v484, %v483
      %v502 = vpack.c.bf16 %v486, %v485
      %503 = vst [vmem:[#allocation3] sm:$0xff] %v487
      %504 = vst [vmem:[#allocation3 + $0x48] sm:$0xff] %v488
      %505 = vst [vmem:[#allocation3 + $0x90] sm:$0xff] %v489
      %506 = vst [vmem:[#allocation3 + $0xd8] sm:$0xff] %v490
      %507 = vst [vmem:[#allocation3 + $0x120] sm:$0xff] %v491
      %508 = vst [vmem:[#allocation3 + $0x168] sm:$0xff] %v492
      %509 = vst [vmem:[#allocation3 + $0x1b0] sm:$0xff] %v493
      %510 = vst [vmem:[#allocation3 + $0x1f8] sm:$0xff] %v494
      %511 = vst [vmem:[#allocation3 + $0x240] sm:$0xff] %v495
      %512 = vst [vmem:[#allocation3 + $0x288] sm:$0xff] %v496
      %513 = vst [vmem:[#allocation3 + $0x2d0] sm:$0xff] %v497
      %514 = vst [vmem:[#allocation3 + $0x318] sm:$0xff] %v498
      %515 = vst [vmem:[#allocation3 + $0x360] sm:$0xff] %v499
      %516 = vst [vmem:[#allocation3 + $0x3a8] sm:$0xff] %v500
      %517 = vst [vmem:[#allocation3 + $0x3f0] sm:$0xff] %v501
      %518 = vst [vmem:[#allocation3 + $0x438] sm:$0xff] %v502
      %v519 = vld [vmem:[#allocation2 + $0x1] sm:$0xff]
      %v520 = vld [vmem:[#allocation2 + $0x9] sm:$0xff]
      %v521 = vld [vmem:[#allocation2 + $0x19] sm:$0xff]
      %v522 = vld [vmem:[#allocation2 + $0x21] sm:$0xff]
      %v523 = vld [vmem:[#allocation2 + $0x31] sm:$0xff]
      %v524 = vld [vmem:[#allocation2 + $0x39] sm:$0xff]
      %v525 = vld [vmem:[#allocation2 + $0x49] sm:$0xff]
      %v526 = vld [vmem:[#allocation2 + $0x51] sm:$0xff]
      %v527 = vld [vmem:[#allocation2 + $0x61] sm:$0xff]
      %v528 = vld [vmem:[#allocation2 + $0x69] sm:$0xff]
      %v529 = vld [vmem:[#allocation2 + $0x79] sm:$0xff]
      %v530 = vld [vmem:[#allocation2 + $0x81] sm:$0xff]
      %v531 = vld [vmem:[#allocation2 + $0x91] sm:$0xff]
      %v532 = vld [vmem:[#allocation2 + $0x99] sm:$0xff]
      %v533 = vld [vmem:[#allocation2 + $0xa9] sm:$0xff]
      %v534 = vld [vmem:[#allocation2 + $0xb1] sm:$0xff]
      %v535 = vld [vmem:[#allocation2 + $0xc1] sm:$0xff]
      %v536 = vld [vmem:[#allocation2 + $0xc9] sm:$0xff]
      %v537 = vld [vmem:[#allocation2 + $0xd9] sm:$0xff]
      %v538 = vld [vmem:[#allocation2 + $0xe1] sm:$0xff]
      %v539 = vld [vmem:[#allocation2 + $0xf1] sm:$0xff]
      %v540 = vld [vmem:[#allocation2 + $0xf9] sm:$0xff]
      %v541 = vld [vmem:[#allocation2 + $0x109] sm:$0xff]
      %v542 = vld [vmem:[#allocation2 + $0x111] sm:$0xff]
      %v543 = vld [vmem:[#allocation2 + $0x121] sm:$0xff]
      %v544 = vld [vmem:[#allocation2 + $0x129] sm:$0xff]
      %v545 = vld [vmem:[#allocation2 + $0x139] sm:$0xff]
      %v546 = vld [vmem:[#allocation2 + $0x141] sm:$0xff]
      %v547 = vld [vmem:[#allocation2 + $0x151] sm:$0xff]
      %v548 = vld [vmem:[#allocation2 + $0x159] sm:$0xff]
      %v549 = vld [vmem:[#allocation2 + $0x169] sm:$0xff]
      %v550 = vld [vmem:[#allocation2 + $0x171] sm:$0xff]
      %v551 = vpack.c.bf16 %v520, %v519
      %v552 = vpack.c.bf16 %v522, %v521
      %v553 = vpack.c.bf16 %v524, %v523
      %v554 = vpack.c.bf16 %v526, %v525
      %v555 = vpack.c.bf16 %v528, %v527
      %v556 = vpack.c.bf16 %v530, %v529
      %v557 = vpack.c.bf16 %v532, %v531
      %v558 = vpack.c.bf16 %v534, %v533
      %v559 = vpack.c.bf16 %v536, %v535
      %v560 = vpack.c.bf16 %v538, %v537
      %v561 = vpack.c.bf16 %v540, %v539
      %v562 = vpack.c.bf16 %v542, %v541
      %v563 = vpack.c.bf16 %v544, %v543
      %v564 = vpack.c.bf16 %v546, %v545
      %v565 = vpack.c.bf16 %v548, %v547
      %v566 = vpack.c.bf16 %v550, %v549
      %567 = vst [vmem:[#allocation3 + $0x8] sm:$0xff] %v551
      %568 = vst [vmem:[#allocation3 + $0x50] sm:$0xff] %v552
      %569 = vst [vmem:[#allocation3 + $0x98] sm:$0xff] %v553
      %570 = vst [vmem:[#allocation3 + $0xe0] sm:$0xff] %v554
      %571 = vst [vmem:[#allocation3 + $0x128] sm:$0xff] %v555
      %572 = vst [vmem:[#allocation3 + $0x170] sm:$0xff] %v556
      %573 = vst [vmem:[#allocation3 + $0x1b8] sm:$0xff] %v557
      %574 = vst [vmem:[#allocation3 + $0x200] sm:$0xff] %v558
      %575 = vst [vmem:[#allocation3 + $0x248] sm:$0xff] %v559
      %576 = vst [vmem:[#allocation3 + $0x290] sm:$0xff] %v560
      %577 = vst [vmem:[#allocation3 + $0x2d8] sm:$0xff] %v561
      %578 = vst [vmem:[#allocation3 + $0x320] sm:$0xff] %v562
      %579 = vst [vmem:[#allocation3 + $0x368] sm:$0xff] %v563
      %580 = vst [vmem:[#allocation3 + $0x3b0] sm:$0xff] %v564
      %581 = vst [vmem:[#allocation3 + $0x3f8] sm:$0xff] %v565
      %582 = vst [vmem:[#allocation3 + $0x440] sm:$0xff] %v566
      %v583 = vld [vmem:[#allocation2 + $0x2] sm:$0xff]
      %v584 = vld [vmem:[#allocation2 + $0xa] sm:$0xff]
      %v585 = vld [vmem:[#allocation2 + $0x1a] sm:$0xff]
      %v586 = vld [vmem:[#allocation2 + $0x22] sm:$0xff]
      %v587 = vld [vmem:[#allocation2 + $0x32] sm:$0xff]
      %v588 = vld [vmem:[#allocation2 + $0x3a] sm:$0xff]
      %v589 = vld [vmem:[#allocation2 + $0x4a] sm:$0xff]
      %v590 = vld [vmem:[#allocation2 + $0x52] sm:$0xff]
      %v591 = vld [vmem:[#allocation2 + $0x62] sm:$0xff]
      %v592 = vld [vmem:[#allocation2 + $0x6a] sm:$0xff]
      %v593 = vld [vmem:[#allocation2 + $0x7a] sm:$0xff]
      %v594 = vld [vmem:[#allocation2 + $0x82] sm:$0xff]
      %v595 = vld [vmem:[#allocation2 + $0x92] sm:$0xff]
      %v596 = vld [vmem:[#allocation2 + $0x9a] sm:$0xff]
      %v597 = vld [vmem:[#allocation2 + $0xaa] sm:$0xff]
      %v598 = vld [vmem:[#allocation2 + $0xb2] sm:$0xff]
      %v599 = vld [vmem:[#allocation2 + $0xc2] sm:$0xff]
      %v600 = vld [vmem:[#allocation2 + $0xca] sm:$0xff]
      %v601 = vld [vmem:[#allocation2 + $0xda] sm:$0xff]
      %v602 = vld [vmem:[#allocation2 + $0xe2] sm:$0xff]
      %v603 = vld [vmem:[#allocation2 + $0xf2] sm:$0xff]
      %v604 = vld [vmem:[#allocation2 + $0xfa] sm:$0xff]
      %v605 = vld [vmem:[#allocation2 + $0x10a] sm:$0xff]
      %v606 = vld [vmem:[#allocation2 + $0x112] sm:$0xff]
      %v607 = vld [vmem:[#allocation2 + $0x122] sm:$0xff]
      %v608 = vld [vmem:[#allocation2 + $0x12a] sm:$0xff]
      %v609 = vld [vmem:[#allocation2 + $0x13a] sm:$0xff]
      %v610 = vld [vmem:[#allocation2 + $0x142] sm:$0xff]
      %v611 = vld [vmem:[#allocation2 + $0x152] sm:$0xff]
      %v612 = vld [vmem:[#allocation2 + $0x15a] sm:$0xff]
      %v613 = vld [vmem:[#allocation2 + $0x16a] sm:$0xff]
      %v614 = vld [vmem:[#allocation2 + $0x172] sm:$0xff]
      %v615 = vpack.c.bf16 %v584, %v583
      %v616 = vpack.c.bf16 %v586, %v585
      %v617 = vpack.c.bf16 %v588, %v587
      %v618 = vpack.c.bf16 %v590, %v589
      %v619 = vpack.c.bf16 %v592, %v591
      %v620 = vpack.c.bf16 %v594, %v593
      %v621 = vpack.c.bf16 %v596, %v595
      %v622 = vpack.c.bf16 %v598, %v597
      %v623 = vpack.c.bf16 %v600, %v599
      %v624 = vpack.c.bf16 %v602, %v601
      %v625 = vpack.c.bf16 %v604, %v603
      %v626 = vpack.c.bf16 %v606, %v605
      %v627 = vpack.c.bf16 %v608, %v607
      %v628 = vpack.c.bf16 %v610, %v609
      %v629 = vpack.c.bf16 %v612, %v611
      %v630 = vpack.c.bf16 %v614, %v613
      %631 = vst [vmem:[#allocation3 + $0x10] sm:$0xff] %v615
      %632 = vst [vmem:[#allocation3 + $0x58] sm:$0xff] %v616
      %633 = vst [vmem:[#allocation3 + $0xa0] sm:$0xff] %v617
      %634 = vst [vmem:[#allocation3 + $0xe8] sm:$0xff] %v618
      %635 = vst [vmem:[#allocation3 + $0x130] sm:$0xff] %v619
      %636 = vst [vmem:[#allocation3 + $0x178] sm:$0xff] %v620
      %637 = vst [vmem:[#allocation3 + $0x1c0] sm:$0xff] %v621
      %638 = vst [vmem:[#allocation3 + $0x208] sm:$0xff] %v622
      %639 = vst [vmem:[#allocation3 + $0x250] sm:$0xff] %v623
      %640 = vst [vmem:[#allocation3 + $0x298] sm:$0xff] %v624
      %641 = vst [vmem:[#allocation3 + $0x2e0] sm:$0xff] %v625
      %642 = vst [vmem:[#allocation3 + $0x328] sm:$0xff] %v626
      %643 = vst [vmem:[#allocation3 + $0x370] sm:$0xff] %v627
      %644 = vst [vmem:[#allocation3 + $0x3b8] sm:$0xff] %v628
      %645 = vst [vmem:[#allocation3 + $0x400] sm:$0xff] %v629
      %646 = vst [vmem:[#allocation3 + $0x448] sm:$0xff] %v630
      %v647 = vld [vmem:[%s422] sm:$0xff]
      %v648 = vld [vmem:[%s422 + $0x8] sm:$0xff]
      %v649 = vld [vmem:[%s422 + $0x18] sm:$0xff]
      %v650 = vld [vmem:[%s422 + $0x20] sm:$0xff]
      %v651 = vld [vmem:[%s422 + $0x30] sm:$0xff]
      %v652 = vld [vmem:[%s422 + $0x38] sm:$0xff]
      %v653 = vld [vmem:[%s422 + $0x48] sm:$0xff]
      %v654 = vld [vmem:[%s422 + $0x50] sm:$0xff]
      %v655 = vld [vmem:[%s422 + $0x60] sm:$0xff]
      %v656 = vld [vmem:[%s422 + $0x68] sm:$0xff]
      %v657 = vld [vmem:[%s422 + $0x78] sm:$0xff]
      %v658 = vld [vmem:[%s422 + $0x80] sm:$0xff]
      %v659 = vld [vmem:[%s422 + $0x90] sm:$0xff]
      %v660 = vld [vmem:[%s422 + $0x98] sm:$0xff]
      %v661 = vld [vmem:[%s422 + $0xa8] sm:$0xff]
      %v662 = vld [vmem:[%s422 + $0xb0] sm:$0xff]
      %v663 = vld [vmem:[%s422 + $0xc0] sm:$0xff]
      %v664 = vld [vmem:[%s422 + $0xc8] sm:$0xff]
      %v665 = vld [vmem:[%s422 + $0xd8] sm:$0xff]
      %v666 = vld [vmem:[%s422 + $0xe0] sm:$0xff]
      %v667 = vld [vmem:[%s422 + $0xf0] sm:$0xff]
      %v668 = vld [vmem:[%s422 + $0xf8] sm:$0xff]
      %v669 = vld [vmem:[%s422 + $0x108] sm:$0xff]
      %v670 = vld [vmem:[%s422 + $0x110] sm:$0xff]
      %v671 = vld [vmem:[%s422 + $0x120] sm:$0xff]
      %v672 = vld [vmem:[%s422 + $0x128] sm:$0xff]
      %v673 = vld [vmem:[%s422 + $0x138] sm:$0xff]
      %v674 = vld [vmem:[%s422 + $0x140] sm:$0xff]
      %v675 = vld [vmem:[%s422 + $0x150] sm:$0xff]
      %v676 = vld [vmem:[%s422 + $0x158] sm:$0xff]
      %v677 = vld [vmem:[%s422 + $0x168] sm:$0xff]
      %v678 = vld [vmem:[%s422 + $0x170] sm:$0xff]
      %v679 = vpack.c.bf16 %v648, %v647
      %v680 = vpack.c.bf16 %v650, %v649
      %v681 = vpack.c.bf16 %v652, %v651
      %v682 = vpack.c.bf16 %v654, %v653
      %v683 = vpack.c.bf16 %v656, %v655
      %v684 = vpack.c.bf16 %v658, %v657
      %v685 = vpack.c.bf16 %v660, %v659
      %v686 = vpack.c.bf16 %v662, %v661
      %v687 = vpack.c.bf16 %v664, %v663
      %v688 = vpack.c.bf16 %v666, %v665
      %v689 = vpack.c.bf16 %v668, %v667
      %v690 = vpack.c.bf16 %v670, %v669
      %v691 = vpack.c.bf16 %v672, %v671
      %v692 = vpack.c.bf16 %v674, %v673
      %v693 = vpack.c.bf16 %v676, %v675
      %v694 = vpack.c.bf16 %v678, %v677
      %695 = vst [vmem:[#allocation3 + $0x18] sm:$0xff] %v679
      %696 = vst [vmem:[#allocation3 + $0x60] sm:$0xff] %v680
      %697 = vst [vmem:[#allocation3 + $0xa8] sm:$0xff] %v681
      %698 = vst [vmem:[#allocation3 + $0xf0] sm:$0xff] %v682
      %699 = vst [vmem:[#allocation3 + $0x138] sm:$0xff] %v683
      %700 = vst [vmem:[#allocation3 + $0x180] sm:$0xff] %v684
      %701 = vst [vmem:[#allocation3 + $0x1c8] sm:$0xff] %v685
      %702 = vst [vmem:[#allocation3 + $0x210] sm:$0xff] %v686
      %703 = vst [vmem:[#allocation3 + $0x258] sm:$0xff] %v687
      %704 = vst [vmem:[#allocation3 + $0x2a0] sm:$0xff] %v688
      %705 = vst [vmem:[#allocation3 + $0x2e8] sm:$0xff] %v689
      %706 = vst [vmem:[#allocation3 + $0x330] sm:$0xff] %v690
      %707 = vst [vmem:[#allocation3 + $0x378] sm:$0xff] %v691
      %708 = vst [vmem:[#allocation3 + $0x3c0] sm:$0xff] %v692
      %709 = vst [vmem:[#allocation3 + $0x408] sm:$0xff] %v693
      %710 = vst [vmem:[#allocation3 + $0x450] sm:$0xff] %v694
      %v711 = vld [vmem:[%s422 + $0x1] sm:$0xff]
      %v712 = vld [vmem:[%s422 + $0x9] sm:$0xff]
      %v713 = vld [vmem:[%s422 + $0x19] sm:$0xff]
      %v714 = vld [vmem:[%s422 + $0x21] sm:$0xff]
      %v715 = vld [vmem:[%s422 + $0x31] sm:$0xff]
      %v716 = vld [vmem:[%s422 + $0x39] sm:$0xff]
      %v717 = vld [vmem:[%s422 + $0x49] sm:$0xff]
      %v718 = vld [vmem:[%s422 + $0x51] sm:$0xff]
      %v719 = vld [vmem:[%s422 + $0x61] sm:$0xff]
      %v720 = vld [vmem:[%s422 + $0x69] sm:$0xff]
      %v721 = vld [vmem:[%s422 + $0x79] sm:$0xff]
      %v722 = vld [vmem:[%s422 + $0x81] sm:$0xff]
      %v723 = vld [vmem:[%s422 + $0x91] sm:$0xff]
      %v724 = vld [vmem:[%s422 + $0x99] sm:$0xff]
      %v725 = vld [vmem:[%s422 + $0xa9] sm:$0xff]
      %v726 = vld [vmem:[%s422 + $0xb1] sm:$0xff]
      %v727 = vld [vmem:[%s422 + $0xc1] sm:$0xff]
      %v728 = vld [vmem:[%s422 + $0xc9] sm:$0xff]
      %v729 = vld [vmem:[%s422 + $0xd9] sm:$0xff]
      %v730 = vld [vmem:[%s422 + $0xe1] sm:$0xff]
      %v731 = vld [vmem:[%s422 + $0xf1] sm:$0xff]
      %v732 = vld [vmem:[%s422 + $0xf9] sm:$0xff]
      %v733 = vld [vmem:[%s422 + $0x109] sm:$0xff]
      %v734 = vld [vmem:[%s422 + $0x111] sm:$0xff]
      %v735 = vld [vmem:[%s422 + $0x121] sm:$0xff]
      %v736 = vld [vmem:[%s422 + $0x129] sm:$0xff]
      %v737 = vld [vmem:[%s422 + $0x139] sm:$0xff]
      %v738 = vld [vmem:[%s422 + $0x141] sm:$0xff]
      %v739 = vld [vmem:[%s422 + $0x151] sm:$0xff]
      %v740 = vld [vmem:[%s422 + $0x159] sm:$0xff]
      %v741 = vld [vmem:[%s422 + $0x169] sm:$0xff]
      %v742 = vld [vmem:[%s422 + $0x171] sm:$0xff]
      %v743 = vpack.c.bf16 %v712, %v711
      %v744 = vpack.c.bf16 %v714, %v713
      %v745 = vpack.c.bf16 %v716, %v715
      %v746 = vpack.c.bf16 %v718, %v717
      %v747 = vpack.c.bf16 %v720, %v719
      %v748 = vpack.c.bf16 %v722, %v721
      %v749 = vpack.c.bf16 %v724, %v723
      %v750 = vpack.c.bf16 %v726, %v725
      %v751 = vpack.c.bf16 %v728, %v727
      %v752 = vpack.c.bf16 %v730, %v729
      %v753 = vpack.c.bf16 %v732, %v731
      %v754 = vpack.c.bf16 %v734, %v733
      %v755 = vpack.c.bf16 %v736, %v735
      %v756 = vpack.c.bf16 %v738, %v737
      %v757 = vpack.c.bf16 %v740, %v739
      %v758 = vpack.c.bf16 %v742, %v741
      %759 = vst [vmem:[#allocation3 + $0x20] sm:$0xff] %v743
      %760 = vst [vmem:[#allocation3 + $0x68] sm:$0xff] %v744
      %761 = vst [vmem:[#allocation3 + $0xb0] sm:$0xff] %v745
      %762 = vst [vmem:[#allocation3 + $0xf8] sm:$0xff] %v746
      %763 = vst [vmem:[#allocation3 + $0x140] sm:$0xff] %v747
      %764 = vst [vmem:[#allocation3 + $0x188] sm:$0xff] %v748
      %765 = vst [vmem:[#allocation3 + $0x1d0] sm:$0xff] %v749
      %766 = vst [vmem:[#allocation3 + $0x218] sm:$0xff] %v750
      %767 = vst [vmem:[#allocation3 + $0x260] sm:$0xff] %v751
      %768 = vst [vmem:[#allocation3 + $0x2a8] sm:$0xff] %v752
      %769 = vst [vmem:[#allocation3 + $0x2f0] sm:$0xff] %v753
      %770 = vst [vmem:[#allocation3 + $0x338] sm:$0xff] %v754
      %771 = vst [vmem:[#allocation3 + $0x380] sm:$0xff] %v755
      %772 = vst [vmem:[#allocation3 + $0x3c8] sm:$0xff] %v756
      %773 = vst [vmem:[#allocation3 + $0x410] sm:$0xff] %v757
      %774 = vst [vmem:[#allocation3 + $0x458] sm:$0xff] %v758
      %v775 = vld [vmem:[%s422 + $0x2] sm:$0xff]
      %v776 = vld [vmem:[%s422 + $0xa] sm:$0xff]
      %v777 = vld [vmem:[%s422 + $0x1a] sm:$0xff]
      %v778 = vld [vmem:[%s422 + $0x22] sm:$0xff]
      %v779 = vld [vmem:[%s422 + $0x32] sm:$0xff]
      %v780 = vld [vmem:[%s422 + $0x3a] sm:$0xff]
      %v781 = vld [vmem:[%s422 + $0x4a] sm:$0xff]
      %v782 = vld [vmem:[%s422 + $0x52] sm:$0xff]
      %v783 = vld [vmem:[%s422 + $0x62] sm:$0xff]
      %v784 = vld [vmem:[%s422 + $0x6a] sm:$0xff]
      %v785 = vld [vmem:[%s422 + $0x7a] sm:$0xff]
      %v786 = vld [vmem:[%s422 + $0x82] sm:$0xff]
      %v787 = vld [vmem:[%s422 + $0x92] sm:$0xff]
      %v788 = vld [vmem:[%s422 + $0x9a] sm:$0xff]
      %v789 = vld [vmem:[%s422 + $0xaa] sm:$0xff]
      %v790 = vld [vmem:[%s422 + $0xb2] sm:$0xff]
      %v791 = vld [vmem:[%s422 + $0xc2] sm:$0xff]
      %v792 = vld [vmem:[%s422 + $0xca] sm:$0xff]
      %v793 = vld [vmem:[%s422 + $0xda] sm:$0xff]
      %v794 = vld [vmem:[%s422 + $0xe2] sm:$0xff]
      %v795 = vld [vmem:[%s422 + $0xf2] sm:$0xff]
      %v796 = vld [vmem:[%s422 + $0xfa] sm:$0xff]
      %v797 = vld [vmem:[%s422 + $0x10a] sm:$0xff]
      %v798 = vld [vmem:[%s422 + $0x112] sm:$0xff]
      %v799 = vld [vmem:[%s422 + $0x122] sm:$0xff]
      %v800 = vld [vmem:[%s422 + $0x12a] sm:$0xff]
      %v801 = vld [vmem:[%s422 + $0x13a] sm:$0xff]
      %v802 = vld [vmem:[%s422 + $0x142] sm:$0xff]
      %v803 = vld [vmem:[%s422 + $0x152] sm:$0xff]
      %v804 = vld [vmem:[%s422 + $0x15a] sm:$0xff]
      %v805 = vld [vmem:[%s422 + $0x16a] sm:$0xff]
      %v806 = vld [vmem:[%s422 + $0x172] sm:$0xff]
      %v807 = vpack.c.bf16 %v776, %v775
      %v808 = vpack.c.bf16 %v778, %v777
      %v809 = vpack.c.bf16 %v780, %v779
      %v810 = vpack.c.bf16 %v782, %v781
      %v811 = vpack.c.bf16 %v784, %v783
      %v812 = vpack.c.bf16 %v786, %v785
      %v813 = vpack.c.bf16 %v788, %v787
      %v814 = vpack.c.bf16 %v790, %v789
      %v815 = vpack.c.bf16 %v792, %v791
      %v816 = vpack.c.bf16 %v794, %v793
      %v817 = vpack.c.bf16 %v796, %v795
      %v818 = vpack.c.bf16 %v798, %v797
      %v819 = vpack.c.bf16 %v800, %v799
      %v820 = vpack.c.bf16 %v802, %v801
      %v821 = vpack.c.bf16 %v804, %v803
      %v822 = vpack.c.bf16 %v806, %v805
      %823 = vst [vmem:[#allocation3 + $0x28] sm:$0xff] %v807
      %824 = vst [vmem:[#allocation3 + $0x70] sm:$0xff] %v808
      %825 = vst [vmem:[#allocation3 + $0xb8] sm:$0xff] %v809
      %826 = vst [vmem:[#allocation3 + $0x100] sm:$0xff] %v810
      %827 = vst [vmem:[#allocation3 + $0x148] sm:$0xff] %v811
      %828 = vst [vmem:[#allocation3 + $0x190] sm:$0xff] %v812
      %829 = vst [vmem:[#allocation3 + $0x1d8] sm:$0xff] %v813
      %830 = vst [vmem:[#allocation3 + $0x220] sm:$0xff] %v814
      %831 = vst [vmem:[#allocation3 + $0x268] sm:$0xff] %v815
      %832 = vst [vmem:[#allocation3 + $0x2b0] sm:$0xff] %v816
      %833 = vst [vmem:[#allocation3 + $0x2f8] sm:$0xff] %v817
      %834 = vst [vmem:[#allocation3 + $0x340] sm:$0xff] %v818
      %835 = vst [vmem:[#allocation3 + $0x388] sm:$0xff] %v819
      %836 = vst [vmem:[#allocation3 + $0x3d0] sm:$0xff] %v820
      %837 = vst [vmem:[#allocation3 + $0x418] sm:$0xff] %v821
      %838 = vst [vmem:[#allocation3 + $0x460] sm:$0xff] %v822
      %s839 = scalar_lea.vmem [#allocation2], 48
      %v840 = vld [vmem:[%s839] sm:$0xff]
      %v841 = vld [vmem:[%s839 + $0x8] sm:$0xff]
      %v842 = vld [vmem:[%s839 + $0x18] sm:$0xff]
      %v843 = vld [vmem:[%s839 + $0x20] sm:$0xff]
      %v844 = vld [vmem:[%s839 + $0x30] sm:$0xff]
      %v845 = vld [vmem:[%s839 + $0x38] sm:$0xff]
      %v846 = vld [vmem:[%s839 + $0x48] sm:$0xff]
      %v847 = vld [vmem:[%s839 + $0x50] sm:$0xff]
      %v848 = vld [vmem:[%s839 + $0x60] sm:$0xff]
      %v849 = vld [vmem:[%s839 + $0x68] sm:$0xff]
      %v850 = vld [vmem:[%s839 + $0x78] sm:$0xff]
      %v851 = vld [vmem:[%s839 + $0x80] sm:$0xff]
      %v852 = vld [vmem:[%s839 + $0x90] sm:$0xff]
      %v853 = vld [vmem:[%s839 + $0x98] sm:$0xff]
      %v854 = vld [vmem:[%s839 + $0xa8] sm:$0xff]
      %v855 = vld [vmem:[%s839 + $0xb0] sm:$0xff]
      %v856 = vld [vmem:[%s839 + $0xc0] sm:$0xff]
      %v857 = vld [vmem:[%s839 + $0xc8] sm:$0xff]
      %v858 = vld [vmem:[%s839 + $0xd8] sm:$0xff]
      %v859 = vld [vmem:[%s839 + $0xe0] sm:$0xff]
      %v860 = vld [vmem:[%s839 + $0xf0] sm:$0xff]
      %v861 = vld [vmem:[%s839 + $0xf8] sm:$0xff]
      %v862 = vld [vmem:[%s839 + $0x108] sm:$0xff]
      %v863 = vld [vmem:[%s839 + $0x110] sm:$0xff]
      %v864 = vld [vmem:[%s839 + $0x120] sm:$0xff]
      %v865 = vld [vmem:[%s839 + $0x128] sm:$0xff]
      %v866 = vld [vmem:[%s839 + $0x138] sm:$0xff]
      %v867 = vld [vmem:[%s839 + $0x140] sm:$0xff]
      %v868 = vld [vmem:[%s839 + $0x150] sm:$0xff]
      %v869 = vld [vmem:[%s839 + $0x158] sm:$0xff]
      %v870 = vld [vmem:[%s839 + $0x168] sm:$0xff]
      %v871 = vld [vmem:[%s839 + $0x170] sm:$0xff]
      %v872 = vpack.c.bf16 %v841, %v840
      %v873 = vpack.c.bf16 %v843, %v842
      %v874 = vpack.c.bf16 %v845, %v844
      %v875 = vpack.c.bf16 %v847, %v846
      %v876 = vpack.c.bf16 %v849, %v848
      %v877 = vpack.c.bf16 %v851, %v850
      %v878 = vpack.c.bf16 %v853, %v852
      %v879 = vpack.c.bf16 %v855, %v854
      %v880 = vpack.c.bf16 %v857, %v856
      %v881 = vpack.c.bf16 %v859, %v858
      %v882 = vpack.c.bf16 %v861, %v860
      %v883 = vpack.c.bf16 %v863, %v862
      %v884 = vpack.c.bf16 %v865, %v864
      %v885 = vpack.c.bf16 %v867, %v866
      %v886 = vpack.c.bf16 %v869, %v868
      %v887 = vpack.c.bf16 %v871, %v870
      %888 = vst [vmem:[#allocation3 + $0x30] sm:$0xff] %v872
      %889 = vst [vmem:[#allocation3 + $0x78] sm:$0xff] %v873
      %890 = vst [vmem:[#allocation3 + $0xc0] sm:$0xff] %v874
      %891 = vst [vmem:[#allocation3 + $0x108] sm:$0xff] %v875
      %892 = vst [vmem:[#allocation3 + $0x150] sm:$0xff] %v876
      %893 = vst [vmem:[#allocation3 + $0x198] sm:$0xff] %v877
      %894 = vst [vmem:[#allocation3 + $0x1e0] sm:$0xff] %v878
      %895 = vst [vmem:[#allocation3 + $0x228] sm:$0xff] %v879
      %896 = vst [vmem:[#allocation3 + $0x270] sm:$0xff] %v880
      %897 = vst [vmem:[#allocation3 + $0x2b8] sm:$0xff] %v881
      %898 = vst [vmem:[#allocation3 + $0x300] sm:$0xff] %v882
      %899 = vst [vmem:[#allocation3 + $0x348] sm:$0xff] %v883
      %900 = vst [vmem:[#allocation3 + $0x390] sm:$0xff] %v884
      %901 = vst [vmem:[#allocation3 + $0x3d8] sm:$0xff] %v885
      %902 = vst [vmem:[#allocation3 + $0x420] sm:$0xff] %v886
      %903 = vst [vmem:[#allocation3 + $0x468] sm:$0xff] %v887
      %v904 = vld [vmem:[%s839 + $0x1] sm:$0xff]
      %v905 = vld [vmem:[%s839 + $0x9] sm:$0xff]
      %v906 = vld [vmem:[%s839 + $0x19] sm:$0xff]
      %v907 = vld [vmem:[%s839 + $0x21] sm:$0xff]
      %v908 = vld [vmem:[%s839 + $0x31] sm:$0xff]
      %v909 = vld [vmem:[%s839 + $0x39] sm:$0xff]
      %v910 = vld [vmem:[%s839 + $0x49] sm:$0xff]
      %v911 = vld [vmem:[%s839 + $0x51] sm:$0xff]
      %v912 = vld [vmem:[%s839 + $0x61] sm:$0xff]
      %v913 = vld [vmem:[%s839 + $0x69] sm:$0xff]
      %v914 = vld [vmem:[%s839 + $0x79] sm:$0xff]
      %v915 = vld [vmem:[%s839 + $0x81] sm:$0xff]
      %v916 = vld [vmem:[%s839 + $0x91] sm:$0xff]
      %v917 = vld [vmem:[%s839 + $0x99] sm:$0xff]
      %v918 = vld [vmem:[%s839 + $0xa9] sm:$0xff]
      %v919 = vld [vmem:[%s839 + $0xb1] sm:$0xff]
      %v920 = vld [vmem:[%s839 + $0xc1] sm:$0xff]
      %v921 = vld [vmem:[%s839 + $0xc9] sm:$0xff]
      %v922 = vld [vmem:[%s839 + $0xd9] sm:$0xff]
      %v923 = vld [vmem:[%s839 + $0xe1] sm:$0xff]
      %v924 = vld [vmem:[%s839 + $0xf1] sm:$0xff]
      %v925 = vld [vmem:[%s839 + $0xf9] sm:$0xff]
      %v926 = vld [vmem:[%s839 + $0x109] sm:$0xff]
      %v927 = vld [vmem:[%s839 + $0x111] sm:$0xff]
      %v928 = vld [vmem:[%s839 + $0x121] sm:$0xff]
      %v929 = vld [vmem:[%s839 + $0x129] sm:$0xff]
      %v930 = vld [vmem:[%s839 + $0x139] sm:$0xff]
      %v931 = vld [vmem:[%s839 + $0x141] sm:$0xff]
      %v932 = vld [vmem:[%s839 + $0x151] sm:$0xff]
      %v933 = vld [vmem:[%s839 + $0x159] sm:$0xff]
      %v934 = vld [vmem:[%s839 + $0x169] sm:$0xff]
      %v935 = vld [vmem:[%s839 + $0x171] sm:$0xff]
      %v936 = vpack.c.bf16 %v905, %v904
      %v937 = vpack.c.bf16 %v907, %v906
      %v938 = vpack.c.bf16 %v909, %v908
      %v939 = vpack.c.bf16 %v911, %v910
      %v940 = vpack.c.bf16 %v913, %v912
      %v941 = vpack.c.bf16 %v915, %v914
      %v942 = vpack.c.bf16 %v917, %v916
      %v943 = vpack.c.bf16 %v919, %v918
      %v944 = vpack.c.bf16 %v921, %v920
      %v945 = vpack.c.bf16 %v923, %v922
      %v946 = vpack.c.bf16 %v925, %v924
      %v947 = vpack.c.bf16 %v927, %v926
      %v948 = vpack.c.bf16 %v929, %v928
      %v949 = vpack.c.bf16 %v931, %v930
      %v950 = vpack.c.bf16 %v933, %v932
      %v951 = vpack.c.bf16 %v935, %v934
      %952 = vst [vmem:[#allocation3 + $0x38] sm:$0xff] %v936
      %953 = vst [vmem:[#allocation3 + $0x80] sm:$0xff] %v937
      %954 = vst [vmem:[#allocation3 + $0xc8] sm:$0xff] %v938
      %955 = vst [vmem:[#allocation3 + $0x110] sm:$0xff] %v939
      %956 = vst [vmem:[#allocation3 + $0x158] sm:$0xff] %v940
      %957 = vst [vmem:[#allocation3 + $0x1a0] sm:$0xff] %v941
      %958 = vst [vmem:[#allocation3 + $0x1e8] sm:$0xff] %v942
      %959 = vst [vmem:[#allocation3 + $0x230] sm:$0xff] %v943
      %960 = vst [vmem:[#allocation3 + $0x278] sm:$0xff] %v944
      %961 = vst [vmem:[#allocation3 + $0x2c0] sm:$0xff] %v945
      %962 = vst [vmem:[#allocation3 + $0x308] sm:$0xff] %v946
      %963 = vst [vmem:[#allocation3 + $0x350] sm:$0xff] %v947
      %964 = vst [vmem:[#allocation3 + $0x398] sm:$0xff] %v948
      %965 = vst [vmem:[#allocation3 + $0x3e0] sm:$0xff] %v949
      %966 = vst [vmem:[#allocation3 + $0x428] sm:$0xff] %v950
      %967 = vst [vmem:[#allocation3 + $0x470] sm:$0xff] %v951
      %v968 = vld [vmem:[%s839 + $0x2] sm:$0xff]
      %v969 = vld [vmem:[%s839 + $0xa] sm:$0xff]
      %v970 = vld [vmem:[%s839 + $0x1a] sm:$0xff]
      %v971 = vld [vmem:[%s839 + $0x22] sm:$0xff]
      %v972 = vld [vmem:[%s839 + $0x32] sm:$0xff]
      %v973 = vld [vmem:[%s839 + $0x3a] sm:$0xff]
      %v974 = vld [vmem:[%s839 + $0x4a] sm:$0xff]
      %v975 = vld [vmem:[%s839 + $0x52] sm:$0xff]
      %v976 = vld [vmem:[%s839 + $0x62] sm:$0xff]
      %v977 = vld [vmem:[%s839 + $0x6a] sm:$0xff]
      %v978 = vld [vmem:[%s839 + $0x7a] sm:$0xff]
      %v979 = vld [vmem:[%s839 + $0x82] sm:$0xff]
      %v980 = vld [vmem:[%s839 + $0x92] sm:$0xff]
      %v981 = vld [vmem:[%s839 + $0x9a] sm:$0xff]
      %v982 = vld [vmem:[%s839 + $0xaa] sm:$0xff]
      %v983 = vld [vmem:[%s839 + $0xb2] sm:$0xff]
      %v984 = vld [vmem:[%s839 + $0xc2] sm:$0xff]
      %v985 = vld [vmem:[%s839 + $0xca] sm:$0xff]
      %v986 = vld [vmem:[%s839 + $0xda] sm:$0xff]
      %v987 = vld [vmem:[%s839 + $0xe2] sm:$0xff]
      %v988 = vld [vmem:[%s839 + $0xf2] sm:$0xff]
      %v989 = vld [vmem:[%s839 + $0xfa] sm:$0xff]
      %v990 = vld [vmem:[%s839 + $0x10a] sm:$0xff]
      %v991 = vld [vmem:[%s839 + $0x112] sm:$0xff]
      %v992 = vld [vmem:[%s839 + $0x122] sm:$0xff]
      %v993 = vld [vmem:[%s839 + $0x12a] sm:$0xff]
      %v994 = vld [vmem:[%s839 + $0x13a] sm:$0xff]
      %v995 = vld [vmem:[%s839 + $0x142] sm:$0xff]
      %v996 = vld [vmem:[%s839 + $0x152] sm:$0xff]
      %v997 = vld [vmem:[%s839 + $0x15a] sm:$0xff]
      %v998 = vld [vmem:[%s839 + $0x16a] sm:$0xff]
      %v999 = vld [vmem:[%s839 + $0x172] sm:$0xff]
      %v1000 = vpack.c.bf16 %v969, %v968
      %v1001 = vpack.c.bf16 %v971, %v970
      %v1002 = vpack.c.bf16 %v973, %v972
      %v1003 = vpack.c.bf16 %v975, %v974
      %v1004 = vpack.c.bf16 %v977, %v976
      %v1005 = vpack.c.bf16 %v979, %v978
      %v1006 = vpack.c.bf16 %v981, %v980
      %v1007 = vpack.c.bf16 %v983, %v982
      %v1008 = vpack.c.bf16 %v985, %v984
      %v1009 = vpack.c.bf16 %v987, %v986
      %v1010 = vpack.c.bf16 %v989, %v988
      %v1011 = vpack.c.bf16 %v991, %v990
      %v1012 = vpack.c.bf16 %v993, %v992
      %v1013 = vpack.c.bf16 %v995, %v994
      %v1014 = vpack.c.bf16 %v997, %v996
      %v1015 = vpack.c.bf16 %v999, %v998
      %1016 = vst [vmem:[#allocation3 + $0x40] sm:$0xff] %v1000
      %1017 = vst [vmem:[#allocation3 + $0x88] sm:$0xff] %v1001
      %1018 = vst [vmem:[#allocation3 + $0xd0] sm:$0xff] %v1002
      %1019 = vst [vmem:[#allocation3 + $0x118] sm:$0xff] %v1003
      %1020 = vst [vmem:[#allocation3 + $0x160] sm:$0xff] %v1004
      %1021 = vst [vmem:[#allocation3 + $0x1a8] sm:$0xff] %v1005
      %1022 = vst [vmem:[#allocation3 + $0x1f0] sm:$0xff] %v1006
      %1023 = vst [vmem:[#allocation3 + $0x238] sm:$0xff] %v1007
      %1024 = vst [vmem:[#allocation3 + $0x280] sm:$0xff] %v1008
      %1025 = vst [vmem:[#allocation3 + $0x2c8] sm:$0xff] %v1009
      %1026 = vst [vmem:[#allocation3 + $0x310] sm:$0xff] %v1010
      %1027 = vst [vmem:[#allocation3 + $0x358] sm:$0xff] %v1011
      %1028 = vst [vmem:[#allocation3 + $0x3a0] sm:$0xff] %v1012
      %1029 = vst [vmem:[#allocation3 + $0x3e8] sm:$0xff] %v1013
      %1030 = vst [vmem:[#allocation3 + $0x430] sm:$0xff] %v1014
      %1031 = vst [vmem:[#allocation3 + $0x478] sm:$0xff] %v1015
      %v1032 = vld [vmem:[#allocation3] sm:$0xff]
      %v1033 = vld [vmem:[#allocation3 + $0x8] sm:$0xff]
      %v1034 = vld [vmem:[#allocation3 + $0x10] sm:$0xff]
      %v1035 = vld [vmem:[#allocation3 + $0x18] sm:$0xff]
      %v1036 = vld [vmem:[#allocation3 + $0x20] sm:$0xff]
      %v1037 = vld [vmem:[#allocation3 + $0x28] sm:$0xff]
      %v1038 = vld [vmem:[#allocation3 + $0x30] sm:$0xff]
      %v1039 = vld [vmem:[#allocation3 + $0x38] sm:$0xff]
      %v1040 = vld [vmem:[#allocation3 + $0x40] sm:$0xff]
      %v1041 = vld [vmem:[#allocation3 + $0x48] sm:$0xff]
      %v1042 = vld [vmem:[#allocation3 + $0x50] sm:$0xff]
      %v1043 = vld [vmem:[#allocation3 + $0x58] sm:$0xff]
      %v1044 = vld [vmem:[#allocation3 + $0x60] sm:$0xff]
      %v1045 = vld [vmem:[#allocation3 + $0x68] sm:$0xff]
      %v1046 = vld [vmem:[#allocation3 + $0x70] sm:$0xff]
      %v1047 = vld [vmem:[#allocation3 + $0x78] sm:$0xff]
      %v1048 = vld [vmem:[#allocation3 + $0x80] sm:$0xff]
      %v1049 = vld [vmem:[#allocation3 + $0x88] sm:$0xff]
      %v1050 = vld [vmem:[#allocation3 + $0x90] sm:$0xff]
      %v1051 = vld [vmem:[#allocation3 + $0x98] sm:$0xff]
      %v1052 = vld [vmem:[#allocation3 + $0xa0] sm:$0xff]
      %v1053 = vld [vmem:[#allocation3 + $0xa8] sm:$0xff]
      %v1054 = vld [vmem:[#allocation3 + $0xb0] sm:$0xff]
      %v1055 = vld [vmem:[#allocation3 + $0xb8] sm:$0xff]
      %v1056 = vld [vmem:[#allocation3 + $0xc0] sm:$0xff]
      %v1057 = vld [vmem:[#allocation3 + $0xc8] sm:$0xff]
      %v1058 = vld [vmem:[#allocation3 + $0xd0] sm:$0xff]
      %v1059 = vld [vmem:[#allocation3 + $0xd8] sm:$0xff]
      %v1060 = vld [vmem:[#allocation3 + $0xe0] sm:$0xff]
      %v1061 = vld [vmem:[#allocation3 + $0xe8] sm:$0xff]
      %v1062 = vld [vmem:[#allocation3 + $0xf0] sm:$0xff]
      %v1063 = vld [vmem:[#allocation3 + $0xf8] sm:$0xff]
      %v1064 = vld [vmem:[#allocation3 + $0x100] sm:$0xff]
      %v1065 = vld [vmem:[#allocation3 + $0x108] sm:$0xff]
      %v1066 = vld [vmem:[#allocation3 + $0x110] sm:$0xff]
      %v1067 = vld [vmem:[#allocation3 + $0x118] sm:$0xff]
      %v1068 = vld [vmem:[#allocation3 + $0x120] sm:$0xff]
      %v1069 = vld [vmem:[#allocation3 + $0x128] sm:$0xff]
      %v1070 = vld [vmem:[#allocation3 + $0x130] sm:$0xff]
      %v1071 = vld [vmem:[#allocation3 + $0x138] sm:$0xff]
      %v1072 = vld [vmem:[#allocation3 + $0x140] sm:$0xff]
      %v1073 = vld [vmem:[#allocation3 + $0x148] sm:$0xff]
      %v1074 = vld [vmem:[#allocation3 + $0x150] sm:$0xff]
      %v1075 = vld [vmem:[#allocation3 + $0x158] sm:$0xff]
      %v1076 = vld [vmem:[#allocation3 + $0x160] sm:$0xff]
      %v1077 = vld [vmem:[#allocation3 + $0x168] sm:$0xff]
      %v1078 = vld [vmem:[#allocation3 + $0x170] sm:$0xff]
      %v1079 = vld [vmem:[#allocation3 + $0x178] sm:$0xff]
      %v1080 = vld [vmem:[#allocation3 + $0x180] sm:$0xff]
      %v1081 = vld [vmem:[#allocation3 + $0x188] sm:$0xff]
      %v1082 = vld [vmem:[#allocation3 + $0x190] sm:$0xff]
      %v1083 = vld [vmem:[#allocation3 + $0x198] sm:$0xff]
      %v1084 = vld [vmem:[#allocation3 + $0x1a0] sm:$0xff]
      %v1085 = vld [vmem:[#allocation3 + $0x1a8] sm:$0xff]
      %v1086 = vld [vmem:[#allocation3 + $0x1b0] sm:$0xff]
      %v1087 = vld [vmem:[#allocation3 + $0x1b8] sm:$0xff]
      %v1088 = vld [vmem:[#allocation3 + $0x1c0] sm:$0xff]
      %v1089 = vld [vmem:[#allocation3 + $0x1c8] sm:$0xff]
      %v1090 = vld [vmem:[#allocation3 + $0x1d0] sm:$0xff]
      %v1091 = vld [vmem:[#allocation3 + $0x1d8] sm:$0xff]
      %v1092 = vld [vmem:[#allocation3 + $0x1e0] sm:$0xff]
      %v1093 = vld [vmem:[#allocation3 + $0x1e8] sm:$0xff]
      %v1094 = vld [vmem:[#allocation3 + $0x1f0] sm:$0xff]
      %v1095 = vld [vmem:[#allocation3 + $0x1f8] sm:$0xff]
      %v1096 = vld [vmem:[#allocation3 + $0x200] sm:$0xff]
      %v1097 = vld [vmem:[#allocation3 + $0x208] sm:$0xff]
      %v1098 = vld [vmem:[#allocation3 + $0x210] sm:$0xff]
      %v1099 = vld [vmem:[#allocation3 + $0x218] sm:$0xff]
      %v1100 = vld [vmem:[#allocation3 + $0x220] sm:$0xff]
      %v1101 = vld [vmem:[#allocation3 + $0x228] sm:$0xff]
      %v1102 = vld [vmem:[#allocation3 + $0x230] sm:$0xff]
      %v1103 = vld [vmem:[#allocation3 + $0x238] sm:$0xff]
      %v1104 = vld [vmem:[#allocation3 + $0x240] sm:$0xff]
      %v1105 = vld [vmem:[#allocation3 + $0x248] sm:$0xff]
      %v1106 = vld [vmem:[#allocation3 + $0x250] sm:$0xff]
      %v1107 = vld [vmem:[#allocation3 + $0x258] sm:$0xff]
      %v1108 = vld [vmem:[#allocation3 + $0x260] sm:$0xff]
      %v1109 = vld [vmem:[#allocation3 + $0x268] sm:$0xff]
      %v1110 = vld [vmem:[#allocation3 + $0x270] sm:$0xff]
      %v1111 = vld [vmem:[#allocation3 + $0x278] sm:$0xff]
      %v1112 = vld [vmem:[#allocation3 + $0x280] sm:$0xff]
      %v1113 = vld [vmem:[#allocation3 + $0x288] sm:$0xff]
      %v1114 = vld [vmem:[#allocation3 + $0x290] sm:$0xff]
      %v1115 = vld [vmem:[#allocation3 + $0x298] sm:$0xff]
      %v1116 = vld [vmem:[#allocation3 + $0x2a0] sm:$0xff]
      %v1117 = vld [vmem:[#allocation3 + $0x2a8] sm:$0xff]
      %v1118 = vld [vmem:[#allocation3 + $0x2b0] sm:$0xff]
      %v1119 = vld [vmem:[#allocation3 + $0x2b8] sm:$0xff]
      %v1120 = vld [vmem:[#allocation3 + $0x2c0] sm:$0xff]
      %v1121 = vld [vmem:[#allocation3 + $0x2c8] sm:$0xff]
      %v1122 = vld [vmem:[#allocation3 + $0x2d0] sm:$0xff]
      %v1123 = vld [vmem:[#allocation3 + $0x2d8] sm:$0xff]
      %v1124 = vld [vmem:[#allocation3 + $0x2e0] sm:$0xff]
      %v1125 = vld [vmem:[#allocation3 + $0x2e8] sm:$0xff]
      %v1126 = vld [vmem:[#allocation3 + $0x2f0] sm:$0xff]
      %v1127 = vld [vmem:[#allocation3 + $0x2f8] sm:$0xff]
      %v1128 = vld [vmem:[#allocation3 + $0x300] sm:$0xff]
      %v1129 = vld [vmem:[#allocation3 + $0x308] sm:$0xff]
      %v1130 = vld [vmem:[#allocation3 + $0x310] sm:$0xff]
      %v1131 = vld [vmem:[#allocation3 + $0x318] sm:$0xff]
      %v1132 = vld [vmem:[#allocation3 + $0x320] sm:$0xff]
      %v1133 = vld [vmem:[#allocation3 + $0x328] sm:$0xff]
      %v1134 = vld [vmem:[#allocation3 + $0x330] sm:$0xff]
      %v1135 = vld [vmem:[#allocation3 + $0x338] sm:$0xff]
      %v1136 = vld [vmem:[#allocation3 + $0x340] sm:$0xff]
      %v1137 = vld [vmem:[#allocation3 + $0x348] sm:$0xff]
      %v1138 = vld [vmem:[#allocation3 + $0x350] sm:$0xff]
      %v1139 = vld [vmem:[#allocation3 + $0x358] sm:$0xff]
      %v1140 = vld [vmem:[#allocation3 + $0x360] sm:$0xff]
      %v1141 = vld [vmem:[#allocation3 + $0x368] sm:$0xff]
      %v1142 = vld [vmem:[#allocation3 + $0x370] sm:$0xff]
      %v1143 = vld [vmem:[#allocation3 + $0x378] sm:$0xff]
      %v1144 = vld [vmem:[#allocation3 + $0x380] sm:$0xff]
      %v1145 = vld [vmem:[#allocation3 + $0x388] sm:$0xff]
      %v1146 = vld [vmem:[#allocation3 + $0x390] sm:$0xff]
      %v1147 = vld [vmem:[#allocation3 + $0x398] sm:$0xff]
      %v1148 = vld [vmem:[#allocation3 + $0x3a0] sm:$0xff]
      %v1149 = vld [vmem:[#allocation3 + $0x3a8] sm:$0xff]
      %v1150 = vld [vmem:[#allocation3 + $0x3b0] sm:$0xff]
      %v1151 = vld [vmem:[#allocation3 + $0x3b8] sm:$0xff]
      %v1152 = vld [vmem:[#allocation3 + $0x3c0] sm:$0xff]
      %v1153 = vld [vmem:[#allocation3 + $0x3c8] sm:$0xff]
      %v1154 = vld [vmem:[#allocation3 + $0x3d0] sm:$0xff]
      %v1155 = vld [vmem:[#allocation3 + $0x3d8] sm:$0xff]
      %v1156 = vld [vmem:[#allocation3 + $0x3e0] sm:$0xff]
      %v1157 = vld [vmem:[#allocation3 + $0x3e8] sm:$0xff]
      %v1158 = vld [vmem:[#allocation3 + $0x3f0] sm:$0xff]
      %v1159 = vld [vmem:[#allocation3 + $0x3f8] sm:$0xff]
      %v1160 = vld [vmem:[#allocation3 + $0x400] sm:$0xff]
      %v1161 = vld [vmem:[#allocation3 + $0x408] sm:$0xff]
      %v1162 = vld [vmem:[#allocation3 + $0x410] sm:$0xff]
      %v1163 = vld [vmem:[#allocation3 + $0x418] sm:$0xff]
      %v1164 = vld [vmem:[#allocation3 + $0x420] sm:$0xff]
      %v1165 = vld [vmem:[#allocation3 + $0x428] sm:$0xff]
      %v1166 = vld [vmem:[#allocation3 + $0x430] sm:$0xff]
      %v1167 = vld [vmem:[#allocation3 + $0x438] sm:$0xff]
      %v1168 = vld [vmem:[#allocation3 + $0x440] sm:$0xff]
      %v1169 = vld [vmem:[#allocation3 + $0x448] sm:$0xff]
      %v1170 = vld [vmem:[#allocation3 + $0x450] sm:$0xff]
      %v1171 = vld [vmem:[#allocation3 + $0x458] sm:$0xff]
      %v1172 = vld [vmem:[#allocation3 + $0x460] sm:$0xff]
      %v1173 = vld [vmem:[#allocation3 + $0x468] sm:$0xff]
      %v1174 = vld [vmem:[#allocation3 + $0x470] sm:$0xff]
      %v1175 = vld [vmem:[#allocation3 + $0x478] sm:$0xff]
      %v1176 = vld [vmem:[%s3] sm:$0xf]
      %v1177 = vld [vmem:[%s3 + $0x4] sm:$0xf]
      %v1178 = vld [vmem:[%s3 + $0x8] sm:$0xf]
      %v1179 = vld [vmem:[%s3 + $0xc] sm:$0xf]
      %v1180 = vld [vmem:[%s3 + $0x10] sm:$0xf]
      %v1181 = vld [vmem:[%s3 + $0x14] sm:$0xf]
      %v1182 = vld [vmem:[%s3 + $0x18] sm:$0xf]
      %v1183 = vld [vmem:[%s3 + $0x1c] sm:$0xf]
      %v1184 = vld [vmem:[%s3 + $0x20] sm:$0xf]
      %v1185 = vld [vmem:[%s3 + $0x24] sm:$0xf]
      %v1186 = vld [vmem:[%s3 + $0x28] sm:$0xf]
      %v1187 = vld [vmem:[%s3 + $0x2c] sm:$0xf]
      %v1188 = vld [vmem:[%s3 + $0x30] sm:$0xf]
      %v1189 = vld [vmem:[%s3 + $0x34] sm:$0xf]
      %v1190 = vld [vmem:[%s3 + $0x38] sm:$0xf]
      %v1191 = vld [vmem:[%s3 + $0x3c] sm:$0xf]
      %v1192 = vld [vmem:[%s3 + $0x40] sm:$0xf]
      %v1193 = vld [vmem:[%s3 + $0x44] sm:$0xf]
      %v1194 = vld [vmem:[%s3 + $0x48] sm:$0xf]
      %v1195 = vld [vmem:[%s3 + $0x4c] sm:$0xf]
      %v1196 = vld [vmem:[%s3 + $0x50] sm:$0xf]
      %v1197 = vld [vmem:[%s3 + $0x54] sm:$0xf]
      %v1198 = vld [vmem:[%s3 + $0x58] sm:$0xf]
      %v1199 = vld [vmem:[%s3 + $0x5c] sm:$0xf]
      %v1200 = vld [vmem:[%s3 + $0x60] sm:$0xf]
      %v1201 = vld [vmem:[%s3 + $0x64] sm:$0xf]
      %v1202 = vld [vmem:[%s3 + $0x68] sm:$0xf]
      %v1203 = vld [vmem:[%s3 + $0x6c] sm:$0xf]
      %v1204 = vld [vmem:[%s3 + $0x70] sm:$0xf]
      %v1205 = vld [vmem:[%s3 + $0x74] sm:$0xf]
      %v1206 = vld [vmem:[%s3 + $0x78] sm:$0xf]
      %v1207 = vld [vmem:[%s3 + $0x7c] sm:$0xf]
      %v1208 = vld [vmem:[%s3 + $0x80] sm:$0xf]
      %v1209 = vld [vmem:[%s3 + $0x84] sm:$0xf]
      %v1210 = vld [vmem:[%s3 + $0x88] sm:$0xf]
      %v1211 = vld [vmem:[%s3 + $0x8c] sm:$0xf]
      %v1212 = vld [vmem:[%s3 + $0x90] sm:$0xf]
      %v1213 = vld [vmem:[%s3 + $0x94] sm:$0xf]
      %v1214 = vld [vmem:[%s3 + $0x98] sm:$0xf]
      %v1215 = vld [vmem:[%s3 + $0x9c] sm:$0xf]
      %v1216 = vld [vmem:[%s3 + $0xa0] sm:$0xf]
      %v1217 = vld [vmem:[%s3 + $0xa4] sm:$0xf]
      %v1218 = vld [vmem:[%s3 + $0xa8] sm:$0xf]
      %v1219 = vld [vmem:[%s3 + $0xac] sm:$0xf]
      %v1220 = vld [vmem:[%s3 + $0xb0] sm:$0xf]
      %v1221 = vld [vmem:[%s3 + $0xb4] sm:$0xf]
      %v1222 = vld [vmem:[%s3 + $0xb8] sm:$0xf]
      %v1223 = vld [vmem:[%s3 + $0xbc] sm:$0xf]
      %v1224 = vld [vmem:[%s3 + $0xc0] sm:$0xf]
      %v1225 = vld [vmem:[%s3 + $0xc4] sm:$0xf]
      %v1226 = vld [vmem:[%s3 + $0xc8] sm:$0xf]
      %v1227 = vld [vmem:[%s3 + $0xcc] sm:$0xf]
      %v1228 = vld [vmem:[%s3 + $0xd0] sm:$0xf]
      %v1229 = vld [vmem:[%s3 + $0xd4] sm:$0xf]
      %v1230 = vld [vmem:[%s3 + $0xd8] sm:$0xf]
      %v1231 = vld [vmem:[%s3 + $0xdc] sm:$0xf]
      %v1232 = vld [vmem:[%s3 + $0xe0] sm:$0xf]
      %v1233 = vld [vmem:[%s3 + $0xe4] sm:$0xf]
      %v1234 = vld [vmem:[%s3 + $0xe8] sm:$0xf]
      %v1235 = vld [vmem:[%s3 + $0xec] sm:$0xf]
      %v1236 = vld [vmem:[%s3 + $0xf0] sm:$0xf]
      %v1237 = vld [vmem:[%s3 + $0xf4] sm:$0xf]
      %v1238 = vld [vmem:[%s3 + $0xf8] sm:$0xf]
      %v1239 = vld [vmem:[%s3 + $0xfc] sm:$0xf]
      %v1240 = vld [vmem:[%s3 + $0x100] sm:$0xf]
      %v1241 = vld [vmem:[%s3 + $0x104] sm:$0xf]
      %v1242 = vld [vmem:[%s3 + $0x108] sm:$0xf]
      %v1243 = vld [vmem:[%s3 + $0x10c] sm:$0xf]
      %v1244 = vld [vmem:[%s3 + $0x110] sm:$0xf]
      %v1245 = vld [vmem:[%s3 + $0x114] sm:$0xf]
      %v1246 = vld [vmem:[%s3 + $0x118] sm:$0xf]
      %v1247 = vld [vmem:[%s3 + $0x11c] sm:$0xf]
      %v1248 = vld [vmem:[%s3 + $0x120] sm:$0xf]
      %v1249 = vld [vmem:[%s3 + $0x124] sm:$0xf]
      %v1250 = vld [vmem:[%s3 + $0x128] sm:$0xf]
      %v1251 = vld [vmem:[%s3 + $0x12c] sm:$0xf]
      %v1252 = vld [vmem:[%s3 + $0x130] sm:$0xf]
      %v1253 = vld [vmem:[%s3 + $0x134] sm:$0xf]
      %v1254 = vld [vmem:[%s3 + $0x138] sm:$0xf]
      %v1255 = vld [vmem:[%s3 + $0x13c] sm:$0xf]
      %v1256 = vld [vmem:[%s3 + $0x140] sm:$0xf]
      %v1257 = vld [vmem:[%s3 + $0x144] sm:$0xf]
      %v1258 = vld [vmem:[%s3 + $0x148] sm:$0xf]
      %v1259 = vld [vmem:[%s3 + $0x14c] sm:$0xf]
      %v1260 = vld [vmem:[%s3 + $0x150] sm:$0xf]
      %v1261 = vld [vmem:[%s3 + $0x154] sm:$0xf]
      %v1262 = vld [vmem:[%s3 + $0x158] sm:$0xf]
      %v1263 = vld [vmem:[%s3 + $0x15c] sm:$0xf]
      %v1264 = vld [vmem:[%s3 + $0x160] sm:$0xf]
      %v1265 = vld [vmem:[%s3 + $0x164] sm:$0xf]
      %v1266 = vld [vmem:[%s3 + $0x168] sm:$0xf]
      %v1267 = vld [vmem:[%s3 + $0x16c] sm:$0xf]
      %v1268 = vld [vmem:[%s3 + $0x170] sm:$0xf]
      %v1269 = vld [vmem:[%s3 + $0x174] sm:$0xf]
      %v1270 = vld [vmem:[%s3 + $0x178] sm:$0xf]
      %v1271 = vld [vmem:[%s3 + $0x17c] sm:$0xf]
      %v1272 = vld [vmem:[%s3 + $0x180] sm:$0xf]
      %v1273 = vld [vmem:[%s3 + $0x184] sm:$0xf]
      %v1274 = vld [vmem:[%s3 + $0x188] sm:$0xf]
      %v1275 = vld [vmem:[%s3 + $0x18c] sm:$0xf]
      %v1276 = vld [vmem:[%s3 + $0x190] sm:$0xf]
      %v1277 = vld [vmem:[%s3 + $0x194] sm:$0xf]
      %v1278 = vld [vmem:[%s3 + $0x198] sm:$0xf]
      %v1279 = vld [vmem:[%s3 + $0x19c] sm:$0xf]
      %v1280 = vld [vmem:[%s3 + $0x1a0] sm:$0xf]
      %v1281 = vld [vmem:[%s3 + $0x1a4] sm:$0xf]
      %v1282 = vld [vmem:[%s3 + $0x1a8] sm:$0xf]
      %v1283 = vld [vmem:[%s3 + $0x1ac] sm:$0xf]
      %v1284 = vld [vmem:[%s3 + $0x1b0] sm:$0xf]
      %v1285 = vld [vmem:[%s3 + $0x1b4] sm:$0xf]
      %v1286 = vld [vmem:[%s3 + $0x1b8] sm:$0xf]
      %v1287 = vld [vmem:[%s3 + $0x1bc] sm:$0xf]
      %v1288 = vld [vmem:[%s3 + $0x1c0] sm:$0xf]
      %v1289 = vld [vmem:[%s3 + $0x1c4] sm:$0xf]
      %v1290 = vld [vmem:[%s3 + $0x1c8] sm:$0xf]
      %v1291 = vld [vmem:[%s3 + $0x1cc] sm:$0xf]
      %v1292 = vld [vmem:[%s3 + $0x1d0] sm:$0xf]
      %v1293 = vld [vmem:[%s3 + $0x1d4] sm:$0xf]
      %v1294 = vld [vmem:[%s3 + $0x1d8] sm:$0xf]
      %v1295 = vld [vmem:[%s3 + $0x1dc] sm:$0xf]
      %v1296 = vld [vmem:[%s3 + $0x1e0] sm:$0xf]
      %v1297 = vld [vmem:[%s3 + $0x1e4] sm:$0xf]
      %v1298 = vld [vmem:[%s3 + $0x1e8] sm:$0xf]
      %v1299 = vld [vmem:[%s3 + $0x1ec] sm:$0xf]
      %v1300 = vld [vmem:[%s3 + $0x1f0] sm:$0xf]
      %v1301 = vld [vmem:[%s3 + $0x1f4] sm:$0xf]
      %v1302 = vld [vmem:[%s3 + $0x1f8] sm:$0xf]
      %v1303 = vld [vmem:[%s3 + $0x1fc] sm:$0xf]
      %v1304 = vld [vmem:[%s3 + $0x200] sm:$0xf]
      %v1305 = vld [vmem:[%s3 + $0x204] sm:$0xf]
      %v1306 = vld [vmem:[%s3 + $0x208] sm:$0xf]
      %v1307 = vld [vmem:[%s3 + $0x20c] sm:$0xf]
      %v1308 = vld [vmem:[%s3 + $0x210] sm:$0xf]
      %v1309 = vld [vmem:[%s3 + $0x214] sm:$0xf]
      %v1310 = vld [vmem:[%s3 + $0x218] sm:$0xf]
      %v1311 = vld [vmem:[%s3 + $0x21c] sm:$0xf]
      %v1312 = vld [vmem:[%s3 + $0x220] sm:$0xf]
      %v1313 = vld [vmem:[%s3 + $0x224] sm:$0xf]
      %v1314 = vld [vmem:[%s3 + $0x228] sm:$0xf]
      %v1315 = vld [vmem:[%s3 + $0x22c] sm:$0xf]
      %v1316 = vld [vmem:[%s3 + $0x230] sm:$0xf]
      %v1317 = vld [vmem:[%s3 + $0x234] sm:$0xf]
      %v1318 = vld [vmem:[%s3 + $0x238] sm:$0xf]
      %v1319 = vld [vmem:[%s3 + $0x23c] sm:$0xf]
      %v1320 = vld [vmem:[%s4] sm:$0x1]
      %v1322 = vlaneseq
      %v1323 = vshrl.u32 %v1322, 7
      %v1324 = vsub.s32 0, %v1323
      %v1325 = vrot.slane %v1320, %v1324
      %v1471 = vunpack.c.l.b16 %v1176
      %v1472 = vunpack.c.l.b16 %v1177
      %v1473 = vunpack.c.l.b16 %v1178
      %v1474 = vunpack.c.l.b16 %v1179
      %v1475 = vunpack.c.l.b16 %v1180
      %v1476 = vunpack.c.l.b16 %v1181
      %v1477 = vunpack.c.l.b16 %v1182
      %v1478 = vunpack.c.l.b16 %v1183
      %v1479 = vunpack.c.l.b16 %v1184
      %v1480 = vunpack.c.l.b16 %v1185
      %v1481 = vunpack.c.l.b16 %v1186
      %v1482 = vunpack.c.l.b16 %v1187
      %v1483 = vunpack.c.l.b16 %v1188
      %v1484 = vunpack.c.l.b16 %v1189
      %v1485 = vunpack.c.l.b16 %v1190
      %v1486 = vunpack.c.l.b16 %v1191
      %v1487 = vunpack.c.l.b16 %v1192
      %v1488 = vunpack.c.l.b16 %v1193
      %v1489 = vunpack.c.l.b16 %v1194
      %v1490 = vunpack.c.l.b16 %v1195
      %v1491 = vunpack.c.l.b16 %v1196
      %v1492 = vunpack.c.l.b16 %v1197
      %v1493 = vunpack.c.l.b16 %v1198
      %v1494 = vunpack.c.l.b16 %v1199
      %v1495 = vunpack.c.l.b16 %v1200
      %v1496 = vunpack.c.l.b16 %v1201
      %v1497 = vunpack.c.l.b16 %v1202
      %v1498 = vunpack.c.l.b16 %v1203
      %v1499 = vunpack.c.l.b16 %v1204
      %v1500 = vunpack.c.l.b16 %v1205
      %v1501 = vunpack.c.l.b16 %v1206
      %v1502 = vunpack.c.l.b16 %v1207
      %v1503 = vunpack.c.l.b16 %v1208
      %v1504 = vunpack.c.l.b16 %v1209
      %v1505 = vunpack.c.l.b16 %v1210
      %v1506 = vunpack.c.l.b16 %v1211
      %v1507 = vunpack.c.l.b16 %v1212
      %v1508 = vunpack.c.l.b16 %v1213
      %v1509 = vunpack.c.l.b16 %v1214
      %v1510 = vunpack.c.l.b16 %v1215
      %v1511 = vunpack.c.l.b16 %v1216
      %v1512 = vunpack.c.l.b16 %v1217
      %v1513 = vunpack.c.l.b16 %v1218
      %v1514 = vunpack.c.l.b16 %v1219
      %v1515 = vunpack.c.l.b16 %v1220
      %v1516 = vunpack.c.l.b16 %v1221
      %v1517 = vunpack.c.l.b16 %v1222
      %v1518 = vunpack.c.l.b16 %v1223
      %v1519 = vunpack.c.l.b16 %v1224
      %v1520 = vunpack.c.l.b16 %v1225
      %v1521 = vunpack.c.l.b16 %v1226
      %v1522 = vunpack.c.l.b16 %v1227
      %v1523 = vunpack.c.l.b16 %v1228
      %v1524 = vunpack.c.l.b16 %v1229
      %v1525 = vunpack.c.l.b16 %v1230
      %v1526 = vunpack.c.l.b16 %v1231
      %v1527 = vunpack.c.l.b16 %v1232
      %v1528 = vunpack.c.l.b16 %v1233
      %v1529 = vunpack.c.l.b16 %v1234
      %v1530 = vunpack.c.l.b16 %v1235
      %v1531 = vunpack.c.l.b16 %v1236
      %v1532 = vunpack.c.l.b16 %v1237
      %v1533 = vunpack.c.l.b16 %v1238
      %v1534 = vunpack.c.l.b16 %v1239
      %v1535 = vunpack.c.l.b16 %v1240
      %v1536 = vunpack.c.l.b16 %v1241
      %v1537 = vunpack.c.l.b16 %v1242
      %v1538 = vunpack.c.l.b16 %v1243
      %v1539 = vunpack.c.l.b16 %v1244
      %v1540 = vunpack.c.l.b16 %v1245
      %v1541 = vunpack.c.l.b16 %v1246
      %v1542 = vunpack.c.l.b16 %v1247
      %v1543 = vunpack.c.l.b16 %v1248
      %v1544 = vunpack.c.l.b16 %v1249
      %v1545 = vunpack.c.l.b16 %v1250
      %v1546 = vunpack.c.l.b16 %v1251
      %v1547 = vunpack.c.l.b16 %v1252
      %v1548 = vunpack.c.l.b16 %v1253
      %v1549 = vunpack.c.l.b16 %v1254
      %v1550 = vunpack.c.l.b16 %v1255
      %v1551 = vunpack.c.l.b16 %v1256
      %v1552 = vunpack.c.l.b16 %v1257
      %v1553 = vunpack.c.l.b16 %v1258
      %v1554 = vunpack.c.l.b16 %v1259
      %v1555 = vunpack.c.l.b16 %v1260
      %v1556 = vunpack.c.l.b16 %v1261
      %v1557 = vunpack.c.l.b16 %v1262
      %v1558 = vunpack.c.l.b16 %v1263
      %v1559 = vunpack.c.l.b16 %v1264
      %v1560 = vunpack.c.l.b16 %v1265
      %v1561 = vunpack.c.l.b16 %v1266
      %v1562 = vunpack.c.l.b16 %v1267
      %v1563 = vunpack.c.l.b16 %v1268
      %v1564 = vunpack.c.l.b16 %v1269
      %v1565 = vunpack.c.l.b16 %v1270
      %v1566 = vunpack.c.l.b16 %v1271
      %v1567 = vunpack.c.l.b16 %v1272
      %v1568 = vunpack.c.l.b16 %v1273
      %v1569 = vunpack.c.l.b16 %v1274
      %v1570 = vunpack.c.l.b16 %v1275
      %v1571 = vunpack.c.l.b16 %v1276
      %v1572 = vunpack.c.l.b16 %v1277
      %v1573 = vunpack.c.l.b16 %v1278
      %v1574 = vunpack.c.l.b16 %v1279
      %v1575 = vunpack.c.l.b16 %v1280
      %v1576 = vunpack.c.l.b16 %v1281
      %v1577 = vunpack.c.l.b16 %v1282
      %v1578 = vunpack.c.l.b16 %v1283
      %v1579 = vunpack.c.l.b16 %v1284
      %v1580 = vunpack.c.l.b16 %v1285
      %v1581 = vunpack.c.l.b16 %v1286
      %v1582 = vunpack.c.l.b16 %v1287
      %v1583 = vunpack.c.l.b16 %v1288
      %v1584 = vunpack.c.l.b16 %v1289
      %v1585 = vunpack.c.l.b16 %v1290
      %v1586 = vunpack.c.l.b16 %v1291
      %v1587 = vunpack.c.l.b16 %v1292
      %v1588 = vunpack.c.l.b16 %v1293
      %v1589 = vunpack.c.l.b16 %v1294
      %v1590 = vunpack.c.l.b16 %v1295
      %v1591 = vunpack.c.l.b16 %v1296
      %v1592 = vunpack.c.l.b16 %v1297
      %v1593 = vunpack.c.l.b16 %v1298
      %v1594 = vunpack.c.l.b16 %v1299
      %v1595 = vunpack.c.l.b16 %v1300
      %v1596 = vunpack.c.l.b16 %v1301
      %v1597 = vunpack.c.l.b16 %v1302
      %v1598 = vunpack.c.l.b16 %v1303
      %v1599 = vunpack.c.l.b16 %v1304
      %v1600 = vunpack.c.l.b16 %v1305
      %v1601 = vunpack.c.l.b16 %v1306
      %v1602 = vunpack.c.l.b16 %v1307
      %v1603 = vunpack.c.l.b16 %v1308
      %v1604 = vunpack.c.l.b16 %v1309
      %v1605 = vunpack.c.l.b16 %v1310
      %v1606 = vunpack.c.l.b16 %v1311
      %v1607 = vunpack.c.l.b16 %v1312
      %v1608 = vunpack.c.l.b16 %v1313
      %v1609 = vunpack.c.l.b16 %v1314
      %v1610 = vunpack.c.l.b16 %v1315
      %v1611 = vunpack.c.l.b16 %v1316
      %v1612 = vunpack.c.l.b16 %v1317
      %v1613 = vunpack.c.l.b16 %v1318
      %v1614 = vunpack.c.l.b16 %v1319
      %v1615 = vpack.c.b16 %v1472, %v1471
      %v1616 = vpack.c.b16 %v1474, %v1473
      %v1617 = vpack.c.b16 %v1476, %v1475
      %v1618 = vpack.c.b16 %v1478, %v1477
      %v1619 = vpack.c.b16 %v1480, %v1479
      %v1620 = vpack.c.b16 %v1482, %v1481
      %v1621 = vpack.c.b16 %v1484, %v1483
      %v1622 = vpack.c.b16 %v1486, %v1485
      %v1623 = vpack.c.b16 %v1488, %v1487
      %v1624 = vpack.c.b16 %v1490, %v1489
      %v1625 = vpack.c.b16 %v1492, %v1491
      %v1626 = vpack.c.b16 %v1494, %v1493
      %v1627 = vpack.c.b16 %v1496, %v1495
      %v1628 = vpack.c.b16 %v1498, %v1497
      %v1629 = vpack.c.b16 %v1500, %v1499
      %v1630 = vpack.c.b16 %v1502, %v1501
      %v1631 = vpack.c.b16 %v1504, %v1503
      %v1632 = vpack.c.b16 %v1506, %v1505
      %v1633 = vpack.c.b16 %v1508, %v1507
      %v1634 = vpack.c.b16 %v1510, %v1509
      %v1635 = vpack.c.b16 %v1512, %v1511
      %v1636 = vpack.c.b16 %v1514, %v1513
      %v1637 = vpack.c.b16 %v1516, %v1515
      %v1638 = vpack.c.b16 %v1518, %v1517
      %v1639 = vpack.c.b16 %v1520, %v1519
      %v1640 = vpack.c.b16 %v1522, %v1521
      %v1641 = vpack.c.b16 %v1524, %v1523
      %v1642 = vpack.c.b16 %v1526, %v1525
      %v1643 = vpack.c.b16 %v1528, %v1527
      %v1644 = vpack.c.b16 %v1530, %v1529
      %v1645 = vpack.c.b16 %v1532, %v1531
      %v1646 = vpack.c.b16 %v1534, %v1533
      %v1647 = vpack.c.b16 %v1536, %v1535
      %v1648 = vpack.c.b16 %v1538, %v1537
      %v1649 = vpack.c.b16 %v1540, %v1539
      %v1650 = vpack.c.b16 %v1542, %v1541
      %v1651 = vpack.c.b16 %v1544, %v1543
      %v1652 = vpack.c.b16 %v1546, %v1545
      %v1653 = vpack.c.b16 %v1548, %v1547
      %v1654 = vpack.c.b16 %v1550, %v1549
      %v1655 = vpack.c.b16 %v1552, %v1551
      %v1656 = vpack.c.b16 %v1554, %v1553
      %v1657 = vpack.c.b16 %v1556, %v1555
      %v1658 = vpack.c.b16 %v1558, %v1557
      %v1659 = vpack.c.b16 %v1560, %v1559
      %v1660 = vpack.c.b16 %v1562, %v1561
      %v1661 = vpack.c.b16 %v1564, %v1563
      %v1662 = vpack.c.b16 %v1566, %v1565
      %v1663 = vpack.c.b16 %v1568, %v1567
      %v1664 = vpack.c.b16 %v1570, %v1569
      %v1665 = vpack.c.b16 %v1572, %v1571
      %v1666 = vpack.c.b16 %v1574, %v1573
      %v1667 = vpack.c.b16 %v1576, %v1575
      %v1668 = vpack.c.b16 %v1578, %v1577
      %v1669 = vpack.c.b16 %v1580, %v1579
      %v1670 = vpack.c.b16 %v1582, %v1581
      %v1671 = vpack.c.b16 %v1584, %v1583
      %v1672 = vpack.c.b16 %v1586, %v1585
      %v1673 = vpack.c.b16 %v1588, %v1587
      %v1674 = vpack.c.b16 %v1590, %v1589
      %v1675 = vpack.c.b16 %v1592, %v1591
      %v1676 = vpack.c.b16 %v1594, %v1593
      %v1677 = vpack.c.b16 %v1596, %v1595
      %v1678 = vpack.c.b16 %v1598, %v1597
      %v1679 = vpack.c.b16 %v1600, %v1599
      %v1680 = vpack.c.b16 %v1602, %v1601
      %v1681 = vpack.c.b16 %v1604, %v1603
      %v1682 = vpack.c.b16 %v1606, %v1605
      %v1683 = vpack.c.b16 %v1608, %v1607
      %v1684 = vpack.c.b16 %v1610, %v1609
      %v1685 = vpack.c.b16 %v1612, %v1611
      %v1686 = vpack.c.b16 %v1614, %v1613
      %1759 = vmatprep.subr.bf16.mxu0 0
      %1760 = vmatpush1.bf16.msra.mxu0 %v1615
      %1761 = vmatprep.subr.bf16.mxu0 0
      %1762 = vmatpush1.bf16.msra.mxu0 %v1616
      %1763 = vmatprep.subr.bf16.mxu0 0
      %1764 = vmatpush1.bf16.msra.mxu0 %v1617
      %1765 = vmatprep.subr.bf16.mxu0 0
      %1766 = vmatpush1.bf16.msra.mxu0 %v1618
      %1767 = vmatprep.subr.bf16.mxu0 0
      %1768 = vmatpush1.bf16.msra.mxu0 %v1619
      %1769 = vmatprep.subr.bf16.mxu0 0
      %1770 = vmatpush1.bf16.msra.mxu0 %v1620
      %1771 = vmatprep.subr.bf16.mxu0 0
      %1772 = vmatpush1.bf16.msra.mxu0 %v1621
      %1773 = vmatprep.subr.bf16.mxu0 0
      %1774 = vmatpush1.bf16.msra.mxu0 %v1622
      %1775 = vmatprep.subr.bf16.mxu0 0
      %1776 = vmatpush1.bf16.msra.mxu0 %v1623
      %1777 = vmatprep.subr.bf16.mxu0 0
      %1778 = vmatpush1.bf16.msra.mxu0 %v1624
      %1779 = vmatprep.subr.bf16.mxu0 0
      %1780 = vmatpush1.bf16.msra.mxu0 %v1625
      %1781 = vmatprep.subr.bf16.mxu0 0
      %1782 = vmatpush1.bf16.msra.mxu0 %v1626
      %1783 = vmatprep.subr.bf16.mxu0 0
      %1784 = vmatpush1.bf16.msra.mxu0 %v1627
      %1785 = vmatprep.subr.bf16.mxu0 0
      %1786 = vmatpush1.bf16.msra.mxu0 %v1628
      %1787 = vmatprep.subr.bf16.mxu0 0
      %1788 = vmatpush1.bf16.msra.mxu0 %v1629
      %1789 = vmatprep.subr.bf16.mxu0 0
      %1790 = vmatpush1.bf16.msra.mxu0 %v1630
      %1791 = vmatprep.mubr.bf16.mxu0 %v1033
      %1792 = vmatmul.mubr.bf16.gmra.mrb[0].mxu0 %v1032
      %v1793 = vpop.f32.mrb[0].mxu0
      %v1794 = vadd.f32 %v1325, %v1793
      %v1795 = vpop.f32.mrb[0].mxu0
      %v1796 = vpop.f32.mrb[0].mxu0
      %v1797 = vadd.f32 %v1325, %v1796
      %v1798 = vpop.f32.mrb[0].mxu0
      %1799 = vmatprep.mubr.bf16.mxu0 %v1042
      %1800 = vmatmul.mubr.bf16.gmra.mrb[0].mxu0 %v1041
      %v1801 = vpop.f32.mrb[0].mxu0
      %v1802 = vadd.f32 %v1325, %v1801
      %v1803 = vpop.f32.mrb[0].mxu0
      %v1804 = vpop.f32.mrb[0].mxu0
      %v1805 = vadd.f32 %v1325, %v1804
      %v1806 = vpop.f32.mrb[0].mxu0
      %1807 = vmatprep.mubr.bf16.mxu0 %v1051
      %1808 = vmatmul.mubr.bf16.gmra.mrb[0].mxu0 %v1050
      %v1809 = vpop.f32.mrb[0].mxu0
      %v1810 = vadd.f32 %v1325, %v1809
      %v1811 = vpop.f32.mrb[0].mxu0
      %v1812 = vpop.f32.mrb[0].mxu0
      %v1813 = vadd.f32 %v1325, %v1812
      %v1814 = vpop.f32.mrb[0].mxu0
      %1815 = vmatprep.mubr.bf16.mxu0 %v1060
      %1816 = vmatmul.mubr.bf16.gmra.mrb[0].mxu0 %v1059
      %v1817 = vpop.f32.mrb[0].mxu0
      %v1818 = vadd.f32 %v1325, %v1817
      %v1819 = vpop.f32.mrb[0].mxu0
      %v1820 = vpop.f32.mrb[0].mxu0
      %v1821 = vadd.f32 %v1325, %v1820
      %v1822 = vpop.f32.mrb[0].mxu0
      %1823 = vmatprep.mubr.bf16.mxu0 %v1069
      %1824 = vmatmul.mubr.bf16.gmra.mrb[0].mxu0 %v1068
      %v1825 = vpop.f32.mrb[0].mxu0
      %v1826 = vadd.f32 %v1325, %v1825
      %v1827 = vpop.f32.mrb[0].mxu0
      %v1828 = vpop.f32.mrb[0].mxu0
      %v1829 = vadd.f32 %v1325, %v1828
      %v1830 = vpop.f32.mrb[0].mxu0
      %1831 = vmatprep.mubr.bf16.mxu0 %v1078
      %1832 = vmatmul.mubr.bf16.gmra.mrb[0].mxu0 %v1077
      %v1833 = vpop.f32.mrb[0].mxu0
      %v1834 = vadd.f32 %v1325, %v1833
      %v1835 = vpop.f32.mrb[0].mxu0
      %v1836 = vpop.f32.mrb[0].mxu0
      %v1837 = vadd.f32 %v1325, %v1836
      %v1838 = vpop.f32.mrb[0].mxu0
      %1839 = vmatprep.mubr.bf16.mxu0 %v1087
      %1840 = vmatmul.mubr.bf16.gmra.mrb[0].mxu0 %v1086
      %v1841 = vpop.f32.mrb[0].mxu0
      %v1842 = vadd.f32 %v1325, %v1841
      %v1843 = vpop.f32.mrb[0].mxu0
      %v1844 = vpop.f32.mrb[0].mxu0
      %v1845 = vadd.f32 %v1325, %v1844
      %v1846 = vpop.f32.mrb[0].mxu0
      %1847 = vmatprep.mubr.bf16.mxu0 %v1096
      %1848 = vmatmul.mubr.bf16.gmra.mrb[0].mxu0 %v1095
      %v1849 = vpop.f32.mrb[0].mxu0
      %v1850 = vadd.f32 %v1325, %v1849
      %v1851 = vpop.f32.mrb[0].mxu0
      %v1852 = vpop.f32.mrb[0].mxu0
      %v1853 = vadd.f32 %v1325, %v1852
      %v1854 = vpop.f32.mrb[0].mxu0
      %1855 = vmatprep.mubr.bf16.mxu0 %v1105
      %1856 = vmatmul.mubr.bf16.gmra.mrb[0].mxu0 %v1104
      %v1857 = vpop.f32.mrb[0].mxu0
      %v1858 = vadd.f32 %v1325, %v1857
      %v1859 = vpop.f32.mrb[0].mxu0
      %v1860 = vpop.f32.mrb[0].mxu0
      %v1861 = vadd.f32 %v1325, %v1860
      %v1862 = vpop.f32.mrb[0].mxu0
      %1863 = vmatprep.mubr.bf16.mxu0 %v1114
      %1864 = vmatmul.mubr.bf16.gmra.mrb[0].mxu0 %v1113
      %v1865 = vpop.f32.mrb[0].mxu0
      %v1866 = vadd.f32 %v1325, %v1865
      %v1867 = vpop.f32.mrb[0].mxu0
      %v1868 = vpop.f32.mrb[0].mxu0
      %v1869 = vadd.f32 %v1325, %v1868
      %v1870 = vpop.f32.mrb[0].mxu0
      %1871 = vmatprep.mubr.bf16.mxu0 %v1123
      %1872 = vmatmul.mubr.bf16.gmra.mrb[0].mxu0 %v1122
      %v1873 = vpop.f32.mrb[0].mxu0
      %v1874 = vadd.f32 %v1325, %v1873
      %v1875 = vpop.f32.mrb[0].mxu0
      %v1876 = vpop.f32.mrb[0].mxu0
      %v1877 = vadd.f32 %v1325, %v1876
      %v1878 = vpop.f32.mrb[0].mxu0
      %1879 = vmatprep.mubr.bf16.mxu0 %v1132
      %1880 = vmatmul.mubr.bf16.gmra.mrb[0].mxu0 %v1131
      %v1881 = vpop.f32.mrb[0].mxu0
      %v1882 = vadd.f32 %v1325, %v1881
      %v1883 = vpop.f32.mrb[0].mxu0
      %v1884 = vpop.f32.mrb[0].mxu0
      %v1885 = vadd.f32 %v1325, %v1884
      %v1886 = vpop.f32.mrb[0].mxu0
      %1887 = vmatprep.mubr.bf16.mxu0 %v1141
      %1888 = vmatmul.mubr.bf16.gmra.mrb[0].mxu0 %v1140
      %v1889 = vpop.f32.mrb[0].mxu0
      %v1890 = vadd.f32 %v1325, %v1889
      %v1891 = vpop.f32.mrb[0].mxu0
      %v1892 = vpop.f32.mrb[0].mxu0
      %v1893 = vadd.f32 %v1325, %v1892
      %v1894 = vpop.f32.mrb[0].mxu0
      %1895 = vmatprep.mubr.bf16.mxu0 %v1150
      %1896 = vmatmul.mubr.bf16.gmra.mrb[0].mxu0 %v1149
      %v1897 = vpop.f32.mrb[0].mxu0
      %v1898 = vadd.f32 %v1325, %v1897
      %v1899 = vpop.f32.mrb[0].mxu0
      %v1900 = vpop.f32.mrb[0].mxu0
      %v1901 = vadd.f32 %v1325, %v1900
      %v1902 = vpop.f32.mrb[0].mxu0
      %1903 = vmatprep.mubr.bf16.mxu0 %v1159
      %1904 = vmatmul.mubr.bf16.gmra.mrb[0].mxu0 %v1158
      %v1905 = vpop.f32.mrb[0].mxu0
      %v1906 = vadd.f32 %v1325, %v1905
      %v1907 = vpop.f32.mrb[0].mxu0
      %v1908 = vpop.f32.mrb[0].mxu0
      %v1909 = vadd.f32 %v1325, %v1908
      %v1910 = vpop.f32.mrb[0].mxu0
      %1911 = vmatprep.mubr.bf16.mxu0 %v1168
      %1912 = vmatmul.mubr.bf16.gmra.mrb[0].mxu0 %v1167
      %v1913 = vpop.f32.mrb[0].mxu0
      %v1914 = vadd.f32 %v1325, %v1913
      %v1915 = vpop.f32.mrb[0].mxu0
      %v1916 = vpop.f32.mrb[0].mxu0
      %v1917 = vadd.f32 %v1325, %v1916
      %v1918 = vpop.f32.mrb[0].mxu0
      %1919 = vdwg.mxu0
      %1920 = vmatprep.subr.bf16.mxu0 0
      %1921 = vmatpush1.bf16.msra.mxu0 %v1631
      %1922 = vmatprep.subr.bf16.mxu0 0
      %1923 = vmatpush1.bf16.msra.mxu0 %v1632
      %1924 = vmatprep.subr.bf16.mxu0 0
      %1925 = vmatpush1.bf16.msra.mxu0 %v1633
      %1926 = vmatprep.subr.bf16.mxu0 0
      %1927 = vmatpush1.bf16.msra.mxu0 %v1634
      %1928 = vmatprep.subr.bf16.mxu0 0
      %1929 = vmatpush1.bf16.msra.mxu0 %v1635
      %1930 = vmatprep.subr.bf16.mxu0 0
      %1931 = vmatpush1.bf16.msra.mxu0 %v1636
      %1932 = vmatprep.subr.bf16.mxu0 0
      %1933 = vmatpush1.bf16.msra.mxu0 %v1637
      %1934 = vmatprep.subr.bf16.mxu0 0
      %1935 = vmatpush1.bf16.msra.mxu0 %v1638
      %1936 = vmatprep.subr.bf16.mxu0 0
      %1937 = vmatpush1.bf16.msra.mxu0 %v1639
      %1938 = vmatprep.subr.bf16.mxu0 0
      %1939 = vmatpush1.bf16.msra.mxu0 %v1640
      %1940 = vmatprep.subr.bf16.mxu0 0
      %1941 = vmatpush1.bf16.msra.mxu0 %v1641
      %1942 = vmatprep.subr.bf16.mxu0 0
      %1943 = vmatpush1.bf16.msra.mxu0 %v1642
      %1944 = vmatprep.subr.bf16.mxu0 0
      %1945 = vmatpush1.bf16.msra.mxu0 %v1643
      %1946 = vmatprep.subr.bf16.mxu0 0
      %1947 = vmatpush1.bf16.msra.mxu0 %v1644
      %1948 = vmatprep.subr.bf16.mxu0 0
      %1949 = vmatpush1.bf16.msra.mxu0 %v1645
      %1950 = vmatprep.subr.bf16.mxu0 0
      %1951 = vmatpush1.bf16.msra.mxu0 %v1646
      %1952 = vmatprep.mubr.bf16.mxu0 %v1035
      %1953 = vmatmul.mubr.bf16.gmra.mrb[0].mxu0 %v1034
      %v1954 = vpop.f32.mrb[0].mxu0
      %v1955 = vadd.f32 %v1794, %v1954
      %v1956 = vpop.f32.mrb[0].mxu0
      %v1957 = vpop.f32.mrb[0].mxu0
      %v1958 = vadd.f32 %v1797, %v1957
      %v1959 = vpop.f32.mrb[0].mxu0
      %1960 = vmatprep.mubr.bf16.mxu0 %v1044
      %1961 = vmatmul.mubr.bf16.gmra.mrb[0].mxu0 %v1043
      %v1962 = vpop.f32.mrb[0].mxu0
      %v1963 = vadd.f32 %v1802, %v1962
      %v1964 = vpop.f32.mrb[0].mxu0
      %v1965 = vpop.f32.mrb[0].mxu0
      %v1966 = vadd.f32 %v1805, %v1965
      %v1967 = vpop.f32.mrb[0].mxu0
      %1968 = vmatprep.mubr.bf16.mxu0 %v1053
      %1969 = vmatmul.mubr.bf16.gmra.mrb[0].mxu0 %v1052
      %v1970 = vpop.f32.mrb[0].mxu0
      %v1971 = vadd.f32 %v1810, %v1970
      %v1972 = vpop.f32.mrb[0].mxu0
      %v1973 = vpop.f32.mrb[0].mxu0
      %v1974 = vadd.f32 %v1813, %v1973
      %v1975 = vpop.f32.mrb[0].mxu0
      %1976 = vmatprep.mubr.bf16.mxu0 %v1062
      %1977 = vmatmul.mubr.bf16.gmra.mrb[0].mxu0 %v1061
      %v1978 = vpop.f32.mrb[0].mxu0
      %v1979 = vadd.f32 %v1818, %v1978
      %v1980 = vpop.f32.mrb[0].mxu0
      %v1981 = vpop.f32.mrb[0].mxu0
      %v1982 = vadd.f32 %v1821, %v1981
      %v1983 = vpop.f32.mrb[0].mxu0
      %1984 = vmatprep.mubr.bf16.mxu0 %v1071
      %1985 = vmatmul.mubr.bf16.gmra.mrb[0].mxu0 %v1070
      %v1986 = vpop.f32.mrb[0].mxu0
      %v1987 = vadd.f32 %v1826, %v1986
      %v1988 = vpop.f32.mrb[0].mxu0
      %v1989 = vpop.f32.mrb[0].mxu0
      %v1990 = vadd.f32 %v1829, %v1989
      %v1991 = vpop.f32.mrb[0].mxu0
      %1992 = vmatprep.mubr.bf16.mxu0 %v1080
      %1993 = vmatmul.mubr.bf16.gmra.mrb[0].mxu0 %v1079
      %v1994 = vpop.f32.mrb[0].mxu0
      %v1995 = vadd.f32 %v1834, %v1994
      %v1996 = vpop.f32.mrb[0].mxu0
      %v1997 = vpop.f32.mrb[0].mxu0
      %v1998 = vadd.f32 %v1837, %v1997
      %v1999 = vpop.f32.mrb[0].mxu0
      %2000 = vmatprep.mubr.bf16.mxu0 %v1089
      %2001 = vmatmul.mubr.bf16.gmra.mrb[0].mxu0 %v1088
      %v2002 = vpop.f32.mrb[0].mxu0
      %v2003 = vadd.f32 %v1842, %v2002
      %v2004 = vpop.f32.mrb[0].mxu0
      %v2005 = vpop.f32.mrb[0].mxu0
      %v2006 = vadd.f32 %v1845, %v2005
      %v2007 = vpop.f32.mrb[0].mxu0
      %2008 = vmatprep.mubr.bf16.mxu0 %v1098
      %2009 = vmatmul.mubr.bf16.gmra.mrb[0].mxu0 %v1097
      %v2010 = vpop.f32.mrb[0].mxu0
      %v2011 = vadd.f32 %v1850, %v2010
      %v2012 = vpop.f32.mrb[0].mxu0
      %v2013 = vpop.f32.mrb[0].mxu0
      %v2014 = vadd.f32 %v1853, %v2013
      %v2015 = vpop.f32.mrb[0].mxu0
      %2016 = vmatprep.mubr.bf16.mxu0 %v1107
      %2017 = vmatmul.mubr.bf16.gmra.mrb[0].mxu0 %v1106
      %v2018 = vpop.f32.mrb[0].mxu0
      %v2019 = vadd.f32 %v1858, %v2018
      %v2020 = vpop.f32.mrb[0].mxu0
      %v2021 = vpop.f32.mrb[0].mxu0
      %v2022 = vadd.f32 %v1861, %v2021
      %v2023 = vpop.f32.mrb[0].mxu0
      %2024 = vmatprep.mubr.bf16.mxu0 %v1116
      %2025 = vmatmul.mubr.bf16.gmra.mrb[0].mxu0 %v1115
      %v2026 = vpop.f32.mrb[0].mxu0
      %v2027 = vadd.f32 %v1866, %v2026
      %v2028 = vpop.f32.mrb[0].mxu0
      %v2029 = vpop.f32.mrb[0].mxu0
      %v2030 = vadd.f32 %v1869, %v2029
      %v2031 = vpop.f32.mrb[0].mxu0
      %2032 = vmatprep.mubr.bf16.mxu0 %v1125
      %2033 = vmatmul.mubr.bf16.gmra.mrb[0].mxu0 %v1124
      %v2034 = vpop.f32.mrb[0].mxu0
      %v2035 = vadd.f32 %v1874, %v2034
      %v2036 = vpop.f32.mrb[0].mxu0
      %v2037 = vpop.f32.mrb[0].mxu0
      %v2038 = vadd.f32 %v1877, %v2037
      %v2039 = vpop.f32.mrb[0].mxu0
      %2040 = vmatprep.mubr.bf16.mxu0 %v1134
      %2041 = vmatmul.mubr.bf16.gmra.mrb[0].mxu0 %v1133
      %v2042 = vpop.f32.mrb[0].mxu0
      %v2043 = vadd.f32 %v1882, %v2042
      %v2044 = vpop.f32.mrb[0].mxu0
      %v2045 = vpop.f32.mrb[0].mxu0
      %v2046 = vadd.f32 %v1885, %v2045
      %v2047 = vpop.f32.mrb[0].mxu0
      %2048 = vmatprep.mubr.bf16.mxu0 %v1143
      %2049 = vmatmul.mubr.bf16.gmra.mrb[0].mxu0 %v1142
      %v2050 = vpop.f32.mrb[0].mxu0
      %v2051 = vadd.f32 %v1890, %v2050
      %v2052 = vpop.f32.mrb[0].mxu0
      %v2053 = vpop.f32.mrb[0].mxu0
      %v2054 = vadd.f32 %v1893, %v2053
      %v2055 = vpop.f32.mrb[0].mxu0
      %2056 = vmatprep.mubr.bf16.mxu0 %v1152
      %2057 = vmatmul.mubr.bf16.gmra.mrb[0].mxu0 %v1151
      %v2058 = vpop.f32.mrb[0].mxu0
      %v2059 = vadd.f32 %v1898, %v2058
      %v2060 = vpop.f32.mrb[0].mxu0
      %v2061 = vpop.f32.mrb[0].mxu0
      %v2062 = vadd.f32 %v1901, %v2061
      %v2063 = vpop.f32.mrb[0].mxu0
      %2064 = vmatprep.mubr.bf16.mxu0 %v1161
      %2065 = vmatmul.mubr.bf16.gmra.mrb[0].mxu0 %v1160
      %v2066 = vpop.f32.mrb[0].mxu0
      %v2067 = vadd.f32 %v1906, %v2066
      %v2068 = vpop.f32.mrb[0].mxu0
      %v2069 = vpop.f32.mrb[0].mxu0
      %v2070 = vadd.f32 %v1909, %v2069
      %v2071 = vpop.f32.mrb[0].mxu0
      %2072 = vmatprep.mubr.bf16.mxu0 %v1170
      %2073 = vmatmul.mubr.bf16.gmra.mrb[0].mxu0 %v1169
      %v2074 = vpop.f32.mrb[0].mxu0
      %v2075 = vadd.f32 %v1914, %v2074
      %v2076 = vpop.f32.mrb[0].mxu0
      %v2077 = vpop.f32.mrb[0].mxu0
      %v2078 = vadd.f32 %v1917, %v2077
      %v2079 = vpop.f32.mrb[0].mxu0
      %2080 = vdwg.mxu0
      %2081 = vmatprep.subr.bf16.mxu0 0
      %2082 = vmatpush1.bf16.msra.mxu0 %v1647
      %2083 = vmatprep.subr.bf16.mxu0 0
      %2084 = vmatpush1.bf16.msra.mxu0 %v1648
      %2085 = vmatprep.subr.bf16.mxu0 0
      %2086 = vmatpush1.bf16.msra.mxu0 %v1649
      %2087 = vmatprep.subr.bf16.mxu0 0
      %2088 = vmatpush1.bf16.msra.mxu0 %v1650
      %2089 = vmatprep.subr.bf16.mxu0 0
      %2090 = vmatpush1.bf16.msra.mxu0 %v1651
      %2091 = vmatprep.subr.bf16.mxu0 0
      %2092 = vmatpush1.bf16.msra.mxu0 %v1652
      %2093 = vmatprep.subr.bf16.mxu0 0
      %2094 = vmatpush1.bf16.msra.mxu0 %v1653
      %2095 = vmatprep.subr.bf16.mxu0 0
      %2096 = vmatpush1.bf16.msra.mxu0 %v1654
      %2097 = vmatprep.subr.bf16.mxu0 0
      %2098 = vmatpush1.bf16.msra.mxu0 %v1655
      %2099 = vmatprep.subr.bf16.mxu0 0
      %2100 = vmatpush1.bf16.msra.mxu0 %v1656
      %2101 = vmatprep.subr.bf16.mxu0 0
      %2102 = vmatpush1.bf16.msra.mxu0 %v1657
      %2103 = vmatprep.subr.bf16.mxu0 0
      %2104 = vmatpush1.bf16.msra.mxu0 %v1658
      %2105 = vmatprep.subr.bf16.mxu0 0
      %2106 = vmatpush1.bf16.msra.mxu0 %v1659
      %2107 = vmatprep.subr.bf16.mxu0 0
      %2108 = vmatpush1.bf16.msra.mxu0 %v1660
      %2109 = vmatprep.subr.bf16.mxu0 0
      %2110 = vmatpush1.bf16.msra.mxu0 %v1661
      %2111 = vmatprep.subr.bf16.mxu0 0
      %2112 = vmatpush1.bf16.msra.mxu0 %v1662
      %2113 = vmatprep.mubr.bf16.mxu0 %v1037
      %2114 = vmatmul.mubr.bf16.gmra.mrb[0].mxu0 %v1036
      %v2115 = vpop.f32.mrb[0].mxu0
      %v2116 = vadd.f32 %v1955, %v2115
      %v2117 = vpop.f32.mrb[0].mxu0
      %v2118 = vpop.f32.mrb[0].mxu0
      %v2119 = vadd.f32 %v1958, %v2118
      %v2120 = vpop.f32.mrb[0].mxu0
      %2121 = vmatprep.mubr.bf16.mxu0 %v1046
      %2122 = vmatmul.mubr.bf16.gmra.mrb[0].mxu0 %v1045
      %v2123 = vpop.f32.mrb[0].mxu0
      %v2124 = vadd.f32 %v1963, %v2123
      %v2125 = vpop.f32.mrb[0].mxu0
      %v2126 = vpop.f32.mrb[0].mxu0
      %v2127 = vadd.f32 %v1966, %v2126
      %v2128 = vpop.f32.mrb[0].mxu0
      %2129 = vmatprep.mubr.bf16.mxu0 %v1055
      %2130 = vmatmul.mubr.bf16.gmra.mrb[0].mxu0 %v1054
      %v2131 = vpop.f32.mrb[0].mxu0
      %v2132 = vadd.f32 %v1971, %v2131
      %v2133 = vpop.f32.mrb[0].mxu0
      %v2134 = vpop.f32.mrb[0].mxu0
      %v2135 = vadd.f32 %v1974, %v2134
      %v2136 = vpop.f32.mrb[0].mxu0
      %2137 = vmatprep.mubr.bf16.mxu0 %v1064
      %2138 = vmatmul.mubr.bf16.gmra.mrb[0].mxu0 %v1063
      %v2139 = vpop.f32.mrb[0].mxu0
      %v2140 = vadd.f32 %v1979, %v2139
      %v2141 = vpop.f32.mrb[0].mxu0
      %v2142 = vpop.f32.mrb[0].mxu0
      %v2143 = vadd.f32 %v1982, %v2142
      %v2144 = vpop.f32.mrb[0].mxu0
      %2145 = vmatprep.mubr.bf16.mxu0 %v1073
      %2146 = vmatmul.mubr.bf16.gmra.mrb[0].mxu0 %v1072
      %v2147 = vpop.f32.mrb[0].mxu0
      %v2148 = vadd.f32 %v1987, %v2147
      %v2149 = vpop.f32.mrb[0].mxu0
      %v2150 = vpop.f32.mrb[0].mxu0
      %v2151 = vadd.f32 %v1990, %v2150
      %v2152 = vpop.f32.mrb[0].mxu0
      %2153 = vmatprep.mubr.bf16.mxu0 %v1082
      %2154 = vmatmul.mubr.bf16.gmra.mrb[0].mxu0 %v1081
      %v2155 = vpop.f32.mrb[0].mxu0
      %v2156 = vadd.f32 %v1995, %v2155
      %v2157 = vpop.f32.mrb[0].mxu0
      %v2158 = vpop.f32.mrb[0].mxu0
      %v2159 = vadd.f32 %v1998, %v2158
      %v2160 = vpop.f32.mrb[0].mxu0
      %2161 = vmatprep.mubr.bf16.mxu0 %v1091
      %2162 = vmatmul.mubr.bf16.gmra.mrb[0].mxu0 %v1090
      %v2163 = vpop.f32.mrb[0].mxu0
      %v2164 = vadd.f32 %v2003, %v2163
      %v2165 = vpop.f32.mrb[0].mxu0
      %v2166 = vpop.f32.mrb[0].mxu0
      %v2167 = vadd.f32 %v2006, %v2166
      %v2168 = vpop.f32.mrb[0].mxu0
      %2169 = vmatprep.mubr.bf16.mxu0 %v1100
      %2170 = vmatmul.mubr.bf16.gmra.mrb[0].mxu0 %v1099
      %v2171 = vpop.f32.mrb[0].mxu0
      %v2172 = vadd.f32 %v2011, %v2171
      %v2173 = vpop.f32.mrb[0].mxu0
      %v2174 = vpop.f32.mrb[0].mxu0
      %v2175 = vadd.f32 %v2014, %v2174
      %v2176 = vpop.f32.mrb[0].mxu0
      %2177 = vmatprep.mubr.bf16.mxu0 %v1109
      %2178 = vmatmul.mubr.bf16.gmra.mrb[0].mxu0 %v1108
      %v2179 = vpop.f32.mrb[0].mxu0
      %v2180 = vadd.f32 %v2019, %v2179
      %v2181 = vpop.f32.mrb[0].mxu0
      %v2182 = vpop.f32.mrb[0].mxu0
      %v2183 = vadd.f32 %v2022, %v2182
      %v2184 = vpop.f32.mrb[0].mxu0
      %2185 = vmatprep.mubr.bf16.mxu0 %v1118
      %2186 = vmatmul.mubr.bf16.gmra.mrb[0].mxu0 %v1117
      %v2187 = vpop.f32.mrb[0].mxu0
      %v2188 = vadd.f32 %v2027, %v2187
      %v2189 = vpop.f32.mrb[0].mxu0
      %v2190 = vpop.f32.mrb[0].mxu0
      %v2191 = vadd.f32 %v2030, %v2190
      %v2192 = vpop.f32.mrb[0].mxu0
      %2193 = vmatprep.mubr.bf16.mxu0 %v1127
      %2194 = vmatmul.mubr.bf16.gmra.mrb[0].mxu0 %v1126
      %v2195 = vpop.f32.mrb[0].mxu0
      %v2196 = vadd.f32 %v2035, %v2195
      %v2197 = vpop.f32.mrb[0].mxu0
      %v2198 = vpop.f32.mrb[0].mxu0
      %v2199 = vadd.f32 %v2038, %v2198
      %v2200 = vpop.f32.mrb[0].mxu0
      %2201 = vmatprep.mubr.bf16.mxu0 %v1136
      %2202 = vmatmul.mubr.bf16.gmra.mrb[0].mxu0 %v1135
      %v2203 = vpop.f32.mrb[0].mxu0
      %v2204 = vadd.f32 %v2043, %v2203
      %v2205 = vpop.f32.mrb[0].mxu0
      %v2206 = vpop.f32.mrb[0].mxu0
      %v2207 = vadd.f32 %v2046, %v2206
      %v2208 = vpop.f32.mrb[0].mxu0
      %2209 = vmatprep.mubr.bf16.mxu0 %v1145
      %2210 = vmatmul.mubr.bf16.gmra.mrb[0].mxu0 %v1144
      %v2211 = vpop.f32.mrb[0].mxu0
      %v2212 = vadd.f32 %v2051, %v2211
      %v2213 = vpop.f32.mrb[0].mxu0
      %v2214 = vpop.f32.mrb[0].mxu0
      %v2215 = vadd.f32 %v2054, %v2214
      %v2216 = vpop.f32.mrb[0].mxu0
      %2217 = vmatprep.mubr.bf16.mxu0 %v1154
      %2218 = vmatmul.mubr.bf16.gmra.mrb[0].mxu0 %v1153
      %v2219 = vpop.f32.mrb[0].mxu0
      %v2220 = vadd.f32 %v2059, %v2219
      %v2221 = vpop.f32.mrb[0].mxu0
      %v2222 = vpop.f32.mrb[0].mxu0
      %v2223 = vadd.f32 %v2062, %v2222
      %v2224 = vpop.f32.mrb[0].mxu0
      %2225 = vmatprep.mubr.bf16.mxu0 %v1163
      %2226 = vmatmul.mubr.bf16.gmra.mrb[0].mxu0 %v1162
      %v2227 = vpop.f32.mrb[0].mxu0
      %v2228 = vadd.f32 %v2067, %v2227
      %v2229 = vpop.f32.mrb[0].mxu0
      %v2230 = vpop.f32.mrb[0].mxu0
      %v2231 = vadd.f32 %v2070, %v2230
      %v2232 = vpop.f32.mrb[0].mxu0
      %2233 = vmatprep.mubr.bf16.mxu0 %v1172
      %2234 = vmatmul.mubr.bf16.gmra.mrb[0].mxu0 %v1171
      %v2235 = vpop.f32.mrb[0].mxu0
      %v2236 = vadd.f32 %v2075, %v2235
      %v2237 = vpop.f32.mrb[0].mxu0
      %v2238 = vpop.f32.mrb[0].mxu0
      %v2239 = vadd.f32 %v2078, %v2238
      %v2240 = vpop.f32.mrb[0].mxu0
      %2241 = vdwg.mxu0
      %2242 = vmatprep.subr.bf16.mxu0 0
      %2243 = vmatpush1.bf16.msra.mxu0 %v1663
      %2244 = vmatprep.subr.bf16.mxu0 0
      %2245 = vmatpush1.bf16.msra.mxu0 %v1664
      %2246 = vmatprep.subr.bf16.mxu0 0
      %2247 = vmatpush1.bf16.msra.mxu0 %v1665
      %2248 = vmatprep.subr.bf16.mxu0 0
      %2249 = vmatpush1.bf16.msra.mxu0 %v1666
      %2250 = vmatprep.subr.bf16.mxu0 0
      %2251 = vmatpush1.bf16.msra.mxu0 %v1667
      %2252 = vmatprep.subr.bf16.mxu0 0
      %2253 = vmatpush1.bf16.msra.mxu0 %v1668
      %2254 = vmatprep.subr.bf16.mxu0 0
      %2255 = vmatpush1.bf16.msra.mxu0 %v1669
      %2256 = vmatprep.subr.bf16.mxu0 0
      %2257 = vmatpush1.bf16.msra.mxu0 %v1670
      %2258 = vmatprep.subr.bf16.mxu0 0
      %2259 = vmatpush1.bf16.msra.mxu0 %v1671
      %2260 = vmatprep.subr.bf16.mxu0 0
      %2261 = vmatpush1.bf16.msra.mxu0 %v1672
      %2262 = vmatprep.subr.bf16.mxu0 0
      %2263 = vmatpush1.bf16.msra.mxu0 %v1673
      %2264 = vmatprep.subr.bf16.mxu0 0
      %2265 = vmatpush1.bf16.msra.mxu0 %v1674
      %2266 = vmatprep.subr.bf16.mxu0 0
      %2267 = vmatpush1.bf16.msra.mxu0 %v1675
      %2268 = vmatprep.subr.bf16.mxu0 0
      %2269 = vmatpush1.bf16.msra.mxu0 %v1676
      %2270 = vmatprep.subr.bf16.mxu0 0
      %2271 = vmatpush1.bf16.msra.mxu0 %v1677
      %2272 = vmatprep.subr.bf16.mxu0 0
      %2273 = vmatpush1.bf16.msra.mxu0 %v1678
      %2274 = vmatprep.mubr.bf16.mxu0 %v1039
      %2275 = vmatmul.mubr.bf16.gmra.mrb[0].mxu0 %v1038
      %v2276 = vpop.f32.mrb[0].mxu0
      %v2277 = vadd.f32 %v2116, %v2276
      %v2278 = vpop.f32.mrb[0].mxu0
      %v2279 = vpop.f32.mrb[0].mxu0
      %v2280 = vadd.f32 %v2119, %v2279
      %v2281 = vpop.f32.mrb[0].mxu0
      %2282 = vmatprep.mubr.bf16.mxu0 %v1048
      %2283 = vmatmul.mubr.bf16.gmra.mrb[0].mxu0 %v1047
      %v2284 = vpop.f32.mrb[0].mxu0
      %v2285 = vadd.f32 %v2124, %v2284
      %v2286 = vpop.f32.mrb[0].mxu0
      %v2287 = vpop.f32.mrb[0].mxu0
      %v2288 = vadd.f32 %v2127, %v2287
      %v2289 = vpop.f32.mrb[0].mxu0
      %2290 = vmatprep.mubr.bf16.mxu0 %v1057
      %2291 = vmatmul.mubr.bf16.gmra.mrb[0].mxu0 %v1056
      %v2292 = vpop.f32.mrb[0].mxu0
      %v2293 = vadd.f32 %v2132, %v2292
      %v2294 = vpop.f32.mrb[0].mxu0
      %v2295 = vpop.f32.mrb[0].mxu0
      %v2296 = vadd.f32 %v2135, %v2295
      %v2297 = vpop.f32.mrb[0].mxu0
      %2298 = vmatprep.mubr.bf16.mxu0 %v1066
      %2299 = vmatmul.mubr.bf16.gmra.mrb[0].mxu0 %v1065
      %v2300 = vpop.f32.mrb[0].mxu0
      %v2301 = vadd.f32 %v2140, %v2300
      %v2302 = vpop.f32.mrb[0].mxu0
      %v2303 = vpop.f32.mrb[0].mxu0
      %v2304 = vadd.f32 %v2143, %v2303
      %v2305 = vpop.f32.mrb[0].mxu0
      %2306 = vmatprep.mubr.bf16.mxu0 %v1075
      %2307 = vmatmul.mubr.bf16.gmra.mrb[0].mxu0 %v1074
      %v2308 = vpop.f32.mrb[0].mxu0
      %v2309 = vadd.f32 %v2148, %v2308
      %v2310 = vpop.f32.mrb[0].mxu0
      %v2311 = vpop.f32.mrb[0].mxu0
      %v2312 = vadd.f32 %v2151, %v2311
      %v2313 = vpop.f32.mrb[0].mxu0
      %2314 = vmatprep.mubr.bf16.mxu0 %v1084
      %2315 = vmatmul.mubr.bf16.gmra.mrb[0].mxu0 %v1083
      %v2316 = vpop.f32.mrb[0].mxu0
      %v2317 = vadd.f32 %v2156, %v2316
      %v2318 = vpop.f32.mrb[0].mxu0
      %v2319 = vpop.f32.mrb[0].mxu0
      %v2320 = vadd.f32 %v2159, %v2319
      %v2321 = vpop.f32.mrb[0].mxu0
      %2322 = vmatprep.mubr.bf16.mxu0 %v1093
      %2323 = vmatmul.mubr.bf16.gmra.mrb[0].mxu0 %v1092
      %v2324 = vpop.f32.mrb[0].mxu0
      %v2325 = vadd.f32 %v2164, %v2324
      %v2326 = vpop.f32.mrb[0].mxu0
      %v2327 = vpop.f32.mrb[0].mxu0
      %v2328 = vadd.f32 %v2167, %v2327
      %v2329 = vpop.f32.mrb[0].mxu0
      %2330 = vmatprep.mubr.bf16.mxu0 %v1102
      %2331 = vmatmul.mubr.bf16.gmra.mrb[0].mxu0 %v1101
      %v2332 = vpop.f32.mrb[0].mxu0
      %v2333 = vadd.f32 %v2172, %v2332
      %v2334 = vpop.f32.mrb[0].mxu0
      %v2335 = vpop.f32.mrb[0].mxu0
      %v2336 = vadd.f32 %v2175, %v2335
      %v2337 = vpop.f32.mrb[0].mxu0
      %2338 = vmatprep.mubr.bf16.mxu0 %v1111
      %2339 = vmatmul.mubr.bf16.gmra.mrb[0].mxu0 %v1110
      %v2340 = vpop.f32.mrb[0].mxu0
      %v2341 = vadd.f32 %v2180, %v2340
      %v2342 = vpop.f32.mrb[0].mxu0
      %v2343 = vpop.f32.mrb[0].mxu0
      %v2344 = vadd.f32 %v2183, %v2343
      %v2345 = vpop.f32.mrb[0].mxu0
      %2346 = vmatprep.mubr.bf16.mxu0 %v1120
      %2347 = vmatmul.mubr.bf16.gmra.mrb[0].mxu0 %v1119
      %v2348 = vpop.f32.mrb[0].mxu0
      %v2349 = vadd.f32 %v2188, %v2348
      %v2350 = vpop.f32.mrb[0].mxu0
      %v2351 = vpop.f32.mrb[0].mxu0
      %v2352 = vadd.f32 %v2191, %v2351
      %v2353 = vpop.f32.mrb[0].mxu0
      %2354 = vmatprep.mubr.bf16.mxu0 %v1129
      %2355 = vmatmul.mubr.bf16.gmra.mrb[0].mxu0 %v1128
      %v2356 = vpop.f32.mrb[0].mxu0
      %v2357 = vadd.f32 %v2196, %v2356
      %v2358 = vpop.f32.mrb[0].mxu0
      %v2359 = vpop.f32.mrb[0].mxu0
      %v2360 = vadd.f32 %v2199, %v2359
      %v2361 = vpop.f32.mrb[0].mxu0
      %2362 = vmatprep.mubr.bf16.mxu0 %v1138
      %2363 = vmatmul.mubr.bf16.gmra.mrb[0].mxu0 %v1137
      %v2364 = vpop.f32.mrb[0].mxu0
      %v2365 = vadd.f32 %v2204, %v2364
      %v2366 = vpop.f32.mrb[0].mxu0
      %v2367 = vpop.f32.mrb[0].mxu0
      %v2368 = vadd.f32 %v2207, %v2367
      %v2369 = vpop.f32.mrb[0].mxu0
      %2370 = vmatprep.mubr.bf16.mxu0 %v1147
      %2371 = vmatmul.mubr.bf16.gmra.mrb[0].mxu0 %v1146
      %v2372 = vpop.f32.mrb[0].mxu0
      %v2373 = vadd.f32 %v2212, %v2372
      %v2374 = vpop.f32.mrb[0].mxu0
      %v2375 = vpop.f32.mrb[0].mxu0
      %v2376 = vadd.f32 %v2215, %v2375
      %v2377 = vpop.f32.mrb[0].mxu0
      %2378 = vmatprep.mubr.bf16.mxu0 %v1156
      %2379 = vmatmul.mubr.bf16.gmra.mrb[0].mxu0 %v1155
      %v2380 = vpop.f32.mrb[0].mxu0
      %v2381 = vadd.f32 %v2220, %v2380
      %v2382 = vpop.f32.mrb[0].mxu0
      %v2383 = vpop.f32.mrb[0].mxu0
      %v2384 = vadd.f32 %v2223, %v2383
      %v2385 = vpop.f32.mrb[0].mxu0
      %2386 = vmatprep.mubr.bf16.mxu0 %v1165
      %2387 = vmatmul.mubr.bf16.gmra.mrb[0].mxu0 %v1164
      %v2388 = vpop.f32.mrb[0].mxu0
      %v2389 = vadd.f32 %v2228, %v2388
      %v2390 = vpop.f32.mrb[0].mxu0
      %v2391 = vpop.f32.mrb[0].mxu0
      %v2392 = vadd.f32 %v2231, %v2391
      %v2393 = vpop.f32.mrb[0].mxu0
      %2394 = vmatprep.mubr.bf16.mxu0 %v1174
      %2395 = vmatmul.mubr.bf16.gmra.mrb[0].mxu0 %v1173
      %v2396 = vpop.f32.mrb[0].mxu0
      %v2397 = vadd.f32 %v2236, %v2396
      %v2398 = vpop.f32.mrb[0].mxu0
      %v2399 = vpop.f32.mrb[0].mxu0
      %v2400 = vadd.f32 %v2239, %v2399
      %v2401 = vpop.f32.mrb[0].mxu0
      %2402 = vdwg.mxu0
      %2403 = vmatprep.subr.bf16.mxu0 0
      %2404 = vmatpush1.bf16.msra.mxu0 %v1679
      %2405 = vmatprep.subr.bf16.mxu0 0
      %2406 = vmatpush1.bf16.msra.mxu0 %v1680
      %2407 = vmatprep.subr.bf16.mxu0 0
      %2408 = vmatpush1.bf16.msra.mxu0 %v1681
      %2409 = vmatprep.subr.bf16.mxu0 0
      %2410 = vmatpush1.bf16.msra.mxu0 %v1682
      %2411 = vmatprep.subr.bf16.mxu0 0
      %2412 = vmatpush1.bf16.msra.mxu0 %v1683
      %2413 = vmatprep.subr.bf16.mxu0 0
      %2414 = vmatpush1.bf16.msra.mxu0 %v1684
      %2415 = vmatprep.subr.bf16.mxu0 0
      %2416 = vmatpush1.bf16.msra.mxu0 %v1685
      %2417 = vmatprep.subr.bf16.mxu0 0
      %2418 = vmatpush1.bf16.msra.mxu0 %v1686
      %2419 = vmatprep.subr.bf16.mxu0 0
      %2420 = vmatpush1.bf16.msra.mxu0 0
      %2421 = vmatprep.subr.bf16.mxu0 0
      %2422 = vmatpush1.bf16.msra.mxu0 0
      %2423 = vmatprep.subr.bf16.mxu0 0
      %2424 = vmatpush1.bf16.msra.mxu0 0
      %2425 = vmatprep.subr.bf16.mxu0 0
      %2426 = vmatpush1.bf16.msra.mxu0 0
      %2427 = vmatprep.subr.bf16.mxu0 0
      %2428 = vmatpush1.bf16.msra.mxu0 0
      %2429 = vmatprep.subr.bf16.mxu0 0
      %2430 = vmatpush1.bf16.msra.mxu0 0
      %2431 = vmatprep.subr.bf16.mxu0 0
      %2432 = vmatpush1.bf16.msra.mxu0 0
      %2433 = vmatprep.subr.bf16.mxu0 0
      %2434 = vmatpush1.bf16.msra.mxu0 0
      %2435 = vmatprep.mubr.bf16.mxu0 0
      %2436 = vmatmul.mubr.bf16.gmra.mrb[0].mxu0 %v1040
      %v2437 = vpop.f32.mrb[0].mxu0
      %v2438 = vadd.f32 %v2277, %v2437
      %v2439 = vpop.f32.mrb[0].mxu0
      %v2440 = vpop.f32.mrb[0].mxu0
      %v2441 = vadd.f32 %v2280, %v2440
      %v2442 = vpop.f32.mrb[0].mxu0
      %2443 = vmatprep.mubr.bf16.mxu0 0
      %2444 = vmatmul.mubr.bf16.gmra.mrb[0].mxu0 %v1049
      %v2445 = vpop.f32.mrb[0].mxu0
      %v2446 = vadd.f32 %v2285, %v2445
      %v2447 = vpop.f32.mrb[0].mxu0
      %v2448 = vpop.f32.mrb[0].mxu0
      %v2449 = vadd.f32 %v2288, %v2448
      %v2450 = vpop.f32.mrb[0].mxu0
      %2451 = vmatprep.mubr.bf16.mxu0 0
      %2452 = vmatmul.mubr.bf16.gmra.mrb[0].mxu0 %v1058
      %v2453 = vpop.f32.mrb[0].mxu0
      %v2454 = vadd.f32 %v2293, %v2453
      %v2455 = vpop.f32.mrb[0].mxu0
      %v2456 = vpop.f32.mrb[0].mxu0
      %v2457 = vadd.f32 %v2296, %v2456
      %v2458 = vpop.f32.mrb[0].mxu0
      %2459 = vmatprep.mubr.bf16.mxu0 0
      %2460 = vmatmul.mubr.bf16.gmra.mrb[0].mxu0 %v1067
      %v2461 = vpop.f32.mrb[0].mxu0
      %v2462 = vadd.f32 %v2301, %v2461
      %v2463 = vpop.f32.mrb[0].mxu0
      %v2464 = vpop.f32.mrb[0].mxu0
      %v2465 = vadd.f32 %v2304, %v2464
      %v2466 = vpop.f32.mrb[0].mxu0
      %2467 = vmatprep.mubr.bf16.mxu0 0
      %2468 = vmatmul.mubr.bf16.gmra.mrb[0].mxu0 %v1076
      %v2469 = vpop.f32.mrb[0].mxu0
      %v2470 = vadd.f32 %v2309, %v2469
      %v2471 = vpop.f32.mrb[0].mxu0
      %v2472 = vpop.f32.mrb[0].mxu0
      %v2473 = vadd.f32 %v2312, %v2472
      %v2474 = vpop.f32.mrb[0].mxu0
      %2475 = vmatprep.mubr.bf16.mxu0 0
      %2476 = vmatmul.mubr.bf16.gmra.mrb[0].mxu0 %v1085
      %v2477 = vpop.f32.mrb[0].mxu0
      %v2478 = vadd.f32 %v2317, %v2477
      %v2479 = vpop.f32.mrb[0].mxu0
      %v2480 = vpop.f32.mrb[0].mxu0
      %v2481 = vadd.f32 %v2320, %v2480
      %v2482 = vpop.f32.mrb[0].mxu0
      %2483 = vmatprep.mubr.bf16.mxu0 0
      %2484 = vmatmul.mubr.bf16.gmra.mrb[0].mxu0 %v1094
      %v2485 = vpop.f32.mrb[0].mxu0
      %v2486 = vadd.f32 %v2325, %v2485
      %v2487 = vpop.f32.mrb[0].mxu0
      %v2488 = vpop.f32.mrb[0].mxu0
      %v2489 = vadd.f32 %v2328, %v2488
      %v2490 = vpop.f32.mrb[0].mxu0
      %2491 = vmatprep.mubr.bf16.mxu0 0
      %2492 = vmatmul.mubr.bf16.gmra.mrb[0].mxu0 %v1103
      %v2493 = vpop.f32.mrb[0].mxu0
      %v2494 = vadd.f32 %v2333, %v2493
      %v2495 = vpop.f32.mrb[0].mxu0
      %v2496 = vpop.f32.mrb[0].mxu0
      %v2497 = vadd.f32 %v2336, %v2496
      %v2498 = vpop.f32.mrb[0].mxu0
      %2499 = vmatprep.mubr.bf16.mxu0 0
      %2500 = vmatmul.mubr.bf16.gmra.mrb[0].mxu0 %v1112
      %v2501 = vpop.f32.mrb[0].mxu0
      %v2502 = vadd.f32 %v2341, %v2501
      %v2503 = vpop.f32.mrb[0].mxu0
      %v2504 = vpop.f32.mrb[0].mxu0
      %v2505 = vadd.f32 %v2344, %v2504
      %v2506 = vpop.f32.mrb[0].mxu0
      %2507 = vmatprep.mubr.bf16.mxu0 0
      %2508 = vmatmul.mubr.bf16.gmra.mrb[0].mxu0 %v1121
      %v2509 = vpop.f32.mrb[0].mxu0
      %v2510 = vadd.f32 %v2349, %v2509
      %v2511 = vpop.f32.mrb[0].mxu0
      %v2512 = vpop.f32.mrb[0].mxu0
      %v2513 = vadd.f32 %v2352, %v2512
      %v2514 = vpop.f32.mrb[0].mxu0
      %2515 = vmatprep.mubr.bf16.mxu0 0
      %2516 = vmatmul.mubr.bf16.gmra.mrb[0].mxu0 %v1130
      %v2517 = vpop.f32.mrb[0].mxu0
      %v2518 = vadd.f32 %v2357, %v2517
      %v2519 = vpop.f32.mrb[0].mxu0
      %v2520 = vpop.f32.mrb[0].mxu0
      %v2521 = vadd.f32 %v2360, %v2520
      %v2522 = vpop.f32.mrb[0].mxu0
      %2523 = vmatprep.mubr.bf16.mxu0 0
      %2524 = vmatmul.mubr.bf16.gmra.mrb[0].mxu0 %v1139
      %v2525 = vpop.f32.mrb[0].mxu0
      %v2526 = vadd.f32 %v2365, %v2525
      %v2527 = vpop.f32.mrb[0].mxu0
      %v2528 = vpop.f32.mrb[0].mxu0
      %v2529 = vadd.f32 %v2368, %v2528
      %v2530 = vpop.f32.mrb[0].mxu0
      %2531 = vmatprep.mubr.bf16.mxu0 0
      %2532 = vmatmul.mubr.bf16.gmra.mrb[0].mxu0 %v1148
      %v2533 = vpop.f32.mrb[0].mxu0
      %v2534 = vadd.f32 %v2373, %v2533
      %v2535 = vpop.f32.mrb[0].mxu0
      %v2536 = vpop.f32.mrb[0].mxu0
      %v2537 = vadd.f32 %v2376, %v2536
      %v2538 = vpop.f32.mrb[0].mxu0
      %2539 = vmatprep.mubr.bf16.mxu0 0
      %2540 = vmatmul.mubr.bf16.gmra.mrb[0].mxu0 %v1157
      %v2541 = vpop.f32.mrb[0].mxu0
      %v2542 = vadd.f32 %v2381, %v2541
      %v2543 = vpop.f32.mrb[0].mxu0
      %v2544 = vpop.f32.mrb[0].mxu0
      %v2545 = vadd.f32 %v2384, %v2544
      %v2546 = vpop.f32.mrb[0].mxu0
      %2547 = vmatprep.mubr.bf16.mxu0 0
      %2548 = vmatmul.mubr.bf16.gmra.mrb[0].mxu0 %v1166
      %v2549 = vpop.f32.mrb[0].mxu0
      %v2550 = vadd.f32 %v2389, %v2549
      %v2551 = vpop.f32.mrb[0].mxu0
      %v2552 = vpop.f32.mrb[0].mxu0
      %v2553 = vadd.f32 %v2392, %v2552
      %v2554 = vpop.f32.mrb[0].mxu0
      %2555 = vmatprep.mubr.bf16.mxu0 0
      %2556 = vmatmul.mubr.bf16.gmra.mrb[0].mxu0 %v1175
      %v2557 = vpop.f32.mrb[0].mxu0
      %v2558 = vadd.f32 %v2397, %v2557
      %v2559 = vpop.f32.mrb[0].mxu0
      %v2560 = vpop.f32.mrb[0].mxu0
      %v2561 = vadd.f32 %v2400, %v2560
      %v2562 = vpop.f32.mrb[0].mxu0
      %2563 = vdwg.mxu0
      %2564 = vst [vmem:[%s224] sm:$0xff] %v2438
      %2565 = vst [vmem:[%s224 + $0x8] sm:$0xff] %v2441
      %2566 = vst [vmem:[%s224 + $0x10] sm:$0xff] %v2446
      %2567 = vst [vmem:[%s224 + $0x18] sm:$0xff] %v2449
      %2568 = vst [vmem:[%s224 + $0x20] sm:$0xff] %v2454
      %2569 = vst [vmem:[%s224 + $0x28] sm:$0xff] %v2457
      %2570 = vst [vmem:[%s224 + $0x30] sm:$0xff] %v2462
      %2571 = vst [vmem:[%s224 + $0x38] sm:$0xff] %v2465
      %2572 = vst [vmem:[%s224 + $0x40] sm:$0xff] %v2470
      %2573 = vst [vmem:[%s224 + $0x48] sm:$0xff] %v2473
      %2574 = vst [vmem:[%s224 + $0x50] sm:$0xff] %v2478
      %2575 = vst [vmem:[%s224 + $0x58] sm:$0xff] %v2481
      %2576 = vst [vmem:[%s224 + $0x60] sm:$0xff] %v2486
      %2577 = vst [vmem:[%s224 + $0x68] sm:$0xff] %v2489
      %2578 = vst [vmem:[%s224 + $0x70] sm:$0xff] %v2494
      %2579 = vst [vmem:[%s224 + $0x78] sm:$0xff] %v2497
      %2580 = vst [vmem:[%s224 + $0x80] sm:$0xff] %v2502
      %2581 = vst [vmem:[%s224 + $0x88] sm:$0xff] %v2505
      %2582 = vst [vmem:[%s224 + $0x90] sm:$0xff] %v2510
      %2583 = vst [vmem:[%s224 + $0x98] sm:$0xff] %v2513
      %2584 = vst [vmem:[%s224 + $0xa0] sm:$0xff] %v2518
      %2585 = vst [vmem:[%s224 + $0xa8] sm:$0xff] %v2521
      %2586 = vst [vmem:[%s224 + $0xb0] sm:$0xff] %v2526
      %2587 = vst [vmem:[%s224 + $0xb8] sm:$0xff] %v2529
      %2588 = vst [vmem:[%s224 + $0xc0] sm:$0xff] %v2534
      %2589 = vst [vmem:[%s224 + $0xc8] sm:$0xff] %v2537
      %2590 = vst [vmem:[%s224 + $0xd0] sm:$0xff] %v2542
      %2591 = vst [vmem:[%s224 + $0xd8] sm:$0xff] %v2545
      %2592 = vst [vmem:[%s224 + $0xe0] sm:$0xff] %v2550
      %2593 = vst [vmem:[%s224 + $0xe8] sm:$0xff] %v2553
      %2594 = vst [vmem:[%s224 + $0xf0] sm:$0xff] %v2558
      %2595 = vst [vmem:[%s224 + $0xf8] sm:$0xff] %v2561
      %p2596 = scmp.lt.s32.totalorder %s16, 1
      %s2597 = scalar_select %p2596, %s16, 1
      %s2598 = smul.addr %s2597, 32
      %s2599 = smul.addr %s2598, 8
      %s2600 = scalar_lea.vmem %s5, %s2599
      // Predicated region
      $region41: #{downsample_forward.10} parent=39 // pred_check
        %p2601 = pneg %p144
      $region42: #{downsample_forward.10} parent=39 // pred_check_branch
        %2603 = sbr.rel (%p2601) target = $region44
      $region43: #{downsample_forward.10} parent=39 // pred_region
        _
      $region44: #{downsample_forward.10} parent=39 // pred_fallthru
        _
    $region40: #{downsample_forward.10} parent=5 // pred_fallthru
      _
    %p2604 = scmp.le.s32.totalorder 2, %s11
    // Predicated region
    $region45: #{downsample_forward.10} parent=5 // pred_check
      %p2605 = pneg %p2604
    $region46: #{downsample_forward.10} parent=5 // pred_check_branch
      %2607 = sbr.rel (%p2605) target = $region48
    $region47: #{downsample_forward.10} parent=5 // pred_region
      %s2608 = ssub.s32 %s11, 2
      // Predicated region
      $region49: #{downsample_forward.10} parent=47 // pred_check
        %p2609 = pneg %p150
      $region50: #{downsample_forward.10} parent=47 // pred_check_branch
        %2611 = sbr.rel (%p2609) target = $region52
      $region51: #{downsample_forward.10} parent=47 // pred_region
        %p2612 = scmp.lt.s32.totalorder %s17, 1
        %s2613 = scalar_select %p2612, %s17, 1
        %s2614 = smul.addr %s2613, 32
        %s2615 = smul.addr %s2614, 8
        %s2616 = scalar_lea.vmem %s5, %s2615
      $region52: #{downsample_forward.10} parent=47 // pred_fallthru
        _
    $region48: #{downsample_forward.10} parent=5 // pred_fallthru
      _
  $region6: #{downsample_forward.10} parent=0 // loop_footer
    %s15 = sadd.s32 1, %s11
  $region7: #{downsample_forward.10} parent=0 // loop_footer_branch
    %10 = sbr.rel target = $region3
  $region8: #{downsample_forward.10} parent=0 // loop_exit
    _

</llo_original>
